<compile_context>
chip_gen: v5e
topology: v5e:2x2
jax: 0.10.0
libtpu: 0.0.40
codegen_flags: <defaults>
</compile_context>

<pallas_src>
import math

import jax
import jax.numpy as jnp
from jax.experimental import pallas as pl
from jax.experimental.pallas import tpu as pltpu

# ---- module hyper-parameters (small but TPU-friendly shapes) ----
E = 128          # embed_dim
HEADS = 8        # num_heads
L = 128          # target sequence length
S = 128          # source sequence length
N = 2            # batch size
L2_REG = 0.01
# TODO(synk): attention-prob dropout (p=0.5) is identity here (eval/inference mode).
# TODO(synk): key_padding_mask / attn_mask are None in the spec's forward; not implemented.


# ---------------------------------------------------------------------------
# Kernel: one batch element per grid step, fully fused multi-head attention.
# ---------------------------------------------------------------------------
def _mha_kernel(q_ref, k_ref, v_ref,
                wq_ref, bq_ref, wk_ref, bk_ref, wv_ref, bv_ref,
                wo_ref, bo_ref,
                out_ref, attn_ref):
    f32 = jnp.float32
    _, Lq, Ed = q_ref.shape
    Sk = k_ref.shape[1]
    hd = Ed // HEADS
    scale = 1.0 / math.sqrt(hd)

    q = q_ref[0]                                   # (L, E)
    k = k_ref[0]                                   # (S, E)
    v = v_ref[0]                                   # (S, E)

    # packed in-projection (weights pre-split / pre-transposed in the wrapper)
    qp = (jnp.dot(q, wq_ref[...], preferred_element_type=f32) + bq_ref[...]) * scale
    kp = jnp.dot(k, wk_ref[...], preferred_element_type=f32) + bk_ref[...]
    vp = jnp.dot(v, wv_ref[...], preferred_element_type=f32) + bv_ref[...]

    attn_sum = jnp.zeros((Lq, Sk), f32)
    head_outs = []
    for h in range(HEADS):                         # static unroll -> full scheduler visibility
        lo = h * hd
        qh = qp[:, lo:lo + hd]                     # (L, hd)
        kh = kp[:, lo:lo + hd]                     # (S, hd)
        vh = vp[:, lo:lo + hd]                     # (S, hd)
        # scores: contract the per-head dim of both operands (NT matmul on the MXU)
        s = jnp.einsum('ld,sd->ls', qh, kh, preferred_element_type=f32)   # (L, S)
        m = jnp.max(s, axis=-1, keepdims=True)
        e = jnp.exp(s - m)
        denom = jnp.sum(e, axis=-1, keepdims=True)
        p = e * pl.reciprocal(denom)               # exact reciprocal (weights are an output)
        attn_sum = attn_sum + p
        head_outs.append(jnp.dot(p, vh, preferred_element_type=f32))      # (L, hd)

    ctx = jnp.concatenate(head_outs, axis=-1)                              # (L, E)
    # out-projection; l2_reg * sum-of-parameter-norms already folded into bo_ref.
    out_ref[0] = jnp.dot(ctx, wo_ref[...], preferred_element_type=f32) + bo_ref[...]
    attn_ref[0] = attn_sum * (1.0 / HEADS)         # head-averaged attention weights


# ---------------------------------------------------------------------------
# JAX wrapper: weight prep + regularization fold + pallas_call.
# ---------------------------------------------------------------------------
def multihead_attention_with_regularization(query, key, value, params, *, l2_reg=L2_REG):
    """query/key/value: (L, N, E) / (S, N, E) / (S, N, E), seq-first like the torch module.

    Returns (output (L, N, E), attn_weights (N, L, S) averaged over heads).
    """
    Lq, Nb, Ed = query.shape
    Sk = key.shape[0]
    in_w = params['in_proj_weight']       # (3E, E), torch layout
    in_b = params['in_proj_bias']         # (3E,)
    out_w = params['out_proj_weight']     # (E, E)
    out_b = params['out_proj_bias']       # (E,)

    # split & pre-transpose the packed in-projection so every kernel matmul is x @ W
    wq = in_w[:Ed].T
    wk = in_w[Ed:2 * Ed].T
    wv = in_w[2 * Ed:].T
    bq = in_b[:Ed].reshape(1, Ed)
    bk = in_b[Ed:2 * Ed].reshape(1, Ed)
    bv = in_b[2 * Ed:].reshape(1, Ed)
    wo = out_w.T

    # output = attention_output + l2_reg * sum_p ||p||_2  -> input independent, fold into bias
    l2 = (jnp.sqrt(jnp.sum(in_w * in_w)) + jnp.sqrt(jnp.sum(in_b * in_b))
          + jnp.sqrt(jnp.sum(out_w * out_w)) + jnp.sqrt(jnp.sum(out_b * out_b)))
    bo = (out_b + l2_reg * l2).reshape(1, Ed)

    # batch-major views so each grid step owns one lane-dense (seq, E) slab
    qb = jnp.transpose(query, (1, 0, 2))
    kb = jnp.transpose(key, (1, 0, 2))
    vb = jnp.transpose(value, (1, 0, 2))

    def full_spec(a):
        return pl.BlockSpec(a.shape, lambda n, _nd=a.ndim: (0,) * _nd)

    out_bm, attn = pl.pallas_call(
        _mha_kernel,
        out_shape=(jax.ShapeDtypeStruct((Nb, Lq, Ed), jnp.float32),
                   jax.ShapeDtypeStruct((Nb, Lq, Sk), jnp.float32)),
        grid=(Nb,),
        in_specs=[
            pl.BlockSpec((1, Lq, Ed), lambda n: (n, 0, 0)),
            pl.BlockSpec((1, Sk, Ed), lambda n: (n, 0, 0)),
            pl.BlockSpec((1, Sk, Ed), lambda n: (n, 0, 0)),
            full_spec(wq), full_spec(bq), full_spec(wk), full_spec(bk),
            full_spec(wv), full_spec(bv), full_spec(wo), full_spec(bo),
        ],
        out_specs=(pl.BlockSpec((1, Lq, Ed), lambda n: (n, 0, 0)),
                   pl.BlockSpec((1, Lq, Sk), lambda n: (n, 0, 0))),
        compiler_params=pltpu.CompilerParams(dimension_semantics=("parallel",)),
    )(qb, kb, vb, wq, bq, wk, bk, wv, bv, wo, bo)

    output = jnp.transpose(out_bm, (1, 0, 2))      # back to (L, N, E), batch_first=False
    return output, attn


# ---------------------------------------------------------------------------
# Pure-JAX reference (for a correctness check only).
# ---------------------------------------------------------------------------
def _reference(query, key, value, params, l2_reg):
    hp = jax.lax.Precision.HIGHEST
    Ed = query.shape[-1]
    in_w, in_b = params['in_proj_weight'], params['in_proj_bias']
    out_w, out_b = params['out_proj_weight'], params['out_proj_bias']
    q = jnp.einsum('lne,fe->lnf', query, in_w[:Ed], precision=hp) + in_b[:Ed]
    k = jnp.einsum('sne,fe->snf', key, in_w[Ed:2 * Ed], precision=hp) + in_b[Ed:2 * Ed]
    v = jnp.einsum('sne,fe->snf', value, in_w[2 * Ed:], precision=hp) + in_b[2 * Ed:]
    Lq, Nb, _ = q.shape
    Sk = k.shape[0]
    hd = Ed // HEADS
    qh = q.reshape(Lq, Nb, HEADS, hd)
    kh = k.reshape(Sk, Nb, HEADS, hd)
    vh = v.reshape(Sk, Nb, HEADS, hd)
    scores = jnp.einsum('lnhd,snhd->nhls', qh, kh, precision=hp) / math.sqrt(hd)
    p = jax.nn.softmax(scores, axis=-1)
    ctx = jnp.einsum('nhls,snhd->lnhd', p, vh, precision=hp).reshape(Lq, Nb, Ed)
    out = jnp.einsum('lne,fe->lnf', ctx, out_w, precision=hp) + out_b
    l2 = (jnp.linalg.norm(in_w) + jnp.linalg.norm(in_b)
          + jnp.linalg.norm(out_w) + jnp.linalg.norm(out_b))
    return out + l2_reg * l2, jnp.mean(p, axis=1)


if __name__ == "__main__":
    root = jax.random.PRNGKey(0)
    kq, kk, kv, kw = jax.random.split(root, 4)
    query = jax.random.normal(kq, (L, N, E), jnp.float32)
    key_t = jax.random.normal(kk, (S, N, E), jnp.float32)
    value = jax.random.normal(kv, (S, N, E), jnp.float32)

    kws = jax.random.split(kw, 4)
    bound = 1.0 / math.sqrt(E)
    params = {
        'in_proj_weight': jax.random.uniform(kws[0], (3 * E, E), jnp.float32, -bound, bound),
        'in_proj_bias': jax.random.uniform(kws[1], (3 * E,), jnp.float32, -bound, bound),
        'out_proj_weight': jax.random.uniform(kws[2], (E, E), jnp.float32, -bound, bound),
        'out_proj_bias': jax.random.uniform(kws[3], (E,), jnp.float32, -bound, bound),
    }

    out, attn = jax.jit(multihead_attention_with_regularization)(query, key_t, value, params)
    jax.block_until_ready((out, attn))

    ref_out, ref_attn = _reference(query, key_t, value, params, L2_REG)
    assert out.shape == (L, N, E) and attn.shape == (N, L, S)
    assert bool(jnp.allclose(out, ref_out, atol=2e-3, rtol=2e-3))
    assert bool(jnp.allclose(attn, ref_attn, atol=2e-3, rtol=2e-3))
    print("KERNEL_OK")
</pallas_src>

<mosaic_0001>
module attributes {stable_mosaic.version = 11 : i64} {
  func.func @_mha_kernel(%arg0: i32, %arg1: memref<1x128x128xf32, #tpu.memory_space<vmem>>, %arg2: memref<1x128x128xf32, #tpu.memory_space<vmem>>, %arg3: memref<1x128x128xf32, #tpu.memory_space<vmem>>, %arg4: memref<128x128xf32, #tpu.memory_space<vmem>>, %arg5: memref<1x128xf32, #tpu.memory_space<vmem>>, %arg6: memref<128x128xf32, #tpu.memory_space<vmem>>, %arg7: memref<1x128xf32, #tpu.memory_space<vmem>>, %arg8: memref<128x128xf32, #tpu.memory_space<vmem>>, %arg9: memref<1x128xf32, #tpu.memory_space<vmem>>, %arg10: memref<128x128xf32, #tpu.memory_space<vmem>>, %arg11: memref<1x128xf32, #tpu.memory_space<vmem>>, %arg12: memref<1x128x128xf32, #tpu.memory_space<vmem>>, %arg13: memref<1x128x128xf32, #tpu.memory_space<vmem>>) attributes {dimension_semantics = [#tpu.dimension_semantics<parallel>], iteration_bounds = array<i64: 2>, scalar_prefetch = 0 : i64, scratch_operands = 0 : i64, tpu.core_type = #tpu.core_type<tc>, window_params = [{transform_indices = @transform_0, window_bounds = array<i64: 1, 128, 128>}, {transform_indices = @transform_1, window_bounds = array<i64: 1, 128, 128>}, {transform_indices = @transform_2, window_bounds = array<i64: 1, 128, 128>}, {pipeline_mode = #tpu.pipeline_mode<synchronous>, transform_indices = @transform_3, window_bounds = array<i64: 128, 128>}, {pipeline_mode = #tpu.pipeline_mode<synchronous>, transform_indices = @transform_4, window_bounds = array<i64: 1, 128>}, {pipeline_mode = #tpu.pipeline_mode<synchronous>, transform_indices = @transform_5, window_bounds = array<i64: 128, 128>}, {pipeline_mode = #tpu.pipeline_mode<synchronous>, transform_indices = @transform_6, window_bounds = array<i64: 1, 128>}, {pipeline_mode = #tpu.pipeline_mode<synchronous>, transform_indices = @transform_7, window_bounds = array<i64: 128, 128>}, {pipeline_mode = #tpu.pipeline_mode<synchronous>, transform_indices = @transform_8, window_bounds = array<i64: 1, 128>}, {pipeline_mode = #tpu.pipeline_mode<synchronous>, transform_indices = @transform_9, window_bounds = array<i64: 128, 128>}, {pipeline_mode = #tpu.pipeline_mode<synchronous>, transform_indices = @transform_10, window_bounds = array<i64: 1, 128>}, {transform_indices = @transform_11, window_bounds = array<i64: 1, 128, 128>}, {transform_indices = @transform_12, window_bounds = array<i64: 1, 128, 128>}]} {
    %c0 = arith.constant 0 : index
    %c0_0 = arith.constant 0 : index
    %c0_1 = arith.constant 0 : index
    %0 = vector.load %arg1[%c0, %c0_0, %c0_1] : memref<1x128x128xf32, #tpu.memory_space<vmem>>, vector<1x128x128xf32>
    %1 = vector.shape_cast %0 : vector<1x128x128xf32> to vector<128x128xf32>
    %c0_2 = arith.constant 0 : index
    %c0_3 = arith.constant 0 : index
    %c0_4 = arith.constant 0 : index
    %2 = vector.load %arg2[%c0_2, %c0_3, %c0_4] : memref<1x128x128xf32, #tpu.memory_space<vmem>>, vector<1x128x128xf32>
    %3 = vector.shape_cast %2 : vector<1x128x128xf32> to vector<128x128xf32>
    %c0_5 = arith.constant 0 : index
    %c0_6 = arith.constant 0 : index
    %c0_7 = arith.constant 0 : index
    %4 = vector.load %arg3[%c0_5, %c0_6, %c0_7] : memref<1x128x128xf32, #tpu.memory_space<vmem>>, vector<1x128x128xf32>
    %5 = vector.shape_cast %4 : vector<1x128x128xf32> to vector<128x128xf32>
    %c0_8 = arith.constant 0 : index
    %c0_9 = arith.constant 0 : index
    %6 = vector.load %arg4[%c0_8, %c0_9] : memref<128x128xf32, #tpu.memory_space<vmem>>, vector<128x128xf32>
    %cst = arith.constant dense<0.000000e+00> : vector<128x128xf32>
    %7 = tpu.matmul %1, %6, %cst {dimension_numbers = #tpu.dot_dimension_numbers<[1], [0], [0], [1], [0, 0, 1, 1], [], []>} : vector<128x128xf32>, vector<128x128xf32>, vector<128x128xf32> -> vector<128x128xf32>
    %c0_10 = arith.constant 0 : index
    %c0_11 = arith.constant 0 : index
    %8 = vector.load %arg5[%c0_10, %c0_11] : memref<1x128xf32, #tpu.memory_space<vmem>>, vector<1x128xf32>
    %9 = vector.broadcast %8 : vector<1x128xf32> to vector<128x128xf32>
    %10 = arith.addf %7, %9 : vector<128x128xf32>
    %cst_12 = arith.constant 2.500000e-01 : f32
    %11 = vector.broadcast %cst_12 : f32 to vector<128x128xf32>
    %12 = arith.mulf %10, %11 : vector<128x128xf32>
    %c0_13 = arith.constant 0 : index
    %c0_14 = arith.constant 0 : index
    %13 = vector.load %arg6[%c0_13, %c0_14] : memref<128x128xf32, #tpu.memory_space<vmem>>, vector<128x128xf32>
    %cst_15 = arith.constant dense<0.000000e+00> : vector<128x128xf32>
    %14 = tpu.matmul %3, %13, %cst_15 {dimension_numbers = #tpu.dot_dimension_numbers<[1], [0], [0], [1], [0, 0, 1, 1], [], []>} : vector<128x128xf32>, vector<128x128xf32>, vector<128x128xf32> -> vector<128x128xf32>
    %c0_16 = arith.constant 0 : index
    %c0_17 = arith.constant 0 : index
    %15 = vector.load %arg7[%c0_16, %c0_17] : memref<1x128xf32, #tpu.memory_space<vmem>>, vector<1x128xf32>
    %16 = vector.broadcast %15 : vector<1x128xf32> to vector<128x128xf32>
    %17 = arith.addf %14, %16 : vector<128x128xf32>
    %c0_18 = arith.constant 0 : index
    %c0_19 = arith.constant 0 : index
    %18 = vector.load %arg8[%c0_18, %c0_19] : memref<128x128xf32, #tpu.memory_space<vmem>>, vector<128x128xf32>
    %cst_20 = arith.constant dense<0.000000e+00> : vector<128x128xf32>
    %19 = tpu.matmul %5, %18, %cst_20 {dimension_numbers = #tpu.dot_dimension_numbers<[1], [0], [0], [1], [0, 0, 1, 1], [], []>} : vector<128x128xf32>, vector<128x128xf32>, vector<128x128xf32> -> vector<128x128xf32>
    %c0_21 = arith.constant 0 : index
    %c0_22 = arith.constant 0 : index
    %20 = vector.load %arg9[%c0_21, %c0_22] : memref<1x128xf32, #tpu.memory_space<vmem>>, vector<1x128xf32>
    %21 = vector.broadcast %20 : vector<1x128xf32> to vector<128x128xf32>
    %22 = arith.addf %19, %21 : vector<128x128xf32>
    %cst_23 = arith.constant 0.000000e+00 : f32
    %23 = vector.broadcast %cst_23 : f32 to vector<128x128xf32>
    %24 = vector.extract_strided_slice %12 {offsets = [0, 0], sizes = [128, 16], strides = [1, 1]} : vector<128x128xf32> to vector<128x16xf32>
    %25 = vector.extract_strided_slice %17 {offsets = [0, 0], sizes = [128, 16], strides = [1, 1]} : vector<128x128xf32> to vector<128x16xf32>
    %26 = vector.extract_strided_slice %22 {offsets = [0, 0], sizes = [128, 16], strides = [1, 1]} : vector<128x128xf32> to vector<128x16xf32>
    "tpu.trace_start"() <{level = 10 : i32, message = "ld,sd->ls"}> : () -> ()
    %cst_24 = arith.constant dense<0.000000e+00> : vector<128x128xf32>
    %27 = tpu.matmul %24, %25, %cst_24 {dimension_numbers = #tpu.dot_dimension_numbers<[1], [1], [0], [0], [0, 0, 1, 0], [], []>} : vector<128x16xf32>, vector<128x16xf32>, vector<128x128xf32> -> vector<128x128xf32>
    "tpu.trace_stop"() : () -> ()
    %cst_25 = arith.constant dense<0xFF800000> : vector<128xf32>
    %28 = vector.multi_reduction <maximumf>, %27, %cst_25 [1] : vector<128x128xf32> to vector<128xf32>
    %29 = vector.shape_cast %28 : vector<128xf32> to vector<128x1xf32>
    %30 = vector.broadcast %29 : vector<128x1xf32> to vector<128x128xf32>
    %31 = arith.subf %27, %30 : vector<128x128xf32>
    %32 = math.exp %31 : vector<128x128xf32>
    %cst_26 = arith.constant dense<0.000000e+00> : vector<128xf32>
    %33 = vector.multi_reduction <add>, %32, %cst_26 [1] : vector<128x128xf32> to vector<128xf32>
    %34 = vector.shape_cast %33 : vector<128xf32> to vector<128x1xf32>
    %35 = tpu.reciprocal %34 : vector<128x1xf32> -> vector<128x1xf32>
    %36 = vector.broadcast %35 : vector<128x1xf32> to vector<128x128xf32>
    %37 = arith.mulf %32, %36 : vector<128x128xf32>
    %38 = arith.addf %23, %37 : vector<128x128xf32>
    %cst_27 = arith.constant dense<0.000000e+00> : vector<128x16xf32>
    %39 = tpu.matmul %37, %26, %cst_27 {dimension_numbers = #tpu.dot_dimension_numbers<[1], [0], [0], [1], [0, 0, 1, 1], [], []>} : vector<128x128xf32>, vector<128x16xf32>, vector<128x16xf32> -> vector<128x16xf32>
    %40 = vector.extract_strided_slice %12 {offsets = [0, 16], sizes = [128, 16], strides = [1, 1]} : vector<128x128xf32> to vector<128x16xf32>
    %41 = vector.extract_strided_slice %17 {offsets = [0, 16], sizes = [128, 16], strides = [1, 1]} : vector<128x128xf32> to vector<128x16xf32>
    %42 = vector.extract_strided_slice %22 {offsets = [0, 16], sizes = [128, 16], strides = [1, 1]} : vector<128x128xf32> to vector<128x16xf32>
    "tpu.trace_start"() <{level = 10 : i32, message = "ld,sd->ls"}> : () -> ()
    %cst_28 = arith.constant dense<0.000000e+00> : vector<128x128xf32>
    %43 = tpu.matmul %40, %41, %cst_28 {dimension_numbers = #tpu.dot_dimension_numbers<[1], [1], [0], [0], [0, 0, 1, 0], [], []>} : vector<128x16xf32>, vector<128x16xf32>, vector<128x128xf32> -> vector<128x128xf32>
    "tpu.trace_stop"() : () -> ()
    %cst_29 = arith.constant dense<0xFF800000> : vector<128xf32>
    %44 = vector.multi_reduction <maximumf>, %43, %cst_29 [1] : vector<128x128xf32> to vector<128xf32>
    %45 = vector.shape_cast %44 : vector<128xf32> to vector<128x1xf32>
    %46 = vector.broadcast %45 : vector<128x1xf32> to vector<128x128xf32>
    %47 = arith.subf %43, %46 : vector<128x128xf32>
    %48 = math.exp %47 : vector<128x128xf32>
    %cst_30 = arith.constant dense<0.000000e+00> : vector<128xf32>
    %49 = vector.multi_reduction <add>, %48, %cst_30 [1] : vector<128x128xf32> to vector<128xf32>
    %50 = vector.shape_cast %49 : vector<128xf32> to vector<128x1xf32>
    %51 = tpu.reciprocal %50 : vector<128x1xf32> -> vector<128x1xf32>
    %52 = vector.broadcast %51 : vector<128x1xf32> to vector<128x128xf32>
    %53 = arith.mulf %48, %52 : vector<128x128xf32>
    %54 = arith.addf %38, %53 : vector<128x128xf32>
    %cst_31 = arith.constant dense<0.000000e+00> : vector<128x16xf32>
    %55 = tpu.matmul %53, %42, %cst_31 {dimension_numbers = #tpu.dot_dimension_numbers<[1], [0], [0], [1], [0, 0, 1, 1], [], []>} : vector<128x128xf32>, vector<128x16xf32>, vector<128x16xf32> -> vector<128x16xf32>
    %56 = vector.extract_strided_slice %12 {offsets = [0, 32], sizes = [128, 16], strides = [1, 1]} : vector<128x128xf32> to vector<128x16xf32>
    %57 = vector.extract_strided_slice %17 {offsets = [0, 32], sizes = [128, 16], strides = [1, 1]} : vector<128x128xf32> to vector<128x16xf32>
    %58 = vector.extract_strided_slice %22 {offsets = [0, 32], sizes = [128, 16], strides = [1, 1]} : vector<128x128xf32> to vector<128x16xf32>
    "tpu.trace_start"() <{level = 10 : i32, message = "ld,sd->ls"}> : () -> ()
    %cst_32 = arith.constant dense<0.000000e+00> : vector<128x128xf32>
    %59 = tpu.matmul %56, %57, %cst_32 {dimension_numbers = #tpu.dot_dimension_numbers<[1], [1], [0], [0], [0, 0, 1, 0], [], []>} : vector<128x16xf32>, vector<128x16xf32>, vector<128x128xf32> -> vector<128x128xf32>
    "tpu.trace_stop"() : () -> ()
    %cst_33 = arith.constant dense<0xFF800000> : vector<128xf32>
    %60 = vector.multi_reduction <maximumf>, %59, %cst_33 [1] : vector<128x128xf32> to vector<128xf32>
    %61 = vector.shape_cast %60 : vector<128xf32> to vector<128x1xf32>
    %62 = vector.broadcast %61 : vector<128x1xf32> to vector<128x128xf32>
    %63 = arith.subf %59, %62 : vector<128x128xf32>
    %64 = math.exp %63 : vector<128x128xf32>
    %cst_34 = arith.constant dense<0.000000e+00> : vector<128xf32>
    %65 = vector.multi_reduction <add>, %64, %cst_34 [1] : vector<128x128xf32> to vector<128xf32>
    %66 = vector.shape_cast %65 : vector<128xf32> to vector<128x1xf32>
    %67 = tpu.reciprocal %66 : vector<128x1xf32> -> vector<128x1xf32>
    %68 = vector.broadcast %67 : vector<128x1xf32> to vector<128x128xf32>
    %69 = arith.mulf %64, %68 : vector<128x128xf32>
    %70 = arith.addf %54, %69 : vector<128x128xf32>
    %cst_35 = arith.constant dense<0.000000e+00> : vector<128x16xf32>
    %71 = tpu.matmul %69, %58, %cst_35 {dimension_numbers = #tpu.dot_dimension_numbers<[1], [0], [0], [1], [0, 0, 1, 1], [], []>} : vector<128x128xf32>, vector<128x16xf32>, vector<128x16xf32> -> vector<128x16xf32>
    %72 = vector.extract_strided_slice %12 {offsets = [0, 48], sizes = [128, 16], strides = [1, 1]} : vector<128x128xf32> to vector<128x16xf32>
    %73 = vector.extract_strided_slice %17 {offsets = [0, 48], sizes = [128, 16], strides = [1, 1]} : vector<128x128xf32> to vector<128x16xf32>
    %74 = vector.extract_strided_slice %22 {offsets = [0, 48], sizes = [128, 16], strides = [1, 1]} : vector<128x128xf32> to vector<128x16xf32>
    "tpu.trace_start"() <{level = 10 : i32, message = "ld,sd->ls"}> : () -> ()
    %cst_36 = arith.constant dense<0.000000e+00> : vector<128x128xf32>
    %75 = tpu.matmul %72, %73, %cst_36 {dimension_numbers = #tpu.dot_dimension_numbers<[1], [1], [0], [0], [0, 0, 1, 0], [], []>} : vector<128x16xf32>, vector<128x16xf32>, vector<128x128xf32> -> vector<128x128xf32>
    "tpu.trace_stop"() : () -> ()
    %cst_37 = arith.constant dense<0xFF800000> : vector<128xf32>
    %76 = vector.multi_reduction <maximumf>, %75, %cst_37 [1] : vector<128x128xf32> to vector<128xf32>
    %77 = vector.shape_cast %76 : vector<128xf32> to vector<128x1xf32>
    %78 = vector.broadcast %77 : vector<128x1xf32> to vector<128x128xf32>
    %79 = arith.subf %75, %78 : vector<128x128xf32>
    %80 = math.exp %79 : vector<128x128xf32>
    %cst_38 = arith.constant dense<0.000000e+00> : vector<128xf32>
    %81 = vector.multi_reduction <add>, %80, %cst_38 [1] : vector<128x128xf32> to vector<128xf32>
    %82 = vector.shape_cast %81 : vector<128xf32> to vector<128x1xf32>
    %83 = tpu.reciprocal %82 : vector<128x1xf32> -> vector<128x1xf32>
    %84 = vector.broadcast %83 : vector<128x1xf32> to vector<128x128xf32>
    %85 = arith.mulf %80, %84 : vector<128x128xf32>
    %86 = arith.addf %70, %85 : vector<128x128xf32>
    %cst_39 = arith.constant dense<0.000000e+00> : vector<128x16xf32>
    %87 = tpu.matmul %85, %74, %cst_39 {dimension_numbers = #tpu.dot_dimension_numbers<[1], [0], [0], [1], [0, 0, 1, 1], [], []>} : vector<128x128xf32>, vector<128x16xf32>, vector<128x16xf32> -> vector<128x16xf32>
    %88 = vector.extract_strided_slice %12 {offsets = [0, 64], sizes = [128, 16], strides = [1, 1]} : vector<128x128xf32> to vector<128x16xf32>
    %89 = vector.extract_strided_slice %17 {offsets = [0, 64], sizes = [128, 16], strides = [1, 1]} : vector<128x128xf32> to vector<128x16xf32>
    %90 = vector.extract_strided_slice %22 {offsets = [0, 64], sizes = [128, 16], strides = [1, 1]} : vector<128x128xf32> to vector<128x16xf32>
    "tpu.trace_start"() <{level = 10 : i32, message = "ld,sd->ls"}> : () -> ()
    %cst_40 = arith.constant dense<0.000000e+00> : vector<128x128xf32>
    %91 = tpu.matmul %88, %89, %cst_40 {dimension_numbers = #tpu.dot_dimension_numbers<[1], [1], [0], [0], [0, 0, 1, 0], [], []>} : vector<128x16xf32>, vector<128x16xf32>, vector<128x128xf32> -> vector<128x128xf32>
    "tpu.trace_stop"() : () -> ()
    %cst_41 = arith.constant dense<0xFF800000> : vector<128xf32>
    %92 = vector.multi_reduction <maximumf>, %91, %cst_41 [1] : vector<128x128xf32> to vector<128xf32>
    %93 = vector.shape_cast %92 : vector<128xf32> to vector<128x1xf32>
    %94 = vector.broadcast %93 : vector<128x1xf32> to vector<128x128xf32>
    %95 = arith.subf %91, %94 : vector<128x128xf32>
    %96 = math.exp %95 : vector<128x128xf32>
    %cst_42 = arith.constant dense<0.000000e+00> : vector<128xf32>
    %97 = vector.multi_reduction <add>, %96, %cst_42 [1] : vector<128x128xf32> to vector<128xf32>
    %98 = vector.shape_cast %97 : vector<128xf32> to vector<128x1xf32>
    %99 = tpu.reciprocal %98 : vector<128x1xf32> -> vector<128x1xf32>
    %100 = vector.broadcast %99 : vector<128x1xf32> to vector<128x128xf32>
    %101 = arith.mulf %96, %100 : vector<128x128xf32>
    %102 = arith.addf %86, %101 : vector<128x128xf32>
    %cst_43 = arith.constant dense<0.000000e+00> : vector<128x16xf32>
    %103 = tpu.matmul %101, %90, %cst_43 {dimension_numbers = #tpu.dot_dimension_numbers<[1], [0], [0], [1], [0, 0, 1, 1], [], []>} : vector<128x128xf32>, vector<128x16xf32>, vector<128x16xf32> -> vector<128x16xf32>
    %104 = vector.extract_strided_slice %12 {offsets = [0, 80], sizes = [128, 16], strides = [1, 1]} : vector<128x128xf32> to vector<128x16xf32>
    %105 = vector.extract_strided_slice %17 {offsets = [0, 80], sizes = [128, 16], strides = [1, 1]} : vector<128x128xf32> to vector<128x16xf32>
    %106 = vector.extract_strided_slice %22 {offsets = [0, 80], sizes = [128, 16], strides = [1, 1]} : vector<128x128xf32> to vector<128x16xf32>
    "tpu.trace_start"() <{level = 10 : i32, message = "ld,sd->ls"}> : () -> ()
    %cst_44 = arith.constant dense<0.000000e+00> : vector<128x128xf32>
    %107 = tpu.matmul %104, %105, %cst_44 {dimension_numbers = #tpu.dot_dimension_numbers<[1], [1], [0], [0], [0, 0, 1, 0], [], []>} : vector<128x16xf32>, vector<128x16xf32>, vector<128x128xf32> -> vector<128x128xf32>
    "tpu.trace_stop"() : () -> ()
    %cst_45 = arith.constant dense<0xFF800000> : vector<128xf32>
    %108 = vector.multi_reduction <maximumf>, %107, %cst_45 [1] : vector<128x128xf32> to vector<128xf32>
    %109 = vector.shape_cast %108 : vector<128xf32> to vector<128x1xf32>
    %110 = vector.broadcast %109 : vector<128x1xf32> to vector<128x128xf32>
    %111 = arith.subf %107, %110 : vector<128x128xf32>
    %112 = math.exp %111 : vector<128x128xf32>
    %cst_46 = arith.constant dense<0.000000e+00> : vector<128xf32>
    %113 = vector.multi_reduction <add>, %112, %cst_46 [1] : vector<128x128xf32> to vector<128xf32>
    %114 = vector.shape_cast %113 : vector<128xf32> to vector<128x1xf32>
    %115 = tpu.reciprocal %114 : vector<128x1xf32> -> vector<128x1xf32>
    %116 = vector.broadcast %115 : vector<128x1xf32> to vector<128x128xf32>
    %117 = arith.mulf %112, %116 : vector<128x128xf32>
    %118 = arith.addf %102, %117 : vector<128x128xf32>
    %cst_47 = arith.constant dense<0.000000e+00> : vector<128x16xf32>
    %119 = tpu.matmul %117, %106, %cst_47 {dimension_numbers = #tpu.dot_dimension_numbers<[1], [0], [0], [1], [0, 0, 1, 1], [], []>} : vector<128x128xf32>, vector<128x16xf32>, vector<128x16xf32> -> vector<128x16xf32>
    %120 = vector.extract_strided_slice %12 {offsets = [0, 96], sizes = [128, 16], strides = [1, 1]} : vector<128x128xf32> to vector<128x16xf32>
    %121 = vector.extract_strided_slice %17 {offsets = [0, 96], sizes = [128, 16], strides = [1, 1]} : vector<128x128xf32> to vector<128x16xf32>
    %122 = vector.extract_strided_slice %22 {offsets = [0, 96], sizes = [128, 16], strides = [1, 1]} : vector<128x128xf32> to vector<128x16xf32>
    "tpu.trace_start"() <{level = 10 : i32, message = "ld,sd->ls"}> : () -> ()
    %cst_48 = arith.constant dense<0.000000e+00> : vector<128x128xf32>
    %123 = tpu.matmul %120, %121, %cst_48 {dimension_numbers = #tpu.dot_dimension_numbers<[1], [1], [0], [0], [0, 0, 1, 0], [], []>} : vector<128x16xf32>, vector<128x16xf32>, vector<128x128xf32> -> vector<128x128xf32>
    "tpu.trace_stop"() : () -> ()
    %cst_49 = arith.constant dense<0xFF800000> : vector<128xf32>
    %124 = vector.multi_reduction <maximumf>, %123, %cst_49 [1] : vector<128x128xf32> to vector<128xf32>
    %125 = vector.shape_cast %124 : vector<128xf32> to vector<128x1xf32>
    %126 = vector.broadcast %125 : vector<128x1xf32> to vector<128x128xf32>
    %127 = arith.subf %123, %126 : vector<128x128xf32>
    %128 = math.exp %127 : vector<128x128xf32>
    %cst_50 = arith.constant dense<0.000000e+00> : vector<128xf32>
    %129 = vector.multi_reduction <add>, %128, %cst_50 [1] : vector<128x128xf32> to vector<128xf32>
    %130 = vector.shape_cast %129 : vector<128xf32> to vector<128x1xf32>
    %131 = tpu.reciprocal %130 : vector<128x1xf32> -> vector<128x1xf32>
    %132 = vector.broadcast %131 : vector<128x1xf32> to vector<128x128xf32>
    %133 = arith.mulf %128, %132 : vector<128x128xf32>
    %134 = arith.addf %118, %133 : vector<128x128xf32>
    %cst_51 = arith.constant dense<0.000000e+00> : vector<128x16xf32>
    %135 = tpu.matmul %133, %122, %cst_51 {dimension_numbers = #tpu.dot_dimension_numbers<[1], [0], [0], [1], [0, 0, 1, 1], [], []>} : vector<128x128xf32>, vector<128x16xf32>, vector<128x16xf32> -> vector<128x16xf32>
    %136 = vector.extract_strided_slice %12 {offsets = [0, 112], sizes = [128, 16], strides = [1, 1]} : vector<128x128xf32> to vector<128x16xf32>
    %137 = vector.extract_strided_slice %17 {offsets = [0, 112], sizes = [128, 16], strides = [1, 1]} : vector<128x128xf32> to vector<128x16xf32>
    %138 = vector.extract_strided_slice %22 {offsets = [0, 112], sizes = [128, 16], strides = [1, 1]} : vector<128x128xf32> to vector<128x16xf32>
    "tpu.trace_start"() <{level = 10 : i32, message = "ld,sd->ls"}> : () -> ()
    %cst_52 = arith.constant dense<0.000000e+00> : vector<128x128xf32>
    %139 = tpu.matmul %136, %137, %cst_52 {dimension_numbers = #tpu.dot_dimension_numbers<[1], [1], [0], [0], [0, 0, 1, 0], [], []>} : vector<128x16xf32>, vector<128x16xf32>, vector<128x128xf32> -> vector<128x128xf32>
    "tpu.trace_stop"() : () -> ()
    %cst_53 = arith.constant dense<0xFF800000> : vector<128xf32>
    %140 = vector.multi_reduction <maximumf>, %139, %cst_53 [1] : vector<128x128xf32> to vector<128xf32>
    %141 = vector.shape_cast %140 : vector<128xf32> to vector<128x1xf32>
    %142 = vector.broadcast %141 : vector<128x1xf32> to vector<128x128xf32>
    %143 = arith.subf %139, %142 : vector<128x128xf32>
    %144 = math.exp %143 : vector<128x128xf32>
    %cst_54 = arith.constant dense<0.000000e+00> : vector<128xf32>
    %145 = vector.multi_reduction <add>, %144, %cst_54 [1] : vector<128x128xf32> to vector<128xf32>
    %146 = vector.shape_cast %145 : vector<128xf32> to vector<128x1xf32>
    %147 = tpu.reciprocal %146 : vector<128x1xf32> -> vector<128x1xf32>
    %148 = vector.broadcast %147 : vector<128x1xf32> to vector<128x128xf32>
    %149 = arith.mulf %144, %148 : vector<128x128xf32>
    %150 = arith.addf %134, %149 : vector<128x128xf32>
    %cst_55 = arith.constant dense<0.000000e+00> : vector<128x16xf32>
    %151 = tpu.matmul %149, %138, %cst_55 {dimension_numbers = #tpu.dot_dimension_numbers<[1], [0], [0], [1], [0, 0, 1, 1], [], []>} : vector<128x128xf32>, vector<128x16xf32>, vector<128x16xf32> -> vector<128x16xf32>
    %152 = tpu.concatenate %39, %55, %71, %87, %103, %119, %135, %151 in 1 : vector<128x16xf32>, vector<128x16xf32>, vector<128x16xf32>, vector<128x16xf32>, vector<128x16xf32>, vector<128x16xf32>, vector<128x16xf32>, vector<128x16xf32> -> vector<128x128xf32>
    %c0_56 = arith.constant 0 : index
    %c0_57 = arith.constant 0 : index
    %153 = vector.load %arg10[%c0_56, %c0_57] : memref<128x128xf32, #tpu.memory_space<vmem>>, vector<128x128xf32>
    %cst_58 = arith.constant dense<0.000000e+00> : vector<128x128xf32>
    %154 = tpu.matmul %152, %153, %cst_58 {dimension_numbers = #tpu.dot_dimension_numbers<[1], [0], [0], [1], [0, 0, 1, 1], [], []>} : vector<128x128xf32>, vector<128x128xf32>, vector<128x128xf32> -> vector<128x128xf32>
    %c0_59 = arith.constant 0 : index
    %c0_60 = arith.constant 0 : index
    %155 = vector.load %arg11[%c0_59, %c0_60] : memref<1x128xf32, #tpu.memory_space<vmem>>, vector<1x128xf32>
    %156 = vector.broadcast %155 : vector<1x128xf32> to vector<128x128xf32>
    %157 = arith.addf %154, %156 : vector<128x128xf32>
    %c0_61 = arith.constant 0 : index
    %c0_62 = arith.constant 0 : index
    %c0_63 = arith.constant 0 : index
    %158 = vector.load %arg12[%c0_61, %c0_62, %c0_63] : memref<1x128x128xf32, #tpu.memory_space<vmem>>, vector<1x128x128xf32>
    %159 = vector.shape_cast %158 : vector<1x128x128xf32> to vector<128x128xf32>
    %160 = vector.shape_cast %157 : vector<128x128xf32> to vector<1x128x128xf32>
    tpu.vector_store %arg12[%c0_61, %c0_62, %c0_63], %160 {strides = array<i32>} : memref<1x128x128xf32, #tpu.memory_space<vmem>>, vector<1x128x128xf32>,
    %cst_64 = arith.constant 1.250000e-01 : f32
    %161 = vector.broadcast %cst_64 : f32 to vector<128x128xf32>
    %162 = arith.mulf %150, %161 : vector<128x128xf32>
    %c0_65 = arith.constant 0 : index
    %c0_66 = arith.constant 0 : index
    %c0_67 = arith.constant 0 : index
    %163 = vector.load %arg13[%c0_65, %c0_66, %c0_67] : memref<1x128x128xf32, #tpu.memory_space<vmem>>, vector<1x128x128xf32>
    %164 = vector.shape_cast %163 : vector<1x128x128xf32> to vector<128x128xf32>
    %165 = vector.shape_cast %162 : vector<128x128xf32> to vector<1x128x128xf32>
    tpu.vector_store %arg13[%c0_65, %c0_66, %c0_67], %165 {strides = array<i32>} : memref<1x128x128xf32, #tpu.memory_space<vmem>>, vector<1x128x128xf32>,
    return
  }
  func.func @transform_0(%arg0: i32) -> (i32, i32, i32) {
    %c0_i32 = arith.constant 0 : i32
    %c0_i32_0 = arith.constant 0 : i32
    %c0_i32_1 = arith.constant 0 : i32
    return %arg0, %c0_i32, %c0_i32_0 : i32, i32, i32
  }
  func.func @transform_1(%arg0: i32) -> (i32, i32, i32) {
    %c0_i32 = arith.constant 0 : i32
    %c0_i32_0 = arith.constant 0 : i32
    %c0_i32_1 = arith.constant 0 : i32
    return %arg0, %c0_i32, %c0_i32_0 : i32, i32, i32
  }
  func.func @transform_2(%arg0: i32) -> (i32, i32, i32) {
    %c0_i32 = arith.constant 0 : i32
    %c0_i32_0 = arith.constant 0 : i32
    %c0_i32_1 = arith.constant 0 : i32
    return %arg0, %c0_i32, %c0_i32_0 : i32, i32, i32
  }
  func.func @transform_3(%arg0: i32) -> (i32, i32) {
    %c0_i32 = arith.constant 0 : i32
    %c0_i32_0 = arith.constant 0 : i32
    %c0_i32_1 = arith.constant 0 : i32
    return %c0_i32, %c0_i32_0 : i32, i32
  }
  func.func @transform_4(%arg0: i32) -> (i32, i32) {
    %c0_i32 = arith.constant 0 : i32
    %c0_i32_0 = arith.constant 0 : i32
    %c0_i32_1 = arith.constant 0 : i32
    return %c0_i32, %c0_i32_0 : i32, i32
  }
  func.func @transform_5(%arg0: i32) -> (i32, i32) {
    %c0_i32 = arith.constant 0 : i32
    %c0_i32_0 = arith.constant 0 : i32
    %c0_i32_1 = arith.constant 0 : i32
    return %c0_i32, %c0_i32_0 : i32, i32
  }
  func.func @transform_6(%arg0: i32) -> (i32, i32) {
    %c0_i32 = arith.constant 0 : i32
    %c0_i32_0 = arith.constant 0 : i32
    %c0_i32_1 = arith.constant 0 : i32
    return %c0_i32, %c0_i32_0 : i32, i32
  }
  func.func @transform_7(%arg0: i32) -> (i32, i32) {
    %c0_i32 = arith.constant 0 : i32
    %c0_i32_0 = arith.constant 0 : i32
    %c0_i32_1 = arith.constant 0 : i32
    return %c0_i32, %c0_i32_0 : i32, i32
  }
  func.func @transform_8(%arg0: i32) -> (i32, i32) {
    %c0_i32 = arith.constant 0 : i32
    %c0_i32_0 = arith.constant 0 : i32
    %c0_i32_1 = arith.constant 0 : i32
    return %c0_i32, %c0_i32_0 : i32, i32
  }
  func.func @transform_9(%arg0: i32) -> (i32, i32) {
    %c0_i32 = arith.constant 0 : i32
    %c0_i32_0 = arith.constant 0 : i32
    %c0_i32_1 = arith.constant 0 : i32
    return %c0_i32, %c0_i32_0 : i32, i32
  }
  func.func @transform_10(%arg0: i32) -> (i32, i32) {
    %c0_i32 = arith.constant 0 : i32
    %c0_i32_0 = arith.constant 0 : i32
    %c0_i32_1 = arith.constant 0 : i32
    return %c0_i32, %c0_i32_0 : i32, i32
  }
  func.func @transform_11(%arg0: i32) -> (i32, i32, i32) {
    %c0_i32 = arith.constant 0 : i32
    %c0_i32_0 = arith.constant 0 : i32
    %c0_i32_1 = arith.constant 0 : i32
    return %arg0, %c0_i32, %c0_i32_0 : i32, i32, i32
  }
  func.func @transform_12(%arg0: i32) -> (i32, i32, i32) {
    %c0_i32 = arith.constant 0 : i32
    %c0_i32_0 = arith.constant 0 : i32
    %c0_i32_1 = arith.constant 0 : i32
    return %arg0, %c0_i32, %c0_i32_0 : i32, i32, i32
  }
}

</mosaic_0001>

<llo_original>
// kernel: multihead_attention_with_regularization.1
$region0: #{multihead_attention_with_regularization.1}
  #allocation0 [shape = 'u32[]', space=smem, size = 0x4, offset = 0x4, fixed_abs, tag = 'smem constant byte address 0x4 - core index']
  #allocation1 [shape = 'u32[72,128]{1,0:T(1,128)}', space=vmem, size = 0x9000, scoped, tag = 'internal scratch']
  %s0 = inlined_call_operand.vmem [shape: f32[2,128,128], index: 0, kind: input, shape index: {}]
  %s1 = inlined_call_operand.vmem [shape: f32[2,128,128], index: 1, kind: input, shape index: {}]
  %s2 = inlined_call_operand.vmem [shape: f32[2,128,128], index: 2, kind: input, shape index: {}]
  %s3 = inlined_call_operand.vmem [shape: f32[128,128], index: 3, kind: input, shape index: {}]
  %s4 = inlined_call_operand.vmem [shape: f32[1,128], index: 4, kind: input, shape index: {}]
  %s5 = inlined_call_operand.vmem [shape: f32[128,128], index: 5, kind: input, shape index: {}]
  %s6 = inlined_call_operand.vmem [shape: f32[1,128], index: 6, kind: input, shape index: {}]
  %s7 = inlined_call_operand.vmem [shape: f32[128,128], index: 7, kind: input, shape index: {}]
  %s8 = inlined_call_operand.vmem [shape: f32[1,128], index: 8, kind: input, shape index: {}]
  %s9 = inlined_call_operand.vmem [shape: f32[128,128], index: 9, kind: input, shape index: {}]
  %s10 = inlined_call_operand.vmem [shape: f32[1,128], index: 10, kind: input, shape index: {}]
  %s11 = inlined_call_operand.vmem [shape: f32[2,128,128], index: 11, kind: output, shape index: {0}]
  %s12 = inlined_call_operand.hbm [shape: f32[2,128,128], index: 12, kind: output, shape index: {1}]
  %13 = xla_tuple %s11, %s12
  %s14 = sld [smem:[#allocation0]]
  $region85: #{multihead_attention_with_regularization.1} parent=0
    _
  %s16 = ssub.s32 1, %s14
  %s17 = scalar_select 0, %s16, %s14
  $region1: #{multihead_attention_with_regularization.1} parent=0
    #allocation2 [shape = 'u8[131072]{0}', space=vmem, size = 0x20000, scoped, tag = 'output window, operand 1']
    #allocation3 [shape = 's32[2]{0}', space=sflag, size = 0x8, scoped, tag = 'scoped memory for multihead_attention_with_regularization.1']
    %18 = vsyncpa [#allocation3], 0
    %s19 = scalar_lea.sflag [#allocation3], 1
    %20 = vsyncpa %s19, 0
    loop: start=0, step=1, limit=4
    $region2: #{multihead_attention_with_regularization.1} parent=1 // loop_pre_header
      _
    $region3: #{multihead_attention_with_regularization.1} parent=1 // loop_header
      %s22 = sphi 0, %s26
      %p23 = scmp.ge.s32.totalorder %s22, 4
      %s32 = sphi 0, %s34
      %s35 = sphi 0, %s32
      %s36 = sphi 0, %s35
      %s52 = sphi 0, %s36
      %s58 = sphi 0, %s60
      %s61 = sphi 0, %s58
      %s62 = sphi 0, %s61
      %s78 = sphi 0, %s62
      %s84 = sphi 0, %s86
      %s87 = sphi 0, %s84
      %s88 = sphi 0, %s87
      %s104 = sphi 0, %s88
      %s108 = sphi 0, %s108
      %s110 = sphi 0, %s108
      %s111 = sphi 0, %s110
      %s125 = sphi 0, %s111
      %s129 = sphi 0, %s129
      %s131 = sphi 0, %s129
      %s132 = sphi 0, %s131
      %s146 = sphi 0, %s132
      %s150 = sphi 0, %s150
      %s152 = sphi 0, %s150
      %s153 = sphi 0, %s152
      %s167 = sphi 0, %s153
      %s171 = sphi 0, %s171
      %s173 = sphi 0, %s171
      %s174 = sphi 0, %s173
      %s188 = sphi 0, %s174
      %s192 = sphi 0, %s192
      %s194 = sphi 0, %s192
      %s195 = sphi 0, %s194
      %s209 = sphi 0, %s195
      %s213 = sphi 0, %s213
      %s215 = sphi 0, %s213
      %s216 = sphi 0, %s215
      %s230 = sphi 0, %s216
      %s234 = sphi 0, %s234
      %s236 = sphi 0, %s234
      %s237 = sphi 0, %s236
      %s251 = sphi 0, %s237
      %s255 = sphi 0, %s255
      %s257 = sphi 0, %s255
      %s258 = sphi 0, %s257
      %s272 = sphi 0, %s258
      %s278 = sphi 0, %s280
      %s281 = sphi 0, %s278
      %s282 = sphi 0, %s281
      %s298 = sphi 0, %s282
      %s304 = sphi 0, %s306
      %s307 = sphi 0, %s304
      %s308 = sphi 0, %s307
      %s324 = sphi 0, %s308
    $region4: #{multihead_attention_with_regularization.1} parent=1 // loop_header_branch
      %25 = sbr.rel (%p23) target = $region8
    $region5: #{multihead_attention_with_regularization.1} parent=1 // loop_body
      %s27 = ssub.s32 %s22, 1
      %s28 = ssub.s32 %s22, 2
      %s29 = sadd.s32 %s22, 1
      %s30 = ssub.s32 %s22, %s29
      %p31 = scmp.eq.s32.totalorder %s30, 0
      %s33 = sadd.s32 %s32, 1
      %s34 = scalar_select %p31, %s32, %s33
      %p37 = pneg %p31
      %p38 = scmp.eq.s32.totalorder %s22, 1
      %p39 = por %p37, %p38
      %p40 = scmp.ne.s32.totalorder %s32, %s35
      %p41 = scmp.eq.s32.totalorder %s22, 0
      %p42 = por %p40, %p41
      %p43 = scmp.ne.s32.totalorder %s32, %s35
      %p44 = scmp.eq.s32.totalorder %s27, 1
      %p45 = por %p43, %p44
      %p46 = scmp.ne.s32.totalorder %s35, %s36
      %p47 = scmp.eq.s32.totalorder %s27, 0
      %p48 = por %p46, %p47
      %p49 = scmp.ne.s32.totalorder %s35, %s36
      %p50 = scmp.eq.s32.totalorder %s28, 1
      %p51 = por %p49, %p50
      %p53 = scmp.ne.s32.totalorder %s36, %s52
      %p54 = scmp.eq.s32.totalorder %s28, 0
      %p55 = por %p53, %p54
      %s56 = ssub.s32 %s22, %s29
      %p57 = scmp.eq.s32.totalorder %s56, 0
      %s59 = sadd.s32 %s58, 1
      %s60 = scalar_select %p57, %s58, %s59
      %p63 = pneg %p57
      %p64 = scmp.eq.s32.totalorder %s22, 1
      %p65 = por %p63, %p64
      %p66 = scmp.ne.s32.totalorder %s58, %s61
      %p67 = scmp.eq.s32.totalorder %s22, 0
      %p68 = por %p66, %p67
      %p69 = scmp.ne.s32.totalorder %s58, %s61
      %p70 = scmp.eq.s32.totalorder %s27, 1
      %p71 = por %p69, %p70
      %p72 = scmp.ne.s32.totalorder %s61, %s62
      %p73 = scmp.eq.s32.totalorder %s27, 0
      %p74 = por %p72, %p73
      %p75 = scmp.ne.s32.totalorder %s61, %s62
      %p76 = scmp.eq.s32.totalorder %s28, 1
      %p77 = por %p75, %p76
      %p79 = scmp.ne.s32.totalorder %s62, %s78
      %p80 = scmp.eq.s32.totalorder %s28, 0
      %p81 = por %p79, %p80
      %s82 = ssub.s32 %s22, %s29
      %p83 = scmp.eq.s32.totalorder %s82, 0
      %s85 = sadd.s32 %s84, 1
      %s86 = scalar_select %p83, %s84, %s85
      %p89 = pneg %p83
      %p90 = scmp.eq.s32.totalorder %s22, 1
      %p91 = por %p89, %p90
      %p92 = scmp.ne.s32.totalorder %s84, %s87
      %p93 = scmp.eq.s32.totalorder %s22, 0
      %p94 = por %p92, %p93
      %p95 = scmp.ne.s32.totalorder %s84, %s87
      %p96 = scmp.eq.s32.totalorder %s27, 1
      %p97 = por %p95, %p96
      %p98 = scmp.ne.s32.totalorder %s87, %s88
      %p99 = scmp.eq.s32.totalorder %s27, 0
      %p100 = por %p98, %p99
      %p101 = scmp.ne.s32.totalorder %s87, %s88
      %p102 = scmp.eq.s32.totalorder %s28, 1
      %p103 = por %p101, %p102
      %p105 = scmp.ne.s32.totalorder %s88, %s104
      %p106 = scmp.eq.s32.totalorder %s28, 0
      %p107 = por %p105, %p106
      %s109 = sadd.s32 %s108, 1
      %p112 = scmp.eq.s32.totalorder %s22, 1
      %p113 = scmp.ne.s32.totalorder %s108, %s110
      %p114 = scmp.eq.s32.totalorder %s22, 0
      %p115 = por %p113, %p114
      %p116 = scmp.ne.s32.totalorder %s108, %s110
      %p117 = scmp.eq.s32.totalorder %s27, 1
      %p118 = por %p116, %p117
      %p119 = scmp.ne.s32.totalorder %s110, %s111
      %p120 = scmp.eq.s32.totalorder %s27, 0
      %p121 = por %p119, %p120
      %p122 = scmp.ne.s32.totalorder %s110, %s111
      %p123 = scmp.eq.s32.totalorder %s28, 1
      %p124 = por %p122, %p123
      %p126 = scmp.ne.s32.totalorder %s111, %s125
      %p127 = scmp.eq.s32.totalorder %s28, 0
      %p128 = por %p126, %p127
      %s130 = sadd.s32 %s129, 1
      %p133 = scmp.eq.s32.totalorder %s22, 1
      %p134 = scmp.ne.s32.totalorder %s129, %s131
      %p135 = scmp.eq.s32.totalorder %s22, 0
      %p136 = por %p134, %p135
      %p137 = scmp.ne.s32.totalorder %s129, %s131
      %p138 = scmp.eq.s32.totalorder %s27, 1
      %p139 = por %p137, %p138
      %p140 = scmp.ne.s32.totalorder %s131, %s132
      %p141 = scmp.eq.s32.totalorder %s27, 0
      %p142 = por %p140, %p141
      %p143 = scmp.ne.s32.totalorder %s131, %s132
      %p144 = scmp.eq.s32.totalorder %s28, 1
      %p145 = por %p143, %p144
      %p147 = scmp.ne.s32.totalorder %s132, %s146
      %p148 = scmp.eq.s32.totalorder %s28, 0
      %p149 = por %p147, %p148
      %s151 = sadd.s32 %s150, 1
      %p154 = scmp.eq.s32.totalorder %s22, 1
      %p155 = scmp.ne.s32.totalorder %s150, %s152
      %p156 = scmp.eq.s32.totalorder %s22, 0
      %p157 = por %p155, %p156
      %p158 = scmp.ne.s32.totalorder %s150, %s152
      %p159 = scmp.eq.s32.totalorder %s27, 1
      %p160 = por %p158, %p159
      %p161 = scmp.ne.s32.totalorder %s152, %s153
      %p162 = scmp.eq.s32.totalorder %s27, 0
      %p163 = por %p161, %p162
      %p164 = scmp.ne.s32.totalorder %s152, %s153
      %p165 = scmp.eq.s32.totalorder %s28, 1
      %p166 = por %p164, %p165
      %p168 = scmp.ne.s32.totalorder %s153, %s167
      %p169 = scmp.eq.s32.totalorder %s28, 0
      %p170 = por %p168, %p169
      %s172 = sadd.s32 %s171, 1
      %p175 = scmp.eq.s32.totalorder %s22, 1
      %p176 = scmp.ne.s32.totalorder %s171, %s173
      %p177 = scmp.eq.s32.totalorder %s22, 0
      %p178 = por %p176, %p177
      %p179 = scmp.ne.s32.totalorder %s171, %s173
      %p180 = scmp.eq.s32.totalorder %s27, 1
      %p181 = por %p179, %p180
      %p182 = scmp.ne.s32.totalorder %s173, %s174
      %p183 = scmp.eq.s32.totalorder %s27, 0
      %p184 = por %p182, %p183
      %p185 = scmp.ne.s32.totalorder %s173, %s174
      %p186 = scmp.eq.s32.totalorder %s28, 1
      %p187 = por %p185, %p186
      %p189 = scmp.ne.s32.totalorder %s174, %s188
      %p190 = scmp.eq.s32.totalorder %s28, 0
      %p191 = por %p189, %p190
      %s193 = sadd.s32 %s192, 1
      %p196 = scmp.eq.s32.totalorder %s22, 1
      %p197 = scmp.ne.s32.totalorder %s192, %s194
      %p198 = scmp.eq.s32.totalorder %s22, 0
      %p199 = por %p197, %p198
      %p200 = scmp.ne.s32.totalorder %s192, %s194
      %p201 = scmp.eq.s32.totalorder %s27, 1
      %p202 = por %p200, %p201
      %p203 = scmp.ne.s32.totalorder %s194, %s195
      %p204 = scmp.eq.s32.totalorder %s27, 0
      %p205 = por %p203, %p204
      %p206 = scmp.ne.s32.totalorder %s194, %s195
      %p207 = scmp.eq.s32.totalorder %s28, 1
      %p208 = por %p206, %p207
      %p210 = scmp.ne.s32.totalorder %s195, %s209
      %p211 = scmp.eq.s32.totalorder %s28, 0
      %p212 = por %p210, %p211
      %s214 = sadd.s32 %s213, 1
      %p217 = scmp.eq.s32.totalorder %s22, 1
      %p218 = scmp.ne.s32.totalorder %s213, %s215
      %p219 = scmp.eq.s32.totalorder %s22, 0
      %p220 = por %p218, %p219
      %p221 = scmp.ne.s32.totalorder %s213, %s215
      %p222 = scmp.eq.s32.totalorder %s27, 1
      %p223 = por %p221, %p222
      %p224 = scmp.ne.s32.totalorder %s215, %s216
      %p225 = scmp.eq.s32.totalorder %s27, 0
      %p226 = por %p224, %p225
      %p227 = scmp.ne.s32.totalorder %s215, %s216
      %p228 = scmp.eq.s32.totalorder %s28, 1
      %p229 = por %p227, %p228
      %p231 = scmp.ne.s32.totalorder %s216, %s230
      %p232 = scmp.eq.s32.totalorder %s28, 0
      %p233 = por %p231, %p232
      %s235 = sadd.s32 %s234, 1
      %p238 = scmp.eq.s32.totalorder %s22, 1
      %p239 = scmp.ne.s32.totalorder %s234, %s236
      %p240 = scmp.eq.s32.totalorder %s22, 0
      %p241 = por %p239, %p240
      %p242 = scmp.ne.s32.totalorder %s234, %s236
      %p243 = scmp.eq.s32.totalorder %s27, 1
      %p244 = por %p242, %p243
      %p245 = scmp.ne.s32.totalorder %s236, %s237
      %p246 = scmp.eq.s32.totalorder %s27, 0
      %p247 = por %p245, %p246
      %p248 = scmp.ne.s32.totalorder %s236, %s237
      %p249 = scmp.eq.s32.totalorder %s28, 1
      %p250 = por %p248, %p249
      %p252 = scmp.ne.s32.totalorder %s237, %s251
      %p253 = scmp.eq.s32.totalorder %s28, 0
      %p254 = por %p252, %p253
      %s256 = sadd.s32 %s255, 1
      %p259 = scmp.eq.s32.totalorder %s22, 1
      %p260 = scmp.ne.s32.totalorder %s255, %s257
      %p261 = scmp.eq.s32.totalorder %s22, 0
      %p262 = por %p260, %p261
      %p263 = scmp.ne.s32.totalorder %s255, %s257
      %p264 = scmp.eq.s32.totalorder %s27, 1
      %p265 = por %p263, %p264
      %p266 = scmp.ne.s32.totalorder %s257, %s258
      %p267 = scmp.eq.s32.totalorder %s27, 0
      %p268 = por %p266, %p267
      %p269 = scmp.ne.s32.totalorder %s257, %s258
      %p270 = scmp.eq.s32.totalorder %s28, 1
      %p271 = por %p269, %p270
      %p273 = scmp.ne.s32.totalorder %s258, %s272
      %p274 = scmp.eq.s32.totalorder %s28, 0
      %p275 = por %p273, %p274
      %s276 = ssub.s32 %s22, %s29
      %p277 = scmp.eq.s32.totalorder %s276, 0
      %s279 = sadd.s32 %s278, 1
      %s280 = scalar_select %p277, %s278, %s279
      %p283 = pneg %p277
      %p284 = scmp.eq.s32.totalorder %s22, 1
      %p285 = por %p283, %p284
      %p286 = scmp.ne.s32.totalorder %s278, %s281
      %p287 = scmp.eq.s32.totalorder %s22, 0
      %p288 = por %p286, %p287
      %p289 = scmp.ne.s32.totalorder %s278, %s281
      %p290 = scmp.eq.s32.totalorder %s27, 1
      %p291 = por %p289, %p290
      %p292 = scmp.ne.s32.totalorder %s281, %s282
      %p293 = scmp.eq.s32.totalorder %s27, 0
      %p294 = por %p292, %p293
      %p295 = scmp.ne.s32.totalorder %s281, %s282
      %p296 = scmp.eq.s32.totalorder %s28, 1
      %p297 = por %p295, %p296
      %p299 = scmp.ne.s32.totalorder %s282, %s298
      %p300 = scmp.eq.s32.totalorder %s28, 0
      %p301 = por %p299, %p300
      %s302 = ssub.s32 %s22, %s29
      %p303 = scmp.eq.s32.totalorder %s302, 0
      %s305 = sadd.s32 %s304, 1
      %s306 = scalar_select %p303, %s304, %s305
      %p309 = pneg %p303
      %p310 = scmp.eq.s32.totalorder %s22, 1
      %p311 = por %p309, %p310
      %p312 = scmp.ne.s32.totalorder %s304, %s307
      %p313 = scmp.eq.s32.totalorder %s22, 0
      %p314 = por %p312, %p313
      %p315 = scmp.ne.s32.totalorder %s304, %s307
      %p316 = scmp.eq.s32.totalorder %s27, 1
      %p317 = por %p315, %p316
      %p318 = scmp.ne.s32.totalorder %s307, %s308
      %p319 = scmp.eq.s32.totalorder %s27, 0
      %p320 = por %p318, %p319
      %p321 = scmp.ne.s32.totalorder %s307, %s308
      %p322 = scmp.eq.s32.totalorder %s28, 1
      %p323 = por %p321, %p322
      %p325 = scmp.ne.s32.totalorder %s308, %s324
      %p326 = scmp.eq.s32.totalorder %s28, 0
      %p327 = por %p325, %p326
      %p328 = scmp.le.s32.totalorder 1, %s22
      %p329 = scmp.lt.s32.totalorder %s22, 3
      %p330 = pnand %p328, %p329
      %p331 = pneg %p330
      // Predicated region
      $region9: #{multihead_attention_with_regularization.1} parent=5 // pred_check
        _
      $region10: #{multihead_attention_with_regularization.1} parent=5 // pred_check_branch
        %333 = sbr.rel (%p330) target = $region12
      $region11: #{multihead_attention_with_regularization.1} parent=5 // pred_region
        %s334 = ssub.s32 %s22, 1
        // Predicated region
        $region13: #{multihead_attention_with_regularization.1} parent=11 // pred_check
          %p335 = pneg %p121
        $region14: #{multihead_attention_with_regularization.1} parent=11 // pred_check_branch
          %337 = sbr.rel (%p335) target = $region16
        $region15: #{multihead_attention_with_regularization.1} parent=11 // pred_region
          _
        $region16: #{multihead_attention_with_regularization.1} parent=11 // pred_fallthru
          _
        // Predicated region
        $region17: #{multihead_attention_with_regularization.1} parent=11 // pred_check
          %p338 = pneg %p142
        $region18: #{multihead_attention_with_regularization.1} parent=11 // pred_check_branch
          %340 = sbr.rel (%p338) target = $region20
        $region19: #{multihead_attention_with_regularization.1} parent=11 // pred_region
          _
        $region20: #{multihead_attention_with_regularization.1} parent=11 // pred_fallthru
          _
        // Predicated region
        $region21: #{multihead_attention_with_regularization.1} parent=11 // pred_check
          %p341 = pneg %p163
        $region22: #{multihead_attention_with_regularization.1} parent=11 // pred_check_branch
          %343 = sbr.rel (%p341) target = $region24
        $region23: #{multihead_attention_with_regularization.1} parent=11 // pred_region
          _
        $region24: #{multihead_attention_with_regularization.1} parent=11 // pred_fallthru
          _
        // Predicated region
        $region25: #{multihead_attention_with_regularization.1} parent=11 // pred_check
          %p344 = pneg %p184
        $region26: #{multihead_attention_with_regularization.1} parent=11 // pred_check_branch
          %346 = sbr.rel (%p344) target = $region28
        $region27: #{multihead_attention_with_regularization.1} parent=11 // pred_region
          _
        $region28: #{multihead_attention_with_regularization.1} parent=11 // pred_fallthru
          _
        // Predicated region
        $region29: #{multihead_attention_with_regularization.1} parent=11 // pred_check
          %p347 = pneg %p205
        $region30: #{multihead_attention_with_regularization.1} parent=11 // pred_check_branch
          %349 = sbr.rel (%p347) target = $region32
        $region31: #{multihead_attention_with_regularization.1} parent=11 // pred_region
          _
        $region32: #{multihead_attention_with_regularization.1} parent=11 // pred_fallthru
          _
        // Predicated region
        $region33: #{multihead_attention_with_regularization.1} parent=11 // pred_check
          %p350 = pneg %p226
        $region34: #{multihead_attention_with_regularization.1} parent=11 // pred_check_branch
          %352 = sbr.rel (%p350) target = $region36
        $region35: #{multihead_attention_with_regularization.1} parent=11 // pred_region
          _
        $region36: #{multihead_attention_with_regularization.1} parent=11 // pred_fallthru
          _
        // Predicated region
        $region37: #{multihead_attention_with_regularization.1} parent=11 // pred_check
          %p353 = pneg %p247
        $region38: #{multihead_attention_with_regularization.1} parent=11 // pred_check_branch
          %355 = sbr.rel (%p353) target = $region40
        $region39: #{multihead_attention_with_regularization.1} parent=11 // pred_region
          _
        $region40: #{multihead_attention_with_regularization.1} parent=11 // pred_fallthru
          _
        // Predicated region
        $region41: #{multihead_attention_with_regularization.1} parent=11 // pred_check
          %p356 = pneg %p268
        $region42: #{multihead_attention_with_regularization.1} parent=11 // pred_check_branch
          %358 = sbr.rel (%p356) target = $region44
        $region43: #{multihead_attention_with_regularization.1} parent=11 // pred_region
          _
        $region44: #{multihead_attention_with_regularization.1} parent=11 // pred_fallthru
          _
      $region12: #{multihead_attention_with_regularization.1} parent=5 // pred_fallthru
        _
      %p359 = scmp.lt.s32.totalorder %s22, 2
      // Predicated region
      $region45: #{multihead_attention_with_regularization.1} parent=5 // pred_check
        %p360 = pneg %p359
      $region46: #{multihead_attention_with_regularization.1} parent=5 // pred_check_branch
        %362 = sbr.rel (%p360) target = $region48
      $region47: #{multihead_attention_with_regularization.1} parent=5 // pred_region
        // Predicated region
        $region49: #{multihead_attention_with_regularization.1} parent=47 // pred_check
          %p363 = pneg %p42
        $region50: #{multihead_attention_with_regularization.1} parent=47 // pred_check_branch
          %365 = sbr.rel (%p363) target = $region52
        $region51: #{multihead_attention_with_regularization.1} parent=47 // pred_region
          %p366 = scmp.lt.s32.totalorder %s22, 1
          %s367 = scalar_select %p366, %s22, 1
          %s368 = smul.addr %s367, 16
          %s369 = smul.addr %s368, 8
          %s370 = scalar_lea.vmem %s0, %s369
        $region52: #{multihead_attention_with_regularization.1} parent=47 // pred_fallthru
          _
        // Predicated region
        $region53: #{multihead_attention_with_regularization.1} parent=47 // pred_check
          %p371 = pneg %p68
        $region54: #{multihead_attention_with_regularization.1} parent=47 // pred_check_branch
          %373 = sbr.rel (%p371) target = $region56
        $region55: #{multihead_attention_with_regularization.1} parent=47 // pred_region
          %p374 = scmp.lt.s32.totalorder %s22, 1
          %s375 = scalar_select %p374, %s22, 1
          %s376 = smul.addr %s375, 16
          %s377 = smul.addr %s376, 8
          %s378 = scalar_lea.vmem %s1, %s377
        $region56: #{multihead_attention_with_regularization.1} parent=47 // pred_fallthru
          _
        // Predicated region
        $region57: #{multihead_attention_with_regularization.1} parent=47 // pred_check
          %p379 = pneg %p94
        $region58: #{multihead_attention_with_regularization.1} parent=47 // pred_check_branch
          %381 = sbr.rel (%p379) target = $region60
        $region59: #{multihead_attention_with_regularization.1} parent=47 // pred_region
          %p382 = scmp.lt.s32.totalorder %s22, 1
          %s383 = scalar_select %p382, %s22, 1
          %s384 = smul.addr %s383, 16
          %s385 = smul.addr %s384, 8
          %s386 = scalar_lea.vmem %s2, %s385
        $region60: #{multihead_attention_with_regularization.1} parent=47 // pred_fallthru
          _
      $region48: #{multihead_attention_with_regularization.1} parent=5 // pred_fallthru
        _
      %p387 = scmp.le.s32.totalorder 1, %s22
      %p388 = scmp.lt.s32.totalorder %s22, 3
      %p389 = pnand %p387, %p388
      %p390 = pneg %p389
      // Predicated region
      $region61: #{multihead_attention_with_regularization.1} parent=5 // pred_check
        _
      $region62: #{multihead_attention_with_regularization.1} parent=5 // pred_check_branch
        %392 = sbr.rel (%p389) target = $region64
      $region63: #{multihead_attention_with_regularization.1} parent=5 // pred_region
        %s393 = ssub.s32 %s22, 1
        %p394 = scmp.lt.s32.totalorder %s27, 1
        %s395 = scalar_select %p394, %s27, 1
        %s396 = smul.addr %s395, 16
        %s397 = smul.addr %s396, 8
        %s398 = scalar_lea.vmem %s0, %s397
        %p399 = pneg %p48
        %p400 = pneg %p45
        %p401 = scmp.lt.s32.totalorder %s27, 1
        %s402 = scalar_select %p401, %s27, 1
        %s403 = smul.addr %s402, 16
        %s404 = smul.addr %s403, 8
        %s405 = scalar_lea.vmem %s1, %s404
        %p406 = pneg %p74
        %p407 = pneg %p71
        %p408 = scmp.lt.s32.totalorder %s27, 1
        %s409 = scalar_select %p408, %s27, 1
        %s410 = smul.addr %s409, 16
        %s411 = smul.addr %s410, 8
        %s412 = scalar_lea.vmem %s2, %s411
        %p413 = pneg %p100
        %p414 = pneg %p97
        %p415 = pneg %p121
        %p416 = pneg %p118
        %p417 = pneg %p142
        %p418 = pneg %p139
        %p419 = pneg %p163
        %p420 = pneg %p160
        %p421 = pneg %p184
        %p422 = pneg %p181
        %p423 = pneg %p205
        %p424 = pneg %p202
        %p425 = pneg %p226
        %p426 = pneg %p223
        %p427 = pneg %p247
        %p428 = pneg %p244
        %p429 = pneg %p268
        %p430 = pneg %p265
        %p431 = pneg %p294
        %p432 = pneg %p291
        %p433 = scmp.lt.s32.totalorder %s27, 1
        %s434 = scalar_select %p433, %s27, 1
        %s435 = smul.addr %s434, 16
        %s436 = smul.addr %s435, 8
        %s437 = scalar_lea.vmem %s11, %s436
        %p438 = pneg %p320
        %p439 = pneg %p317
        %s440 = sand.u32 %s307, 1
        %s441 = scalar_lea.sflag [#allocation3], %s440
        %s442 = sand.u32 %s307, 1
        %s443 = smul.addr %s442, 128
        %s444 = scalar_lea.vmem [#allocation2], %s443
        %p445 = scmp.lt.s32.totalorder %s27, 1
        %s446 = scalar_select %p445, %s27, 1
        %s447 = smul.addr %s446, 16
        %s448 = smul.addr %s447, 8
        %s449 = scalar_lea.vmem %s0, %s448
        %p450 = scmp.lt.s32.totalorder %s27, 1
        %s451 = scalar_select %p450, %s27, 1
        %s452 = smul.addr %s451, 16
        %s453 = smul.addr %s452, 8
        %s454 = scalar_lea.vmem %s1, %s453
        %p455 = scmp.lt.s32.totalorder %s27, 1
        %s456 = scalar_select %p455, %s27, 1
        %s457 = smul.addr %s456, 16
        %s458 = smul.addr %s457, 8
        %s459 = scalar_lea.vmem %s2, %s458
        %p460 = scmp.lt.s32.totalorder %s27, 1
        %s461 = scalar_select %p460, %s27, 1
        %s462 = smul.addr %s461, 16
        %s463 = smul.addr %s462, 8
        %s464 = scalar_lea.vmem %s11, %s463
        %v465 = vld [vmem:[%s449] sm:$0xff]
        %v466 = vld [vmem:[%s449 + $0x8] sm:$0xff]
        %v467 = vld [vmem:[%s449 + $0x10] sm:$0xff]
        %v468 = vld [vmem:[%s449 + $0x18] sm:$0xff]
        %v469 = vld [vmem:[%s449 + $0x20] sm:$0xff]
        %v470 = vld [vmem:[%s449 + $0x28] sm:$0xff]
        %v471 = vld [vmem:[%s449 + $0x30] sm:$0xff]
        %v472 = vld [vmem:[%s449 + $0x38] sm:$0xff]
        %v473 = vld [vmem:[%s449 + $0x40] sm:$0xff]
        %v474 = vld [vmem:[%s449 + $0x48] sm:$0xff]
        %v475 = vld [vmem:[%s449 + $0x50] sm:$0xff]
        %v476 = vld [vmem:[%s449 + $0x58] sm:$0xff]
        %v477 = vld [vmem:[%s449 + $0x60] sm:$0xff]
        %v478 = vld [vmem:[%s449 + $0x68] sm:$0xff]
        %v479 = vld [vmem:[%s449 + $0x70] sm:$0xff]
        %v480 = vld [vmem:[%s449 + $0x78] sm:$0xff]
        %v481 = vld [vmem:[%s454] sm:$0xff]
        %v482 = vld [vmem:[%s454 + $0x8] sm:$0xff]
        %v483 = vld [vmem:[%s454 + $0x10] sm:$0xff]
        %v484 = vld [vmem:[%s454 + $0x18] sm:$0xff]
        %v485 = vld [vmem:[%s454 + $0x20] sm:$0xff]
        %v486 = vld [vmem:[%s454 + $0x28] sm:$0xff]
        %v487 = vld [vmem:[%s454 + $0x30] sm:$0xff]
        %v488 = vld [vmem:[%s454 + $0x38] sm:$0xff]
        %v489 = vld [vmem:[%s454 + $0x40] sm:$0xff]
        %v490 = vld [vmem:[%s454 + $0x48] sm:$0xff]
        %v491 = vld [vmem:[%s454 + $0x50] sm:$0xff]
        %v492 = vld [vmem:[%s454 + $0x58] sm:$0xff]
        %v493 = vld [vmem:[%s454 + $0x60] sm:$0xff]
        %v494 = vld [vmem:[%s454 + $0x68] sm:$0xff]
        %v495 = vld [vmem:[%s454 + $0x70] sm:$0xff]
        %v496 = vld [vmem:[%s454 + $0x78] sm:$0xff]
        %v497 = vld [vmem:[%s459] sm:$0xff]
        %v498 = vld [vmem:[%s459 + $0x8] sm:$0xff]
        %v499 = vld [vmem:[%s459 + $0x10] sm:$0xff]
        %v500 = vld [vmem:[%s459 + $0x18] sm:$0xff]
        %v501 = vld [vmem:[%s459 + $0x20] sm:$0xff]
        %v502 = vld [vmem:[%s459 + $0x28] sm:$0xff]
        %v503 = vld [vmem:[%s459 + $0x30] sm:$0xff]
        %v504 = vld [vmem:[%s459 + $0x38] sm:$0xff]
        %v505 = vld [vmem:[%s459 + $0x40] sm:$0xff]
        %v506 = vld [vmem:[%s459 + $0x48] sm:$0xff]
        %v507 = vld [vmem:[%s459 + $0x50] sm:$0xff]
        %v508 = vld [vmem:[%s459 + $0x58] sm:$0xff]
        %v509 = vld [vmem:[%s459 + $0x60] sm:$0xff]
        %v510 = vld [vmem:[%s459 + $0x68] sm:$0xff]
        %v511 = vld [vmem:[%s459 + $0x70] sm:$0xff]
        %v512 = vld [vmem:[%s459 + $0x78] sm:$0xff]
        %v513 = vld [vmem:[%s3] sm:$0xff]
        %v514 = vld [vmem:[%s3 + $0x8] sm:$0xff]
        %v515 = vld [vmem:[%s3 + $0x10] sm:$0xff]
        %v516 = vld [vmem:[%s3 + $0x18] sm:$0xff]
        %v517 = vld [vmem:[%s3 + $0x20] sm:$0xff]
        %v518 = vld [vmem:[%s3 + $0x28] sm:$0xff]
        %v519 = vld [vmem:[%s3 + $0x30] sm:$0xff]
        %v520 = vld [vmem:[%s3 + $0x38] sm:$0xff]
        %v521 = vld [vmem:[%s3 + $0x40] sm:$0xff]
        %v522 = vld [vmem:[%s3 + $0x48] sm:$0xff]
        %v523 = vld [vmem:[%s3 + $0x50] sm:$0xff]
        %v524 = vld [vmem:[%s3 + $0x58] sm:$0xff]
        %v525 = vld [vmem:[%s3 + $0x60] sm:$0xff]
        %v526 = vld [vmem:[%s3 + $0x68] sm:$0xff]
        %v527 = vld [vmem:[%s3 + $0x70] sm:$0xff]
        %v528 = vld [vmem:[%s3 + $0x78] sm:$0xff]
        %v529 = vld [vmem:[%s4] sm:$0x1]
        %v531 = vperm.slane %v529, 0
        %533 = vmatpush.msra.mxu0 %v528
        %534 = vmatpush.msra.mxu0 %v527
        %535 = vmatpush.msra.mxu0 %v526
        %536 = vmatpush.msra.mxu0 %v525
        %537 = vmatpush.msra.mxu0 %v524
        %538 = vmatpush.msra.mxu0 %v523
        %539 = vmatpush.msra.mxu0 %v522
        %540 = vmatpush.msra.mxu0 %v521
        %541 = vmatpush.msra.mxu0 %v520
        %542 = vmatpush.msra.mxu0 %v519
        %543 = vmatpush.msra.mxu0 %v518
        %544 = vmatpush.msra.mxu0 %v517
        %545 = vmatpush.msra.mxu0 %v516
        %546 = vmatpush.msra.mxu0 %v515
        %547 = vmatpush.msra.mxu0 %v514
        %548 = vmatpush.msra.mxu0 %v513
        %549 = vmatmul.f32.gmra.mxu0 %v465
        %v550 = vpop.f32.mrf.mxu0
        %v551 = vadd.f32 %v531, %v550
        %552 = vmatmul.f32.gmra.mxu0 %v466
        %v553 = vpop.f32.mrf.mxu0
        %v554 = vadd.f32 %v531, %v553
        %555 = vmatmul.f32.gmra.mxu0 %v467
        %v556 = vpop.f32.mrf.mxu0
        %v557 = vadd.f32 %v531, %v556
        %558 = vmatmul.f32.gmra.mxu0 %v468
        %v559 = vpop.f32.mrf.mxu0
        %v560 = vadd.f32 %v531, %v559
        %561 = vmatmul.f32.gmra.mxu0 %v469
        %v562 = vpop.f32.mrf.mxu0
        %v563 = vadd.f32 %v531, %v562
        %564 = vmatmul.f32.gmra.mxu0 %v470
        %v565 = vpop.f32.mrf.mxu0
        %v566 = vadd.f32 %v531, %v565
        %567 = vmatmul.f32.gmra.mxu0 %v471
        %v568 = vpop.f32.mrf.mxu0
        %v569 = vadd.f32 %v531, %v568
        %570 = vmatmul.f32.gmra.mxu0 %v472
        %v571 = vpop.f32.mrf.mxu0
        %v572 = vadd.f32 %v531, %v571
        %573 = vmatmul.f32.gmra.mxu0 %v473
        %v574 = vpop.f32.mrf.mxu0
        %v575 = vadd.f32 %v531, %v574
        %576 = vmatmul.f32.gmra.mxu0 %v474
        %v577 = vpop.f32.mrf.mxu0
        %v578 = vadd.f32 %v531, %v577
        %579 = vmatmul.f32.gmra.mxu0 %v475
        %v580 = vpop.f32.mrf.mxu0
        %v581 = vadd.f32 %v531, %v580
        %582 = vmatmul.f32.gmra.mxu0 %v476
        %v583 = vpop.f32.mrf.mxu0
        %v584 = vadd.f32 %v531, %v583
        %585 = vmatmul.f32.gmra.mxu0 %v477
        %v586 = vpop.f32.mrf.mxu0
        %v587 = vadd.f32 %v531, %v586
        %588 = vmatmul.f32.gmra.mxu0 %v478
        %v589 = vpop.f32.mrf.mxu0
        %v590 = vadd.f32 %v531, %v589
        %591 = vmatmul.f32.gmra.mxu0 %v479
        %v592 = vpop.f32.mrf.mxu0
        %v593 = vadd.f32 %v531, %v592
        %594 = vmatmul.f32.gmra.mxu0 %v480
        %v595 = vpop.f32.mrf.mxu0
        %v596 = vadd.f32 %v531, %v595
        %597 = vdwg.mxu0
        %v598 = vmul.f32 %v551, 0.25
        %v599 = vmul.f32 %v554, 0.25
        %v600 = vmul.f32 %v557, 0.25
        %v601 = vmul.f32 %v560, 0.25
        %v602 = vmul.f32 %v563, 0.25
        %v603 = vmul.f32 %v566, 0.25
        %v604 = vmul.f32 %v569, 0.25
        %v605 = vmul.f32 %v572, 0.25
        %v606 = vmul.f32 %v575, 0.25
        %v607 = vmul.f32 %v578, 0.25
        %v608 = vmul.f32 %v581, 0.25
        %v609 = vmul.f32 %v584, 0.25
        %v610 = vmul.f32 %v587, 0.25
        %v611 = vmul.f32 %v590, 0.25
        %v612 = vmul.f32 %v593, 0.25
        %v613 = vmul.f32 %v596, 0.25
        %v614 = vld [vmem:[%s5] sm:$0xff]
        %v615 = vld [vmem:[%s5 + $0x8] sm:$0xff]
        %v616 = vld [vmem:[%s5 + $0x10] sm:$0xff]
        %v617 = vld [vmem:[%s5 + $0x18] sm:$0xff]
        %v618 = vld [vmem:[%s5 + $0x20] sm:$0xff]
        %v619 = vld [vmem:[%s5 + $0x28] sm:$0xff]
        %v620 = vld [vmem:[%s5 + $0x30] sm:$0xff]
        %v621 = vld [vmem:[%s5 + $0x38] sm:$0xff]
        %v622 = vld [vmem:[%s5 + $0x40] sm:$0xff]
        %v623 = vld [vmem:[%s5 + $0x48] sm:$0xff]
        %v624 = vld [vmem:[%s5 + $0x50] sm:$0xff]
        %v625 = vld [vmem:[%s5 + $0x58] sm:$0xff]
        %v626 = vld [vmem:[%s5 + $0x60] sm:$0xff]
        %v627 = vld [vmem:[%s5 + $0x68] sm:$0xff]
        %v628 = vld [vmem:[%s5 + $0x70] sm:$0xff]
        %v629 = vld [vmem:[%s5 + $0x78] sm:$0xff]
        %v630 = vld [vmem:[%s6] sm:$0x1]
        %v632 = vperm.slane %v630, 0
        %634 = vmatpush.msra.mxu0 %v629
        %635 = vmatpush.msra.mxu0 %v628
        %636 = vmatpush.msra.mxu0 %v627
        %637 = vmatpush.msra.mxu0 %v626
        %638 = vmatpush.msra.mxu0 %v625
        %639 = vmatpush.msra.mxu0 %v624
        %640 = vmatpush.msra.mxu0 %v623
        %641 = vmatpush.msra.mxu0 %v622
        %642 = vmatpush.msra.mxu0 %v621
        %643 = vmatpush.msra.mxu0 %v620
        %644 = vmatpush.msra.mxu0 %v619
        %645 = vmatpush.msra.mxu0 %v618
        %646 = vmatpush.msra.mxu0 %v617
        %647 = vmatpush.msra.mxu0 %v616
        %648 = vmatpush.msra.mxu0 %v615
        %649 = vmatpush.msra.mxu0 %v614
        %650 = vmatmul.f32.gmra.mxu0 %v481
        %v651 = vpop.f32.mrf.mxu0
        %v652 = vadd.f32 %v632, %v651
        %653 = vmatmul.f32.gmra.mxu0 %v482
        %v654 = vpop.f32.mrf.mxu0
        %v655 = vadd.f32 %v632, %v654
        %656 = vmatmul.f32.gmra.mxu0 %v483
        %v657 = vpop.f32.mrf.mxu0
        %v658 = vadd.f32 %v632, %v657
        %659 = vmatmul.f32.gmra.mxu0 %v484
        %v660 = vpop.f32.mrf.mxu0
        %v661 = vadd.f32 %v632, %v660
        %662 = vmatmul.f32.gmra.mxu0 %v485
        %v663 = vpop.f32.mrf.mxu0
        %v664 = vadd.f32 %v632, %v663
        %665 = vmatmul.f32.gmra.mxu0 %v486
        %v666 = vpop.f32.mrf.mxu0
        %v667 = vadd.f32 %v632, %v666
        %668 = vmatmul.f32.gmra.mxu0 %v487
        %v669 = vpop.f32.mrf.mxu0
        %v670 = vadd.f32 %v632, %v669
        %671 = vmatmul.f32.gmra.mxu0 %v488
        %v672 = vpop.f32.mrf.mxu0
        %v673 = vadd.f32 %v632, %v672
        %674 = vmatmul.f32.gmra.mxu0 %v489
        %v675 = vpop.f32.mrf.mxu0
        %v676 = vadd.f32 %v632, %v675
        %677 = vmatmul.f32.gmra.mxu0 %v490
        %v678 = vpop.f32.mrf.mxu0
        %v679 = vadd.f32 %v632, %v678
        %680 = vmatmul.f32.gmra.mxu0 %v491
        %v681 = vpop.f32.mrf.mxu0
        %v682 = vadd.f32 %v632, %v681
        %683 = vmatmul.f32.gmra.mxu0 %v492
        %v684 = vpop.f32.mrf.mxu0
        %v685 = vadd.f32 %v632, %v684
        %686 = vmatmul.f32.gmra.mxu0 %v493
        %v687 = vpop.f32.mrf.mxu0
        %v688 = vadd.f32 %v632, %v687
        %689 = vmatmul.f32.gmra.mxu0 %v494
        %v690 = vpop.f32.mrf.mxu0
        %v691 = vadd.f32 %v632, %v690
        %692 = vmatmul.f32.gmra.mxu0 %v495
        %v693 = vpop.f32.mrf.mxu0
        %v694 = vadd.f32 %v632, %v693
        %695 = vmatmul.f32.gmra.mxu0 %v496
        %v696 = vpop.f32.mrf.mxu0
        %v697 = vadd.f32 %v632, %v696
        %698 = vdwg.mxu0
        %v699 = vld [vmem:[%s7] sm:$0xff]
        %v700 = vld [vmem:[%s7 + $0x8] sm:$0xff]
        %v701 = vld [vmem:[%s7 + $0x10] sm:$0xff]
        %v702 = vld [vmem:[%s7 + $0x18] sm:$0xff]
        %v703 = vld [vmem:[%s7 + $0x20] sm:$0xff]
        %v704 = vld [vmem:[%s7 + $0x28] sm:$0xff]
        %v705 = vld [vmem:[%s7 + $0x30] sm:$0xff]
        %v706 = vld [vmem:[%s7 + $0x38] sm:$0xff]
        %v707 = vld [vmem:[%s7 + $0x40] sm:$0xff]
        %v708 = vld [vmem:[%s7 + $0x48] sm:$0xff]
        %v709 = vld [vmem:[%s7 + $0x50] sm:$0xff]
        %v710 = vld [vmem:[%s7 + $0x58] sm:$0xff]
        %v711 = vld [vmem:[%s7 + $0x60] sm:$0xff]
        %v712 = vld [vmem:[%s7 + $0x68] sm:$0xff]
        %v713 = vld [vmem:[%s7 + $0x70] sm:$0xff]
        %v714 = vld [vmem:[%s7 + $0x78] sm:$0xff]
        %v715 = vld [vmem:[%s8] sm:$0x1]
        %v717 = vperm.slane %v715, 0
        %719 = vmatpush.msra.mxu0 %v714
        %720 = vmatpush.msra.mxu0 %v713
        %721 = vmatpush.msra.mxu0 %v712
        %722 = vmatpush.msra.mxu0 %v711
        %723 = vmatpush.msra.mxu0 %v710
        %724 = vmatpush.msra.mxu0 %v709
        %725 = vmatpush.msra.mxu0 %v708
        %726 = vmatpush.msra.mxu0 %v707
        %727 = vmatpush.msra.mxu0 %v706
        %728 = vmatpush.msra.mxu0 %v705
        %729 = vmatpush.msra.mxu0 %v704
        %730 = vmatpush.msra.mxu0 %v703
        %731 = vmatpush.msra.mxu0 %v702
        %732 = vmatpush.msra.mxu0 %v701
        %733 = vmatpush.msra.mxu0 %v700
        %734 = vmatpush.msra.mxu0 %v699
        %735 = vmatmul.f32.gmra.mxu0 %v497
        %v736 = vpop.f32.mrf.mxu0
        %v737 = vadd.f32 %v717, %v736
        %738 = vmatmul.f32.gmra.mxu0 %v498
        %v739 = vpop.f32.mrf.mxu0
        %v740 = vadd.f32 %v717, %v739
        %741 = vmatmul.f32.gmra.mxu0 %v499
        %v742 = vpop.f32.mrf.mxu0
        %v743 = vadd.f32 %v717, %v742
        %744 = vmatmul.f32.gmra.mxu0 %v500
        %v745 = vpop.f32.mrf.mxu0
        %v746 = vadd.f32 %v717, %v745
        %747 = vmatmul.f32.gmra.mxu0 %v501
        %v748 = vpop.f32.mrf.mxu0
        %v749 = vadd.f32 %v717, %v748
        %750 = vmatmul.f32.gmra.mxu0 %v502
        %v751 = vpop.f32.mrf.mxu0
        %v752 = vadd.f32 %v717, %v751
        %753 = vmatmul.f32.gmra.mxu0 %v503
        %v754 = vpop.f32.mrf.mxu0
        %v755 = vadd.f32 %v717, %v754
        %756 = vmatmul.f32.gmra.mxu0 %v504
        %v757 = vpop.f32.mrf.mxu0
        %v758 = vadd.f32 %v717, %v757
        %759 = vmatmul.f32.gmra.mxu0 %v505
        %v760 = vpop.f32.mrf.mxu0
        %v761 = vadd.f32 %v717, %v760
        %762 = vmatmul.f32.gmra.mxu0 %v506
        %v763 = vpop.f32.mrf.mxu0
        %v764 = vadd.f32 %v717, %v763
        %765 = vmatmul.f32.gmra.mxu0 %v507
        %v766 = vpop.f32.mrf.mxu0
        %v767 = vadd.f32 %v717, %v766
        %768 = vmatmul.f32.gmra.mxu0 %v508
        %v769 = vpop.f32.mrf.mxu0
        %v770 = vadd.f32 %v717, %v769
        %771 = vmatmul.f32.gmra.mxu0 %v509
        %v772 = vpop.f32.mrf.mxu0
        %v773 = vadd.f32 %v717, %v772
        %774 = vmatmul.f32.gmra.mxu0 %v510
        %v775 = vpop.f32.mrf.mxu0
        %v776 = vadd.f32 %v717, %v775
        %777 = vmatmul.f32.gmra.mxu0 %v511
        %v778 = vpop.f32.mrf.mxu0
        %v779 = vadd.f32 %v717, %v778
        %780 = vmatmul.f32.gmra.mxu0 %v512
        %v781 = vpop.f32.mrf.mxu0
        %v782 = vadd.f32 %v717, %v781
        %783 = vdwg.mxu0
        %vm784 = vcmask 130048
        %v786 = vsel %vm784, %v598, 0
        %v789 = vsel %vm784, %v599, 0
        %v792 = vsel %vm784, %v600, 0
        %v795 = vsel %vm784, %v601, 0
        %v798 = vsel %vm784, %v602, 0
        %v801 = vsel %vm784, %v603, 0
        %v804 = vsel %vm784, %v604, 0
        %v807 = vsel %vm784, %v605, 0
        %v810 = vsel %vm784, %v606, 0
        %v813 = vsel %vm784, %v607, 0
        %v816 = vsel %vm784, %v608, 0
        %v819 = vsel %vm784, %v609, 0
        %v822 = vsel %vm784, %v610, 0
        %v825 = vsel %vm784, %v611, 0
        %v828 = vsel %vm784, %v612, 0
        %v831 = vsel %vm784, %v613, 0
        %v834 = vsel %vm784, %v652, 0
        %v837 = vsel %vm784, %v655, 0
        %v840 = vsel %vm784, %v658, 0
        %v843 = vsel %vm784, %v661, 0
        %v846 = vsel %vm784, %v664, 0
        %v849 = vsel %vm784, %v667, 0
        %v852 = vsel %vm784, %v670, 0
        %v855 = vsel %vm784, %v673, 0
        %v858 = vsel %vm784, %v676, 0
        %v861 = vsel %vm784, %v679, 0
        %v864 = vsel %vm784, %v682, 0
        %v867 = vsel %vm784, %v685, 0
        %v870 = vsel %vm784, %v688, 0
        %v873 = vsel %vm784, %v691, 0
        %v876 = vsel %vm784, %v694, 0
        %v879 = vsel %vm784, %v697, 0
        %881 = vmatpush.xpose.msra.mxu0 %v879
        %882 = vmatpush.xpose.msra.mxu0 %v876
        %883 = vmatpush.xpose.msra.mxu0 %v873
        %884 = vmatpush.xpose.msra.mxu0 %v870
        %885 = vmatpush.xpose.msra.mxu0 %v867
        %886 = vmatpush.xpose.msra.mxu0 %v864
        %887 = vmatpush.xpose.msra.mxu0 %v861
        %888 = vmatpush.xpose.msra.mxu0 %v858
        %889 = vmatpush.xpose.msra.mxu0 %v855
        %890 = vmatpush.xpose.msra.mxu0 %v852
        %891 = vmatpush.xpose.msra.mxu0 %v849
        %892 = vmatpush.xpose.msra.mxu0 %v846
        %893 = vmatpush.xpose.msra.mxu0 %v843
        %894 = vmatpush.xpose.msra.mxu0 %v840
        %895 = vmatpush.xpose.msra.mxu0 %v837
        %896 = vmatpush.xpose.msra.mxu0 %v834
        %897 = vmatmul.f32.gmra.mxu0 %v786
        %v898 = vpop.f32.mrf.mxu0
        %v899 = vadd.f32 0.0, %v898
        %900 = vmatmul.f32.gmra.mxu0 %v789
        %v901 = vpop.f32.mrf.mxu0
        %v902 = vadd.f32 0.0, %v901
        %903 = vmatmul.f32.gmra.mxu0 %v792
        %v904 = vpop.f32.mrf.mxu0
        %v905 = vadd.f32 0.0, %v904
        %906 = vmatmul.f32.gmra.mxu0 %v795
        %v907 = vpop.f32.mrf.mxu0
        %v908 = vadd.f32 0.0, %v907
        %909 = vmatmul.f32.gmra.mxu0 %v798
        %v910 = vpop.f32.mrf.mxu0
        %v911 = vadd.f32 0.0, %v910
        %912 = vmatmul.f32.gmra.mxu0 %v801
        %v913 = vpop.f32.mrf.mxu0
        %v914 = vadd.f32 0.0, %v913
        %915 = vmatmul.f32.gmra.mxu0 %v804
        %v916 = vpop.f32.mrf.mxu0
        %v917 = vadd.f32 0.0, %v916
        %918 = vmatmul.f32.gmra.mxu0 %v807
        %v919 = vpop.f32.mrf.mxu0
        %v920 = vadd.f32 0.0, %v919
        %921 = vmatmul.f32.gmra.mxu0 %v810
        %v922 = vpop.f32.mrf.mxu0
        %v923 = vadd.f32 0.0, %v922
        %924 = vmatmul.f32.gmra.mxu0 %v813
        %v925 = vpop.f32.mrf.mxu0
        %v926 = vadd.f32 0.0, %v925
        %927 = vmatmul.f32.gmra.mxu0 %v816
        %v928 = vpop.f32.mrf.mxu0
        %v929 = vadd.f32 0.0, %v928
        %930 = vmatmul.f32.gmra.mxu0 %v819
        %v931 = vpop.f32.mrf.mxu0
        %v932 = vadd.f32 0.0, %v931
        %933 = vmatmul.f32.gmra.mxu0 %v822
        %v934 = vpop.f32.mrf.mxu0
        %v935 = vadd.f32 0.0, %v934
        %936 = vmatmul.f32.gmra.mxu0 %v825
        %v937 = vpop.f32.mrf.mxu0
        %v938 = vadd.f32 0.0, %v937
        %939 = vmatmul.f32.gmra.mxu0 %v828
        %v940 = vpop.f32.mrf.mxu0
        %v941 = vadd.f32 0.0, %v940
        %942 = vmatmul.f32.gmra.mxu0 %v831
        %v943 = vpop.f32.mrf.mxu0
        %v944 = vadd.f32 0.0, %v943
        %945 = vdwg.mxu0
        %946 = vmax.xlane.f32.xlu0 %v899
        %v947 = vpop.xlane.xlu0 %946
        %948 = vmax.xlane.f32.xlu0 %v902
        %v949 = vpop.xlane.xlu0 %948
        %950 = vmax.xlane.f32.xlu0 %v905
        %v951 = vpop.xlane.xlu0 %950
        %952 = vmax.xlane.f32.xlu0 %v908
        %v953 = vpop.xlane.xlu0 %952
        %954 = vmax.xlane.f32.xlu0 %v911
        %v955 = vpop.xlane.xlu0 %954
        %956 = vmax.xlane.f32.xlu0 %v914
        %v957 = vpop.xlane.xlu0 %956
        %958 = vmax.xlane.f32.xlu0 %v917
        %v959 = vpop.xlane.xlu0 %958
        %960 = vmax.xlane.f32.xlu0 %v920
        %v961 = vpop.xlane.xlu0 %960
        %962 = vmax.xlane.f32.xlu0 %v923
        %v963 = vpop.xlane.xlu0 %962
        %964 = vmax.xlane.f32.xlu0 %v926
        %v965 = vpop.xlane.xlu0 %964
        %966 = vmax.xlane.f32.xlu0 %v929
        %v967 = vpop.xlane.xlu0 %966
        %968 = vmax.xlane.f32.xlu0 %v932
        %v969 = vpop.xlane.xlu0 %968
        %970 = vmax.xlane.f32.xlu0 %v935
        %v971 = vpop.xlane.xlu0 %970
        %972 = vmax.xlane.f32.xlu0 %v938
        %v973 = vpop.xlane.xlu0 %972
        %974 = vmax.xlane.f32.xlu0 %v941
        %v975 = vpop.xlane.xlu0 %974
        %976 = vmax.xlane.f32.xlu0 %v944
        %v977 = vpop.xlane.xlu0 %976
        %v978 = vsub.f32 %v899, %v947
        %v979 = vsub.f32 %v902, %v949
        %v980 = vsub.f32 %v905, %v951
        %v981 = vsub.f32 %v908, %v953
        %v982 = vsub.f32 %v911, %v955
        %v983 = vsub.f32 %v914, %v957
        %v984 = vsub.f32 %v917, %v959
        %v985 = vsub.f32 %v920, %v961
        %v986 = vsub.f32 %v923, %v963
        %v987 = vsub.f32 %v926, %v965
        %v988 = vsub.f32 %v929, %v967
        %v989 = vsub.f32 %v932, %v969
        %v990 = vsub.f32 %v935, %v971
        %v991 = vsub.f32 %v938, %v973
        %v992 = vsub.f32 %v941, %v975
        %v993 = vsub.f32 %v944, %v977
        %v994 = vmul.f32 %v978, 1.442695
        %v995 = vpow.pop %v994
        %v996 = vmul.f32 %v979, 1.442695
        %v997 = vpow.pop %v996
        %v998 = vmul.f32 %v980, 1.442695
        %v999 = vpow.pop %v998
        %v1000 = vmul.f32 %v981, 1.442695
        %v1001 = vpow.pop %v1000
        %v1002 = vmul.f32 %v982, 1.442695
        %v1003 = vpow.pop %v1002
        %v1004 = vmul.f32 %v983, 1.442695
        %v1005 = vpow.pop %v1004
        %v1006 = vmul.f32 %v984, 1.442695
        %v1007 = vpow.pop %v1006
        %v1008 = vmul.f32 %v985, 1.442695
        %v1009 = vpow.pop %v1008
        %v1010 = vmul.f32 %v986, 1.442695
        %v1011 = vpow.pop %v1010
        %v1012 = vmul.f32 %v987, 1.442695
        %v1013 = vpow.pop %v1012
        %v1014 = vmul.f32 %v988, 1.442695
        %v1015 = vpow.pop %v1014
        %v1016 = vmul.f32 %v989, 1.442695
        %v1017 = vpow.pop %v1016
        %v1018 = vmul.f32 %v990, 1.442695
        %v1019 = vpow.pop %v1018
        %v1020 = vmul.f32 %v991, 1.442695
        %v1021 = vpow.pop %v1020
        %v1022 = vmul.f32 %v992, 1.442695
        %v1023 = vpow.pop %v1022
        %v1024 = vmul.f32 %v993, 1.442695
        %v1025 = vpow.pop %v1024
        %1026 = vadd.xlane.f32.xlu0 %v995
        %v1027 = vpop.xlane.xlu0 %1026
        %1028 = vadd.xlane.f32.xlu0 %v997
        %v1029 = vpop.xlane.xlu0 %1028
        %1030 = vadd.xlane.f32.xlu0 %v999
        %v1031 = vpop.xlane.xlu0 %1030
        %1032 = vadd.xlane.f32.xlu0 %v1001
        %v1033 = vpop.xlane.xlu0 %1032
        %1034 = vadd.xlane.f32.xlu0 %v1003
        %v1035 = vpop.xlane.xlu0 %1034
        %1036 = vadd.xlane.f32.xlu0 %v1005
        %v1037 = vpop.xlane.xlu0 %1036
        %1038 = vadd.xlane.f32.xlu0 %v1007
        %v1039 = vpop.xlane.xlu0 %1038
        %1040 = vadd.xlane.f32.xlu0 %v1009
        %v1041 = vpop.xlane.xlu0 %1040
        %1042 = vadd.xlane.f32.xlu0 %v1011
        %v1043 = vpop.xlane.xlu0 %1042
        %1044 = vadd.xlane.f32.xlu0 %v1013
        %v1045 = vpop.xlane.xlu0 %1044
        %1046 = vadd.xlane.f32.xlu0 %v1015
        %v1047 = vpop.xlane.xlu0 %1046
        %1048 = vadd.xlane.f32.xlu0 %v1017
        %v1049 = vpop.xlane.xlu0 %1048
        %1050 = vadd.xlane.f32.xlu0 %v1019
        %v1051 = vpop.xlane.xlu0 %1050
        %1052 = vadd.xlane.f32.xlu0 %v1021
        %v1053 = vpop.xlane.xlu0 %1052
        %1054 = vadd.xlane.f32.xlu0 %v1023
        %v1055 = vpop.xlane.xlu0 %1054
        %1056 = vadd.xlane.f32.xlu0 %v1025
        %v1057 = vpop.xlane.xlu0 %1056
        %v1058 = vrcp.pop %v1027
        %v1059 = vmul.f32 %v1027, %v1058
        %v1060 = vsub.f32 1.0, %v1059
        %v1061 = vmul.f32 %v1058, %v1060
        %v1062 = vadd.f32 %v1058, %v1061
        %vm1063 = vweird.f32 %v1027
        %vm1064 = vweird.f32 %v1058
        %vm1065 = vmor %vm1063, %vm1064
        %v1066 = vsel %vm1065, %v1058, %v1062
        %v1067 = vand.u32 2147483647, %v1027
        %vm1068 = vcmp.eq.f32.partialorder %v1067, 8.507059e+37
        %v1069 = vand.u32 %v1027, 2147483648
        %v1070 = vor.u32 1.1754944e-38, %v1069
        %v1071 = vsel %vm1068, %v1070, %v1066
        %v1072 = vrcp.pop %v1029
        %v1073 = vmul.f32 %v1029, %v1072
        %v1074 = vsub.f32 1.0, %v1073
        %v1075 = vmul.f32 %v1072, %v1074
        %v1076 = vadd.f32 %v1072, %v1075
        %vm1077 = vweird.f32 %v1029
        %vm1078 = vweird.f32 %v1072
        %vm1079 = vmor %vm1077, %vm1078
        %v1080 = vsel %vm1079, %v1072, %v1076
        %v1081 = vand.u32 2147483647, %v1029
        %vm1082 = vcmp.eq.f32.partialorder %v1081, 8.507059e+37
        %v1083 = vand.u32 %v1029, 2147483648
        %v1084 = vor.u32 1.1754944e-38, %v1083
        %v1085 = vsel %vm1082, %v1084, %v1080
        %v1086 = vrcp.pop %v1031
        %v1087 = vmul.f32 %v1031, %v1086
        %v1088 = vsub.f32 1.0, %v1087
        %v1089 = vmul.f32 %v1086, %v1088
        %v1090 = vadd.f32 %v1086, %v1089
        %vm1091 = vweird.f32 %v1031
        %vm1092 = vweird.f32 %v1086
        %vm1093 = vmor %vm1091, %vm1092
        %v1094 = vsel %vm1093, %v1086, %v1090
        %v1095 = vand.u32 2147483647, %v1031
        %vm1096 = vcmp.eq.f32.partialorder %v1095, 8.507059e+37
        %v1097 = vand.u32 %v1031, 2147483648
        %v1098 = vor.u32 1.1754944e-38, %v1097
        %v1099 = vsel %vm1096, %v1098, %v1094
        %v1100 = vrcp.pop %v1033
        %v1101 = vmul.f32 %v1033, %v1100
        %v1102 = vsub.f32 1.0, %v1101
        %v1103 = vmul.f32 %v1100, %v1102
        %v1104 = vadd.f32 %v1100, %v1103
        %vm1105 = vweird.f32 %v1033
        %vm1106 = vweird.f32 %v1100
        %vm1107 = vmor %vm1105, %vm1106
        %v1108 = vsel %vm1107, %v1100, %v1104
        %v1109 = vand.u32 2147483647, %v1033
        %vm1110 = vcmp.eq.f32.partialorder %v1109, 8.507059e+37
        %v1111 = vand.u32 %v1033, 2147483648
        %v1112 = vor.u32 1.1754944e-38, %v1111
        %v1113 = vsel %vm1110, %v1112, %v1108
        %v1114 = vrcp.pop %v1035
        %v1115 = vmul.f32 %v1035, %v1114
        %v1116 = vsub.f32 1.0, %v1115
        %v1117 = vmul.f32 %v1114, %v1116
        %v1118 = vadd.f32 %v1114, %v1117
        %vm1119 = vweird.f32 %v1035
        %vm1120 = vweird.f32 %v1114
        %vm1121 = vmor %vm1119, %vm1120
        %v1122 = vsel %vm1121, %v1114, %v1118
        %v1123 = vand.u32 2147483647, %v1035
        %vm1124 = vcmp.eq.f32.partialorder %v1123, 8.507059e+37
        %v1125 = vand.u32 %v1035, 2147483648
        %v1126 = vor.u32 1.1754944e-38, %v1125
        %v1127 = vsel %vm1124, %v1126, %v1122
        %v1128 = vrcp.pop %v1037
        %v1129 = vmul.f32 %v1037, %v1128
        %v1130 = vsub.f32 1.0, %v1129
        %v1131 = vmul.f32 %v1128, %v1130
        %v1132 = vadd.f32 %v1128, %v1131
        %vm1133 = vweird.f32 %v1037
        %vm1134 = vweird.f32 %v1128
        %vm1135 = vmor %vm1133, %vm1134
        %v1136 = vsel %vm1135, %v1128, %v1132
        %v1137 = vand.u32 2147483647, %v1037
        %vm1138 = vcmp.eq.f32.partialorder %v1137, 8.507059e+37
        %v1139 = vand.u32 %v1037, 2147483648
        %v1140 = vor.u32 1.1754944e-38, %v1139
        %v1141 = vsel %vm1138, %v1140, %v1136
        %v1142 = vrcp.pop %v1039
        %v1143 = vmul.f32 %v1039, %v1142
        %v1144 = vsub.f32 1.0, %v1143
        %v1145 = vmul.f32 %v1142, %v1144
        %v1146 = vadd.f32 %v1142, %v1145
        %vm1147 = vweird.f32 %v1039
        %vm1148 = vweird.f32 %v1142
        %vm1149 = vmor %vm1147, %vm1148
        %v1150 = vsel %vm1149, %v1142, %v1146
        %v1151 = vand.u32 2147483647, %v1039
        %vm1152 = vcmp.eq.f32.partialorder %v1151, 8.507059e+37
        %v1153 = vand.u32 %v1039, 2147483648
        %v1154 = vor.u32 1.1754944e-38, %v1153
        %v1155 = vsel %vm1152, %v1154, %v1150
        %v1156 = vrcp.pop %v1041
        %v1157 = vmul.f32 %v1041, %v1156
        %v1158 = vsub.f32 1.0, %v1157
        %v1159 = vmul.f32 %v1156, %v1158
        %v1160 = vadd.f32 %v1156, %v1159
        %vm1161 = vweird.f32 %v1041
        %vm1162 = vweird.f32 %v1156
        %vm1163 = vmor %vm1161, %vm1162
        %v1164 = vsel %vm1163, %v1156, %v1160
        %v1165 = vand.u32 2147483647, %v1041
        %vm1166 = vcmp.eq.f32.partialorder %v1165, 8.507059e+37
        %v1167 = vand.u32 %v1041, 2147483648
        %v1168 = vor.u32 1.1754944e-38, %v1167
        %v1169 = vsel %vm1166, %v1168, %v1164
        %v1170 = vrcp.pop %v1043
        %v1171 = vmul.f32 %v1043, %v1170
        %v1172 = vsub.f32 1.0, %v1171
        %v1173 = vmul.f32 %v1170, %v1172
        %v1174 = vadd.f32 %v1170, %v1173
        %vm1175 = vweird.f32 %v1043
        %vm1176 = vweird.f32 %v1170
        %vm1177 = vmor %vm1175, %vm1176
        %v1178 = vsel %vm1177, %v1170, %v1174
        %v1179 = vand.u32 2147483647, %v1043
        %vm1180 = vcmp.eq.f32.partialorder %v1179, 8.507059e+37
        %v1181 = vand.u32 %v1043, 2147483648
        %v1182 = vor.u32 1.1754944e-38, %v1181
        %v1183 = vsel %vm1180, %v1182, %v1178
        %v1184 = vrcp.pop %v1045
        %v1185 = vmul.f32 %v1045, %v1184
        %v1186 = vsub.f32 1.0, %v1185
        %v1187 = vmul.f32 %v1184, %v1186
        %v1188 = vadd.f32 %v1184, %v1187
        %vm1189 = vweird.f32 %v1045
        %vm1190 = vweird.f32 %v1184
        %vm1191 = vmor %vm1189, %vm1190
        %v1192 = vsel %vm1191, %v1184, %v1188
        %v1193 = vand.u32 2147483647, %v1045
        %vm1194 = vcmp.eq.f32.partialorder %v1193, 8.507059e+37
        %v1195 = vand.u32 %v1045, 2147483648
        %v1196 = vor.u32 1.1754944e-38, %v1195
        %v1197 = vsel %vm1194, %v1196, %v1192
        %v1198 = vrcp.pop %v1047
        %v1199 = vmul.f32 %v1047, %v1198
        %v1200 = vsub.f32 1.0, %v1199
        %v1201 = vmul.f32 %v1198, %v1200
        %v1202 = vadd.f32 %v1198, %v1201
        %vm1203 = vweird.f32 %v1047
        %vm1204 = vweird.f32 %v1198
        %vm1205 = vmor %vm1203, %vm1204
        %v1206 = vsel %vm1205, %v1198, %v1202
        %v1207 = vand.u32 2147483647, %v1047
        %vm1208 = vcmp.eq.f32.partialorder %v1207, 8.507059e+37
        %v1209 = vand.u32 %v1047, 2147483648
        %v1210 = vor.u32 1.1754944e-38, %v1209
        %v1211 = vsel %vm1208, %v1210, %v1206
        %v1212 = vrcp.pop %v1049
        %v1213 = vmul.f32 %v1049, %v1212
        %v1214 = vsub.f32 1.0, %v1213
        %v1215 = vmul.f32 %v1212, %v1214
        %v1216 = vadd.f32 %v1212, %v1215
        %vm1217 = vweird.f32 %v1049
        %vm1218 = vweird.f32 %v1212
        %vm1219 = vmor %vm1217, %vm1218
        %v1220 = vsel %vm1219, %v1212, %v1216
        %v1221 = vand.u32 2147483647, %v1049
        %vm1222 = vcmp.eq.f32.partialorder %v1221, 8.507059e+37
        %v1223 = vand.u32 %v1049, 2147483648
        %v1224 = vor.u32 1.1754944e-38, %v1223
        %v1225 = vsel %vm1222, %v1224, %v1220
        %v1226 = vrcp.pop %v1051
        %v1227 = vmul.f32 %v1051, %v1226
        %v1228 = vsub.f32 1.0, %v1227
        %v1229 = vmul.f32 %v1226, %v1228
        %v1230 = vadd.f32 %v1226, %v1229
        %vm1231 = vweird.f32 %v1051
        %vm1232 = vweird.f32 %v1226
        %vm1233 = vmor %vm1231, %vm1232
        %v1234 = vsel %vm1233, %v1226, %v1230
        %v1235 = vand.u32 2147483647, %v1051
        %vm1236 = vcmp.eq.f32.partialorder %v1235, 8.507059e+37
        %v1237 = vand.u32 %v1051, 2147483648
        %v1238 = vor.u32 1.1754944e-38, %v1237
        %v1239 = vsel %vm1236, %v1238, %v1234
        %v1240 = vrcp.pop %v1053
        %v1241 = vmul.f32 %v1053, %v1240
        %v1242 = vsub.f32 1.0, %v1241
        %v1243 = vmul.f32 %v1240, %v1242
        %v1244 = vadd.f32 %v1240, %v1243
        %vm1245 = vweird.f32 %v1053
        %vm1246 = vweird.f32 %v1240
        %vm1247 = vmor %vm1245, %vm1246
        %v1248 = vsel %vm1247, %v1240, %v1244
        %v1249 = vand.u32 2147483647, %v1053
        %vm1250 = vcmp.eq.f32.partialorder %v1249, 8.507059e+37
        %v1251 = vand.u32 %v1053, 2147483648
        %v1252 = vor.u32 1.1754944e-38, %v1251
        %v1253 = vsel %vm1250, %v1252, %v1248
        %v1254 = vrcp.pop %v1055
        %v1255 = vmul.f32 %v1055, %v1254
        %v1256 = vsub.f32 1.0, %v1255
        %v1257 = vmul.f32 %v1254, %v1256
        %v1258 = vadd.f32 %v1254, %v1257
        %vm1259 = vweird.f32 %v1055
        %vm1260 = vweird.f32 %v1254
        %vm1261 = vmor %vm1259, %vm1260
        %v1262 = vsel %vm1261, %v1254, %v1258
        %v1263 = vand.u32 2147483647, %v1055
        %vm1264 = vcmp.eq.f32.partialorder %v1263, 8.507059e+37
        %v1265 = vand.u32 %v1055, 2147483648
        %v1266 = vor.u32 1.1754944e-38, %v1265
        %v1267 = vsel %vm1264, %v1266, %v1262
        %v1268 = vrcp.pop %v1057
        %v1269 = vmul.f32 %v1057, %v1268
        %v1270 = vsub.f32 1.0, %v1269
        %v1271 = vmul.f32 %v1268, %v1270
        %v1272 = vadd.f32 %v1268, %v1271
        %vm1273 = vweird.f32 %v1057
        %vm1274 = vweird.f32 %v1268
        %vm1275 = vmor %vm1273, %vm1274
        %v1276 = vsel %vm1275, %v1268, %v1272
        %v1277 = vand.u32 2147483647, %v1057
        %vm1278 = vcmp.eq.f32.partialorder %v1277, 8.507059e+37
        %v1279 = vand.u32 %v1057, 2147483648
        %v1280 = vor.u32 1.1754944e-38, %v1279
        %v1281 = vsel %vm1278, %v1280, %v1276
        %v1282 = vmul.f32 %v995, %v1071
        %v1283 = vmul.f32 %v997, %v1085
        %v1284 = vmul.f32 %v999, %v1099
        %v1285 = vmul.f32 %v1001, %v1113
        %v1286 = vmul.f32 %v1003, %v1127
        %v1287 = vmul.f32 %v1005, %v1141
        %v1288 = vmul.f32 %v1007, %v1155
        %v1289 = vmul.f32 %v1009, %v1169
        %v1290 = vmul.f32 %v1011, %v1183
        %v1291 = vmul.f32 %v1013, %v1197
        %v1292 = vmul.f32 %v1015, %v1211
        %v1293 = vmul.f32 %v1017, %v1225
        %v1294 = vmul.f32 %v1019, %v1239
        %v1295 = vmul.f32 %v1021, %v1253
        %v1296 = vmul.f32 %v1023, %v1267
        %v1297 = vmul.f32 %v1025, %v1281
        %v1298 = vadd.f32 %v1282, 0.0
        %v1299 = vadd.f32 %v1283, 0.0
        %v1300 = vadd.f32 %v1284, 0.0
        %v1301 = vadd.f32 %v1285, 0.0
        %v1302 = vadd.f32 %v1286, 0.0
        %v1303 = vadd.f32 %v1287, 0.0
        %v1304 = vadd.f32 %v1288, 0.0
        %v1305 = vadd.f32 %v1289, 0.0
        %v1306 = vadd.f32 %v1290, 0.0
        %v1307 = vadd.f32 %v1291, 0.0
        %v1308 = vadd.f32 %v1292, 0.0
        %v1309 = vadd.f32 %v1293, 0.0
        %v1310 = vadd.f32 %v1294, 0.0
        %v1311 = vadd.f32 %v1295, 0.0
        %v1312 = vadd.f32 %v1296, 0.0
        %v1313 = vadd.f32 %v1297, 0.0
        %1314 = vmatpush.msra.mxu0 %v782
        %1315 = vmatpush.msra.mxu0 %v779
        %1316 = vmatpush.msra.mxu0 %v776
        %1317 = vmatpush.msra.mxu0 %v773
        %1318 = vmatpush.msra.mxu0 %v770
        %1319 = vmatpush.msra.mxu0 %v767
        %1320 = vmatpush.msra.mxu0 %v764
        %1321 = vmatpush.msra.mxu0 %v761
        %1322 = vmatpush.msra.mxu0 %v758
        %1323 = vmatpush.msra.mxu0 %v755
        %1324 = vmatpush.msra.mxu0 %v752
        %1325 = vmatpush.msra.mxu0 %v749
        %1326 = vmatpush.msra.mxu0 %v746
        %1327 = vmatpush.msra.mxu0 %v743
        %1328 = vmatpush.msra.mxu0 %v740
        %1329 = vmatpush.msra.mxu0 %v737
        %1330 = vmatmul.f32.gmra.mxu0 %v1282
        %v1331 = vpop.f32.mrf.mxu0
        %v1332 = vadd.f32 0.0, %v1331
        %1333 = vmatmul.f32.gmra.mxu0 %v1283
        %v1334 = vpop.f32.mrf.mxu0
        %v1335 = vadd.f32 0.0, %v1334
        %1336 = vmatmul.f32.gmra.mxu0 %v1284
        %v1337 = vpop.f32.mrf.mxu0
        %v1338 = vadd.f32 0.0, %v1337
        %1339 = vmatmul.f32.gmra.mxu0 %v1285
        %v1340 = vpop.f32.mrf.mxu0
        %v1341 = vadd.f32 0.0, %v1340
        %1342 = vmatmul.f32.gmra.mxu0 %v1286
        %v1343 = vpop.f32.mrf.mxu0
        %v1344 = vadd.f32 0.0, %v1343
        %1345 = vmatmul.f32.gmra.mxu0 %v1287
        %v1346 = vpop.f32.mrf.mxu0
        %v1347 = vadd.f32 0.0, %v1346
        %1348 = vmatmul.f32.gmra.mxu0 %v1288
        %v1349 = vpop.f32.mrf.mxu0
        %v1350 = vadd.f32 0.0, %v1349
        %1351 = vmatmul.f32.gmra.mxu0 %v1289
        %v1352 = vpop.f32.mrf.mxu0
        %v1353 = vadd.f32 0.0, %v1352
        %1354 = vmatmul.f32.gmra.mxu0 %v1290
        %v1355 = vpop.f32.mrf.mxu0
        %v1356 = vadd.f32 0.0, %v1355
        %1357 = vmatmul.f32.gmra.mxu0 %v1291
        %v1358 = vpop.f32.mrf.mxu0
        %v1359 = vadd.f32 0.0, %v1358
        %1360 = vmatmul.f32.gmra.mxu0 %v1292
        %v1361 = vpop.f32.mrf.mxu0
        %v1362 = vadd.f32 0.0, %v1361
        %1363 = vmatmul.f32.gmra.mxu0 %v1293
        %v1364 = vpop.f32.mrf.mxu0
        %v1365 = vadd.f32 0.0, %v1364
        %1366 = vmatmul.f32.gmra.mxu0 %v1294
        %v1367 = vpop.f32.mrf.mxu0
        %v1368 = vadd.f32 0.0, %v1367
        %1369 = vmatmul.f32.gmra.mxu0 %v1295
        %v1370 = vpop.f32.mrf.mxu0
        %v1371 = vadd.f32 0.0, %v1370
        %1372 = vmatmul.f32.gmra.mxu0 %v1296
        %v1373 = vpop.f32.mrf.mxu0
        %v1374 = vadd.f32 0.0, %v1373
        %1375 = vmatmul.f32.gmra.mxu0 %v1297
        %v1376 = vpop.f32.mrf.mxu0
        %v1377 = vadd.f32 0.0, %v1376
        %1378 = vdwg.mxu0
        %1379 = vrot.lane.b32.xlu0 %v598, 112
        %v1380 = vpop.permute.xlu0 %1379
        %1381 = vrot.lane.b32.xlu0 %v599, 112
        %v1382 = vpop.permute.xlu0 %1381
        %1383 = vrot.lane.b32.xlu0 %v600, 112
        %v1384 = vpop.permute.xlu0 %1383
        %1385 = vrot.lane.b32.xlu0 %v601, 112
        %v1386 = vpop.permute.xlu0 %1385
        %1387 = vrot.lane.b32.xlu0 %v602, 112
        %v1388 = vpop.permute.xlu0 %1387
        %1389 = vrot.lane.b32.xlu0 %v603, 112
        %v1390 = vpop.permute.xlu0 %1389
        %1391 = vrot.lane.b32.xlu0 %v604, 112
        %v1392 = vpop.permute.xlu0 %1391
        %1393 = vrot.lane.b32.xlu0 %v605, 112
        %v1394 = vpop.permute.xlu0 %1393
        %1395 = vrot.lane.b32.xlu0 %v606, 112
        %v1396 = vpop.permute.xlu0 %1395
        %1397 = vrot.lane.b32.xlu0 %v607, 112
        %v1398 = vpop.permute.xlu0 %1397
        %1399 = vrot.lane.b32.xlu0 %v608, 112
        %v1400 = vpop.permute.xlu0 %1399
        %1401 = vrot.lane.b32.xlu0 %v609, 112
        %v1402 = vpop.permute.xlu0 %1401
        %1403 = vrot.lane.b32.xlu0 %v610, 112
        %v1404 = vpop.permute.xlu0 %1403
        %1405 = vrot.lane.b32.xlu0 %v611, 112
        %v1406 = vpop.permute.xlu0 %1405
        %1407 = vrot.lane.b32.xlu0 %v612, 112
        %v1408 = vpop.permute.xlu0 %1407
        %1409 = vrot.lane.b32.xlu0 %v613, 112
        %v1410 = vpop.permute.xlu0 %1409
        %1411 = vrot.lane.b32.xlu0 %v652, 112
        %v1412 = vpop.permute.xlu0 %1411
        %1413 = vrot.lane.b32.xlu0 %v655, 112
        %v1414 = vpop.permute.xlu0 %1413
        %1415 = vrot.lane.b32.xlu0 %v658, 112
        %v1416 = vpop.permute.xlu0 %1415
        %1417 = vrot.lane.b32.xlu0 %v661, 112
        %v1418 = vpop.permute.xlu0 %1417
        %1419 = vrot.lane.b32.xlu0 %v664, 112
        %v1420 = vpop.permute.xlu0 %1419
        %1421 = vrot.lane.b32.xlu0 %v667, 112
        %v1422 = vpop.permute.xlu0 %1421
        %1423 = vrot.lane.b32.xlu0 %v670, 112
        %v1424 = vpop.permute.xlu0 %1423
        %1425 = vrot.lane.b32.xlu0 %v673, 112
        %v1426 = vpop.permute.xlu0 %1425
        %1427 = vrot.lane.b32.xlu0 %v676, 112
        %v1428 = vpop.permute.xlu0 %1427
        %1429 = vrot.lane.b32.xlu0 %v679, 112
        %v1430 = vpop.permute.xlu0 %1429
        %1431 = vrot.lane.b32.xlu0 %v682, 112
        %v1432 = vpop.permute.xlu0 %1431
        %1433 = vrot.lane.b32.xlu0 %v685, 112
        %v1434 = vpop.permute.xlu0 %1433
        %1435 = vrot.lane.b32.xlu0 %v688, 112
        %v1436 = vpop.permute.xlu0 %1435
        %1437 = vrot.lane.b32.xlu0 %v691, 112
        %v1438 = vpop.permute.xlu0 %1437
        %1439 = vrot.lane.b32.xlu0 %v694, 112
        %v1440 = vpop.permute.xlu0 %1439
        %1441 = vrot.lane.b32.xlu0 %v697, 112
        %v1442 = vpop.permute.xlu0 %1441
        %v1443 = vsel %vm784, %v1380, 0
        %v1445 = vsel %vm784, %v1382, 0
        %v1447 = vsel %vm784, %v1384, 0
        %v1449 = vsel %vm784, %v1386, 0
        %v1451 = vsel %vm784, %v1388, 0
        %v1453 = vsel %vm784, %v1390, 0
        %v1455 = vsel %vm784, %v1392, 0
        %v1457 = vsel %vm784, %v1394, 0
        %v1459 = vsel %vm784, %v1396, 0
        %v1461 = vsel %vm784, %v1398, 0
        %v1463 = vsel %vm784, %v1400, 0
        %v1465 = vsel %vm784, %v1402, 0
        %v1467 = vsel %vm784, %v1404, 0
        %v1469 = vsel %vm784, %v1406, 0
        %v1471 = vsel %vm784, %v1408, 0
        %v1473 = vsel %vm784, %v1410, 0
        %v1475 = vsel %vm784, %v1412, 0
        %v1477 = vsel %vm784, %v1414, 0
        %v1479 = vsel %vm784, %v1416, 0
        %v1481 = vsel %vm784, %v1418, 0
        %v1483 = vsel %vm784, %v1420, 0
        %v1485 = vsel %vm784, %v1422, 0
        %v1487 = vsel %vm784, %v1424, 0
        %v1489 = vsel %vm784, %v1426, 0
        %v1491 = vsel %vm784, %v1428, 0
        %v1493 = vsel %vm784, %v1430, 0
        %v1495 = vsel %vm784, %v1432, 0
        %v1497 = vsel %vm784, %v1434, 0
        %v1499 = vsel %vm784, %v1436, 0
        %v1501 = vsel %vm784, %v1438, 0
        %v1503 = vsel %vm784, %v1440, 0
        %v1505 = vsel %vm784, %v1442, 0
        %1507 = vmatpush.xpose.msra.mxu0 %v1505
        %1508 = vmatpush.xpose.msra.mxu0 %v1503
        %1509 = vmatpush.xpose.msra.mxu0 %v1501
        %1510 = vmatpush.xpose.msra.mxu0 %v1499
        %1511 = vmatpush.xpose.msra.mxu0 %v1497
        %1512 = vmatpush.xpose.msra.mxu0 %v1495
        %1513 = vmatpush.xpose.msra.mxu0 %v1493
        %1514 = vmatpush.xpose.msra.mxu0 %v1491
        %1515 = vmatpush.xpose.msra.mxu0 %v1489
        %1516 = vmatpush.xpose.msra.mxu0 %v1487
        %1517 = vmatpush.xpose.msra.mxu0 %v1485
        %1518 = vmatpush.xpose.msra.mxu0 %v1483
        %1519 = vmatpush.xpose.msra.mxu0 %v1481
        %1520 = vmatpush.xpose.msra.mxu0 %v1479
        %1521 = vmatpush.xpose.msra.mxu0 %v1477
        %1522 = vmatpush.xpose.msra.mxu0 %v1475
        %1523 = vmatmul.f32.gmra.mxu0 %v1443
        %v1524 = vpop.f32.mrf.mxu0
        %v1525 = vadd.f32 0.0, %v1524
        %1526 = vmatmul.f32.gmra.mxu0 %v1445
        %v1527 = vpop.f32.mrf.mxu0
        %v1528 = vadd.f32 0.0, %v1527
        %1529 = vmatmul.f32.gmra.mxu0 %v1447
        %v1530 = vpop.f32.mrf.mxu0
        %v1531 = vadd.f32 0.0, %v1530
        %1532 = vmatmul.f32.gmra.mxu0 %v1449
        %v1533 = vpop.f32.mrf.mxu0
        %v1534 = vadd.f32 0.0, %v1533
        %1535 = vmatmul.f32.gmra.mxu0 %v1451
        %v1536 = vpop.f32.mrf.mxu0
        %v1537 = vadd.f32 0.0, %v1536
        %1538 = vmatmul.f32.gmra.mxu0 %v1453
        %v1539 = vpop.f32.mrf.mxu0
        %v1540 = vadd.f32 0.0, %v1539
        %1541 = vmatmul.f32.gmra.mxu0 %v1455
        %v1542 = vpop.f32.mrf.mxu0
        %v1543 = vadd.f32 0.0, %v1542
        %1544 = vmatmul.f32.gmra.mxu0 %v1457
        %v1545 = vpop.f32.mrf.mxu0
        %v1546 = vadd.f32 0.0, %v1545
        %1547 = vmatmul.f32.gmra.mxu0 %v1459
        %v1548 = vpop.f32.mrf.mxu0
        %v1549 = vadd.f32 0.0, %v1548
        %1550 = vmatmul.f32.gmra.mxu0 %v1461
        %v1551 = vpop.f32.mrf.mxu0
        %v1552 = vadd.f32 0.0, %v1551
        %1553 = vmatmul.f32.gmra.mxu0 %v1463
        %v1554 = vpop.f32.mrf.mxu0
        %v1555 = vadd.f32 0.0, %v1554
        %1556 = vmatmul.f32.gmra.mxu0 %v1465
        %v1557 = vpop.f32.mrf.mxu0
        %v1558 = vadd.f32 0.0, %v1557
        %1559 = vmatmul.f32.gmra.mxu0 %v1467
        %v1560 = vpop.f32.mrf.mxu0
        %v1561 = vadd.f32 0.0, %v1560
        %1562 = vmatmul.f32.gmra.mxu0 %v1469
        %v1563 = vpop.f32.mrf.mxu0
        %v1564 = vadd.f32 0.0, %v1563
        %1565 = vmatmul.f32.gmra.mxu0 %v1471
        %v1566 = vpop.f32.mrf.mxu0
        %v1567 = vadd.f32 0.0, %v1566
        %1568 = vmatmul.f32.gmra.mxu0 %v1473
        %v1569 = vpop.f32.mrf.mxu0
        %v1570 = vadd.f32 0.0, %v1569
        %1571 = vdwg.mxu0
        %1572 = vmax.xlane.f32.xlu0 %v1525
        %v1573 = vpop.xlane.xlu0 %1572
        %1574 = vmax.xlane.f32.xlu0 %v1528
        %v1575 = vpop.xlane.xlu0 %1574
        %1576 = vmax.xlane.f32.xlu0 %v1531
        %v1577 = vpop.xlane.xlu0 %1576
        %1578 = vmax.xlane.f32.xlu0 %v1534
        %v1579 = vpop.xlane.xlu0 %1578
        %1580 = vmax.xlane.f32.xlu0 %v1537
        %v1581 = vpop.xlane.xlu0 %1580
        %1582 = vmax.xlane.f32.xlu0 %v1540
        %v1583 = vpop.xlane.xlu0 %1582
        %1584 = vmax.xlane.f32.xlu0 %v1543
        %v1585 = vpop.xlane.xlu0 %1584
        %1586 = vmax.xlane.f32.xlu0 %v1546
        %v1587 = vpop.xlane.xlu0 %1586
        %1588 = vmax.xlane.f32.xlu0 %v1549
        %v1589 = vpop.xlane.xlu0 %1588
        %1590 = vmax.xlane.f32.xlu0 %v1552
        %v1591 = vpop.xlane.xlu0 %1590
        %1592 = vmax.xlane.f32.xlu0 %v1555
        %v1593 = vpop.xlane.xlu0 %1592
        %1594 = vmax.xlane.f32.xlu0 %v1558
        %v1595 = vpop.xlane.xlu0 %1594
        %1596 = vmax.xlane.f32.xlu0 %v1561
        %v1597 = vpop.xlane.xlu0 %1596
        %1598 = vmax.xlane.f32.xlu0 %v1564
        %v1599 = vpop.xlane.xlu0 %1598
        %1600 = vmax.xlane.f32.xlu0 %v1567
        %v1601 = vpop.xlane.xlu0 %1600
        %1602 = vmax.xlane.f32.xlu0 %v1570
        %v1603 = vpop.xlane.xlu0 %1602
        %v1604 = vsub.f32 %v1525, %v1573
        %v1605 = vsub.f32 %v1528, %v1575
        %v1606 = vsub.f32 %v1531, %v1577
        %v1607 = vsub.f32 %v1534, %v1579
        %v1608 = vsub.f32 %v1537, %v1581
        %v1609 = vsub.f32 %v1540, %v1583
        %v1610 = vsub.f32 %v1543, %v1585
        %v1611 = vsub.f32 %v1546, %v1587
        %v1612 = vsub.f32 %v1549, %v1589
        %v1613 = vsub.f32 %v1552, %v1591
        %v1614 = vsub.f32 %v1555, %v1593
        %v1615 = vsub.f32 %v1558, %v1595
        %v1616 = vsub.f32 %v1561, %v1597
        %v1617 = vsub.f32 %v1564, %v1599
        %v1618 = vsub.f32 %v1567, %v1601
        %v1619 = vsub.f32 %v1570, %v1603
        %v1620 = vmul.f32 %v1604, 1.442695
        %v1621 = vpow.pop %v1620
        %v1622 = vmul.f32 %v1605, 1.442695
        %v1623 = vpow.pop %v1622
        %v1624 = vmul.f32 %v1606, 1.442695
        %v1625 = vpow.pop %v1624
        %v1626 = vmul.f32 %v1607, 1.442695
        %v1627 = vpow.pop %v1626
        %v1628 = vmul.f32 %v1608, 1.442695
        %v1629 = vpow.pop %v1628
        %v1630 = vmul.f32 %v1609, 1.442695
        %v1631 = vpow.pop %v1630
        %v1632 = vmul.f32 %v1610, 1.442695
        %v1633 = vpow.pop %v1632
        %v1634 = vmul.f32 %v1611, 1.442695
        %v1635 = vpow.pop %v1634
        %v1636 = vmul.f32 %v1612, 1.442695
        %v1637 = vpow.pop %v1636
        %v1638 = vmul.f32 %v1613, 1.442695
        %v1639 = vpow.pop %v1638
        %v1640 = vmul.f32 %v1614, 1.442695
        %v1641 = vpow.pop %v1640
        %v1642 = vmul.f32 %v1615, 1.442695
        %v1643 = vpow.pop %v1642
        %v1644 = vmul.f32 %v1616, 1.442695
        %v1645 = vpow.pop %v1644
        %v1646 = vmul.f32 %v1617, 1.442695
        %v1647 = vpow.pop %v1646
        %v1648 = vmul.f32 %v1618, 1.442695
        %v1649 = vpow.pop %v1648
        %v1650 = vmul.f32 %v1619, 1.442695
        %v1651 = vpow.pop %v1650
        %1652 = vadd.xlane.f32.xlu0 %v1621
        %v1653 = vpop.xlane.xlu0 %1652
        %1654 = vadd.xlane.f32.xlu0 %v1623
        %v1655 = vpop.xlane.xlu0 %1654
        %1656 = vadd.xlane.f32.xlu0 %v1625
        %v1657 = vpop.xlane.xlu0 %1656
        %1658 = vadd.xlane.f32.xlu0 %v1627
        %v1659 = vpop.xlane.xlu0 %1658
        %1660 = vadd.xlane.f32.xlu0 %v1629
        %v1661 = vpop.xlane.xlu0 %1660
        %1662 = vadd.xlane.f32.xlu0 %v1631
        %v1663 = vpop.xlane.xlu0 %1662
        %1664 = vadd.xlane.f32.xlu0 %v1633
        %v1665 = vpop.xlane.xlu0 %1664
        %1666 = vadd.xlane.f32.xlu0 %v1635
        %v1667 = vpop.xlane.xlu0 %1666
        %1668 = vadd.xlane.f32.xlu0 %v1637
        %v1669 = vpop.xlane.xlu0 %1668
        %1670 = vadd.xlane.f32.xlu0 %v1639
        %v1671 = vpop.xlane.xlu0 %1670
        %1672 = vadd.xlane.f32.xlu0 %v1641
        %v1673 = vpop.xlane.xlu0 %1672
        %1674 = vadd.xlane.f32.xlu0 %v1643
        %v1675 = vpop.xlane.xlu0 %1674
        %1676 = vadd.xlane.f32.xlu0 %v1645
        %v1677 = vpop.xlane.xlu0 %1676
        %1678 = vadd.xlane.f32.xlu0 %v1647
        %v1679 = vpop.xlane.xlu0 %1678
        %1680 = vadd.xlane.f32.xlu0 %v1649
        %v1681 = vpop.xlane.xlu0 %1680
        %1682 = vadd.xlane.f32.xlu0 %v1651
        %v1683 = vpop.xlane.xlu0 %1682
        %v1684 = vrcp.pop %v1653
        %v1685 = vmul.f32 %v1653, %v1684
        %v1686 = vsub.f32 1.0, %v1685
        %v1687 = vmul.f32 %v1684, %v1686
        %v1688 = vadd.f32 %v1684, %v1687
        %vm1689 = vweird.f32 %v1653
        %vm1690 = vweird.f32 %v1684
        %vm1691 = vmor %vm1689, %vm1690
        %v1692 = vsel %vm1691, %v1684, %v1688
        %v1693 = vand.u32 2147483647, %v1653
        %vm1694 = vcmp.eq.f32.partialorder %v1693, 8.507059e+37
        %v1695 = vand.u32 %v1653, 2147483648
        %v1696 = vor.u32 1.1754944e-38, %v1695
        %v1697 = vsel %vm1694, %v1696, %v1692
        %v1698 = vrcp.pop %v1655
        %v1699 = vmul.f32 %v1655, %v1698
        %v1700 = vsub.f32 1.0, %v1699
        %v1701 = vmul.f32 %v1698, %v1700
        %v1702 = vadd.f32 %v1698, %v1701
        %vm1703 = vweird.f32 %v1655
        %vm1704 = vweird.f32 %v1698
        %vm1705 = vmor %vm1703, %vm1704
        %v1706 = vsel %vm1705, %v1698, %v1702
        %v1707 = vand.u32 2147483647, %v1655
        %vm1708 = vcmp.eq.f32.partialorder %v1707, 8.507059e+37
        %v1709 = vand.u32 %v1655, 2147483648
        %v1710 = vor.u32 1.1754944e-38, %v1709
        %v1711 = vsel %vm1708, %v1710, %v1706
        %v1712 = vrcp.pop %v1657
        %v1713 = vmul.f32 %v1657, %v1712
        %v1714 = vsub.f32 1.0, %v1713
        %v1715 = vmul.f32 %v1712, %v1714
        %v1716 = vadd.f32 %v1712, %v1715
        %vm1717 = vweird.f32 %v1657
        %vm1718 = vweird.f32 %v1712
        %vm1719 = vmor %vm1717, %vm1718
        %v1720 = vsel %vm1719, %v1712, %v1716
        %v1721 = vand.u32 2147483647, %v1657
        %vm1722 = vcmp.eq.f32.partialorder %v1721, 8.507059e+37
        %v1723 = vand.u32 %v1657, 2147483648
        %v1724 = vor.u32 1.1754944e-38, %v1723
        %v1725 = vsel %vm1722, %v1724, %v1720
        %v1726 = vrcp.pop %v1659
        %v1727 = vmul.f32 %v1659, %v1726
        %v1728 = vsub.f32 1.0, %v1727
        %v1729 = vmul.f32 %v1726, %v1728
        %v1730 = vadd.f32 %v1726, %v1729
        %vm1731 = vweird.f32 %v1659
        %vm1732 = vweird.f32 %v1726
        %vm1733 = vmor %vm1731, %vm1732
        %v1734 = vsel %vm1733, %v1726, %v1730
        %v1735 = vand.u32 2147483647, %v1659
        %vm1736 = vcmp.eq.f32.partialorder %v1735, 8.507059e+37
        %v1737 = vand.u32 %v1659, 2147483648
        %v1738 = vor.u32 1.1754944e-38, %v1737
        %v1739 = vsel %vm1736, %v1738, %v1734
        %v1740 = vrcp.pop %v1661
        %v1741 = vmul.f32 %v1661, %v1740
        %v1742 = vsub.f32 1.0, %v1741
        %v1743 = vmul.f32 %v1740, %v1742
        %v1744 = vadd.f32 %v1740, %v1743
        %vm1745 = vweird.f32 %v1661
        %vm1746 = vweird.f32 %v1740
        %vm1747 = vmor %vm1745, %vm1746
        %v1748 = vsel %vm1747, %v1740, %v1744
        %v1749 = vand.u32 2147483647, %v1661
        %vm1750 = vcmp.eq.f32.partialorder %v1749, 8.507059e+37
        %v1751 = vand.u32 %v1661, 2147483648
        %v1752 = vor.u32 1.1754944e-38, %v1751
        %v1753 = vsel %vm1750, %v1752, %v1748
        %v1754 = vrcp.pop %v1663
        %v1755 = vmul.f32 %v1663, %v1754
        %v1756 = vsub.f32 1.0, %v1755
        %v1757 = vmul.f32 %v1754, %v1756
        %v1758 = vadd.f32 %v1754, %v1757
        %vm1759 = vweird.f32 %v1663
        %vm1760 = vweird.f32 %v1754
        %vm1761 = vmor %vm1759, %vm1760
        %v1762 = vsel %vm1761, %v1754, %v1758
        %v1763 = vand.u32 2147483647, %v1663
        %vm1764 = vcmp.eq.f32.partialorder %v1763, 8.507059e+37
        %v1765 = vand.u32 %v1663, 2147483648
        %v1766 = vor.u32 1.1754944e-38, %v1765
        %v1767 = vsel %vm1764, %v1766, %v1762
        %v1768 = vrcp.pop %v1665
        %v1769 = vmul.f32 %v1665, %v1768
        %v1770 = vsub.f32 1.0, %v1769
        %v1771 = vmul.f32 %v1768, %v1770
        %v1772 = vadd.f32 %v1768, %v1771
        %vm1773 = vweird.f32 %v1665
        %vm1774 = vweird.f32 %v1768
        %vm1775 = vmor %vm1773, %vm1774
        %v1776 = vsel %vm1775, %v1768, %v1772
        %v1777 = vand.u32 2147483647, %v1665
        %vm1778 = vcmp.eq.f32.partialorder %v1777, 8.507059e+37
        %v1779 = vand.u32 %v1665, 2147483648
        %v1780 = vor.u32 1.1754944e-38, %v1779
        %v1781 = vsel %vm1778, %v1780, %v1776
        %v1782 = vrcp.pop %v1667
        %v1783 = vmul.f32 %v1667, %v1782
        %v1784 = vsub.f32 1.0, %v1783
        %v1785 = vmul.f32 %v1782, %v1784
        %v1786 = vadd.f32 %v1782, %v1785
        %vm1787 = vweird.f32 %v1667
        %vm1788 = vweird.f32 %v1782
        %vm1789 = vmor %vm1787, %vm1788
        %v1790 = vsel %vm1789, %v1782, %v1786
        %v1791 = vand.u32 2147483647, %v1667
        %vm1792 = vcmp.eq.f32.partialorder %v1791, 8.507059e+37
        %v1793 = vand.u32 %v1667, 2147483648
        %v1794 = vor.u32 1.1754944e-38, %v1793
        %v1795 = vsel %vm1792, %v1794, %v1790
        %v1796 = vrcp.pop %v1669
        %v1797 = vmul.f32 %v1669, %v1796
        %v1798 = vsub.f32 1.0, %v1797
        %v1799 = vmul.f32 %v1796, %v1798
        %v1800 = vadd.f32 %v1796, %v1799
        %vm1801 = vweird.f32 %v1669
        %vm1802 = vweird.f32 %v1796
        %vm1803 = vmor %vm1801, %vm1802
        %v1804 = vsel %vm1803, %v1796, %v1800
        %v1805 = vand.u32 2147483647, %v1669
        %vm1806 = vcmp.eq.f32.partialorder %v1805, 8.507059e+37
        %v1807 = vand.u32 %v1669, 2147483648
        %v1808 = vor.u32 1.1754944e-38, %v1807
        %v1809 = vsel %vm1806, %v1808, %v1804
        %v1810 = vrcp.pop %v1671
        %v1811 = vmul.f32 %v1671, %v1810
        %v1812 = vsub.f32 1.0, %v1811
        %v1813 = vmul.f32 %v1810, %v1812
        %v1814 = vadd.f32 %v1810, %v1813
        %vm1815 = vweird.f32 %v1671
        %vm1816 = vweird.f32 %v1810
        %vm1817 = vmor %vm1815, %vm1816
        %v1818 = vsel %vm1817, %v1810, %v1814
        %v1819 = vand.u32 2147483647, %v1671
        %vm1820 = vcmp.eq.f32.partialorder %v1819, 8.507059e+37
        %v1821 = vand.u32 %v1671, 2147483648
        %v1822 = vor.u32 1.1754944e-38, %v1821
        %v1823 = vsel %vm1820, %v1822, %v1818
        %v1824 = vrcp.pop %v1673
        %v1825 = vmul.f32 %v1673, %v1824
        %v1826 = vsub.f32 1.0, %v1825
        %v1827 = vmul.f32 %v1824, %v1826
        %v1828 = vadd.f32 %v1824, %v1827
        %vm1829 = vweird.f32 %v1673
        %vm1830 = vweird.f32 %v1824
        %vm1831 = vmor %vm1829, %vm1830
        %v1832 = vsel %vm1831, %v1824, %v1828
        %v1833 = vand.u32 2147483647, %v1673
        %vm1834 = vcmp.eq.f32.partialorder %v1833, 8.507059e+37
        %v1835 = vand.u32 %v1673, 2147483648
        %v1836 = vor.u32 1.1754944e-38, %v1835
        %v1837 = vsel %vm1834, %v1836, %v1832
        %v1838 = vrcp.pop %v1675
        %v1839 = vmul.f32 %v1675, %v1838
        %v1840 = vsub.f32 1.0, %v1839
        %v1841 = vmul.f32 %v1838, %v1840
        %v1842 = vadd.f32 %v1838, %v1841
        %vm1843 = vweird.f32 %v1675
        %vm1844 = vweird.f32 %v1838
        %vm1845 = vmor %vm1843, %vm1844
        %v1846 = vsel %vm1845, %v1838, %v1842
        %v1847 = vand.u32 2147483647, %v1675
        %vm1848 = vcmp.eq.f32.partialorder %v1847, 8.507059e+37
        %v1849 = vand.u32 %v1675, 2147483648
        %v1850 = vor.u32 1.1754944e-38, %v1849
        %v1851 = vsel %vm1848, %v1850, %v1846
        %v1852 = vrcp.pop %v1677
        %v1853 = vmul.f32 %v1677, %v1852
        %v1854 = vsub.f32 1.0, %v1853
        %v1855 = vmul.f32 %v1852, %v1854
        %v1856 = vadd.f32 %v1852, %v1855
        %vm1857 = vweird.f32 %v1677
        %vm1858 = vweird.f32 %v1852
        %vm1859 = vmor %vm1857, %vm1858
        %v1860 = vsel %vm1859, %v1852, %v1856
        %v1861 = vand.u32 2147483647, %v1677
        %vm1862 = vcmp.eq.f32.partialorder %v1861, 8.507059e+37
        %v1863 = vand.u32 %v1677, 2147483648
        %v1864 = vor.u32 1.1754944e-38, %v1863
        %v1865 = vsel %vm1862, %v1864, %v1860
        %v1866 = vrcp.pop %v1679
        %v1867 = vmul.f32 %v1679, %v1866
        %v1868 = vsub.f32 1.0, %v1867
        %v1869 = vmul.f32 %v1866, %v1868
        %v1870 = vadd.f32 %v1866, %v1869
        %vm1871 = vweird.f32 %v1679
        %vm1872 = vweird.f32 %v1866
        %vm1873 = vmor %vm1871, %vm1872
        %v1874 = vsel %vm1873, %v1866, %v1870
        %v1875 = vand.u32 2147483647, %v1679
        %vm1876 = vcmp.eq.f32.partialorder %v1875, 8.507059e+37
        %v1877 = vand.u32 %v1679, 2147483648
        %v1878 = vor.u32 1.1754944e-38, %v1877
        %v1879 = vsel %vm1876, %v1878, %v1874
        %v1880 = vrcp.pop %v1681
        %v1881 = vmul.f32 %v1681, %v1880
        %v1882 = vsub.f32 1.0, %v1881
        %v1883 = vmul.f32 %v1880, %v1882
        %v1884 = vadd.f32 %v1880, %v1883
        %vm1885 = vweird.f32 %v1681
        %vm1886 = vweird.f32 %v1880
        %vm1887 = vmor %vm1885, %vm1886
        %v1888 = vsel %vm1887, %v1880, %v1884
        %v1889 = vand.u32 2147483647, %v1681
        %vm1890 = vcmp.eq.f32.partialorder %v1889, 8.507059e+37
        %v1891 = vand.u32 %v1681, 2147483648
        %v1892 = vor.u32 1.1754944e-38, %v1891
        %v1893 = vsel %vm1890, %v1892, %v1888
        %v1894 = vrcp.pop %v1683
        %v1895 = vmul.f32 %v1683, %v1894
        %v1896 = vsub.f32 1.0, %v1895
        %v1897 = vmul.f32 %v1894, %v1896
        %v1898 = vadd.f32 %v1894, %v1897
        %vm1899 = vweird.f32 %v1683
        %vm1900 = vweird.f32 %v1894
        %vm1901 = vmor %vm1899, %vm1900
        %v1902 = vsel %vm1901, %v1894, %v1898
        %v1903 = vand.u32 2147483647, %v1683
        %vm1904 = vcmp.eq.f32.partialorder %v1903, 8.507059e+37
        %v1905 = vand.u32 %v1683, 2147483648
        %v1906 = vor.u32 1.1754944e-38, %v1905
        %v1907 = vsel %vm1904, %v1906, %v1902
        %v1908 = vmul.f32 %v1621, %v1697
        %v1909 = vmul.f32 %v1623, %v1711
        %v1910 = vmul.f32 %v1625, %v1725
        %v1911 = vmul.f32 %v1627, %v1739
        %v1912 = vmul.f32 %v1629, %v1753
        %v1913 = vmul.f32 %v1631, %v1767
        %v1914 = vmul.f32 %v1633, %v1781
        %v1915 = vmul.f32 %v1635, %v1795
        %v1916 = vmul.f32 %v1637, %v1809
        %v1917 = vmul.f32 %v1639, %v1823
        %v1918 = vmul.f32 %v1641, %v1837
        %v1919 = vmul.f32 %v1643, %v1851
        %v1920 = vmul.f32 %v1645, %v1865
        %v1921 = vmul.f32 %v1647, %v1879
        %v1922 = vmul.f32 %v1649, %v1893
        %v1923 = vmul.f32 %v1651, %v1907
        %v1924 = vadd.f32 %v1298, %v1908
        %v1925 = vadd.f32 %v1299, %v1909
        %v1926 = vadd.f32 %v1300, %v1910
        %v1927 = vadd.f32 %v1301, %v1911
        %v1928 = vadd.f32 %v1302, %v1912
        %v1929 = vadd.f32 %v1303, %v1913
        %v1930 = vadd.f32 %v1304, %v1914
        %v1931 = vadd.f32 %v1305, %v1915
        %v1932 = vadd.f32 %v1306, %v1916
        %v1933 = vadd.f32 %v1307, %v1917
        %v1934 = vadd.f32 %v1308, %v1918
        %v1935 = vadd.f32 %v1309, %v1919
        %v1936 = vadd.f32 %v1310, %v1920
        %v1937 = vadd.f32 %v1311, %v1921
        %v1938 = vadd.f32 %v1312, %v1922
        %v1939 = vadd.f32 %v1313, %v1923
        %1956 = vrot.lane.b32.xlu0 %v737, 112
        %v1957 = vpop.permute.xlu0 %1956
        %1958 = vrot.lane.b32.xlu0 %v740, 112
        %v1959 = vpop.permute.xlu0 %1958
        %1960 = vrot.lane.b32.xlu0 %v743, 112
        %v1961 = vpop.permute.xlu0 %1960
        %1962 = vrot.lane.b32.xlu0 %v746, 112
        %v1963 = vpop.permute.xlu0 %1962
        %1964 = vrot.lane.b32.xlu0 %v749, 112
        %v1965 = vpop.permute.xlu0 %1964
        %1966 = vrot.lane.b32.xlu0 %v752, 112
        %v1967 = vpop.permute.xlu0 %1966
        %1968 = vrot.lane.b32.xlu0 %v755, 112
        %v1969 = vpop.permute.xlu0 %1968
        %1970 = vrot.lane.b32.xlu0 %v758, 112
        %v1971 = vpop.permute.xlu0 %1970
        %1972 = vrot.lane.b32.xlu0 %v761, 112
        %v1973 = vpop.permute.xlu0 %1972
        %1974 = vrot.lane.b32.xlu0 %v764, 112
        %v1975 = vpop.permute.xlu0 %1974
        %1976 = vrot.lane.b32.xlu0 %v767, 112
        %v1977 = vpop.permute.xlu0 %1976
        %1978 = vrot.lane.b32.xlu0 %v770, 112
        %v1979 = vpop.permute.xlu0 %1978
        %1980 = vrot.lane.b32.xlu0 %v773, 112
        %v1981 = vpop.permute.xlu0 %1980
        %1982 = vrot.lane.b32.xlu0 %v776, 112
        %v1983 = vpop.permute.xlu0 %1982
        %1984 = vrot.lane.b32.xlu0 %v779, 112
        %v1985 = vpop.permute.xlu0 %1984
        %1986 = vrot.lane.b32.xlu0 %v782, 112
        %v1987 = vpop.permute.xlu0 %1986
        %2004 = vmatpush.msra.mxu0 %v1987
        %2005 = vmatpush.msra.mxu0 %v1985
        %2006 = vmatpush.msra.mxu0 %v1983
        %2007 = vmatpush.msra.mxu0 %v1981
        %2008 = vmatpush.msra.mxu0 %v1979
        %2009 = vmatpush.msra.mxu0 %v1977
        %2010 = vmatpush.msra.mxu0 %v1975
        %2011 = vmatpush.msra.mxu0 %v1973
        %2012 = vmatpush.msra.mxu0 %v1971
        %2013 = vmatpush.msra.mxu0 %v1969
        %2014 = vmatpush.msra.mxu0 %v1967
        %2015 = vmatpush.msra.mxu0 %v1965
        %2016 = vmatpush.msra.mxu0 %v1963
        %2017 = vmatpush.msra.mxu0 %v1961
        %2018 = vmatpush.msra.mxu0 %v1959
        %2019 = vmatpush.msra.mxu0 %v1957
        %2020 = vmatmul.f32.gmra.mxu0 %v1908
        %v2021 = vpop.f32.mrf.mxu0
        %v2022 = vadd.f32 0.0, %v2021
        %2023 = vmatmul.f32.gmra.mxu0 %v1909
        %v2024 = vpop.f32.mrf.mxu0
        %v2025 = vadd.f32 0.0, %v2024
        %2026 = vmatmul.f32.gmra.mxu0 %v1910
        %v2027 = vpop.f32.mrf.mxu0
        %v2028 = vadd.f32 0.0, %v2027
        %2029 = vmatmul.f32.gmra.mxu0 %v1911
        %v2030 = vpop.f32.mrf.mxu0
        %v2031 = vadd.f32 0.0, %v2030
        %2032 = vmatmul.f32.gmra.mxu0 %v1912
        %v2033 = vpop.f32.mrf.mxu0
        %v2034 = vadd.f32 0.0, %v2033
        %2035 = vmatmul.f32.gmra.mxu0 %v1913
        %v2036 = vpop.f32.mrf.mxu0
        %v2037 = vadd.f32 0.0, %v2036
        %2038 = vmatmul.f32.gmra.mxu0 %v1914
        %v2039 = vpop.f32.mrf.mxu0
        %v2040 = vadd.f32 0.0, %v2039
        %2041 = vmatmul.f32.gmra.mxu0 %v1915
        %v2042 = vpop.f32.mrf.mxu0
        %v2043 = vadd.f32 0.0, %v2042
        %2044 = vmatmul.f32.gmra.mxu0 %v1916
        %v2045 = vpop.f32.mrf.mxu0
        %v2046 = vadd.f32 0.0, %v2045
        %2047 = vmatmul.f32.gmra.mxu0 %v1917
        %v2048 = vpop.f32.mrf.mxu0
        %v2049 = vadd.f32 0.0, %v2048
        %2050 = vmatmul.f32.gmra.mxu0 %v1918
        %v2051 = vpop.f32.mrf.mxu0
        %v2052 = vadd.f32 0.0, %v2051
        %2053 = vmatmul.f32.gmra.mxu0 %v1919
        %v2054 = vpop.f32.mrf.mxu0
        %v2055 = vadd.f32 0.0, %v2054
        %2056 = vmatmul.f32.gmra.mxu0 %v1920
        %v2057 = vpop.f32.mrf.mxu0
        %v2058 = vadd.f32 0.0, %v2057
        %2059 = vmatmul.f32.gmra.mxu0 %v1921
        %v2060 = vpop.f32.mrf.mxu0
        %v2061 = vadd.f32 0.0, %v2060
        %2062 = vmatmul.f32.gmra.mxu0 %v1922
        %v2063 = vpop.f32.mrf.mxu0
        %v2064 = vadd.f32 0.0, %v2063
        %2065 = vmatmul.f32.gmra.mxu0 %v1923
        %v2066 = vpop.f32.mrf.mxu0
        %v2067 = vadd.f32 0.0, %v2066
        %2068 = vdwg.mxu0
        %2069 = vrot.lane.b32.xlu0 %v598, 96
        %v2070 = vpop.permute.xlu0 %2069
        %2071 = vrot.lane.b32.xlu0 %v599, 96
        %v2072 = vpop.permute.xlu0 %2071
        %2073 = vrot.lane.b32.xlu0 %v600, 96
        %v2074 = vpop.permute.xlu0 %2073
        %2075 = vrot.lane.b32.xlu0 %v601, 96
        %v2076 = vpop.permute.xlu0 %2075
        %2077 = vrot.lane.b32.xlu0 %v602, 96
        %v2078 = vpop.permute.xlu0 %2077
        %2079 = vrot.lane.b32.xlu0 %v603, 96
        %v2080 = vpop.permute.xlu0 %2079
        %2081 = vrot.lane.b32.xlu0 %v604, 96
        %v2082 = vpop.permute.xlu0 %2081
        %2083 = vrot.lane.b32.xlu0 %v605, 96
        %v2084 = vpop.permute.xlu0 %2083
        %2085 = vrot.lane.b32.xlu0 %v606, 96
        %v2086 = vpop.permute.xlu0 %2085
        %2087 = vrot.lane.b32.xlu0 %v607, 96
        %v2088 = vpop.permute.xlu0 %2087
        %2089 = vrot.lane.b32.xlu0 %v608, 96
        %v2090 = vpop.permute.xlu0 %2089
        %2091 = vrot.lane.b32.xlu0 %v609, 96
        %v2092 = vpop.permute.xlu0 %2091
        %2093 = vrot.lane.b32.xlu0 %v610, 96
        %v2094 = vpop.permute.xlu0 %2093
        %2095 = vrot.lane.b32.xlu0 %v611, 96
        %v2096 = vpop.permute.xlu0 %2095
        %2097 = vrot.lane.b32.xlu0 %v612, 96
        %v2098 = vpop.permute.xlu0 %2097
        %2099 = vrot.lane.b32.xlu0 %v613, 96
        %v2100 = vpop.permute.xlu0 %2099
        %2101 = vrot.lane.b32.xlu0 %v652, 96
        %v2102 = vpop.permute.xlu0 %2101
        %2103 = vrot.lane.b32.xlu0 %v655, 96
        %v2104 = vpop.permute.xlu0 %2103
        %2105 = vrot.lane.b32.xlu0 %v658, 96
        %v2106 = vpop.permute.xlu0 %2105
        %2107 = vrot.lane.b32.xlu0 %v661, 96
        %v2108 = vpop.permute.xlu0 %2107
        %2109 = vrot.lane.b32.xlu0 %v664, 96
        %v2110 = vpop.permute.xlu0 %2109
        %2111 = vrot.lane.b32.xlu0 %v667, 96
        %v2112 = vpop.permute.xlu0 %2111
        %2113 = vrot.lane.b32.xlu0 %v670, 96
        %v2114 = vpop.permute.xlu0 %2113
        %2115 = vrot.lane.b32.xlu0 %v673, 96
        %v2116 = vpop.permute.xlu0 %2115
        %2117 = vrot.lane.b32.xlu0 %v676, 96
        %v2118 = vpop.permute.xlu0 %2117
        %2119 = vrot.lane.b32.xlu0 %v679, 96
        %v2120 = vpop.permute.xlu0 %2119
        %2121 = vrot.lane.b32.xlu0 %v682, 96
        %v2122 = vpop.permute.xlu0 %2121
        %2123 = vrot.lane.b32.xlu0 %v685, 96
        %v2124 = vpop.permute.xlu0 %2123
        %2125 = vrot.lane.b32.xlu0 %v688, 96
        %v2126 = vpop.permute.xlu0 %2125
        %2127 = vrot.lane.b32.xlu0 %v691, 96
        %v2128 = vpop.permute.xlu0 %2127
        %2129 = vrot.lane.b32.xlu0 %v694, 96
        %v2130 = vpop.permute.xlu0 %2129
        %2131 = vrot.lane.b32.xlu0 %v697, 96
        %v2132 = vpop.permute.xlu0 %2131
        %v2133 = vsel %vm784, %v2070, 0
        %v2135 = vsel %vm784, %v2072, 0
        %v2137 = vsel %vm784, %v2074, 0
        %v2139 = vsel %vm784, %v2076, 0
        %v2141 = vsel %vm784, %v2078, 0
        %v2143 = vsel %vm784, %v2080, 0
        %v2145 = vsel %vm784, %v2082, 0
        %v2147 = vsel %vm784, %v2084, 0
        %v2149 = vsel %vm784, %v2086, 0
        %v2151 = vsel %vm784, %v2088, 0
        %v2153 = vsel %vm784, %v2090, 0
        %v2155 = vsel %vm784, %v2092, 0
        %v2157 = vsel %vm784, %v2094, 0
        %v2159 = vsel %vm784, %v2096, 0
        %v2161 = vsel %vm784, %v2098, 0
        %v2163 = vsel %vm784, %v2100, 0
        %v2165 = vsel %vm784, %v2102, 0
        %v2167 = vsel %vm784, %v2104, 0
        %v2169 = vsel %vm784, %v2106, 0
        %v2171 = vsel %vm784, %v2108, 0
        %v2173 = vsel %vm784, %v2110, 0
        %v2175 = vsel %vm784, %v2112, 0
        %v2177 = vsel %vm784, %v2114, 0
        %v2179 = vsel %vm784, %v2116, 0
        %v2181 = vsel %vm784, %v2118, 0
        %v2183 = vsel %vm784, %v2120, 0
        %v2185 = vsel %vm784, %v2122, 0
        %v2187 = vsel %vm784, %v2124, 0
        %v2189 = vsel %vm784, %v2126, 0
        %v2191 = vsel %vm784, %v2128, 0
        %v2193 = vsel %vm784, %v2130, 0
        %v2195 = vsel %vm784, %v2132, 0
        %2197 = vmatpush.xpose.msra.mxu0 %v2195
        %2198 = vmatpush.xpose.msra.mxu0 %v2193
        %2199 = vmatpush.xpose.msra.mxu0 %v2191
        %2200 = vmatpush.xpose.msra.mxu0 %v2189
        %2201 = vmatpush.xpose.msra.mxu0 %v2187
        %2202 = vmatpush.xpose.msra.mxu0 %v2185
        %2203 = vmatpush.xpose.msra.mxu0 %v2183
        %2204 = vmatpush.xpose.msra.mxu0 %v2181
        %2205 = vmatpush.xpose.msra.mxu0 %v2179
        %2206 = vmatpush.xpose.msra.mxu0 %v2177
        %2207 = vmatpush.xpose.msra.mxu0 %v2175
        %2208 = vmatpush.xpose.msra.mxu0 %v2173
        %2209 = vmatpush.xpose.msra.mxu0 %v2171
        %2210 = vmatpush.xpose.msra.mxu0 %v2169
        %2211 = vmatpush.xpose.msra.mxu0 %v2167
        %2212 = vmatpush.xpose.msra.mxu0 %v2165
        %2213 = vmatmul.f32.gmra.mxu0 %v2133
        %v2214 = vpop.f32.mrf.mxu0
        %v2215 = vadd.f32 0.0, %v2214
        %2216 = vmatmul.f32.gmra.mxu0 %v2135
        %v2217 = vpop.f32.mrf.mxu0
        %v2218 = vadd.f32 0.0, %v2217
        %2219 = vmatmul.f32.gmra.mxu0 %v2137
        %v2220 = vpop.f32.mrf.mxu0
        %v2221 = vadd.f32 0.0, %v2220
        %2222 = vmatmul.f32.gmra.mxu0 %v2139
        %v2223 = vpop.f32.mrf.mxu0
        %v2224 = vadd.f32 0.0, %v2223
        %2225 = vmatmul.f32.gmra.mxu0 %v2141
        %v2226 = vpop.f32.mrf.mxu0
        %v2227 = vadd.f32 0.0, %v2226
        %2228 = vmatmul.f32.gmra.mxu0 %v2143
        %v2229 = vpop.f32.mrf.mxu0
        %v2230 = vadd.f32 0.0, %v2229
        %2231 = vmatmul.f32.gmra.mxu0 %v2145
        %v2232 = vpop.f32.mrf.mxu0
        %v2233 = vadd.f32 0.0, %v2232
        %2234 = vmatmul.f32.gmra.mxu0 %v2147
        %v2235 = vpop.f32.mrf.mxu0
        %v2236 = vadd.f32 0.0, %v2235
        %2237 = vmatmul.f32.gmra.mxu0 %v2149
        %v2238 = vpop.f32.mrf.mxu0
        %v2239 = vadd.f32 0.0, %v2238
        %2240 = vmatmul.f32.gmra.mxu0 %v2151
        %v2241 = vpop.f32.mrf.mxu0
        %v2242 = vadd.f32 0.0, %v2241
        %2243 = vmatmul.f32.gmra.mxu0 %v2153
        %v2244 = vpop.f32.mrf.mxu0
        %v2245 = vadd.f32 0.0, %v2244
        %2246 = vmatmul.f32.gmra.mxu0 %v2155
        %v2247 = vpop.f32.mrf.mxu0
        %v2248 = vadd.f32 0.0, %v2247
        %2249 = vmatmul.f32.gmra.mxu0 %v2157
        %v2250 = vpop.f32.mrf.mxu0
        %v2251 = vadd.f32 0.0, %v2250
        %2252 = vmatmul.f32.gmra.mxu0 %v2159
        %v2253 = vpop.f32.mrf.mxu0
        %v2254 = vadd.f32 0.0, %v2253
        %2255 = vmatmul.f32.gmra.mxu0 %v2161
        %v2256 = vpop.f32.mrf.mxu0
        %v2257 = vadd.f32 0.0, %v2256
        %2258 = vmatmul.f32.gmra.mxu0 %v2163
        %v2259 = vpop.f32.mrf.mxu0
        %v2260 = vadd.f32 0.0, %v2259
        %2261 = vdwg.mxu0
        %2262 = vmax.xlane.f32.xlu0 %v2215
        %v2263 = vpop.xlane.xlu0 %2262
        %2264 = vmax.xlane.f32.xlu0 %v2218
        %v2265 = vpop.xlane.xlu0 %2264
        %2266 = vmax.xlane.f32.xlu0 %v2221
        %v2267 = vpop.xlane.xlu0 %2266
        %2268 = vmax.xlane.f32.xlu0 %v2224
        %v2269 = vpop.xlane.xlu0 %2268
        %2270 = vmax.xlane.f32.xlu0 %v2227
        %v2271 = vpop.xlane.xlu0 %2270
        %2272 = vmax.xlane.f32.xlu0 %v2230
        %v2273 = vpop.xlane.xlu0 %2272
        %2274 = vmax.xlane.f32.xlu0 %v2233
        %v2275 = vpop.xlane.xlu0 %2274
        %2276 = vmax.xlane.f32.xlu0 %v2236
        %v2277 = vpop.xlane.xlu0 %2276
        %2278 = vmax.xlane.f32.xlu0 %v2239
        %v2279 = vpop.xlane.xlu0 %2278
        %2280 = vmax.xlane.f32.xlu0 %v2242
        %v2281 = vpop.xlane.xlu0 %2280
        %2282 = vmax.xlane.f32.xlu0 %v2245
        %v2283 = vpop.xlane.xlu0 %2282
        %2284 = vmax.xlane.f32.xlu0 %v2248
        %v2285 = vpop.xlane.xlu0 %2284
        %2286 = vmax.xlane.f32.xlu0 %v2251
        %v2287 = vpop.xlane.xlu0 %2286
        %2288 = vmax.xlane.f32.xlu0 %v2254
        %v2289 = vpop.xlane.xlu0 %2288
        %2290 = vmax.xlane.f32.xlu0 %v2257
        %v2291 = vpop.xlane.xlu0 %2290
        %2292 = vmax.xlane.f32.xlu0 %v2260
        %v2293 = vpop.xlane.xlu0 %2292
        %v2294 = vsub.f32 %v2215, %v2263
        %v2295 = vsub.f32 %v2218, %v2265
        %v2296 = vsub.f32 %v2221, %v2267
        %v2297 = vsub.f32 %v2224, %v2269
        %v2298 = vsub.f32 %v2227, %v2271
        %v2299 = vsub.f32 %v2230, %v2273
        %v2300 = vsub.f32 %v2233, %v2275
        %v2301 = vsub.f32 %v2236, %v2277
        %v2302 = vsub.f32 %v2239, %v2279
        %v2303 = vsub.f32 %v2242, %v2281
        %v2304 = vsub.f32 %v2245, %v2283
        %v2305 = vsub.f32 %v2248, %v2285
        %v2306 = vsub.f32 %v2251, %v2287
        %v2307 = vsub.f32 %v2254, %v2289
        %v2308 = vsub.f32 %v2257, %v2291
        %v2309 = vsub.f32 %v2260, %v2293
        %v2310 = vmul.f32 %v2294, 1.442695
        %v2311 = vpow.pop %v2310
        %v2312 = vmul.f32 %v2295, 1.442695
        %v2313 = vpow.pop %v2312
        %v2314 = vmul.f32 %v2296, 1.442695
        %v2315 = vpow.pop %v2314
        %v2316 = vmul.f32 %v2297, 1.442695
        %v2317 = vpow.pop %v2316
        %v2318 = vmul.f32 %v2298, 1.442695
        %v2319 = vpow.pop %v2318
        %v2320 = vmul.f32 %v2299, 1.442695
        %v2321 = vpow.pop %v2320
        %v2322 = vmul.f32 %v2300, 1.442695
        %v2323 = vpow.pop %v2322
        %v2324 = vmul.f32 %v2301, 1.442695
        %v2325 = vpow.pop %v2324
        %v2326 = vmul.f32 %v2302, 1.442695
        %v2327 = vpow.pop %v2326
        %v2328 = vmul.f32 %v2303, 1.442695
        %v2329 = vpow.pop %v2328
        %v2330 = vmul.f32 %v2304, 1.442695
        %v2331 = vpow.pop %v2330
        %v2332 = vmul.f32 %v2305, 1.442695
        %v2333 = vpow.pop %v2332
        %v2334 = vmul.f32 %v2306, 1.442695
        %v2335 = vpow.pop %v2334
        %v2336 = vmul.f32 %v2307, 1.442695
        %v2337 = vpow.pop %v2336
        %v2338 = vmul.f32 %v2308, 1.442695
        %v2339 = vpow.pop %v2338
        %v2340 = vmul.f32 %v2309, 1.442695
        %v2341 = vpow.pop %v2340
        %2342 = vadd.xlane.f32.xlu0 %v2311
        %v2343 = vpop.xlane.xlu0 %2342
        %2344 = vadd.xlane.f32.xlu0 %v2313
        %v2345 = vpop.xlane.xlu0 %2344
        %2346 = vadd.xlane.f32.xlu0 %v2315
        %v2347 = vpop.xlane.xlu0 %2346
        %2348 = vadd.xlane.f32.xlu0 %v2317
        %v2349 = vpop.xlane.xlu0 %2348
        %2350 = vadd.xlane.f32.xlu0 %v2319
        %v2351 = vpop.xlane.xlu0 %2350
        %2352 = vadd.xlane.f32.xlu0 %v2321
        %v2353 = vpop.xlane.xlu0 %2352
        %2354 = vadd.xlane.f32.xlu0 %v2323
        %v2355 = vpop.xlane.xlu0 %2354
        %2356 = vadd.xlane.f32.xlu0 %v2325
        %v2357 = vpop.xlane.xlu0 %2356
        %2358 = vadd.xlane.f32.xlu0 %v2327
        %v2359 = vpop.xlane.xlu0 %2358
        %2360 = vadd.xlane.f32.xlu0 %v2329
        %v2361 = vpop.xlane.xlu0 %2360
        %2362 = vadd.xlane.f32.xlu0 %v2331
        %v2363 = vpop.xlane.xlu0 %2362
        %2364 = vadd.xlane.f32.xlu0 %v2333
        %v2365 = vpop.xlane.xlu0 %2364
        %2366 = vadd.xlane.f32.xlu0 %v2335
        %v2367 = vpop.xlane.xlu0 %2366
        %2368 = vadd.xlane.f32.xlu0 %v2337
        %v2369 = vpop.xlane.xlu0 %2368
        %2370 = vadd.xlane.f32.xlu0 %v2339
        %v2371 = vpop.xlane.xlu0 %2370
        %2372 = vadd.xlane.f32.xlu0 %v2341
        %v2373 = vpop.xlane.xlu0 %2372
        %v2374 = vrcp.pop %v2343
        %v2375 = vmul.f32 %v2343, %v2374
        %v2376 = vsub.f32 1.0, %v2375
        %v2377 = vmul.f32 %v2374, %v2376
        %v2378 = vadd.f32 %v2374, %v2377
        %vm2379 = vweird.f32 %v2343
        %vm2380 = vweird.f32 %v2374
        %vm2381 = vmor %vm2379, %vm2380
        %v2382 = vsel %vm2381, %v2374, %v2378
        %v2383 = vand.u32 2147483647, %v2343
        %vm2384 = vcmp.eq.f32.partialorder %v2383, 8.507059e+37
        %v2385 = vand.u32 %v2343, 2147483648
        %v2386 = vor.u32 1.1754944e-38, %v2385
        %v2387 = vsel %vm2384, %v2386, %v2382
        %v2388 = vrcp.pop %v2345
        %v2389 = vmul.f32 %v2345, %v2388
        %v2390 = vsub.f32 1.0, %v2389
        %v2391 = vmul.f32 %v2388, %v2390
        %v2392 = vadd.f32 %v2388, %v2391
        %vm2393 = vweird.f32 %v2345
        %vm2394 = vweird.f32 %v2388
        %vm2395 = vmor %vm2393, %vm2394
        %v2396 = vsel %vm2395, %v2388, %v2392
        %v2397 = vand.u32 2147483647, %v2345
        %vm2398 = vcmp.eq.f32.partialorder %v2397, 8.507059e+37
        %v2399 = vand.u32 %v2345, 2147483648
        %v2400 = vor.u32 1.1754944e-38, %v2399
        %v2401 = vsel %vm2398, %v2400, %v2396
        %v2402 = vrcp.pop %v2347
        %v2403 = vmul.f32 %v2347, %v2402
        %v2404 = vsub.f32 1.0, %v2403
        %v2405 = vmul.f32 %v2402, %v2404
        %v2406 = vadd.f32 %v2402, %v2405
        %vm2407 = vweird.f32 %v2347
        %vm2408 = vweird.f32 %v2402
        %vm2409 = vmor %vm2407, %vm2408
        %v2410 = vsel %vm2409, %v2402, %v2406
        %v2411 = vand.u32 2147483647, %v2347
        %vm2412 = vcmp.eq.f32.partialorder %v2411, 8.507059e+37
        %v2413 = vand.u32 %v2347, 2147483648
        %v2414 = vor.u32 1.1754944e-38, %v2413
        %v2415 = vsel %vm2412, %v2414, %v2410
        %v2416 = vrcp.pop %v2349
        %v2417 = vmul.f32 %v2349, %v2416
        %v2418 = vsub.f32 1.0, %v2417
        %v2419 = vmul.f32 %v2416, %v2418
        %v2420 = vadd.f32 %v2416, %v2419
        %vm2421 = vweird.f32 %v2349
        %vm2422 = vweird.f32 %v2416
        %vm2423 = vmor %vm2421, %vm2422
        %v2424 = vsel %vm2423, %v2416, %v2420
        %v2425 = vand.u32 2147483647, %v2349
        %vm2426 = vcmp.eq.f32.partialorder %v2425, 8.507059e+37
        %v2427 = vand.u32 %v2349, 2147483648
        %v2428 = vor.u32 1.1754944e-38, %v2427
        %v2429 = vsel %vm2426, %v2428, %v2424
        %v2430 = vrcp.pop %v2351
        %v2431 = vmul.f32 %v2351, %v2430
        %v2432 = vsub.f32 1.0, %v2431
        %v2433 = vmul.f32 %v2430, %v2432
        %v2434 = vadd.f32 %v2430, %v2433
        %vm2435 = vweird.f32 %v2351
        %vm2436 = vweird.f32 %v2430
        %vm2437 = vmor %vm2435, %vm2436
        %v2438 = vsel %vm2437, %v2430, %v2434
        %v2439 = vand.u32 2147483647, %v2351
        %vm2440 = vcmp.eq.f32.partialorder %v2439, 8.507059e+37
        %v2441 = vand.u32 %v2351, 2147483648
        %v2442 = vor.u32 1.1754944e-38, %v2441
        %v2443 = vsel %vm2440, %v2442, %v2438
        %v2444 = vrcp.pop %v2353
        %v2445 = vmul.f32 %v2353, %v2444
        %v2446 = vsub.f32 1.0, %v2445
        %v2447 = vmul.f32 %v2444, %v2446
        %v2448 = vadd.f32 %v2444, %v2447
        %vm2449 = vweird.f32 %v2353
        %vm2450 = vweird.f32 %v2444
        %vm2451 = vmor %vm2449, %vm2450
        %v2452 = vsel %vm2451, %v2444, %v2448
        %v2453 = vand.u32 2147483647, %v2353
        %vm2454 = vcmp.eq.f32.partialorder %v2453, 8.507059e+37
        %v2455 = vand.u32 %v2353, 2147483648
        %v2456 = vor.u32 1.1754944e-38, %v2455
        %v2457 = vsel %vm2454, %v2456, %v2452
        %v2458 = vrcp.pop %v2355
        %v2459 = vmul.f32 %v2355, %v2458
        %v2460 = vsub.f32 1.0, %v2459
        %v2461 = vmul.f32 %v2458, %v2460
        %v2462 = vadd.f32 %v2458, %v2461
        %vm2463 = vweird.f32 %v2355
        %vm2464 = vweird.f32 %v2458
        %vm2465 = vmor %vm2463, %vm2464
        %v2466 = vsel %vm2465, %v2458, %v2462
        %v2467 = vand.u32 2147483647, %v2355
        %vm2468 = vcmp.eq.f32.partialorder %v2467, 8.507059e+37
        %v2469 = vand.u32 %v2355, 2147483648
        %v2470 = vor.u32 1.1754944e-38, %v2469
        %v2471 = vsel %vm2468, %v2470, %v2466
        %v2472 = vrcp.pop %v2357
        %v2473 = vmul.f32 %v2357, %v2472
        %v2474 = vsub.f32 1.0, %v2473
        %v2475 = vmul.f32 %v2472, %v2474
        %v2476 = vadd.f32 %v2472, %v2475
        %vm2477 = vweird.f32 %v2357
        %vm2478 = vweird.f32 %v2472
        %vm2479 = vmor %vm2477, %vm2478
        %v2480 = vsel %vm2479, %v2472, %v2476
        %v2481 = vand.u32 2147483647, %v2357
        %vm2482 = vcmp.eq.f32.partialorder %v2481, 8.507059e+37
        %v2483 = vand.u32 %v2357, 2147483648
        %v2484 = vor.u32 1.1754944e-38, %v2483
        %v2485 = vsel %vm2482, %v2484, %v2480
        %v2486 = vrcp.pop %v2359
        %v2487 = vmul.f32 %v2359, %v2486
        %v2488 = vsub.f32 1.0, %v2487
        %v2489 = vmul.f32 %v2486, %v2488
        %v2490 = vadd.f32 %v2486, %v2489
        %vm2491 = vweird.f32 %v2359
        %vm2492 = vweird.f32 %v2486
        %vm2493 = vmor %vm2491, %vm2492
        %v2494 = vsel %vm2493, %v2486, %v2490
        %v2495 = vand.u32 2147483647, %v2359
        %vm2496 = vcmp.eq.f32.partialorder %v2495, 8.507059e+37
        %v2497 = vand.u32 %v2359, 2147483648
        %v2498 = vor.u32 1.1754944e-38, %v2497
        %v2499 = vsel %vm2496, %v2498, %v2494
        %v2500 = vrcp.pop %v2361
        %v2501 = vmul.f32 %v2361, %v2500
        %v2502 = vsub.f32 1.0, %v2501
        %v2503 = vmul.f32 %v2500, %v2502
        %v2504 = vadd.f32 %v2500, %v2503
        %vm2505 = vweird.f32 %v2361
        %vm2506 = vweird.f32 %v2500
        %vm2507 = vmor %vm2505, %vm2506
        %v2508 = vsel %vm2507, %v2500, %v2504
        %v2509 = vand.u32 2147483647, %v2361
        %vm2510 = vcmp.eq.f32.partialorder %v2509, 8.507059e+37
        %v2511 = vand.u32 %v2361, 2147483648
        %v2512 = vor.u32 1.1754944e-38, %v2511
        %v2513 = vsel %vm2510, %v2512, %v2508
        %v2514 = vrcp.pop %v2363
        %v2515 = vmul.f32 %v2363, %v2514
        %v2516 = vsub.f32 1.0, %v2515
        %v2517 = vmul.f32 %v2514, %v2516
        %v2518 = vadd.f32 %v2514, %v2517
        %vm2519 = vweird.f32 %v2363
        %vm2520 = vweird.f32 %v2514
        %vm2521 = vmor %vm2519, %vm2520
        %v2522 = vsel %vm2521, %v2514, %v2518
        %v2523 = vand.u32 2147483647, %v2363
        %vm2524 = vcmp.eq.f32.partialorder %v2523, 8.507059e+37
        %v2525 = vand.u32 %v2363, 2147483648
        %v2526 = vor.u32 1.1754944e-38, %v2525
        %v2527 = vsel %vm2524, %v2526, %v2522
        %v2528 = vrcp.pop %v2365
        %v2529 = vmul.f32 %v2365, %v2528
        %v2530 = vsub.f32 1.0, %v2529
        %v2531 = vmul.f32 %v2528, %v2530
        %v2532 = vadd.f32 %v2528, %v2531
        %vm2533 = vweird.f32 %v2365
        %vm2534 = vweird.f32 %v2528
        %vm2535 = vmor %vm2533, %vm2534
        %v2536 = vsel %vm2535, %v2528, %v2532
        %v2537 = vand.u32 2147483647, %v2365
        %vm2538 = vcmp.eq.f32.partialorder %v2537, 8.507059e+37
        %v2539 = vand.u32 %v2365, 2147483648
        %v2540 = vor.u32 1.1754944e-38, %v2539
        %v2541 = vsel %vm2538, %v2540, %v2536
        %v2542 = vrcp.pop %v2367
        %v2543 = vmul.f32 %v2367, %v2542
        %v2544 = vsub.f32 1.0, %v2543
        %v2545 = vmul.f32 %v2542, %v2544
        %v2546 = vadd.f32 %v2542, %v2545
        %vm2547 = vweird.f32 %v2367
        %vm2548 = vweird.f32 %v2542
        %vm2549 = vmor %vm2547, %vm2548
        %v2550 = vsel %vm2549, %v2542, %v2546
        %v2551 = vand.u32 2147483647, %v2367
        %vm2552 = vcmp.eq.f32.partialorder %v2551, 8.507059e+37
        %v2553 = vand.u32 %v2367, 2147483648
        %v2554 = vor.u32 1.1754944e-38, %v2553
        %v2555 = vsel %vm2552, %v2554, %v2550
        %v2556 = vrcp.pop %v2369
        %v2557 = vmul.f32 %v2369, %v2556
        %v2558 = vsub.f32 1.0, %v2557
        %v2559 = vmul.f32 %v2556, %v2558
        %v2560 = vadd.f32 %v2556, %v2559
        %vm2561 = vweird.f32 %v2369
        %vm2562 = vweird.f32 %v2556
        %vm2563 = vmor %vm2561, %vm2562
        %v2564 = vsel %vm2563, %v2556, %v2560
        %v2565 = vand.u32 2147483647, %v2369
        %vm2566 = vcmp.eq.f32.partialorder %v2565, 8.507059e+37
        %v2567 = vand.u32 %v2369, 2147483648
        %v2568 = vor.u32 1.1754944e-38, %v2567
        %v2569 = vsel %vm2566, %v2568, %v2564
        %v2570 = vrcp.pop %v2371
        %v2571 = vmul.f32 %v2371, %v2570
        %v2572 = vsub.f32 1.0, %v2571
        %v2573 = vmul.f32 %v2570, %v2572
        %v2574 = vadd.f32 %v2570, %v2573
        %vm2575 = vweird.f32 %v2371
        %vm2576 = vweird.f32 %v2570
        %vm2577 = vmor %vm2575, %vm2576
        %v2578 = vsel %vm2577, %v2570, %v2574
        %v2579 = vand.u32 2147483647, %v2371
        %vm2580 = vcmp.eq.f32.partialorder %v2579, 8.507059e+37
        %v2581 = vand.u32 %v2371, 2147483648
        %v2582 = vor.u32 1.1754944e-38, %v2581
        %v2583 = vsel %vm2580, %v2582, %v2578
        %v2584 = vrcp.pop %v2373
        %v2585 = vmul.f32 %v2373, %v2584
        %v2586 = vsub.f32 1.0, %v2585
        %v2587 = vmul.f32 %v2584, %v2586
        %v2588 = vadd.f32 %v2584, %v2587
        %vm2589 = vweird.f32 %v2373
        %vm2590 = vweird.f32 %v2584
        %vm2591 = vmor %vm2589, %vm2590
        %v2592 = vsel %vm2591, %v2584, %v2588
        %v2593 = vand.u32 2147483647, %v2373
        %vm2594 = vcmp.eq.f32.partialorder %v2593, 8.507059e+37
        %v2595 = vand.u32 %v2373, 2147483648
        %v2596 = vor.u32 1.1754944e-38, %v2595
        %v2597 = vsel %vm2594, %v2596, %v2592
        %v2598 = vmul.f32 %v2311, %v2387
        %v2599 = vmul.f32 %v2313, %v2401
        %v2600 = vmul.f32 %v2315, %v2415
        %v2601 = vmul.f32 %v2317, %v2429
        %v2602 = vmul.f32 %v2319, %v2443
        %v2603 = vmul.f32 %v2321, %v2457
        %v2604 = vmul.f32 %v2323, %v2471
        %v2605 = vmul.f32 %v2325, %v2485
        %v2606 = vmul.f32 %v2327, %v2499
        %v2607 = vmul.f32 %v2329, %v2513
        %v2608 = vmul.f32 %v2331, %v2527
        %v2609 = vmul.f32 %v2333, %v2541
        %v2610 = vmul.f32 %v2335, %v2555
        %v2611 = vmul.f32 %v2337, %v2569
        %v2612 = vmul.f32 %v2339, %v2583
        %v2613 = vmul.f32 %v2341, %v2597
        %v2614 = vadd.f32 %v1924, %v2598
        %v2615 = vadd.f32 %v1925, %v2599
        %v2616 = vadd.f32 %v1926, %v2600
        %v2617 = vadd.f32 %v1927, %v2601
        %v2618 = vadd.f32 %v1928, %v2602
        %v2619 = vadd.f32 %v1929, %v2603
        %v2620 = vadd.f32 %v1930, %v2604
        %v2621 = vadd.f32 %v1931, %v2605
        %v2622 = vadd.f32 %v1932, %v2606
        %v2623 = vadd.f32 %v1933, %v2607
        %v2624 = vadd.f32 %v1934, %v2608
        %v2625 = vadd.f32 %v1935, %v2609
        %v2626 = vadd.f32 %v1936, %v2610
        %v2627 = vadd.f32 %v1937, %v2611
        %v2628 = vadd.f32 %v1938, %v2612
        %v2629 = vadd.f32 %v1939, %v2613
        %2630 = vrot.lane.b32.xlu0 %v737, 96
        %v2631 = vpop.permute.xlu0 %2630
        %2632 = vrot.lane.b32.xlu0 %v740, 96
        %v2633 = vpop.permute.xlu0 %2632
        %2634 = vrot.lane.b32.xlu0 %v743, 96
        %v2635 = vpop.permute.xlu0 %2634
        %2636 = vrot.lane.b32.xlu0 %v746, 96
        %v2637 = vpop.permute.xlu0 %2636
        %2638 = vrot.lane.b32.xlu0 %v749, 96
        %v2639 = vpop.permute.xlu0 %2638
        %2640 = vrot.lane.b32.xlu0 %v752, 96
        %v2641 = vpop.permute.xlu0 %2640
        %2642 = vrot.lane.b32.xlu0 %v755, 96
        %v2643 = vpop.permute.xlu0 %2642
        %2644 = vrot.lane.b32.xlu0 %v758, 96
        %v2645 = vpop.permute.xlu0 %2644
        %2646 = vrot.lane.b32.xlu0 %v761, 96
        %v2647 = vpop.permute.xlu0 %2646
        %2648 = vrot.lane.b32.xlu0 %v764, 96
        %v2649 = vpop.permute.xlu0 %2648
        %2650 = vrot.lane.b32.xlu0 %v767, 96
        %v2651 = vpop.permute.xlu0 %2650
        %2652 = vrot.lane.b32.xlu0 %v770, 96
        %v2653 = vpop.permute.xlu0 %2652
        %2654 = vrot.lane.b32.xlu0 %v773, 96
        %v2655 = vpop.permute.xlu0 %2654
        %2656 = vrot.lane.b32.xlu0 %v776, 96
        %v2657 = vpop.permute.xlu0 %2656
        %2658 = vrot.lane.b32.xlu0 %v779, 96
        %v2659 = vpop.permute.xlu0 %2658
        %2660 = vrot.lane.b32.xlu0 %v782, 96
        %v2661 = vpop.permute.xlu0 %2660
        %2678 = vmatpush.msra.mxu0 %v2661
        %2679 = vmatpush.msra.mxu0 %v2659
        %2680 = vmatpush.msra.mxu0 %v2657
        %2681 = vmatpush.msra.mxu0 %v2655
        %2682 = vmatpush.msra.mxu0 %v2653
        %2683 = vmatpush.msra.mxu0 %v2651
        %2684 = vmatpush.msra.mxu0 %v2649
        %2685 = vmatpush.msra.mxu0 %v2647
        %2686 = vmatpush.msra.mxu0 %v2645
        %2687 = vmatpush.msra.mxu0 %v2643
        %2688 = vmatpush.msra.mxu0 %v2641
        %2689 = vmatpush.msra.mxu0 %v2639
        %2690 = vmatpush.msra.mxu0 %v2637
        %2691 = vmatpush.msra.mxu0 %v2635
        %2692 = vmatpush.msra.mxu0 %v2633
        %2693 = vmatpush.msra.mxu0 %v2631
        %2694 = vmatmul.f32.gmra.mxu0 %v2598
        %v2695 = vpop.f32.mrf.mxu0
        %v2696 = vadd.f32 0.0, %v2695
        %2697 = vmatmul.f32.gmra.mxu0 %v2599
        %v2698 = vpop.f32.mrf.mxu0
        %v2699 = vadd.f32 0.0, %v2698
        %2700 = vmatmul.f32.gmra.mxu0 %v2600
        %v2701 = vpop.f32.mrf.mxu0
        %v2702 = vadd.f32 0.0, %v2701
        %2703 = vmatmul.f32.gmra.mxu0 %v2601
        %v2704 = vpop.f32.mrf.mxu0
        %v2705 = vadd.f32 0.0, %v2704
        %2706 = vmatmul.f32.gmra.mxu0 %v2602
        %v2707 = vpop.f32.mrf.mxu0
        %v2708 = vadd.f32 0.0, %v2707
        %2709 = vmatmul.f32.gmra.mxu0 %v2603
        %v2710 = vpop.f32.mrf.mxu0
        %v2711 = vadd.f32 0.0, %v2710
        %2712 = vmatmul.f32.gmra.mxu0 %v2604
        %v2713 = vpop.f32.mrf.mxu0
        %v2714 = vadd.f32 0.0, %v2713
        %2715 = vmatmul.f32.gmra.mxu0 %v2605
        %v2716 = vpop.f32.mrf.mxu0
        %v2717 = vadd.f32 0.0, %v2716
        %2718 = vmatmul.f32.gmra.mxu0 %v2606
        %v2719 = vpop.f32.mrf.mxu0
        %v2720 = vadd.f32 0.0, %v2719
        %2721 = vmatmul.f32.gmra.mxu0 %v2607
        %v2722 = vpop.f32.mrf.mxu0
        %v2723 = vadd.f32 0.0, %v2722
        %2724 = vmatmul.f32.gmra.mxu0 %v2608
        %v2725 = vpop.f32.mrf.mxu0
        %v2726 = vadd.f32 0.0, %v2725
        %2727 = vmatmul.f32.gmra.mxu0 %v2609
        %v2728 = vpop.f32.mrf.mxu0
        %v2729 = vadd.f32 0.0, %v2728
        %2730 = vmatmul.f32.gmra.mxu0 %v2610
        %v2731 = vpop.f32.mrf.mxu0
        %v2732 = vadd.f32 0.0, %v2731
        %2733 = vmatmul.f32.gmra.mxu0 %v2611
        %v2734 = vpop.f32.mrf.mxu0
        %v2735 = vadd.f32 0.0, %v2734
        %2736 = vmatmul.f32.gmra.mxu0 %v2612
        %v2737 = vpop.f32.mrf.mxu0
        %v2738 = vadd.f32 0.0, %v2737
        %2739 = vmatmul.f32.gmra.mxu0 %v2613
        %v2740 = vpop.f32.mrf.mxu0
        %v2741 = vadd.f32 0.0, %v2740
        %2742 = vdwg.mxu0
        %2743 = vrot.lane.b32.xlu0 %v598, 80
        %v2744 = vpop.permute.xlu0 %2743
        %2745 = vrot.lane.b32.xlu0 %v599, 80
        %v2746 = vpop.permute.xlu0 %2745
        %2747 = vrot.lane.b32.xlu0 %v600, 80
        %v2748 = vpop.permute.xlu0 %2747
        %2749 = vrot.lane.b32.xlu0 %v601, 80
        %v2750 = vpop.permute.xlu0 %2749
        %2751 = vrot.lane.b32.xlu0 %v602, 80
        %v2752 = vpop.permute.xlu0 %2751
        %2753 = vrot.lane.b32.xlu0 %v603, 80
        %v2754 = vpop.permute.xlu0 %2753
        %2755 = vrot.lane.b32.xlu0 %v604, 80
        %v2756 = vpop.permute.xlu0 %2755
        %2757 = vrot.lane.b32.xlu0 %v605, 80
        %v2758 = vpop.permute.xlu0 %2757
        %2759 = vrot.lane.b32.xlu0 %v606, 80
        %v2760 = vpop.permute.xlu0 %2759
        %2761 = vrot.lane.b32.xlu0 %v607, 80
        %v2762 = vpop.permute.xlu0 %2761
        %2763 = vrot.lane.b32.xlu0 %v608, 80
        %v2764 = vpop.permute.xlu0 %2763
        %2765 = vrot.lane.b32.xlu0 %v609, 80
        %v2766 = vpop.permute.xlu0 %2765
        %2767 = vrot.lane.b32.xlu0 %v610, 80
        %v2768 = vpop.permute.xlu0 %2767
        %2769 = vrot.lane.b32.xlu0 %v611, 80
        %v2770 = vpop.permute.xlu0 %2769
        %2771 = vrot.lane.b32.xlu0 %v612, 80
        %v2772 = vpop.permute.xlu0 %2771
        %2773 = vrot.lane.b32.xlu0 %v613, 80
        %v2774 = vpop.permute.xlu0 %2773
        %2775 = vrot.lane.b32.xlu0 %v652, 80
        %v2776 = vpop.permute.xlu0 %2775
        %2777 = vrot.lane.b32.xlu0 %v655, 80
        %v2778 = vpop.permute.xlu0 %2777
        %2779 = vrot.lane.b32.xlu0 %v658, 80
        %v2780 = vpop.permute.xlu0 %2779
        %2781 = vrot.lane.b32.xlu0 %v661, 80
        %v2782 = vpop.permute.xlu0 %2781
        %2783 = vrot.lane.b32.xlu0 %v664, 80
        %v2784 = vpop.permute.xlu0 %2783
        %2785 = vrot.lane.b32.xlu0 %v667, 80
        %v2786 = vpop.permute.xlu0 %2785
        %2787 = vrot.lane.b32.xlu0 %v670, 80
        %v2788 = vpop.permute.xlu0 %2787
        %2789 = vrot.lane.b32.xlu0 %v673, 80
        %v2790 = vpop.permute.xlu0 %2789
        %2791 = vrot.lane.b32.xlu0 %v676, 80
        %v2792 = vpop.permute.xlu0 %2791
        %2793 = vrot.lane.b32.xlu0 %v679, 80
        %v2794 = vpop.permute.xlu0 %2793
        %2795 = vrot.lane.b32.xlu0 %v682, 80
        %v2796 = vpop.permute.xlu0 %2795
        %2797 = vrot.lane.b32.xlu0 %v685, 80
        %v2798 = vpop.permute.xlu0 %2797
        %2799 = vrot.lane.b32.xlu0 %v688, 80
        %v2800 = vpop.permute.xlu0 %2799
        %2801 = vrot.lane.b32.xlu0 %v691, 80
        %v2802 = vpop.permute.xlu0 %2801
        %2803 = vrot.lane.b32.xlu0 %v694, 80
        %v2804 = vpop.permute.xlu0 %2803
        %2805 = vrot.lane.b32.xlu0 %v697, 80
        %v2806 = vpop.permute.xlu0 %2805
        %v2807 = vsel %vm784, %v2744, 0
        %v2809 = vsel %vm784, %v2746, 0
        %v2811 = vsel %vm784, %v2748, 0
        %v2813 = vsel %vm784, %v2750, 0
        %v2815 = vsel %vm784, %v2752, 0
        %v2817 = vsel %vm784, %v2754, 0
        %v2819 = vsel %vm784, %v2756, 0
        %v2821 = vsel %vm784, %v2758, 0
        %v2823 = vsel %vm784, %v2760, 0
        %v2825 = vsel %vm784, %v2762, 0
        %v2827 = vsel %vm784, %v2764, 0
        %v2829 = vsel %vm784, %v2766, 0
        %v2831 = vsel %vm784, %v2768, 0
        %v2833 = vsel %vm784, %v2770, 0
        %v2835 = vsel %vm784, %v2772, 0
        %v2837 = vsel %vm784, %v2774, 0
        %v2839 = vsel %vm784, %v2776, 0
        %v2841 = vsel %vm784, %v2778, 0
        %v2843 = vsel %vm784, %v2780, 0
        %v2845 = vsel %vm784, %v2782, 0
        %v2847 = vsel %vm784, %v2784, 0
        %v2849 = vsel %vm784, %v2786, 0
        %v2851 = vsel %vm784, %v2788, 0
        %v2853 = vsel %vm784, %v2790, 0
        %v2855 = vsel %vm784, %v2792, 0
        %v2857 = vsel %vm784, %v2794, 0
        %v2859 = vsel %vm784, %v2796, 0
        %v2861 = vsel %vm784, %v2798, 0
        %v2863 = vsel %vm784, %v2800, 0
        %v2865 = vsel %vm784, %v2802, 0
        %v2867 = vsel %vm784, %v2804, 0
        %v2869 = vsel %vm784, %v2806, 0
        %2871 = vmatpush.xpose.msra.mxu0 %v2869
        %2872 = vmatpush.xpose.msra.mxu0 %v2867
        %2873 = vmatpush.xpose.msra.mxu0 %v2865
        %2874 = vmatpush.xpose.msra.mxu0 %v2863
        %2875 = vmatpush.xpose.msra.mxu0 %v2861
        %2876 = vmatpush.xpose.msra.mxu0 %v2859
        %2877 = vmatpush.xpose.msra.mxu0 %v2857
        %2878 = vmatpush.xpose.msra.mxu0 %v2855
        %2879 = vmatpush.xpose.msra.mxu0 %v2853
        %2880 = vmatpush.xpose.msra.mxu0 %v2851
        %2881 = vmatpush.xpose.msra.mxu0 %v2849
        %2882 = vmatpush.xpose.msra.mxu0 %v2847
        %2883 = vmatpush.xpose.msra.mxu0 %v2845
        %2884 = vmatpush.xpose.msra.mxu0 %v2843
        %2885 = vmatpush.xpose.msra.mxu0 %v2841
        %2886 = vmatpush.xpose.msra.mxu0 %v2839
        %2887 = vmatmul.f32.gmra.mxu0 %v2807
        %v2888 = vpop.f32.mrf.mxu0
        %v2889 = vadd.f32 0.0, %v2888
        %2890 = vmatmul.f32.gmra.mxu0 %v2809
        %v2891 = vpop.f32.mrf.mxu0
        %v2892 = vadd.f32 0.0, %v2891
        %2893 = vmatmul.f32.gmra.mxu0 %v2811
        %v2894 = vpop.f32.mrf.mxu0
        %v2895 = vadd.f32 0.0, %v2894
        %2896 = vmatmul.f32.gmra.mxu0 %v2813
        %v2897 = vpop.f32.mrf.mxu0
        %v2898 = vadd.f32 0.0, %v2897
        %2899 = vmatmul.f32.gmra.mxu0 %v2815
        %v2900 = vpop.f32.mrf.mxu0
        %v2901 = vadd.f32 0.0, %v2900
        %2902 = vmatmul.f32.gmra.mxu0 %v2817
        %v2903 = vpop.f32.mrf.mxu0
        %v2904 = vadd.f32 0.0, %v2903
        %2905 = vmatmul.f32.gmra.mxu0 %v2819
        %v2906 = vpop.f32.mrf.mxu0
        %v2907 = vadd.f32 0.0, %v2906
        %2908 = vmatmul.f32.gmra.mxu0 %v2821
        %v2909 = vpop.f32.mrf.mxu0
        %v2910 = vadd.f32 0.0, %v2909
        %2911 = vmatmul.f32.gmra.mxu0 %v2823
        %v2912 = vpop.f32.mrf.mxu0
        %v2913 = vadd.f32 0.0, %v2912
        %2914 = vmatmul.f32.gmra.mxu0 %v2825
        %v2915 = vpop.f32.mrf.mxu0
        %v2916 = vadd.f32 0.0, %v2915
        %2917 = vmatmul.f32.gmra.mxu0 %v2827
        %v2918 = vpop.f32.mrf.mxu0
        %v2919 = vadd.f32 0.0, %v2918
        %2920 = vmatmul.f32.gmra.mxu0 %v2829
        %v2921 = vpop.f32.mrf.mxu0
        %v2922 = vadd.f32 0.0, %v2921
        %2923 = vmatmul.f32.gmra.mxu0 %v2831
        %v2924 = vpop.f32.mrf.mxu0
        %v2925 = vadd.f32 0.0, %v2924
        %2926 = vmatmul.f32.gmra.mxu0 %v2833
        %v2927 = vpop.f32.mrf.mxu0
        %v2928 = vadd.f32 0.0, %v2927
        %2929 = vmatmul.f32.gmra.mxu0 %v2835
        %v2930 = vpop.f32.mrf.mxu0
        %v2931 = vadd.f32 0.0, %v2930
        %2932 = vmatmul.f32.gmra.mxu0 %v2837
        %v2933 = vpop.f32.mrf.mxu0
        %v2934 = vadd.f32 0.0, %v2933
        %2935 = vdwg.mxu0
        %2936 = vmax.xlane.f32.xlu0 %v2889
        %v2937 = vpop.xlane.xlu0 %2936
        %2938 = vmax.xlane.f32.xlu0 %v2892
        %v2939 = vpop.xlane.xlu0 %2938
        %2940 = vmax.xlane.f32.xlu0 %v2895
        %v2941 = vpop.xlane.xlu0 %2940
        %2942 = vmax.xlane.f32.xlu0 %v2898
        %v2943 = vpop.xlane.xlu0 %2942
        %2944 = vmax.xlane.f32.xlu0 %v2901
        %v2945 = vpop.xlane.xlu0 %2944
        %2946 = vmax.xlane.f32.xlu0 %v2904
        %v2947 = vpop.xlane.xlu0 %2946
        %2948 = vmax.xlane.f32.xlu0 %v2907
        %v2949 = vpop.xlane.xlu0 %2948
        %2950 = vmax.xlane.f32.xlu0 %v2910
        %v2951 = vpop.xlane.xlu0 %2950
        %2952 = vmax.xlane.f32.xlu0 %v2913
        %v2953 = vpop.xlane.xlu0 %2952
        %2954 = vmax.xlane.f32.xlu0 %v2916
        %v2955 = vpop.xlane.xlu0 %2954
        %2956 = vmax.xlane.f32.xlu0 %v2919
        %v2957 = vpop.xlane.xlu0 %2956
        %2958 = vmax.xlane.f32.xlu0 %v2922
        %v2959 = vpop.xlane.xlu0 %2958
        %2960 = vmax.xlane.f32.xlu0 %v2925
        %v2961 = vpop.xlane.xlu0 %2960
        %2962 = vmax.xlane.f32.xlu0 %v2928
        %v2963 = vpop.xlane.xlu0 %2962
        %2964 = vmax.xlane.f32.xlu0 %v2931
        %v2965 = vpop.xlane.xlu0 %2964
        %2966 = vmax.xlane.f32.xlu0 %v2934
        %v2967 = vpop.xlane.xlu0 %2966
        %v2968 = vsub.f32 %v2889, %v2937
        %v2969 = vsub.f32 %v2892, %v2939
        %v2970 = vsub.f32 %v2895, %v2941
        %v2971 = vsub.f32 %v2898, %v2943
        %v2972 = vsub.f32 %v2901, %v2945
        %v2973 = vsub.f32 %v2904, %v2947
        %v2974 = vsub.f32 %v2907, %v2949
        %v2975 = vsub.f32 %v2910, %v2951
        %v2976 = vsub.f32 %v2913, %v2953
        %v2977 = vsub.f32 %v2916, %v2955
        %v2978 = vsub.f32 %v2919, %v2957
        %v2979 = vsub.f32 %v2922, %v2959
        %v2980 = vsub.f32 %v2925, %v2961
        %v2981 = vsub.f32 %v2928, %v2963
        %v2982 = vsub.f32 %v2931, %v2965
        %v2983 = vsub.f32 %v2934, %v2967
        %v2984 = vmul.f32 %v2968, 1.442695
        %v2985 = vpow.pop %v2984
        %v2986 = vmul.f32 %v2969, 1.442695
        %v2987 = vpow.pop %v2986
        %v2988 = vmul.f32 %v2970, 1.442695
        %v2989 = vpow.pop %v2988
        %v2990 = vmul.f32 %v2971, 1.442695
        %v2991 = vpow.pop %v2990
        %v2992 = vmul.f32 %v2972, 1.442695
        %v2993 = vpow.pop %v2992
        %v2994 = vmul.f32 %v2973, 1.442695
        %v2995 = vpow.pop %v2994
        %v2996 = vmul.f32 %v2974, 1.442695
        %v2997 = vpow.pop %v2996
        %v2998 = vmul.f32 %v2975, 1.442695
        %v2999 = vpow.pop %v2998
        %v3000 = vmul.f32 %v2976, 1.442695
        %v3001 = vpow.pop %v3000
        %v3002 = vmul.f32 %v2977, 1.442695
        %v3003 = vpow.pop %v3002
        %v3004 = vmul.f32 %v2978, 1.442695
        %v3005 = vpow.pop %v3004
        %v3006 = vmul.f32 %v2979, 1.442695
        %v3007 = vpow.pop %v3006
        %v3008 = vmul.f32 %v2980, 1.442695
        %v3009 = vpow.pop %v3008
        %v3010 = vmul.f32 %v2981, 1.442695
        %v3011 = vpow.pop %v3010
        %v3012 = vmul.f32 %v2982, 1.442695
        %v3013 = vpow.pop %v3012
        %v3014 = vmul.f32 %v2983, 1.442695
        %v3015 = vpow.pop %v3014
        %3016 = vadd.xlane.f32.xlu0 %v2985
        %v3017 = vpop.xlane.xlu0 %3016
        %3018 = vadd.xlane.f32.xlu0 %v2987
        %v3019 = vpop.xlane.xlu0 %3018
        %3020 = vadd.xlane.f32.xlu0 %v2989
        %v3021 = vpop.xlane.xlu0 %3020
        %3022 = vadd.xlane.f32.xlu0 %v2991
        %v3023 = vpop.xlane.xlu0 %3022
        %3024 = vadd.xlane.f32.xlu0 %v2993
        %v3025 = vpop.xlane.xlu0 %3024
        %3026 = vadd.xlane.f32.xlu0 %v2995
        %v3027 = vpop.xlane.xlu0 %3026
        %3028 = vadd.xlane.f32.xlu0 %v2997
        %v3029 = vpop.xlane.xlu0 %3028
        %3030 = vadd.xlane.f32.xlu0 %v2999
        %v3031 = vpop.xlane.xlu0 %3030
        %3032 = vadd.xlane.f32.xlu0 %v3001
        %v3033 = vpop.xlane.xlu0 %3032
        %3034 = vadd.xlane.f32.xlu0 %v3003
        %v3035 = vpop.xlane.xlu0 %3034
        %3036 = vadd.xlane.f32.xlu0 %v3005
        %v3037 = vpop.xlane.xlu0 %3036
        %3038 = vadd.xlane.f32.xlu0 %v3007
        %v3039 = vpop.xlane.xlu0 %3038
        %3040 = vadd.xlane.f32.xlu0 %v3009
        %v3041 = vpop.xlane.xlu0 %3040
        %3042 = vadd.xlane.f32.xlu0 %v3011
        %v3043 = vpop.xlane.xlu0 %3042
        %3044 = vadd.xlane.f32.xlu0 %v3013
        %v3045 = vpop.xlane.xlu0 %3044
        %3046 = vadd.xlane.f32.xlu0 %v3015
        %v3047 = vpop.xlane.xlu0 %3046
        %v3048 = vrcp.pop %v3017
        %v3049 = vmul.f32 %v3017, %v3048
        %v3050 = vsub.f32 1.0, %v3049
        %v3051 = vmul.f32 %v3048, %v3050
        %v3052 = vadd.f32 %v3048, %v3051
        %vm3053 = vweird.f32 %v3017
        %vm3054 = vweird.f32 %v3048
        %vm3055 = vmor %vm3053, %vm3054
        %v3056 = vsel %vm3055, %v3048, %v3052
        %v3057 = vand.u32 2147483647, %v3017
        %vm3058 = vcmp.eq.f32.partialorder %v3057, 8.507059e+37
        %v3059 = vand.u32 %v3017, 2147483648
        %v3060 = vor.u32 1.1754944e-38, %v3059
        %v3061 = vsel %vm3058, %v3060, %v3056
        %v3062 = vrcp.pop %v3019
        %v3063 = vmul.f32 %v3019, %v3062
        %v3064 = vsub.f32 1.0, %v3063
        %v3065 = vmul.f32 %v3062, %v3064
        %v3066 = vadd.f32 %v3062, %v3065
        %vm3067 = vweird.f32 %v3019
        %vm3068 = vweird.f32 %v3062
        %vm3069 = vmor %vm3067, %vm3068
        %v3070 = vsel %vm3069, %v3062, %v3066
        %v3071 = vand.u32 2147483647, %v3019
        %vm3072 = vcmp.eq.f32.partialorder %v3071, 8.507059e+37
        %v3073 = vand.u32 %v3019, 2147483648
        %v3074 = vor.u32 1.1754944e-38, %v3073
        %v3075 = vsel %vm3072, %v3074, %v3070
        %v3076 = vrcp.pop %v3021
        %v3077 = vmul.f32 %v3021, %v3076
        %v3078 = vsub.f32 1.0, %v3077
        %v3079 = vmul.f32 %v3076, %v3078
        %v3080 = vadd.f32 %v3076, %v3079
        %vm3081 = vweird.f32 %v3021
        %vm3082 = vweird.f32 %v3076
        %vm3083 = vmor %vm3081, %vm3082
        %v3084 = vsel %vm3083, %v3076, %v3080
        %v3085 = vand.u32 2147483647, %v3021
        %vm3086 = vcmp.eq.f32.partialorder %v3085, 8.507059e+37
        %v3087 = vand.u32 %v3021, 2147483648
        %v3088 = vor.u32 1.1754944e-38, %v3087
        %v3089 = vsel %vm3086, %v3088, %v3084
        %v3090 = vrcp.pop %v3023
        %v3091 = vmul.f32 %v3023, %v3090
        %v3092 = vsub.f32 1.0, %v3091
        %v3093 = vmul.f32 %v3090, %v3092
        %v3094 = vadd.f32 %v3090, %v3093
        %vm3095 = vweird.f32 %v3023
        %vm3096 = vweird.f32 %v3090
        %vm3097 = vmor %vm3095, %vm3096
        %v3098 = vsel %vm3097, %v3090, %v3094
        %v3099 = vand.u32 2147483647, %v3023
        %vm3100 = vcmp.eq.f32.partialorder %v3099, 8.507059e+37
        %v3101 = vand.u32 %v3023, 2147483648
        %v3102 = vor.u32 1.1754944e-38, %v3101
        %v3103 = vsel %vm3100, %v3102, %v3098
        %v3104 = vrcp.pop %v3025
        %v3105 = vmul.f32 %v3025, %v3104
        %v3106 = vsub.f32 1.0, %v3105
        %v3107 = vmul.f32 %v3104, %v3106
        %v3108 = vadd.f32 %v3104, %v3107
        %vm3109 = vweird.f32 %v3025
        %vm3110 = vweird.f32 %v3104
        %vm3111 = vmor %vm3109, %vm3110
        %v3112 = vsel %vm3111, %v3104, %v3108
        %v3113 = vand.u32 2147483647, %v3025
        %vm3114 = vcmp.eq.f32.partialorder %v3113, 8.507059e+37
        %v3115 = vand.u32 %v3025, 2147483648
        %v3116 = vor.u32 1.1754944e-38, %v3115
        %v3117 = vsel %vm3114, %v3116, %v3112
        %v3118 = vrcp.pop %v3027
        %v3119 = vmul.f32 %v3027, %v3118
        %v3120 = vsub.f32 1.0, %v3119
        %v3121 = vmul.f32 %v3118, %v3120
        %v3122 = vadd.f32 %v3118, %v3121
        %vm3123 = vweird.f32 %v3027
        %vm3124 = vweird.f32 %v3118
        %vm3125 = vmor %vm3123, %vm3124
        %v3126 = vsel %vm3125, %v3118, %v3122
        %v3127 = vand.u32 2147483647, %v3027
        %vm3128 = vcmp.eq.f32.partialorder %v3127, 8.507059e+37
        %v3129 = vand.u32 %v3027, 2147483648
        %v3130 = vor.u32 1.1754944e-38, %v3129
        %v3131 = vsel %vm3128, %v3130, %v3126
        %v3132 = vrcp.pop %v3029
        %v3133 = vmul.f32 %v3029, %v3132
        %v3134 = vsub.f32 1.0, %v3133
        %v3135 = vmul.f32 %v3132, %v3134
        %v3136 = vadd.f32 %v3132, %v3135
        %vm3137 = vweird.f32 %v3029
        %vm3138 = vweird.f32 %v3132
        %vm3139 = vmor %vm3137, %vm3138
        %v3140 = vsel %vm3139, %v3132, %v3136
        %v3141 = vand.u32 2147483647, %v3029
        %vm3142 = vcmp.eq.f32.partialorder %v3141, 8.507059e+37
        %v3143 = vand.u32 %v3029, 2147483648
        %v3144 = vor.u32 1.1754944e-38, %v3143
        %v3145 = vsel %vm3142, %v3144, %v3140
        %v3146 = vrcp.pop %v3031
        %v3147 = vmul.f32 %v3031, %v3146
        %v3148 = vsub.f32 1.0, %v3147
        %v3149 = vmul.f32 %v3146, %v3148
        %v3150 = vadd.f32 %v3146, %v3149
        %vm3151 = vweird.f32 %v3031
        %vm3152 = vweird.f32 %v3146
        %vm3153 = vmor %vm3151, %vm3152
        %v3154 = vsel %vm3153, %v3146, %v3150
        %v3155 = vand.u32 2147483647, %v3031
        %vm3156 = vcmp.eq.f32.partialorder %v3155, 8.507059e+37
        %v3157 = vand.u32 %v3031, 2147483648
        %v3158 = vor.u32 1.1754944e-38, %v3157
        %v3159 = vsel %vm3156, %v3158, %v3154
        %v3160 = vrcp.pop %v3033
        %v3161 = vmul.f32 %v3033, %v3160
        %v3162 = vsub.f32 1.0, %v3161
        %v3163 = vmul.f32 %v3160, %v3162
        %v3164 = vadd.f32 %v3160, %v3163
        %vm3165 = vweird.f32 %v3033
        %vm3166 = vweird.f32 %v3160
        %vm3167 = vmor %vm3165, %vm3166
        %v3168 = vsel %vm3167, %v3160, %v3164
        %v3169 = vand.u32 2147483647, %v3033
        %vm3170 = vcmp.eq.f32.partialorder %v3169, 8.507059e+37
        %v3171 = vand.u32 %v3033, 2147483648
        %v3172 = vor.u32 1.1754944e-38, %v3171
        %v3173 = vsel %vm3170, %v3172, %v3168
        %v3174 = vrcp.pop %v3035
        %v3175 = vmul.f32 %v3035, %v3174
        %v3176 = vsub.f32 1.0, %v3175
        %v3177 = vmul.f32 %v3174, %v3176
        %v3178 = vadd.f32 %v3174, %v3177
        %vm3179 = vweird.f32 %v3035
        %vm3180 = vweird.f32 %v3174
        %vm3181 = vmor %vm3179, %vm3180
        %v3182 = vsel %vm3181, %v3174, %v3178
        %v3183 = vand.u32 2147483647, %v3035
        %vm3184 = vcmp.eq.f32.partialorder %v3183, 8.507059e+37
        %v3185 = vand.u32 %v3035, 2147483648
        %v3186 = vor.u32 1.1754944e-38, %v3185
        %v3187 = vsel %vm3184, %v3186, %v3182
        %v3188 = vrcp.pop %v3037
        %v3189 = vmul.f32 %v3037, %v3188
        %v3190 = vsub.f32 1.0, %v3189
        %v3191 = vmul.f32 %v3188, %v3190
        %v3192 = vadd.f32 %v3188, %v3191
        %vm3193 = vweird.f32 %v3037
        %vm3194 = vweird.f32 %v3188
        %vm3195 = vmor %vm3193, %vm3194
        %v3196 = vsel %vm3195, %v3188, %v3192
        %v3197 = vand.u32 2147483647, %v3037
        %vm3198 = vcmp.eq.f32.partialorder %v3197, 8.507059e+37
        %v3199 = vand.u32 %v3037, 2147483648
        %v3200 = vor.u32 1.1754944e-38, %v3199
        %v3201 = vsel %vm3198, %v3200, %v3196
        %v3202 = vrcp.pop %v3039
        %v3203 = vmul.f32 %v3039, %v3202
        %v3204 = vsub.f32 1.0, %v3203
        %v3205 = vmul.f32 %v3202, %v3204
        %v3206 = vadd.f32 %v3202, %v3205
        %vm3207 = vweird.f32 %v3039
        %vm3208 = vweird.f32 %v3202
        %vm3209 = vmor %vm3207, %vm3208
        %v3210 = vsel %vm3209, %v3202, %v3206
        %v3211 = vand.u32 2147483647, %v3039
        %vm3212 = vcmp.eq.f32.partialorder %v3211, 8.507059e+37
        %v3213 = vand.u32 %v3039, 2147483648
        %v3214 = vor.u32 1.1754944e-38, %v3213
        %v3215 = vsel %vm3212, %v3214, %v3210
        %v3216 = vrcp.pop %v3041
        %v3217 = vmul.f32 %v3041, %v3216
        %v3218 = vsub.f32 1.0, %v3217
        %v3219 = vmul.f32 %v3216, %v3218
        %v3220 = vadd.f32 %v3216, %v3219
        %vm3221 = vweird.f32 %v3041
        %vm3222 = vweird.f32 %v3216
        %vm3223 = vmor %vm3221, %vm3222
        %v3224 = vsel %vm3223, %v3216, %v3220
        %v3225 = vand.u32 2147483647, %v3041
        %vm3226 = vcmp.eq.f32.partialorder %v3225, 8.507059e+37
        %v3227 = vand.u32 %v3041, 2147483648
        %v3228 = vor.u32 1.1754944e-38, %v3227
        %v3229 = vsel %vm3226, %v3228, %v3224
        %v3230 = vrcp.pop %v3043
        %v3231 = vmul.f32 %v3043, %v3230
        %v3232 = vsub.f32 1.0, %v3231
        %v3233 = vmul.f32 %v3230, %v3232
        %v3234 = vadd.f32 %v3230, %v3233
        %vm3235 = vweird.f32 %v3043
        %vm3236 = vweird.f32 %v3230
        %vm3237 = vmor %vm3235, %vm3236
        %v3238 = vsel %vm3237, %v3230, %v3234
        %v3239 = vand.u32 2147483647, %v3043
        %vm3240 = vcmp.eq.f32.partialorder %v3239, 8.507059e+37
        %v3241 = vand.u32 %v3043, 2147483648
        %v3242 = vor.u32 1.1754944e-38, %v3241
        %v3243 = vsel %vm3240, %v3242, %v3238
        %v3244 = vrcp.pop %v3045
        %v3245 = vmul.f32 %v3045, %v3244
        %v3246 = vsub.f32 1.0, %v3245
        %v3247 = vmul.f32 %v3244, %v3246
        %v3248 = vadd.f32 %v3244, %v3247
        %vm3249 = vweird.f32 %v3045
        %vm3250 = vweird.f32 %v3244
        %vm3251 = vmor %vm3249, %vm3250
        %v3252 = vsel %vm3251, %v3244, %v3248
        %v3253 = vand.u32 2147483647, %v3045
        %vm3254 = vcmp.eq.f32.partialorder %v3253, 8.507059e+37
        %v3255 = vand.u32 %v3045, 2147483648
        %v3256 = vor.u32 1.1754944e-38, %v3255
        %v3257 = vsel %vm3254, %v3256, %v3252
        %v3258 = vrcp.pop %v3047
        %v3259 = vmul.f32 %v3047, %v3258
        %v3260 = vsub.f32 1.0, %v3259
        %v3261 = vmul.f32 %v3258, %v3260
        %v3262 = vadd.f32 %v3258, %v3261
        %vm3263 = vweird.f32 %v3047
        %vm3264 = vweird.f32 %v3258
        %vm3265 = vmor %vm3263, %vm3264
        %v3266 = vsel %vm3265, %v3258, %v3262
        %v3267 = vand.u32 2147483647, %v3047
        %vm3268 = vcmp.eq.f32.partialorder %v3267, 8.507059e+37
        %v3269 = vand.u32 %v3047, 2147483648
        %v3270 = vor.u32 1.1754944e-38, %v3269
        %v3271 = vsel %vm3268, %v3270, %v3266
        %v3272 = vmul.f32 %v2985, %v3061
        %v3273 = vmul.f32 %v2987, %v3075
        %v3274 = vmul.f32 %v2989, %v3089
        %v3275 = vmul.f32 %v2991, %v3103
        %v3276 = vmul.f32 %v2993, %v3117
        %v3277 = vmul.f32 %v2995, %v3131
        %v3278 = vmul.f32 %v2997, %v3145
        %v3279 = vmul.f32 %v2999, %v3159
        %v3280 = vmul.f32 %v3001, %v3173
        %v3281 = vmul.f32 %v3003, %v3187
        %v3282 = vmul.f32 %v3005, %v3201
        %v3283 = vmul.f32 %v3007, %v3215
        %v3284 = vmul.f32 %v3009, %v3229
        %v3285 = vmul.f32 %v3011, %v3243
        %v3286 = vmul.f32 %v3013, %v3257
        %v3287 = vmul.f32 %v3015, %v3271
        %v3288 = vadd.f32 %v2614, %v3272
        %v3289 = vadd.f32 %v2615, %v3273
        %v3290 = vadd.f32 %v2616, %v3274
        %v3291 = vadd.f32 %v2617, %v3275
        %v3292 = vadd.f32 %v2618, %v3276
        %v3293 = vadd.f32 %v2619, %v3277
        %v3294 = vadd.f32 %v2620, %v3278
        %v3295 = vadd.f32 %v2621, %v3279
        %v3296 = vadd.f32 %v2622, %v3280
        %v3297 = vadd.f32 %v2623, %v3281
        %v3298 = vadd.f32 %v2624, %v3282
        %v3299 = vadd.f32 %v2625, %v3283
        %v3300 = vadd.f32 %v2626, %v3284
        %v3301 = vadd.f32 %v2627, %v3285
        %v3302 = vadd.f32 %v2628, %v3286
        %v3303 = vadd.f32 %v2629, %v3287
        %3304 = vrot.lane.b32.xlu0 %v737, 80
        %v3305 = vpop.permute.xlu0 %3304
        %3306 = vrot.lane.b32.xlu0 %v740, 80
        %v3307 = vpop.permute.xlu0 %3306
        %3308 = vrot.lane.b32.xlu0 %v743, 80
        %v3309 = vpop.permute.xlu0 %3308
        %3310 = vrot.lane.b32.xlu0 %v746, 80
        %v3311 = vpop.permute.xlu0 %3310
        %3312 = vrot.lane.b32.xlu0 %v749, 80
        %v3313 = vpop.permute.xlu0 %3312
        %3314 = vrot.lane.b32.xlu0 %v752, 80
        %v3315 = vpop.permute.xlu0 %3314
        %3316 = vrot.lane.b32.xlu0 %v755, 80
        %v3317 = vpop.permute.xlu0 %3316
        %3318 = vrot.lane.b32.xlu0 %v758, 80
        %v3319 = vpop.permute.xlu0 %3318
        %3320 = vrot.lane.b32.xlu0 %v761, 80
        %v3321 = vpop.permute.xlu0 %3320
        %3322 = vrot.lane.b32.xlu0 %v764, 80
        %v3323 = vpop.permute.xlu0 %3322
        %3324 = vrot.lane.b32.xlu0 %v767, 80
        %v3325 = vpop.permute.xlu0 %3324
        %3326 = vrot.lane.b32.xlu0 %v770, 80
        %v3327 = vpop.permute.xlu0 %3326
        %3328 = vrot.lane.b32.xlu0 %v773, 80
        %v3329 = vpop.permute.xlu0 %3328
        %3330 = vrot.lane.b32.xlu0 %v776, 80
        %v3331 = vpop.permute.xlu0 %3330
        %3332 = vrot.lane.b32.xlu0 %v779, 80
        %v3333 = vpop.permute.xlu0 %3332
        %3334 = vrot.lane.b32.xlu0 %v782, 80
        %v3335 = vpop.permute.xlu0 %3334
        %3352 = vmatpush.msra.mxu0 %v3335
        %3353 = vmatpush.msra.mxu0 %v3333
        %3354 = vmatpush.msra.mxu0 %v3331
        %3355 = vmatpush.msra.mxu0 %v3329
        %3356 = vmatpush.msra.mxu0 %v3327
        %3357 = vmatpush.msra.mxu0 %v3325
        %3358 = vmatpush.msra.mxu0 %v3323
        %3359 = vmatpush.msra.mxu0 %v3321
        %3360 = vmatpush.msra.mxu0 %v3319
        %3361 = vmatpush.msra.mxu0 %v3317
        %3362 = vmatpush.msra.mxu0 %v3315
        %3363 = vmatpush.msra.mxu0 %v3313
        %3364 = vmatpush.msra.mxu0 %v3311
        %3365 = vmatpush.msra.mxu0 %v3309
        %3366 = vmatpush.msra.mxu0 %v3307
        %3367 = vmatpush.msra.mxu0 %v3305
        %3368 = vmatmul.f32.gmra.mxu0 %v3272
        %v3369 = vpop.f32.mrf.mxu0
        %v3370 = vadd.f32 0.0, %v3369
        %3371 = vmatmul.f32.gmra.mxu0 %v3273
        %v3372 = vpop.f32.mrf.mxu0
        %v3373 = vadd.f32 0.0, %v3372
        %3374 = vmatmul.f32.gmra.mxu0 %v3274
        %v3375 = vpop.f32.mrf.mxu0
        %v3376 = vadd.f32 0.0, %v3375
        %3377 = vmatmul.f32.gmra.mxu0 %v3275
        %v3378 = vpop.f32.mrf.mxu0
        %v3379 = vadd.f32 0.0, %v3378
        %3380 = vmatmul.f32.gmra.mxu0 %v3276
        %v3381 = vpop.f32.mrf.mxu0
        %v3382 = vadd.f32 0.0, %v3381
        %3383 = vmatmul.f32.gmra.mxu0 %v3277
        %v3384 = vpop.f32.mrf.mxu0
        %v3385 = vadd.f32 0.0, %v3384
        %3386 = vmatmul.f32.gmra.mxu0 %v3278
        %v3387 = vpop.f32.mrf.mxu0
        %v3388 = vadd.f32 0.0, %v3387
        %3389 = vmatmul.f32.gmra.mxu0 %v3279
        %v3390 = vpop.f32.mrf.mxu0
        %v3391 = vadd.f32 0.0, %v3390
        %3392 = vmatmul.f32.gmra.mxu0 %v3280
        %v3393 = vpop.f32.mrf.mxu0
        %v3394 = vadd.f32 0.0, %v3393
        %3395 = vmatmul.f32.gmra.mxu0 %v3281
        %v3396 = vpop.f32.mrf.mxu0
        %v3397 = vadd.f32 0.0, %v3396
        %3398 = vmatmul.f32.gmra.mxu0 %v3282
        %v3399 = vpop.f32.mrf.mxu0
        %v3400 = vadd.f32 0.0, %v3399
        %3401 = vmatmul.f32.gmra.mxu0 %v3283
        %v3402 = vpop.f32.mrf.mxu0
        %v3403 = vadd.f32 0.0, %v3402
        %3404 = vmatmul.f32.gmra.mxu0 %v3284
        %v3405 = vpop.f32.mrf.mxu0
        %v3406 = vadd.f32 0.0, %v3405
        %3407 = vmatmul.f32.gmra.mxu0 %v3285
        %v3408 = vpop.f32.mrf.mxu0
        %v3409 = vadd.f32 0.0, %v3408
        %3410 = vmatmul.f32.gmra.mxu0 %v3286
        %v3411 = vpop.f32.mrf.mxu0
        %v3412 = vadd.f32 0.0, %v3411
        %3413 = vmatmul.f32.gmra.mxu0 %v3287
        %v3414 = vpop.f32.mrf.mxu0
        %v3415 = vadd.f32 0.0, %v3414
        %3416 = vdwg.mxu0
        %3417 = vrot.lane.b32.xlu0 %v598, 64
        %v3418 = vpop.permute.xlu0 %3417
        %3419 = vrot.lane.b32.xlu0 %v599, 64
        %v3420 = vpop.permute.xlu0 %3419
        %3421 = vrot.lane.b32.xlu0 %v600, 64
        %v3422 = vpop.permute.xlu0 %3421
        %3423 = vrot.lane.b32.xlu0 %v601, 64
        %v3424 = vpop.permute.xlu0 %3423
        %3425 = vrot.lane.b32.xlu0 %v602, 64
        %v3426 = vpop.permute.xlu0 %3425
        %3427 = vrot.lane.b32.xlu0 %v603, 64
        %v3428 = vpop.permute.xlu0 %3427
        %3429 = vrot.lane.b32.xlu0 %v604, 64
        %v3430 = vpop.permute.xlu0 %3429
        %3431 = vrot.lane.b32.xlu0 %v605, 64
        %v3432 = vpop.permute.xlu0 %3431
        %3433 = vrot.lane.b32.xlu0 %v606, 64
        %v3434 = vpop.permute.xlu0 %3433
        %3435 = vrot.lane.b32.xlu0 %v607, 64
        %v3436 = vpop.permute.xlu0 %3435
        %3437 = vrot.lane.b32.xlu0 %v608, 64
        %v3438 = vpop.permute.xlu0 %3437
        %3439 = vrot.lane.b32.xlu0 %v609, 64
        %v3440 = vpop.permute.xlu0 %3439
        %3441 = vrot.lane.b32.xlu0 %v610, 64
        %v3442 = vpop.permute.xlu0 %3441
        %3443 = vrot.lane.b32.xlu0 %v611, 64
        %v3444 = vpop.permute.xlu0 %3443
        %3445 = vrot.lane.b32.xlu0 %v612, 64
        %v3446 = vpop.permute.xlu0 %3445
        %3447 = vrot.lane.b32.xlu0 %v613, 64
        %v3448 = vpop.permute.xlu0 %3447
        %3449 = vrot.lane.b32.xlu0 %v652, 64
        %v3450 = vpop.permute.xlu0 %3449
        %3451 = vrot.lane.b32.xlu0 %v655, 64
        %v3452 = vpop.permute.xlu0 %3451
        %3453 = vrot.lane.b32.xlu0 %v658, 64
        %v3454 = vpop.permute.xlu0 %3453
        %3455 = vrot.lane.b32.xlu0 %v661, 64
        %v3456 = vpop.permute.xlu0 %3455
        %3457 = vrot.lane.b32.xlu0 %v664, 64
        %v3458 = vpop.permute.xlu0 %3457
        %3459 = vrot.lane.b32.xlu0 %v667, 64
        %v3460 = vpop.permute.xlu0 %3459
        %3461 = vrot.lane.b32.xlu0 %v670, 64
        %v3462 = vpop.permute.xlu0 %3461
        %3463 = vrot.lane.b32.xlu0 %v673, 64
        %v3464 = vpop.permute.xlu0 %3463
        %3465 = vrot.lane.b32.xlu0 %v676, 64
        %v3466 = vpop.permute.xlu0 %3465
        %3467 = vrot.lane.b32.xlu0 %v679, 64
        %v3468 = vpop.permute.xlu0 %3467
        %3469 = vrot.lane.b32.xlu0 %v682, 64
        %v3470 = vpop.permute.xlu0 %3469
        %3471 = vrot.lane.b32.xlu0 %v685, 64
        %v3472 = vpop.permute.xlu0 %3471
        %3473 = vrot.lane.b32.xlu0 %v688, 64
        %v3474 = vpop.permute.xlu0 %3473
        %3475 = vrot.lane.b32.xlu0 %v691, 64
        %v3476 = vpop.permute.xlu0 %3475
        %3477 = vrot.lane.b32.xlu0 %v694, 64
        %v3478 = vpop.permute.xlu0 %3477
        %3479 = vrot.lane.b32.xlu0 %v697, 64
        %v3480 = vpop.permute.xlu0 %3479
        %v3481 = vsel %vm784, %v3418, 0
        %v3483 = vsel %vm784, %v3420, 0
        %v3485 = vsel %vm784, %v3422, 0
        %v3487 = vsel %vm784, %v3424, 0
        %v3489 = vsel %vm784, %v3426, 0
        %v3491 = vsel %vm784, %v3428, 0
        %v3493 = vsel %vm784, %v3430, 0
        %v3495 = vsel %vm784, %v3432, 0
        %v3497 = vsel %vm784, %v3434, 0
        %v3499 = vsel %vm784, %v3436, 0
        %v3501 = vsel %vm784, %v3438, 0
        %v3503 = vsel %vm784, %v3440, 0
        %v3505 = vsel %vm784, %v3442, 0
        %v3507 = vsel %vm784, %v3444, 0
        %v3509 = vsel %vm784, %v3446, 0
        %v3511 = vsel %vm784, %v3448, 0
        %v3513 = vsel %vm784, %v3450, 0
        %v3515 = vsel %vm784, %v3452, 0
        %v3517 = vsel %vm784, %v3454, 0
        %v3519 = vsel %vm784, %v3456, 0
        %v3521 = vsel %vm784, %v3458, 0
        %v3523 = vsel %vm784, %v3460, 0
        %v3525 = vsel %vm784, %v3462, 0
        %v3527 = vsel %vm784, %v3464, 0
        %v3529 = vsel %vm784, %v3466, 0
        %v3531 = vsel %vm784, %v3468, 0
        %v3533 = vsel %vm784, %v3470, 0
        %v3535 = vsel %vm784, %v3472, 0
        %v3537 = vsel %vm784, %v3474, 0
        %v3539 = vsel %vm784, %v3476, 0
        %v3541 = vsel %vm784, %v3478, 0
        %v3543 = vsel %vm784, %v3480, 0
        %3545 = vmatpush.xpose.msra.mxu0 %v3543
        %3546 = vmatpush.xpose.msra.mxu0 %v3541
        %3547 = vmatpush.xpose.msra.mxu0 %v3539
        %3548 = vmatpush.xpose.msra.mxu0 %v3537
        %3549 = vmatpush.xpose.msra.mxu0 %v3535
        %3550 = vmatpush.xpose.msra.mxu0 %v3533
        %3551 = vmatpush.xpose.msra.mxu0 %v3531
        %3552 = vmatpush.xpose.msra.mxu0 %v3529
        %3553 = vmatpush.xpose.msra.mxu0 %v3527
        %3554 = vmatpush.xpose.msra.mxu0 %v3525
        %3555 = vmatpush.xpose.msra.mxu0 %v3523
        %3556 = vmatpush.xpose.msra.mxu0 %v3521
        %3557 = vmatpush.xpose.msra.mxu0 %v3519
        %3558 = vmatpush.xpose.msra.mxu0 %v3517
        %3559 = vmatpush.xpose.msra.mxu0 %v3515
        %3560 = vmatpush.xpose.msra.mxu0 %v3513
        %3561 = vmatmul.f32.gmra.mxu0 %v3481
        %v3562 = vpop.f32.mrf.mxu0
        %v3563 = vadd.f32 0.0, %v3562
        %3564 = vmatmul.f32.gmra.mxu0 %v3483
        %v3565 = vpop.f32.mrf.mxu0
        %v3566 = vadd.f32 0.0, %v3565
        %3567 = vmatmul.f32.gmra.mxu0 %v3485
        %v3568 = vpop.f32.mrf.mxu0
        %v3569 = vadd.f32 0.0, %v3568
        %3570 = vmatmul.f32.gmra.mxu0 %v3487
        %v3571 = vpop.f32.mrf.mxu0
        %v3572 = vadd.f32 0.0, %v3571
        %3573 = vmatmul.f32.gmra.mxu0 %v3489
        %v3574 = vpop.f32.mrf.mxu0
        %v3575 = vadd.f32 0.0, %v3574
        %3576 = vmatmul.f32.gmra.mxu0 %v3491
        %v3577 = vpop.f32.mrf.mxu0
        %v3578 = vadd.f32 0.0, %v3577
        %3579 = vmatmul.f32.gmra.mxu0 %v3493
        %v3580 = vpop.f32.mrf.mxu0
        %v3581 = vadd.f32 0.0, %v3580
        %3582 = vmatmul.f32.gmra.mxu0 %v3495
        %v3583 = vpop.f32.mrf.mxu0
        %v3584 = vadd.f32 0.0, %v3583
        %3585 = vmatmul.f32.gmra.mxu0 %v3497
        %v3586 = vpop.f32.mrf.mxu0
        %v3587 = vadd.f32 0.0, %v3586
        %3588 = vmatmul.f32.gmra.mxu0 %v3499
        %v3589 = vpop.f32.mrf.mxu0
        %v3590 = vadd.f32 0.0, %v3589
        %3591 = vmatmul.f32.gmra.mxu0 %v3501
        %v3592 = vpop.f32.mrf.mxu0
        %v3593 = vadd.f32 0.0, %v3592
        %3594 = vmatmul.f32.gmra.mxu0 %v3503
        %v3595 = vpop.f32.mrf.mxu0
        %v3596 = vadd.f32 0.0, %v3595
        %3597 = vmatmul.f32.gmra.mxu0 %v3505
        %v3598 = vpop.f32.mrf.mxu0
        %v3599 = vadd.f32 0.0, %v3598
        %3600 = vmatmul.f32.gmra.mxu0 %v3507
        %v3601 = vpop.f32.mrf.mxu0
        %v3602 = vadd.f32 0.0, %v3601
        %3603 = vmatmul.f32.gmra.mxu0 %v3509
        %v3604 = vpop.f32.mrf.mxu0
        %v3605 = vadd.f32 0.0, %v3604
        %3606 = vmatmul.f32.gmra.mxu0 %v3511
        %v3607 = vpop.f32.mrf.mxu0
        %v3608 = vadd.f32 0.0, %v3607
        %3609 = vdwg.mxu0
        %3610 = vmax.xlane.f32.xlu0 %v3563
        %v3611 = vpop.xlane.xlu0 %3610
        %3612 = vmax.xlane.f32.xlu0 %v3566
        %v3613 = vpop.xlane.xlu0 %3612
        %3614 = vmax.xlane.f32.xlu0 %v3569
        %v3615 = vpop.xlane.xlu0 %3614
        %3616 = vmax.xlane.f32.xlu0 %v3572
        %v3617 = vpop.xlane.xlu0 %3616
        %3618 = vmax.xlane.f32.xlu0 %v3575
        %v3619 = vpop.xlane.xlu0 %3618
        %3620 = vmax.xlane.f32.xlu0 %v3578
        %v3621 = vpop.xlane.xlu0 %3620
        %3622 = vmax.xlane.f32.xlu0 %v3581
        %v3623 = vpop.xlane.xlu0 %3622
        %3624 = vmax.xlane.f32.xlu0 %v3584
        %v3625 = vpop.xlane.xlu0 %3624
        %3626 = vmax.xlane.f32.xlu0 %v3587
        %v3627 = vpop.xlane.xlu0 %3626
        %3628 = vmax.xlane.f32.xlu0 %v3590
        %v3629 = vpop.xlane.xlu0 %3628
        %3630 = vmax.xlane.f32.xlu0 %v3593
        %v3631 = vpop.xlane.xlu0 %3630
        %3632 = vmax.xlane.f32.xlu0 %v3596
        %v3633 = vpop.xlane.xlu0 %3632
        %3634 = vmax.xlane.f32.xlu0 %v3599
        %v3635 = vpop.xlane.xlu0 %3634
        %3636 = vmax.xlane.f32.xlu0 %v3602
        %v3637 = vpop.xlane.xlu0 %3636
        %3638 = vmax.xlane.f32.xlu0 %v3605
        %v3639 = vpop.xlane.xlu0 %3638
        %3640 = vmax.xlane.f32.xlu0 %v3608
        %v3641 = vpop.xlane.xlu0 %3640
        %v3642 = vsub.f32 %v3563, %v3611
        %v3643 = vsub.f32 %v3566, %v3613
        %v3644 = vsub.f32 %v3569, %v3615
        %v3645 = vsub.f32 %v3572, %v3617
        %v3646 = vsub.f32 %v3575, %v3619
        %v3647 = vsub.f32 %v3578, %v3621
        %v3648 = vsub.f32 %v3581, %v3623
        %v3649 = vsub.f32 %v3584, %v3625
        %v3650 = vsub.f32 %v3587, %v3627
        %v3651 = vsub.f32 %v3590, %v3629
        %v3652 = vsub.f32 %v3593, %v3631
        %v3653 = vsub.f32 %v3596, %v3633
        %v3654 = vsub.f32 %v3599, %v3635
        %v3655 = vsub.f32 %v3602, %v3637
        %v3656 = vsub.f32 %v3605, %v3639
        %v3657 = vsub.f32 %v3608, %v3641
        %v3658 = vmul.f32 %v3642, 1.442695
        %v3659 = vpow.pop %v3658
        %v3660 = vmul.f32 %v3643, 1.442695
        %v3661 = vpow.pop %v3660
        %v3662 = vmul.f32 %v3644, 1.442695
        %v3663 = vpow.pop %v3662
        %v3664 = vmul.f32 %v3645, 1.442695
        %v3665 = vpow.pop %v3664
        %v3666 = vmul.f32 %v3646, 1.442695
        %v3667 = vpow.pop %v3666
        %v3668 = vmul.f32 %v3647, 1.442695
        %v3669 = vpow.pop %v3668
        %v3670 = vmul.f32 %v3648, 1.442695
        %v3671 = vpow.pop %v3670
        %v3672 = vmul.f32 %v3649, 1.442695
        %v3673 = vpow.pop %v3672
        %v3674 = vmul.f32 %v3650, 1.442695
        %v3675 = vpow.pop %v3674
        %v3676 = vmul.f32 %v3651, 1.442695
        %v3677 = vpow.pop %v3676
        %v3678 = vmul.f32 %v3652, 1.442695
        %v3679 = vpow.pop %v3678
        %v3680 = vmul.f32 %v3653, 1.442695
        %v3681 = vpow.pop %v3680
        %v3682 = vmul.f32 %v3654, 1.442695
        %v3683 = vpow.pop %v3682
        %v3684 = vmul.f32 %v3655, 1.442695
        %v3685 = vpow.pop %v3684
        %v3686 = vmul.f32 %v3656, 1.442695
        %v3687 = vpow.pop %v3686
        %v3688 = vmul.f32 %v3657, 1.442695
        %v3689 = vpow.pop %v3688
        %3690 = vadd.xlane.f32.xlu0 %v3659
        %v3691 = vpop.xlane.xlu0 %3690
        %3692 = vadd.xlane.f32.xlu0 %v3661
        %v3693 = vpop.xlane.xlu0 %3692
        %3694 = vadd.xlane.f32.xlu0 %v3663
        %v3695 = vpop.xlane.xlu0 %3694
        %3696 = vadd.xlane.f32.xlu0 %v3665
        %v3697 = vpop.xlane.xlu0 %3696
        %3698 = vadd.xlane.f32.xlu0 %v3667
        %v3699 = vpop.xlane.xlu0 %3698
        %3700 = vadd.xlane.f32.xlu0 %v3669
        %v3701 = vpop.xlane.xlu0 %3700
        %3702 = vadd.xlane.f32.xlu0 %v3671
        %v3703 = vpop.xlane.xlu0 %3702
        %3704 = vadd.xlane.f32.xlu0 %v3673
        %v3705 = vpop.xlane.xlu0 %3704
        %3706 = vadd.xlane.f32.xlu0 %v3675
        %v3707 = vpop.xlane.xlu0 %3706
        %3708 = vadd.xlane.f32.xlu0 %v3677
        %v3709 = vpop.xlane.xlu0 %3708
        %3710 = vadd.xlane.f32.xlu0 %v3679
        %v3711 = vpop.xlane.xlu0 %3710
        %3712 = vadd.xlane.f32.xlu0 %v3681
        %v3713 = vpop.xlane.xlu0 %3712
        %3714 = vadd.xlane.f32.xlu0 %v3683
        %v3715 = vpop.xlane.xlu0 %3714
        %3716 = vadd.xlane.f32.xlu0 %v3685
        %v3717 = vpop.xlane.xlu0 %3716
        %3718 = vadd.xlane.f32.xlu0 %v3687
        %v3719 = vpop.xlane.xlu0 %3718
        %3720 = vadd.xlane.f32.xlu0 %v3689
        %v3721 = vpop.xlane.xlu0 %3720
        %v3722 = vrcp.pop %v3691
        %v3723 = vmul.f32 %v3691, %v3722
        %v3724 = vsub.f32 1.0, %v3723
        %v3725 = vmul.f32 %v3722, %v3724
        %v3726 = vadd.f32 %v3722, %v3725
        %vm3727 = vweird.f32 %v3691
        %vm3728 = vweird.f32 %v3722
        %vm3729 = vmor %vm3727, %vm3728
        %v3730 = vsel %vm3729, %v3722, %v3726
        %v3731 = vand.u32 2147483647, %v3691
        %vm3732 = vcmp.eq.f32.partialorder %v3731, 8.507059e+37
        %v3733 = vand.u32 %v3691, 2147483648
        %v3734 = vor.u32 1.1754944e-38, %v3733
        %v3735 = vsel %vm3732, %v3734, %v3730
        %v3736 = vrcp.pop %v3693
        %v3737 = vmul.f32 %v3693, %v3736
        %v3738 = vsub.f32 1.0, %v3737
        %v3739 = vmul.f32 %v3736, %v3738
        %v3740 = vadd.f32 %v3736, %v3739
        %vm3741 = vweird.f32 %v3693
        %vm3742 = vweird.f32 %v3736
        %vm3743 = vmor %vm3741, %vm3742
        %v3744 = vsel %vm3743, %v3736, %v3740
        %v3745 = vand.u32 2147483647, %v3693
        %vm3746 = vcmp.eq.f32.partialorder %v3745, 8.507059e+37
        %v3747 = vand.u32 %v3693, 2147483648
        %v3748 = vor.u32 1.1754944e-38, %v3747
        %v3749 = vsel %vm3746, %v3748, %v3744
        %v3750 = vrcp.pop %v3695
        %v3751 = vmul.f32 %v3695, %v3750
        %v3752 = vsub.f32 1.0, %v3751
        %v3753 = vmul.f32 %v3750, %v3752
        %v3754 = vadd.f32 %v3750, %v3753
        %vm3755 = vweird.f32 %v3695
        %vm3756 = vweird.f32 %v3750
        %vm3757 = vmor %vm3755, %vm3756
        %v3758 = vsel %vm3757, %v3750, %v3754
        %v3759 = vand.u32 2147483647, %v3695
        %vm3760 = vcmp.eq.f32.partialorder %v3759, 8.507059e+37
        %v3761 = vand.u32 %v3695, 2147483648
        %v3762 = vor.u32 1.1754944e-38, %v3761
        %v3763 = vsel %vm3760, %v3762, %v3758
        %v3764 = vrcp.pop %v3697
        %v3765 = vmul.f32 %v3697, %v3764
        %v3766 = vsub.f32 1.0, %v3765
        %v3767 = vmul.f32 %v3764, %v3766
        %v3768 = vadd.f32 %v3764, %v3767
        %vm3769 = vweird.f32 %v3697
        %vm3770 = vweird.f32 %v3764
        %vm3771 = vmor %vm3769, %vm3770
        %v3772 = vsel %vm3771, %v3764, %v3768
        %v3773 = vand.u32 2147483647, %v3697
        %vm3774 = vcmp.eq.f32.partialorder %v3773, 8.507059e+37
        %v3775 = vand.u32 %v3697, 2147483648
        %v3776 = vor.u32 1.1754944e-38, %v3775
        %v3777 = vsel %vm3774, %v3776, %v3772
        %v3778 = vrcp.pop %v3699
        %v3779 = vmul.f32 %v3699, %v3778
        %v3780 = vsub.f32 1.0, %v3779
        %v3781 = vmul.f32 %v3778, %v3780
        %v3782 = vadd.f32 %v3778, %v3781
        %vm3783 = vweird.f32 %v3699
        %vm3784 = vweird.f32 %v3778
        %vm3785 = vmor %vm3783, %vm3784
        %v3786 = vsel %vm3785, %v3778, %v3782
        %v3787 = vand.u32 2147483647, %v3699
        %vm3788 = vcmp.eq.f32.partialorder %v3787, 8.507059e+37
        %v3789 = vand.u32 %v3699, 2147483648
        %v3790 = vor.u32 1.1754944e-38, %v3789
        %v3791 = vsel %vm3788, %v3790, %v3786
        %v3792 = vrcp.pop %v3701
        %v3793 = vmul.f32 %v3701, %v3792
        %v3794 = vsub.f32 1.0, %v3793
        %v3795 = vmul.f32 %v3792, %v3794
        %v3796 = vadd.f32 %v3792, %v3795
        %vm3797 = vweird.f32 %v3701
        %vm3798 = vweird.f32 %v3792
        %vm3799 = vmor %vm3797, %vm3798
        %v3800 = vsel %vm3799, %v3792, %v3796
        %v3801 = vand.u32 2147483647, %v3701
        %vm3802 = vcmp.eq.f32.partialorder %v3801, 8.507059e+37
        %v3803 = vand.u32 %v3701, 2147483648
        %v3804 = vor.u32 1.1754944e-38, %v3803
        %v3805 = vsel %vm3802, %v3804, %v3800
        %v3806 = vrcp.pop %v3703
        %v3807 = vmul.f32 %v3703, %v3806
        %v3808 = vsub.f32 1.0, %v3807
        %v3809 = vmul.f32 %v3806, %v3808
        %v3810 = vadd.f32 %v3806, %v3809
        %vm3811 = vweird.f32 %v3703
        %vm3812 = vweird.f32 %v3806
        %vm3813 = vmor %vm3811, %vm3812
        %v3814 = vsel %vm3813, %v3806, %v3810
        %v3815 = vand.u32 2147483647, %v3703
        %vm3816 = vcmp.eq.f32.partialorder %v3815, 8.507059e+37
        %v3817 = vand.u32 %v3703, 2147483648
        %v3818 = vor.u32 1.1754944e-38, %v3817
        %v3819 = vsel %vm3816, %v3818, %v3814
        %v3820 = vrcp.pop %v3705
        %v3821 = vmul.f32 %v3705, %v3820
        %v3822 = vsub.f32 1.0, %v3821
        %v3823 = vmul.f32 %v3820, %v3822
        %v3824 = vadd.f32 %v3820, %v3823
        %vm3825 = vweird.f32 %v3705
        %vm3826 = vweird.f32 %v3820
        %vm3827 = vmor %vm3825, %vm3826
        %v3828 = vsel %vm3827, %v3820, %v3824
        %v3829 = vand.u32 2147483647, %v3705
        %vm3830 = vcmp.eq.f32.partialorder %v3829, 8.507059e+37
        %v3831 = vand.u32 %v3705, 2147483648
        %v3832 = vor.u32 1.1754944e-38, %v3831
        %v3833 = vsel %vm3830, %v3832, %v3828
        %v3834 = vrcp.pop %v3707
        %v3835 = vmul.f32 %v3707, %v3834
        %v3836 = vsub.f32 1.0, %v3835
        %v3837 = vmul.f32 %v3834, %v3836
        %v3838 = vadd.f32 %v3834, %v3837
        %vm3839 = vweird.f32 %v3707
        %vm3840 = vweird.f32 %v3834
        %vm3841 = vmor %vm3839, %vm3840
        %v3842 = vsel %vm3841, %v3834, %v3838
        %v3843 = vand.u32 2147483647, %v3707
        %vm3844 = vcmp.eq.f32.partialorder %v3843, 8.507059e+37
        %v3845 = vand.u32 %v3707, 2147483648
        %v3846 = vor.u32 1.1754944e-38, %v3845
        %v3847 = vsel %vm3844, %v3846, %v3842
        %v3848 = vrcp.pop %v3709
        %v3849 = vmul.f32 %v3709, %v3848
        %v3850 = vsub.f32 1.0, %v3849
        %v3851 = vmul.f32 %v3848, %v3850
        %v3852 = vadd.f32 %v3848, %v3851
        %vm3853 = vweird.f32 %v3709
        %vm3854 = vweird.f32 %v3848
        %vm3855 = vmor %vm3853, %vm3854
        %v3856 = vsel %vm3855, %v3848, %v3852
        %v3857 = vand.u32 2147483647, %v3709
        %vm3858 = vcmp.eq.f32.partialorder %v3857, 8.507059e+37
        %v3859 = vand.u32 %v3709, 2147483648
        %v3860 = vor.u32 1.1754944e-38, %v3859
        %v3861 = vsel %vm3858, %v3860, %v3856
        %v3862 = vrcp.pop %v3711
        %v3863 = vmul.f32 %v3711, %v3862
        %v3864 = vsub.f32 1.0, %v3863
        %v3865 = vmul.f32 %v3862, %v3864
        %v3866 = vadd.f32 %v3862, %v3865
        %vm3867 = vweird.f32 %v3711
        %vm3868 = vweird.f32 %v3862
        %vm3869 = vmor %vm3867, %vm3868
        %v3870 = vsel %vm3869, %v3862, %v3866
        %v3871 = vand.u32 2147483647, %v3711
        %vm3872 = vcmp.eq.f32.partialorder %v3871, 8.507059e+37
        %v3873 = vand.u32 %v3711, 2147483648
        %v3874 = vor.u32 1.1754944e-38, %v3873
        %v3875 = vsel %vm3872, %v3874, %v3870
        %v3876 = vrcp.pop %v3713
        %v3877 = vmul.f32 %v3713, %v3876
        %v3878 = vsub.f32 1.0, %v3877
        %v3879 = vmul.f32 %v3876, %v3878
        %v3880 = vadd.f32 %v3876, %v3879
        %vm3881 = vweird.f32 %v3713
        %vm3882 = vweird.f32 %v3876
        %vm3883 = vmor %vm3881, %vm3882
        %v3884 = vsel %vm3883, %v3876, %v3880
        %v3885 = vand.u32 2147483647, %v3713
        %vm3886 = vcmp.eq.f32.partialorder %v3885, 8.507059e+37
        %v3887 = vand.u32 %v3713, 2147483648
        %v3888 = vor.u32 1.1754944e-38, %v3887
        %v3889 = vsel %vm3886, %v3888, %v3884
        %v3890 = vrcp.pop %v3715
        %v3891 = vmul.f32 %v3715, %v3890
        %v3892 = vsub.f32 1.0, %v3891
        %v3893 = vmul.f32 %v3890, %v3892
        %v3894 = vadd.f32 %v3890, %v3893
        %vm3895 = vweird.f32 %v3715
        %vm3896 = vweird.f32 %v3890
        %vm3897 = vmor %vm3895, %vm3896
        %v3898 = vsel %vm3897, %v3890, %v3894
        %v3899 = vand.u32 2147483647, %v3715
        %vm3900 = vcmp.eq.f32.partialorder %v3899, 8.507059e+37
        %v3901 = vand.u32 %v3715, 2147483648
        %v3902 = vor.u32 1.1754944e-38, %v3901
        %v3903 = vsel %vm3900, %v3902, %v3898
        %v3904 = vrcp.pop %v3717
        %v3905 = vmul.f32 %v3717, %v3904
        %v3906 = vsub.f32 1.0, %v3905
        %v3907 = vmul.f32 %v3904, %v3906
        %v3908 = vadd.f32 %v3904, %v3907
        %vm3909 = vweird.f32 %v3717
        %vm3910 = vweird.f32 %v3904
        %vm3911 = vmor %vm3909, %vm3910
        %v3912 = vsel %vm3911, %v3904, %v3908
        %v3913 = vand.u32 2147483647, %v3717
        %vm3914 = vcmp.eq.f32.partialorder %v3913, 8.507059e+37
        %v3915 = vand.u32 %v3717, 2147483648
        %v3916 = vor.u32 1.1754944e-38, %v3915
        %v3917 = vsel %vm3914, %v3916, %v3912
        %v3918 = vrcp.pop %v3719
        %v3919 = vmul.f32 %v3719, %v3918
        %v3920 = vsub.f32 1.0, %v3919
        %v3921 = vmul.f32 %v3918, %v3920
        %v3922 = vadd.f32 %v3918, %v3921
        %vm3923 = vweird.f32 %v3719
        %vm3924 = vweird.f32 %v3918
        %vm3925 = vmor %vm3923, %vm3924
        %v3926 = vsel %vm3925, %v3918, %v3922
        %v3927 = vand.u32 2147483647, %v3719
        %vm3928 = vcmp.eq.f32.partialorder %v3927, 8.507059e+37
        %v3929 = vand.u32 %v3719, 2147483648
        %v3930 = vor.u32 1.1754944e-38, %v3929
        %v3931 = vsel %vm3928, %v3930, %v3926
        %v3932 = vrcp.pop %v3721
        %v3933 = vmul.f32 %v3721, %v3932
        %v3934 = vsub.f32 1.0, %v3933
        %v3935 = vmul.f32 %v3932, %v3934
        %v3936 = vadd.f32 %v3932, %v3935
        %vm3937 = vweird.f32 %v3721
        %vm3938 = vweird.f32 %v3932
        %vm3939 = vmor %vm3937, %vm3938
        %v3940 = vsel %vm3939, %v3932, %v3936
        %v3941 = vand.u32 2147483647, %v3721
        %vm3942 = vcmp.eq.f32.partialorder %v3941, 8.507059e+37
        %v3943 = vand.u32 %v3721, 2147483648
        %v3944 = vor.u32 1.1754944e-38, %v3943
        %v3945 = vsel %vm3942, %v3944, %v3940
        %v3946 = vmul.f32 %v3659, %v3735
        %v3947 = vmul.f32 %v3661, %v3749
        %v3948 = vmul.f32 %v3663, %v3763
        %v3949 = vmul.f32 %v3665, %v3777
        %v3950 = vmul.f32 %v3667, %v3791
        %v3951 = vmul.f32 %v3669, %v3805
        %v3952 = vmul.f32 %v3671, %v3819
        %v3953 = vmul.f32 %v3673, %v3833
        %v3954 = vmul.f32 %v3675, %v3847
        %v3955 = vmul.f32 %v3677, %v3861
        %v3956 = vmul.f32 %v3679, %v3875
        %v3957 = vmul.f32 %v3681, %v3889
        %v3958 = vmul.f32 %v3683, %v3903
        %v3959 = vmul.f32 %v3685, %v3917
        %v3960 = vmul.f32 %v3687, %v3931
        %v3961 = vmul.f32 %v3689, %v3945
        %v3962 = vadd.f32 %v3288, %v3946
        %v3963 = vadd.f32 %v3289, %v3947
        %v3964 = vadd.f32 %v3290, %v3948
        %v3965 = vadd.f32 %v3291, %v3949
        %v3966 = vadd.f32 %v3292, %v3950
        %v3967 = vadd.f32 %v3293, %v3951
        %v3968 = vadd.f32 %v3294, %v3952
        %v3969 = vadd.f32 %v3295, %v3953
        %v3970 = vadd.f32 %v3296, %v3954
        %v3971 = vadd.f32 %v3297, %v3955
        %v3972 = vadd.f32 %v3298, %v3956
        %v3973 = vadd.f32 %v3299, %v3957
        %v3974 = vadd.f32 %v3300, %v3958
        %v3975 = vadd.f32 %v3301, %v3959
        %v3976 = vadd.f32 %v3302, %v3960
        %v3977 = vadd.f32 %v3303, %v3961
        %3978 = vrot.lane.b32.xlu0 %v737, 64
        %v3979 = vpop.permute.xlu0 %3978
        %3980 = vrot.lane.b32.xlu0 %v740, 64
        %v3981 = vpop.permute.xlu0 %3980
        %3982 = vrot.lane.b32.xlu0 %v743, 64
        %v3983 = vpop.permute.xlu0 %3982
        %3984 = vrot.lane.b32.xlu0 %v746, 64
        %v3985 = vpop.permute.xlu0 %3984
        %3986 = vrot.lane.b32.xlu0 %v749, 64
        %v3987 = vpop.permute.xlu0 %3986
        %3988 = vrot.lane.b32.xlu0 %v752, 64
        %v3989 = vpop.permute.xlu0 %3988
        %3990 = vrot.lane.b32.xlu0 %v755, 64
        %v3991 = vpop.permute.xlu0 %3990
        %3992 = vrot.lane.b32.xlu0 %v758, 64
        %v3993 = vpop.permute.xlu0 %3992
        %3994 = vrot.lane.b32.xlu0 %v761, 64
        %v3995 = vpop.permute.xlu0 %3994
        %3996 = vrot.lane.b32.xlu0 %v764, 64
        %v3997 = vpop.permute.xlu0 %3996
        %3998 = vrot.lane.b32.xlu0 %v767, 64
        %v3999 = vpop.permute.xlu0 %3998
        %4000 = vrot.lane.b32.xlu0 %v770, 64
        %v4001 = vpop.permute.xlu0 %4000
        %4002 = vrot.lane.b32.xlu0 %v773, 64
        %v4003 = vpop.permute.xlu0 %4002
        %4004 = vrot.lane.b32.xlu0 %v776, 64
        %v4005 = vpop.permute.xlu0 %4004
        %4006 = vrot.lane.b32.xlu0 %v779, 64
        %v4007 = vpop.permute.xlu0 %4006
        %4008 = vrot.lane.b32.xlu0 %v782, 64
        %v4009 = vpop.permute.xlu0 %4008
        %4026 = vmatpush.msra.mxu0 %v4009
        %4027 = vmatpush.msra.mxu0 %v4007
        %4028 = vmatpush.msra.mxu0 %v4005
        %4029 = vmatpush.msra.mxu0 %v4003
        %4030 = vmatpush.msra.mxu0 %v4001
        %4031 = vmatpush.msra.mxu0 %v3999
        %4032 = vmatpush.msra.mxu0 %v3997
        %4033 = vmatpush.msra.mxu0 %v3995
        %4034 = vmatpush.msra.mxu0 %v3993
        %4035 = vmatpush.msra.mxu0 %v3991
        %4036 = vmatpush.msra.mxu0 %v3989
        %4037 = vmatpush.msra.mxu0 %v3987
        %4038 = vmatpush.msra.mxu0 %v3985
        %4039 = vmatpush.msra.mxu0 %v3983
        %4040 = vmatpush.msra.mxu0 %v3981
        %4041 = vmatpush.msra.mxu0 %v3979
        %4042 = vmatmul.f32.gmra.mxu0 %v3946
        %v4043 = vpop.f32.mrf.mxu0
        %v4044 = vadd.f32 0.0, %v4043
        %4045 = vmatmul.f32.gmra.mxu0 %v3947
        %v4046 = vpop.f32.mrf.mxu0
        %v4047 = vadd.f32 0.0, %v4046
        %4048 = vmatmul.f32.gmra.mxu0 %v3948
        %v4049 = vpop.f32.mrf.mxu0
        %v4050 = vadd.f32 0.0, %v4049
        %4051 = vmatmul.f32.gmra.mxu0 %v3949
        %v4052 = vpop.f32.mrf.mxu0
        %v4053 = vadd.f32 0.0, %v4052
        %4054 = vmatmul.f32.gmra.mxu0 %v3950
        %v4055 = vpop.f32.mrf.mxu0
        %v4056 = vadd.f32 0.0, %v4055
        %4057 = vmatmul.f32.gmra.mxu0 %v3951
        %v4058 = vpop.f32.mrf.mxu0
        %v4059 = vadd.f32 0.0, %v4058
        %4060 = vmatmul.f32.gmra.mxu0 %v3952
        %v4061 = vpop.f32.mrf.mxu0
        %v4062 = vadd.f32 0.0, %v4061
        %4063 = vmatmul.f32.gmra.mxu0 %v3953
        %v4064 = vpop.f32.mrf.mxu0
        %v4065 = vadd.f32 0.0, %v4064
        %4066 = vmatmul.f32.gmra.mxu0 %v3954
        %v4067 = vpop.f32.mrf.mxu0
        %v4068 = vadd.f32 0.0, %v4067
        %4069 = vmatmul.f32.gmra.mxu0 %v3955
        %v4070 = vpop.f32.mrf.mxu0
        %v4071 = vadd.f32 0.0, %v4070
        %4072 = vmatmul.f32.gmra.mxu0 %v3956
        %v4073 = vpop.f32.mrf.mxu0
        %v4074 = vadd.f32 0.0, %v4073
        %4075 = vmatmul.f32.gmra.mxu0 %v3957
        %v4076 = vpop.f32.mrf.mxu0
        %v4077 = vadd.f32 0.0, %v4076
        %4078 = vmatmul.f32.gmra.mxu0 %v3958
        %v4079 = vpop.f32.mrf.mxu0
        %v4080 = vadd.f32 0.0, %v4079
        %4081 = vmatmul.f32.gmra.mxu0 %v3959
        %v4082 = vpop.f32.mrf.mxu0
        %v4083 = vadd.f32 0.0, %v4082
        %4084 = vmatmul.f32.gmra.mxu0 %v3960
        %v4085 = vpop.f32.mrf.mxu0
        %v4086 = vadd.f32 0.0, %v4085
        %4087 = vmatmul.f32.gmra.mxu0 %v3961
        %v4088 = vpop.f32.mrf.mxu0
        %v4089 = vadd.f32 0.0, %v4088
        %4090 = vdwg.mxu0
        %4091 = vrot.lane.b32.xlu0 %v598, 48
        %v4092 = vpop.permute.xlu0 %4091
        %4093 = vrot.lane.b32.xlu0 %v599, 48
        %v4094 = vpop.permute.xlu0 %4093
        %4095 = vrot.lane.b32.xlu0 %v600, 48
        %v4096 = vpop.permute.xlu0 %4095
        %4097 = vrot.lane.b32.xlu0 %v601, 48
        %v4098 = vpop.permute.xlu0 %4097
        %4099 = vrot.lane.b32.xlu0 %v602, 48
        %v4100 = vpop.permute.xlu0 %4099
        %4101 = vrot.lane.b32.xlu0 %v603, 48
        %v4102 = vpop.permute.xlu0 %4101
        %4103 = vrot.lane.b32.xlu0 %v604, 48
        %v4104 = vpop.permute.xlu0 %4103
        %4105 = vrot.lane.b32.xlu0 %v605, 48
        %v4106 = vpop.permute.xlu0 %4105
        %4107 = vrot.lane.b32.xlu0 %v606, 48
        %v4108 = vpop.permute.xlu0 %4107
        %4109 = vrot.lane.b32.xlu0 %v607, 48
        %v4110 = vpop.permute.xlu0 %4109
        %4111 = vrot.lane.b32.xlu0 %v608, 48
        %v4112 = vpop.permute.xlu0 %4111
        %4113 = vrot.lane.b32.xlu0 %v609, 48
        %v4114 = vpop.permute.xlu0 %4113
        %4115 = vrot.lane.b32.xlu0 %v610, 48
        %v4116 = vpop.permute.xlu0 %4115
        %4117 = vrot.lane.b32.xlu0 %v611, 48
        %v4118 = vpop.permute.xlu0 %4117
        %4119 = vrot.lane.b32.xlu0 %v612, 48
        %v4120 = vpop.permute.xlu0 %4119
        %4121 = vrot.lane.b32.xlu0 %v613, 48
        %v4122 = vpop.permute.xlu0 %4121
        %4123 = vrot.lane.b32.xlu0 %v652, 48
        %v4124 = vpop.permute.xlu0 %4123
        %4125 = vrot.lane.b32.xlu0 %v655, 48
        %v4126 = vpop.permute.xlu0 %4125
        %4127 = vrot.lane.b32.xlu0 %v658, 48
        %v4128 = vpop.permute.xlu0 %4127
        %4129 = vrot.lane.b32.xlu0 %v661, 48
        %v4130 = vpop.permute.xlu0 %4129
        %4131 = vrot.lane.b32.xlu0 %v664, 48
        %v4132 = vpop.permute.xlu0 %4131
        %4133 = vrot.lane.b32.xlu0 %v667, 48
        %v4134 = vpop.permute.xlu0 %4133
        %4135 = vrot.lane.b32.xlu0 %v670, 48
        %v4136 = vpop.permute.xlu0 %4135
        %4137 = vrot.lane.b32.xlu0 %v673, 48
        %v4138 = vpop.permute.xlu0 %4137
        %4139 = vrot.lane.b32.xlu0 %v676, 48
        %v4140 = vpop.permute.xlu0 %4139
        %4141 = vrot.lane.b32.xlu0 %v679, 48
        %v4142 = vpop.permute.xlu0 %4141
        %4143 = vrot.lane.b32.xlu0 %v682, 48
        %v4144 = vpop.permute.xlu0 %4143
        %4145 = vrot.lane.b32.xlu0 %v685, 48
        %v4146 = vpop.permute.xlu0 %4145
        %4147 = vrot.lane.b32.xlu0 %v688, 48
        %v4148 = vpop.permute.xlu0 %4147
        %4149 = vrot.lane.b32.xlu0 %v691, 48
        %v4150 = vpop.permute.xlu0 %4149
        %4151 = vrot.lane.b32.xlu0 %v694, 48
        %v4152 = vpop.permute.xlu0 %4151
        %4153 = vrot.lane.b32.xlu0 %v697, 48
        %v4154 = vpop.permute.xlu0 %4153
        %v4155 = vsel %vm784, %v4092, 0
        %v4157 = vsel %vm784, %v4094, 0
        %v4159 = vsel %vm784, %v4096, 0
        %v4161 = vsel %vm784, %v4098, 0
        %v4163 = vsel %vm784, %v4100, 0
        %v4165 = vsel %vm784, %v4102, 0
        %v4167 = vsel %vm784, %v4104, 0
        %v4169 = vsel %vm784, %v4106, 0
        %v4171 = vsel %vm784, %v4108, 0
        %v4173 = vsel %vm784, %v4110, 0
        %v4175 = vsel %vm784, %v4112, 0
        %v4177 = vsel %vm784, %v4114, 0
        %v4179 = vsel %vm784, %v4116, 0
        %v4181 = vsel %vm784, %v4118, 0
        %v4183 = vsel %vm784, %v4120, 0
        %v4185 = vsel %vm784, %v4122, 0
        %v4187 = vsel %vm784, %v4124, 0
        %v4189 = vsel %vm784, %v4126, 0
        %v4191 = vsel %vm784, %v4128, 0
        %v4193 = vsel %vm784, %v4130, 0
        %v4195 = vsel %vm784, %v4132, 0
        %v4197 = vsel %vm784, %v4134, 0
        %v4199 = vsel %vm784, %v4136, 0
        %v4201 = vsel %vm784, %v4138, 0
        %v4203 = vsel %vm784, %v4140, 0
        %v4205 = vsel %vm784, %v4142, 0
        %v4207 = vsel %vm784, %v4144, 0
        %v4209 = vsel %vm784, %v4146, 0
        %v4211 = vsel %vm784, %v4148, 0
        %v4213 = vsel %vm784, %v4150, 0
        %v4215 = vsel %vm784, %v4152, 0
        %v4217 = vsel %vm784, %v4154, 0
        %4219 = vmatpush.xpose.msra.mxu0 %v4217
        %4220 = vmatpush.xpose.msra.mxu0 %v4215
        %4221 = vmatpush.xpose.msra.mxu0 %v4213
        %4222 = vmatpush.xpose.msra.mxu0 %v4211
        %4223 = vmatpush.xpose.msra.mxu0 %v4209
        %4224 = vmatpush.xpose.msra.mxu0 %v4207
        %4225 = vmatpush.xpose.msra.mxu0 %v4205
        %4226 = vmatpush.xpose.msra.mxu0 %v4203
        %4227 = vmatpush.xpose.msra.mxu0 %v4201
        %4228 = vmatpush.xpose.msra.mxu0 %v4199
        %4229 = vmatpush.xpose.msra.mxu0 %v4197
        %4230 = vmatpush.xpose.msra.mxu0 %v4195
        %4231 = vmatpush.xpose.msra.mxu0 %v4193
        %4232 = vmatpush.xpose.msra.mxu0 %v4191
        %4233 = vmatpush.xpose.msra.mxu0 %v4189
        %4234 = vmatpush.xpose.msra.mxu0 %v4187
        %4235 = vmatmul.f32.gmra.mxu0 %v4155
        %v4236 = vpop.f32.mrf.mxu0
        %v4237 = vadd.f32 0.0, %v4236
        %4238 = vmatmul.f32.gmra.mxu0 %v4157
        %v4239 = vpop.f32.mrf.mxu0
        %v4240 = vadd.f32 0.0, %v4239
        %4241 = vmatmul.f32.gmra.mxu0 %v4159
        %v4242 = vpop.f32.mrf.mxu0
        %v4243 = vadd.f32 0.0, %v4242
        %4244 = vmatmul.f32.gmra.mxu0 %v4161
        %v4245 = vpop.f32.mrf.mxu0
        %v4246 = vadd.f32 0.0, %v4245
        %4247 = vmatmul.f32.gmra.mxu0 %v4163
        %v4248 = vpop.f32.mrf.mxu0
        %v4249 = vadd.f32 0.0, %v4248
        %4250 = vmatmul.f32.gmra.mxu0 %v4165
        %v4251 = vpop.f32.mrf.mxu0
        %v4252 = vadd.f32 0.0, %v4251
        %4253 = vmatmul.f32.gmra.mxu0 %v4167
        %v4254 = vpop.f32.mrf.mxu0
        %v4255 = vadd.f32 0.0, %v4254
        %4256 = vmatmul.f32.gmra.mxu0 %v4169
        %v4257 = vpop.f32.mrf.mxu0
        %v4258 = vadd.f32 0.0, %v4257
        %4259 = vmatmul.f32.gmra.mxu0 %v4171
        %v4260 = vpop.f32.mrf.mxu0
        %v4261 = vadd.f32 0.0, %v4260
        %4262 = vmatmul.f32.gmra.mxu0 %v4173
        %v4263 = vpop.f32.mrf.mxu0
        %v4264 = vadd.f32 0.0, %v4263
        %4265 = vmatmul.f32.gmra.mxu0 %v4175
        %v4266 = vpop.f32.mrf.mxu0
        %v4267 = vadd.f32 0.0, %v4266
        %4268 = vmatmul.f32.gmra.mxu0 %v4177
        %v4269 = vpop.f32.mrf.mxu0
        %v4270 = vadd.f32 0.0, %v4269
        %4271 = vmatmul.f32.gmra.mxu0 %v4179
        %v4272 = vpop.f32.mrf.mxu0
        %v4273 = vadd.f32 0.0, %v4272
        %4274 = vmatmul.f32.gmra.mxu0 %v4181
        %v4275 = vpop.f32.mrf.mxu0
        %v4276 = vadd.f32 0.0, %v4275
        %4277 = vmatmul.f32.gmra.mxu0 %v4183
        %v4278 = vpop.f32.mrf.mxu0
        %v4279 = vadd.f32 0.0, %v4278
        %4280 = vmatmul.f32.gmra.mxu0 %v4185
        %v4281 = vpop.f32.mrf.mxu0
        %v4282 = vadd.f32 0.0, %v4281
        %4283 = vdwg.mxu0
        %4284 = vmax.xlane.f32.xlu0 %v4237
        %v4285 = vpop.xlane.xlu0 %4284
        %4286 = vmax.xlane.f32.xlu0 %v4240
        %v4287 = vpop.xlane.xlu0 %4286
        %4288 = vmax.xlane.f32.xlu0 %v4243
        %v4289 = vpop.xlane.xlu0 %4288
        %4290 = vmax.xlane.f32.xlu0 %v4246
        %v4291 = vpop.xlane.xlu0 %4290
        %4292 = vmax.xlane.f32.xlu0 %v4249
        %v4293 = vpop.xlane.xlu0 %4292
        %4294 = vmax.xlane.f32.xlu0 %v4252
        %v4295 = vpop.xlane.xlu0 %4294
        %4296 = vmax.xlane.f32.xlu0 %v4255
        %v4297 = vpop.xlane.xlu0 %4296
        %4298 = vmax.xlane.f32.xlu0 %v4258
        %v4299 = vpop.xlane.xlu0 %4298
        %4300 = vmax.xlane.f32.xlu0 %v4261
        %v4301 = vpop.xlane.xlu0 %4300
        %4302 = vmax.xlane.f32.xlu0 %v4264
        %v4303 = vpop.xlane.xlu0 %4302
        %4304 = vmax.xlane.f32.xlu0 %v4267
        %v4305 = vpop.xlane.xlu0 %4304
        %4306 = vmax.xlane.f32.xlu0 %v4270
        %v4307 = vpop.xlane.xlu0 %4306
        %4308 = vmax.xlane.f32.xlu0 %v4273
        %v4309 = vpop.xlane.xlu0 %4308
        %4310 = vmax.xlane.f32.xlu0 %v4276
        %v4311 = vpop.xlane.xlu0 %4310
        %4312 = vmax.xlane.f32.xlu0 %v4279
        %v4313 = vpop.xlane.xlu0 %4312
        %4314 = vmax.xlane.f32.xlu0 %v4282
        %v4315 = vpop.xlane.xlu0 %4314
        %v4316 = vsub.f32 %v4237, %v4285
        %v4317 = vsub.f32 %v4240, %v4287
        %v4318 = vsub.f32 %v4243, %v4289
        %v4319 = vsub.f32 %v4246, %v4291
        %v4320 = vsub.f32 %v4249, %v4293
        %v4321 = vsub.f32 %v4252, %v4295
        %v4322 = vsub.f32 %v4255, %v4297
        %v4323 = vsub.f32 %v4258, %v4299
        %v4324 = vsub.f32 %v4261, %v4301
        %v4325 = vsub.f32 %v4264, %v4303
        %v4326 = vsub.f32 %v4267, %v4305
        %v4327 = vsub.f32 %v4270, %v4307
        %v4328 = vsub.f32 %v4273, %v4309
        %v4329 = vsub.f32 %v4276, %v4311
        %v4330 = vsub.f32 %v4279, %v4313
        %v4331 = vsub.f32 %v4282, %v4315
        %v4332 = vmul.f32 %v4316, 1.442695
        %v4333 = vpow.pop %v4332
        %v4334 = vmul.f32 %v4317, 1.442695
        %v4335 = vpow.pop %v4334
        %v4336 = vmul.f32 %v4318, 1.442695
        %v4337 = vpow.pop %v4336
        %v4338 = vmul.f32 %v4319, 1.442695
        %v4339 = vpow.pop %v4338
        %v4340 = vmul.f32 %v4320, 1.442695
        %v4341 = vpow.pop %v4340
        %v4342 = vmul.f32 %v4321, 1.442695
        %v4343 = vpow.pop %v4342
        %v4344 = vmul.f32 %v4322, 1.442695
        %v4345 = vpow.pop %v4344
        %v4346 = vmul.f32 %v4323, 1.442695
        %v4347 = vpow.pop %v4346
        %v4348 = vmul.f32 %v4324, 1.442695
        %v4349 = vpow.pop %v4348
        %v4350 = vmul.f32 %v4325, 1.442695
        %v4351 = vpow.pop %v4350
        %v4352 = vmul.f32 %v4326, 1.442695
        %v4353 = vpow.pop %v4352
        %v4354 = vmul.f32 %v4327, 1.442695
        %v4355 = vpow.pop %v4354
        %v4356 = vmul.f32 %v4328, 1.442695
        %v4357 = vpow.pop %v4356
        %v4358 = vmul.f32 %v4329, 1.442695
        %v4359 = vpow.pop %v4358
        %v4360 = vmul.f32 %v4330, 1.442695
        %v4361 = vpow.pop %v4360
        %v4362 = vmul.f32 %v4331, 1.442695
        %v4363 = vpow.pop %v4362
        %4364 = vadd.xlane.f32.xlu0 %v4333
        %v4365 = vpop.xlane.xlu0 %4364
        %4366 = vadd.xlane.f32.xlu0 %v4335
        %v4367 = vpop.xlane.xlu0 %4366
        %4368 = vadd.xlane.f32.xlu0 %v4337
        %v4369 = vpop.xlane.xlu0 %4368
        %4370 = vadd.xlane.f32.xlu0 %v4339
        %v4371 = vpop.xlane.xlu0 %4370
        %4372 = vadd.xlane.f32.xlu0 %v4341
        %v4373 = vpop.xlane.xlu0 %4372
        %4374 = vadd.xlane.f32.xlu0 %v4343
        %v4375 = vpop.xlane.xlu0 %4374
        %4376 = vadd.xlane.f32.xlu0 %v4345
        %v4377 = vpop.xlane.xlu0 %4376
        %4378 = vadd.xlane.f32.xlu0 %v4347
        %v4379 = vpop.xlane.xlu0 %4378
        %4380 = vadd.xlane.f32.xlu0 %v4349
        %v4381 = vpop.xlane.xlu0 %4380
        %4382 = vadd.xlane.f32.xlu0 %v4351
        %v4383 = vpop.xlane.xlu0 %4382
        %4384 = vadd.xlane.f32.xlu0 %v4353
        %v4385 = vpop.xlane.xlu0 %4384
        %4386 = vadd.xlane.f32.xlu0 %v4355
        %v4387 = vpop.xlane.xlu0 %4386
        %4388 = vadd.xlane.f32.xlu0 %v4357
        %v4389 = vpop.xlane.xlu0 %4388
        %4390 = vadd.xlane.f32.xlu0 %v4359
        %v4391 = vpop.xlane.xlu0 %4390
        %4392 = vadd.xlane.f32.xlu0 %v4361
        %v4393 = vpop.xlane.xlu0 %4392
        %4394 = vadd.xlane.f32.xlu0 %v4363
        %v4395 = vpop.xlane.xlu0 %4394
        %v4396 = vrcp.pop %v4365
        %v4397 = vmul.f32 %v4365, %v4396
        %v4398 = vsub.f32 1.0, %v4397
        %v4399 = vmul.f32 %v4396, %v4398
        %v4400 = vadd.f32 %v4396, %v4399
        %vm4401 = vweird.f32 %v4365
        %vm4402 = vweird.f32 %v4396
        %vm4403 = vmor %vm4401, %vm4402
        %v4404 = vsel %vm4403, %v4396, %v4400
        %v4405 = vand.u32 2147483647, %v4365
        %vm4406 = vcmp.eq.f32.partialorder %v4405, 8.507059e+37
        %v4407 = vand.u32 %v4365, 2147483648
        %v4408 = vor.u32 1.1754944e-38, %v4407
        %v4409 = vsel %vm4406, %v4408, %v4404
        %v4410 = vrcp.pop %v4367
        %v4411 = vmul.f32 %v4367, %v4410
        %v4412 = vsub.f32 1.0, %v4411
        %v4413 = vmul.f32 %v4410, %v4412
        %v4414 = vadd.f32 %v4410, %v4413
        %vm4415 = vweird.f32 %v4367
        %vm4416 = vweird.f32 %v4410
        %vm4417 = vmor %vm4415, %vm4416
        %v4418 = vsel %vm4417, %v4410, %v4414
        %v4419 = vand.u32 2147483647, %v4367
        %vm4420 = vcmp.eq.f32.partialorder %v4419, 8.507059e+37
        %v4421 = vand.u32 %v4367, 2147483648
        %v4422 = vor.u32 1.1754944e-38, %v4421
        %v4423 = vsel %vm4420, %v4422, %v4418
        %v4424 = vrcp.pop %v4369
        %v4425 = vmul.f32 %v4369, %v4424
        %v4426 = vsub.f32 1.0, %v4425
        %v4427 = vmul.f32 %v4424, %v4426
        %v4428 = vadd.f32 %v4424, %v4427
        %vm4429 = vweird.f32 %v4369
        %vm4430 = vweird.f32 %v4424
        %vm4431 = vmor %vm4429, %vm4430
        %v4432 = vsel %vm4431, %v4424, %v4428
        %v4433 = vand.u32 2147483647, %v4369
        %vm4434 = vcmp.eq.f32.partialorder %v4433, 8.507059e+37
        %v4435 = vand.u32 %v4369, 2147483648
        %v4436 = vor.u32 1.1754944e-38, %v4435
        %v4437 = vsel %vm4434, %v4436, %v4432
        %v4438 = vrcp.pop %v4371
        %v4439 = vmul.f32 %v4371, %v4438
        %v4440 = vsub.f32 1.0, %v4439
        %v4441 = vmul.f32 %v4438, %v4440
        %v4442 = vadd.f32 %v4438, %v4441
        %vm4443 = vweird.f32 %v4371
        %vm4444 = vweird.f32 %v4438
        %vm4445 = vmor %vm4443, %vm4444
        %v4446 = vsel %vm4445, %v4438, %v4442
        %v4447 = vand.u32 2147483647, %v4371
        %vm4448 = vcmp.eq.f32.partialorder %v4447, 8.507059e+37
        %v4449 = vand.u32 %v4371, 2147483648
        %v4450 = vor.u32 1.1754944e-38, %v4449
        %v4451 = vsel %vm4448, %v4450, %v4446
        %v4452 = vrcp.pop %v4373
        %v4453 = vmul.f32 %v4373, %v4452
        %v4454 = vsub.f32 1.0, %v4453
        %v4455 = vmul.f32 %v4452, %v4454
        %v4456 = vadd.f32 %v4452, %v4455
        %vm4457 = vweird.f32 %v4373
        %vm4458 = vweird.f32 %v4452
        %vm4459 = vmor %vm4457, %vm4458
        %v4460 = vsel %vm4459, %v4452, %v4456
        %v4461 = vand.u32 2147483647, %v4373
        %vm4462 = vcmp.eq.f32.partialorder %v4461, 8.507059e+37
        %v4463 = vand.u32 %v4373, 2147483648
        %v4464 = vor.u32 1.1754944e-38, %v4463
        %v4465 = vsel %vm4462, %v4464, %v4460
        %v4466 = vrcp.pop %v4375
        %v4467 = vmul.f32 %v4375, %v4466
        %v4468 = vsub.f32 1.0, %v4467
        %v4469 = vmul.f32 %v4466, %v4468
        %v4470 = vadd.f32 %v4466, %v4469
        %vm4471 = vweird.f32 %v4375
        %vm4472 = vweird.f32 %v4466
        %vm4473 = vmor %vm4471, %vm4472
        %v4474 = vsel %vm4473, %v4466, %v4470
        %v4475 = vand.u32 2147483647, %v4375
        %vm4476 = vcmp.eq.f32.partialorder %v4475, 8.507059e+37
        %v4477 = vand.u32 %v4375, 2147483648
        %v4478 = vor.u32 1.1754944e-38, %v4477
        %v4479 = vsel %vm4476, %v4478, %v4474
        %v4480 = vrcp.pop %v4377
        %v4481 = vmul.f32 %v4377, %v4480
        %v4482 = vsub.f32 1.0, %v4481
        %v4483 = vmul.f32 %v4480, %v4482
        %v4484 = vadd.f32 %v4480, %v4483
        %vm4485 = vweird.f32 %v4377
        %vm4486 = vweird.f32 %v4480
        %vm4487 = vmor %vm4485, %vm4486
        %v4488 = vsel %vm4487, %v4480, %v4484
        %v4489 = vand.u32 2147483647, %v4377
        %vm4490 = vcmp.eq.f32.partialorder %v4489, 8.507059e+37
        %v4491 = vand.u32 %v4377, 2147483648
        %v4492 = vor.u32 1.1754944e-38, %v4491
        %v4493 = vsel %vm4490, %v4492, %v4488
        %v4494 = vrcp.pop %v4379
        %v4495 = vmul.f32 %v4379, %v4494
        %v4496 = vsub.f32 1.0, %v4495
        %v4497 = vmul.f32 %v4494, %v4496
        %v4498 = vadd.f32 %v4494, %v4497
        %vm4499 = vweird.f32 %v4379
        %vm4500 = vweird.f32 %v4494
        %vm4501 = vmor %vm4499, %vm4500
        %v4502 = vsel %vm4501, %v4494, %v4498
        %v4503 = vand.u32 2147483647, %v4379
        %vm4504 = vcmp.eq.f32.partialorder %v4503, 8.507059e+37
        %v4505 = vand.u32 %v4379, 2147483648
        %v4506 = vor.u32 1.1754944e-38, %v4505
        %v4507 = vsel %vm4504, %v4506, %v4502
        %v4508 = vrcp.pop %v4381
        %v4509 = vmul.f32 %v4381, %v4508
        %v4510 = vsub.f32 1.0, %v4509
        %v4511 = vmul.f32 %v4508, %v4510
        %v4512 = vadd.f32 %v4508, %v4511
        %vm4513 = vweird.f32 %v4381
        %vm4514 = vweird.f32 %v4508
        %vm4515 = vmor %vm4513, %vm4514
        %v4516 = vsel %vm4515, %v4508, %v4512
        %v4517 = vand.u32 2147483647, %v4381
        %vm4518 = vcmp.eq.f32.partialorder %v4517, 8.507059e+37
        %v4519 = vand.u32 %v4381, 2147483648
        %v4520 = vor.u32 1.1754944e-38, %v4519
        %v4521 = vsel %vm4518, %v4520, %v4516
        %v4522 = vrcp.pop %v4383
        %v4523 = vmul.f32 %v4383, %v4522
        %v4524 = vsub.f32 1.0, %v4523
        %v4525 = vmul.f32 %v4522, %v4524
        %v4526 = vadd.f32 %v4522, %v4525
        %vm4527 = vweird.f32 %v4383
        %vm4528 = vweird.f32 %v4522
        %vm4529 = vmor %vm4527, %vm4528
        %v4530 = vsel %vm4529, %v4522, %v4526
        %v4531 = vand.u32 2147483647, %v4383
        %vm4532 = vcmp.eq.f32.partialorder %v4531, 8.507059e+37
        %v4533 = vand.u32 %v4383, 2147483648
        %v4534 = vor.u32 1.1754944e-38, %v4533
        %v4535 = vsel %vm4532, %v4534, %v4530
        %v4536 = vrcp.pop %v4385
        %v4537 = vmul.f32 %v4385, %v4536
        %v4538 = vsub.f32 1.0, %v4537
        %v4539 = vmul.f32 %v4536, %v4538
        %v4540 = vadd.f32 %v4536, %v4539
        %vm4541 = vweird.f32 %v4385
        %vm4542 = vweird.f32 %v4536
        %vm4543 = vmor %vm4541, %vm4542
        %v4544 = vsel %vm4543, %v4536, %v4540
        %v4545 = vand.u32 2147483647, %v4385
        %vm4546 = vcmp.eq.f32.partialorder %v4545, 8.507059e+37
        %v4547 = vand.u32 %v4385, 2147483648
        %v4548 = vor.u32 1.1754944e-38, %v4547
        %v4549 = vsel %vm4546, %v4548, %v4544
        %v4550 = vrcp.pop %v4387
        %v4551 = vmul.f32 %v4387, %v4550
        %v4552 = vsub.f32 1.0, %v4551
        %v4553 = vmul.f32 %v4550, %v4552
        %v4554 = vadd.f32 %v4550, %v4553
        %vm4555 = vweird.f32 %v4387
        %vm4556 = vweird.f32 %v4550
        %vm4557 = vmor %vm4555, %vm4556
        %v4558 = vsel %vm4557, %v4550, %v4554
        %v4559 = vand.u32 2147483647, %v4387
        %vm4560 = vcmp.eq.f32.partialorder %v4559, 8.507059e+37
        %v4561 = vand.u32 %v4387, 2147483648
        %v4562 = vor.u32 1.1754944e-38, %v4561
        %v4563 = vsel %vm4560, %v4562, %v4558
        %v4564 = vrcp.pop %v4389
        %v4565 = vmul.f32 %v4389, %v4564
        %v4566 = vsub.f32 1.0, %v4565
        %v4567 = vmul.f32 %v4564, %v4566
        %v4568 = vadd.f32 %v4564, %v4567
        %vm4569 = vweird.f32 %v4389
        %vm4570 = vweird.f32 %v4564
        %vm4571 = vmor %vm4569, %vm4570
        %v4572 = vsel %vm4571, %v4564, %v4568
        %v4573 = vand.u32 2147483647, %v4389
        %vm4574 = vcmp.eq.f32.partialorder %v4573, 8.507059e+37
        %v4575 = vand.u32 %v4389, 2147483648
        %v4576 = vor.u32 1.1754944e-38, %v4575
        %v4577 = vsel %vm4574, %v4576, %v4572
        %v4578 = vrcp.pop %v4391
        %v4579 = vmul.f32 %v4391, %v4578
        %v4580 = vsub.f32 1.0, %v4579
        %v4581 = vmul.f32 %v4578, %v4580
        %v4582 = vadd.f32 %v4578, %v4581
        %vm4583 = vweird.f32 %v4391
        %vm4584 = vweird.f32 %v4578
        %vm4585 = vmor %vm4583, %vm4584
        %v4586 = vsel %vm4585, %v4578, %v4582
        %v4587 = vand.u32 2147483647, %v4391
        %vm4588 = vcmp.eq.f32.partialorder %v4587, 8.507059e+37
        %v4589 = vand.u32 %v4391, 2147483648
        %v4590 = vor.u32 1.1754944e-38, %v4589
        %v4591 = vsel %vm4588, %v4590, %v4586
        %v4592 = vrcp.pop %v4393
        %v4593 = vmul.f32 %v4393, %v4592
        %v4594 = vsub.f32 1.0, %v4593
        %v4595 = vmul.f32 %v4592, %v4594
        %v4596 = vadd.f32 %v4592, %v4595
        %vm4597 = vweird.f32 %v4393
        %vm4598 = vweird.f32 %v4592
        %vm4599 = vmor %vm4597, %vm4598
        %v4600 = vsel %vm4599, %v4592, %v4596
        %v4601 = vand.u32 2147483647, %v4393
        %vm4602 = vcmp.eq.f32.partialorder %v4601, 8.507059e+37
        %v4603 = vand.u32 %v4393, 2147483648
        %v4604 = vor.u32 1.1754944e-38, %v4603
        %v4605 = vsel %vm4602, %v4604, %v4600
        %v4606 = vrcp.pop %v4395
        %v4607 = vmul.f32 %v4395, %v4606
        %v4608 = vsub.f32 1.0, %v4607
        %v4609 = vmul.f32 %v4606, %v4608
        %v4610 = vadd.f32 %v4606, %v4609
        %vm4611 = vweird.f32 %v4395
        %vm4612 = vweird.f32 %v4606
        %vm4613 = vmor %vm4611, %vm4612
        %v4614 = vsel %vm4613, %v4606, %v4610
        %v4615 = vand.u32 2147483647, %v4395
        %vm4616 = vcmp.eq.f32.partialorder %v4615, 8.507059e+37
        %v4617 = vand.u32 %v4395, 2147483648
        %v4618 = vor.u32 1.1754944e-38, %v4617
        %v4619 = vsel %vm4616, %v4618, %v4614
        %v4620 = vmul.f32 %v4333, %v4409
        %v4621 = vmul.f32 %v4335, %v4423
        %v4622 = vmul.f32 %v4337, %v4437
        %v4623 = vmul.f32 %v4339, %v4451
        %v4624 = vmul.f32 %v4341, %v4465
        %v4625 = vmul.f32 %v4343, %v4479
        %v4626 = vmul.f32 %v4345, %v4493
        %v4627 = vmul.f32 %v4347, %v4507
        %v4628 = vmul.f32 %v4349, %v4521
        %v4629 = vmul.f32 %v4351, %v4535
        %v4630 = vmul.f32 %v4353, %v4549
        %v4631 = vmul.f32 %v4355, %v4563
        %v4632 = vmul.f32 %v4357, %v4577
        %v4633 = vmul.f32 %v4359, %v4591
        %v4634 = vmul.f32 %v4361, %v4605
        %v4635 = vmul.f32 %v4363, %v4619
        %v4636 = vadd.f32 %v3962, %v4620
        %v4637 = vadd.f32 %v3963, %v4621
        %v4638 = vadd.f32 %v3964, %v4622
        %v4639 = vadd.f32 %v3965, %v4623
        %v4640 = vadd.f32 %v3966, %v4624
        %v4641 = vadd.f32 %v3967, %v4625
        %v4642 = vadd.f32 %v3968, %v4626
        %v4643 = vadd.f32 %v3969, %v4627
        %v4644 = vadd.f32 %v3970, %v4628
        %v4645 = vadd.f32 %v3971, %v4629
        %v4646 = vadd.f32 %v3972, %v4630
        %v4647 = vadd.f32 %v3973, %v4631
        %v4648 = vadd.f32 %v3974, %v4632
        %v4649 = vadd.f32 %v3975, %v4633
        %v4650 = vadd.f32 %v3976, %v4634
        %v4651 = vadd.f32 %v3977, %v4635
        %4652 = vrot.lane.b32.xlu0 %v737, 48
        %v4653 = vpop.permute.xlu0 %4652
        %4654 = vrot.lane.b32.xlu0 %v740, 48
        %v4655 = vpop.permute.xlu0 %4654
        %4656 = vrot.lane.b32.xlu0 %v743, 48
        %v4657 = vpop.permute.xlu0 %4656
        %4658 = vrot.lane.b32.xlu0 %v746, 48
        %v4659 = vpop.permute.xlu0 %4658
        %4660 = vrot.lane.b32.xlu0 %v749, 48
        %v4661 = vpop.permute.xlu0 %4660
        %4662 = vrot.lane.b32.xlu0 %v752, 48
        %v4663 = vpop.permute.xlu0 %4662
        %4664 = vrot.lane.b32.xlu0 %v755, 48
        %v4665 = vpop.permute.xlu0 %4664
        %4666 = vrot.lane.b32.xlu0 %v758, 48
        %v4667 = vpop.permute.xlu0 %4666
        %4668 = vrot.lane.b32.xlu0 %v761, 48
        %v4669 = vpop.permute.xlu0 %4668
        %4670 = vrot.lane.b32.xlu0 %v764, 48
        %v4671 = vpop.permute.xlu0 %4670
        %4672 = vrot.lane.b32.xlu0 %v767, 48
        %v4673 = vpop.permute.xlu0 %4672
        %4674 = vrot.lane.b32.xlu0 %v770, 48
        %v4675 = vpop.permute.xlu0 %4674
        %4676 = vrot.lane.b32.xlu0 %v773, 48
        %v4677 = vpop.permute.xlu0 %4676
        %4678 = vrot.lane.b32.xlu0 %v776, 48
        %v4679 = vpop.permute.xlu0 %4678
        %4680 = vrot.lane.b32.xlu0 %v779, 48
        %v4681 = vpop.permute.xlu0 %4680
        %4682 = vrot.lane.b32.xlu0 %v782, 48
        %v4683 = vpop.permute.xlu0 %4682
        %4700 = vmatpush.msra.mxu0 %v4683
        %4701 = vmatpush.msra.mxu0 %v4681
        %4702 = vmatpush.msra.mxu0 %v4679
        %4703 = vmatpush.msra.mxu0 %v4677
        %4704 = vmatpush.msra.mxu0 %v4675
        %4705 = vmatpush.msra.mxu0 %v4673
        %4706 = vmatpush.msra.mxu0 %v4671
        %4707 = vmatpush.msra.mxu0 %v4669
        %4708 = vmatpush.msra.mxu0 %v4667
        %4709 = vmatpush.msra.mxu0 %v4665
        %4710 = vmatpush.msra.mxu0 %v4663
        %4711 = vmatpush.msra.mxu0 %v4661
        %4712 = vmatpush.msra.mxu0 %v4659
        %4713 = vmatpush.msra.mxu0 %v4657
        %4714 = vmatpush.msra.mxu0 %v4655
        %4715 = vmatpush.msra.mxu0 %v4653
        %4716 = vmatmul.f32.gmra.mxu0 %v4620
        %v4717 = vpop.f32.mrf.mxu0
        %v4718 = vadd.f32 0.0, %v4717
        %4719 = vmatmul.f32.gmra.mxu0 %v4621
        %v4720 = vpop.f32.mrf.mxu0
        %v4721 = vadd.f32 0.0, %v4720
        %4722 = vmatmul.f32.gmra.mxu0 %v4622
        %v4723 = vpop.f32.mrf.mxu0
        %v4724 = vadd.f32 0.0, %v4723
        %4725 = vmatmul.f32.gmra.mxu0 %v4623
        %v4726 = vpop.f32.mrf.mxu0
        %v4727 = vadd.f32 0.0, %v4726
        %4728 = vmatmul.f32.gmra.mxu0 %v4624
        %v4729 = vpop.f32.mrf.mxu0
        %v4730 = vadd.f32 0.0, %v4729
        %4731 = vmatmul.f32.gmra.mxu0 %v4625
        %v4732 = vpop.f32.mrf.mxu0
        %v4733 = vadd.f32 0.0, %v4732
        %4734 = vmatmul.f32.gmra.mxu0 %v4626
        %v4735 = vpop.f32.mrf.mxu0
        %v4736 = vadd.f32 0.0, %v4735
        %4737 = vmatmul.f32.gmra.mxu0 %v4627
        %v4738 = vpop.f32.mrf.mxu0
        %v4739 = vadd.f32 0.0, %v4738
        %4740 = vmatmul.f32.gmra.mxu0 %v4628
        %v4741 = vpop.f32.mrf.mxu0
        %v4742 = vadd.f32 0.0, %v4741
        %4743 = vmatmul.f32.gmra.mxu0 %v4629
        %v4744 = vpop.f32.mrf.mxu0
        %v4745 = vadd.f32 0.0, %v4744
        %4746 = vmatmul.f32.gmra.mxu0 %v4630
        %v4747 = vpop.f32.mrf.mxu0
        %v4748 = vadd.f32 0.0, %v4747
        %4749 = vmatmul.f32.gmra.mxu0 %v4631
        %v4750 = vpop.f32.mrf.mxu0
        %v4751 = vadd.f32 0.0, %v4750
        %4752 = vmatmul.f32.gmra.mxu0 %v4632
        %v4753 = vpop.f32.mrf.mxu0
        %v4754 = vadd.f32 0.0, %v4753
        %4755 = vmatmul.f32.gmra.mxu0 %v4633
        %v4756 = vpop.f32.mrf.mxu0
        %v4757 = vadd.f32 0.0, %v4756
        %4758 = vmatmul.f32.gmra.mxu0 %v4634
        %v4759 = vpop.f32.mrf.mxu0
        %v4760 = vadd.f32 0.0, %v4759
        %4761 = vmatmul.f32.gmra.mxu0 %v4635
        %v4762 = vpop.f32.mrf.mxu0
        %v4763 = vadd.f32 0.0, %v4762
        %4764 = vdwg.mxu0
        %4765 = vrot.lane.b32.xlu0 %v598, 32
        %v4766 = vpop.permute.xlu0 %4765
        %4767 = vrot.lane.b32.xlu0 %v599, 32
        %v4768 = vpop.permute.xlu0 %4767
        %4769 = vrot.lane.b32.xlu0 %v600, 32
        %v4770 = vpop.permute.xlu0 %4769
        %4771 = vrot.lane.b32.xlu0 %v601, 32
        %v4772 = vpop.permute.xlu0 %4771
        %4773 = vrot.lane.b32.xlu0 %v602, 32
        %v4774 = vpop.permute.xlu0 %4773
        %4775 = vrot.lane.b32.xlu0 %v603, 32
        %v4776 = vpop.permute.xlu0 %4775
        %4777 = vrot.lane.b32.xlu0 %v604, 32
        %v4778 = vpop.permute.xlu0 %4777
        %4779 = vrot.lane.b32.xlu0 %v605, 32
        %v4780 = vpop.permute.xlu0 %4779
        %4781 = vrot.lane.b32.xlu0 %v606, 32
        %v4782 = vpop.permute.xlu0 %4781
        %4783 = vrot.lane.b32.xlu0 %v607, 32
        %v4784 = vpop.permute.xlu0 %4783
        %4785 = vrot.lane.b32.xlu0 %v608, 32
        %v4786 = vpop.permute.xlu0 %4785
        %4787 = vrot.lane.b32.xlu0 %v609, 32
        %v4788 = vpop.permute.xlu0 %4787
        %4789 = vrot.lane.b32.xlu0 %v610, 32
        %v4790 = vpop.permute.xlu0 %4789
        %4791 = vrot.lane.b32.xlu0 %v611, 32
        %v4792 = vpop.permute.xlu0 %4791
        %4793 = vrot.lane.b32.xlu0 %v612, 32
        %v4794 = vpop.permute.xlu0 %4793
        %4795 = vrot.lane.b32.xlu0 %v613, 32
        %v4796 = vpop.permute.xlu0 %4795
        %4797 = vrot.lane.b32.xlu0 %v652, 32
        %v4798 = vpop.permute.xlu0 %4797
        %4799 = vrot.lane.b32.xlu0 %v655, 32
        %v4800 = vpop.permute.xlu0 %4799
        %4801 = vrot.lane.b32.xlu0 %v658, 32
        %v4802 = vpop.permute.xlu0 %4801
        %4803 = vrot.lane.b32.xlu0 %v661, 32
        %v4804 = vpop.permute.xlu0 %4803
        %4805 = vrot.lane.b32.xlu0 %v664, 32
        %v4806 = vpop.permute.xlu0 %4805
        %4807 = vrot.lane.b32.xlu0 %v667, 32
        %v4808 = vpop.permute.xlu0 %4807
        %4809 = vrot.lane.b32.xlu0 %v670, 32
        %v4810 = vpop.permute.xlu0 %4809
        %4811 = vrot.lane.b32.xlu0 %v673, 32
        %v4812 = vpop.permute.xlu0 %4811
        %4813 = vrot.lane.b32.xlu0 %v676, 32
        %v4814 = vpop.permute.xlu0 %4813
        %4815 = vrot.lane.b32.xlu0 %v679, 32
        %v4816 = vpop.permute.xlu0 %4815
        %4817 = vrot.lane.b32.xlu0 %v682, 32
        %v4818 = vpop.permute.xlu0 %4817
        %4819 = vrot.lane.b32.xlu0 %v685, 32
        %v4820 = vpop.permute.xlu0 %4819
        %4821 = vrot.lane.b32.xlu0 %v688, 32
        %v4822 = vpop.permute.xlu0 %4821
        %4823 = vrot.lane.b32.xlu0 %v691, 32
        %v4824 = vpop.permute.xlu0 %4823
        %4825 = vrot.lane.b32.xlu0 %v694, 32
        %v4826 = vpop.permute.xlu0 %4825
        %4827 = vrot.lane.b32.xlu0 %v697, 32
        %v4828 = vpop.permute.xlu0 %4827
        %v4829 = vsel %vm784, %v4766, 0
        %v4831 = vsel %vm784, %v4768, 0
        %v4833 = vsel %vm784, %v4770, 0
        %v4835 = vsel %vm784, %v4772, 0
        %v4837 = vsel %vm784, %v4774, 0
        %v4839 = vsel %vm784, %v4776, 0
        %v4841 = vsel %vm784, %v4778, 0
        %v4843 = vsel %vm784, %v4780, 0
        %v4845 = vsel %vm784, %v4782, 0
        %v4847 = vsel %vm784, %v4784, 0
        %v4849 = vsel %vm784, %v4786, 0
        %v4851 = vsel %vm784, %v4788, 0
        %v4853 = vsel %vm784, %v4790, 0
        %v4855 = vsel %vm784, %v4792, 0
        %v4857 = vsel %vm784, %v4794, 0
        %v4859 = vsel %vm784, %v4796, 0
        %v4861 = vsel %vm784, %v4798, 0
        %v4863 = vsel %vm784, %v4800, 0
        %v4865 = vsel %vm784, %v4802, 0
        %v4867 = vsel %vm784, %v4804, 0
        %v4869 = vsel %vm784, %v4806, 0
        %v4871 = vsel %vm784, %v4808, 0
        %v4873 = vsel %vm784, %v4810, 0
        %v4875 = vsel %vm784, %v4812, 0
        %v4877 = vsel %vm784, %v4814, 0
        %v4879 = vsel %vm784, %v4816, 0
        %v4881 = vsel %vm784, %v4818, 0
        %v4883 = vsel %vm784, %v4820, 0
        %v4885 = vsel %vm784, %v4822, 0
        %v4887 = vsel %vm784, %v4824, 0
        %v4889 = vsel %vm784, %v4826, 0
        %v4891 = vsel %vm784, %v4828, 0
        %4893 = vmatpush.xpose.msra.mxu0 %v4891
        %4894 = vmatpush.xpose.msra.mxu0 %v4889
        %4895 = vmatpush.xpose.msra.mxu0 %v4887
        %4896 = vmatpush.xpose.msra.mxu0 %v4885
        %4897 = vmatpush.xpose.msra.mxu0 %v4883
        %4898 = vmatpush.xpose.msra.mxu0 %v4881
        %4899 = vmatpush.xpose.msra.mxu0 %v4879
        %4900 = vmatpush.xpose.msra.mxu0 %v4877
        %4901 = vmatpush.xpose.msra.mxu0 %v4875
        %4902 = vmatpush.xpose.msra.mxu0 %v4873
        %4903 = vmatpush.xpose.msra.mxu0 %v4871
        %4904 = vmatpush.xpose.msra.mxu0 %v4869
        %4905 = vmatpush.xpose.msra.mxu0 %v4867
        %4906 = vmatpush.xpose.msra.mxu0 %v4865
        %4907 = vmatpush.xpose.msra.mxu0 %v4863
        %4908 = vmatpush.xpose.msra.mxu0 %v4861
        %4909 = vmatmul.f32.gmra.mxu0 %v4829
        %v4910 = vpop.f32.mrf.mxu0
        %v4911 = vadd.f32 0.0, %v4910
        %4912 = vmatmul.f32.gmra.mxu0 %v4831
        %v4913 = vpop.f32.mrf.mxu0
        %v4914 = vadd.f32 0.0, %v4913
        %4915 = vmatmul.f32.gmra.mxu0 %v4833
        %v4916 = vpop.f32.mrf.mxu0
        %v4917 = vadd.f32 0.0, %v4916
        %4918 = vmatmul.f32.gmra.mxu0 %v4835
        %v4919 = vpop.f32.mrf.mxu0
        %v4920 = vadd.f32 0.0, %v4919
        %4921 = vmatmul.f32.gmra.mxu0 %v4837
        %v4922 = vpop.f32.mrf.mxu0
        %v4923 = vadd.f32 0.0, %v4922
        %4924 = vmatmul.f32.gmra.mxu0 %v4839
        %v4925 = vpop.f32.mrf.mxu0
        %v4926 = vadd.f32 0.0, %v4925
        %4927 = vmatmul.f32.gmra.mxu0 %v4841
        %v4928 = vpop.f32.mrf.mxu0
        %v4929 = vadd.f32 0.0, %v4928
        %4930 = vmatmul.f32.gmra.mxu0 %v4843
        %v4931 = vpop.f32.mrf.mxu0
        %v4932 = vadd.f32 0.0, %v4931
        %4933 = vmatmul.f32.gmra.mxu0 %v4845
        %v4934 = vpop.f32.mrf.mxu0
        %v4935 = vadd.f32 0.0, %v4934
        %4936 = vmatmul.f32.gmra.mxu0 %v4847
        %v4937 = vpop.f32.mrf.mxu0
        %v4938 = vadd.f32 0.0, %v4937
        %4939 = vmatmul.f32.gmra.mxu0 %v4849
        %v4940 = vpop.f32.mrf.mxu0
        %v4941 = vadd.f32 0.0, %v4940
        %4942 = vmatmul.f32.gmra.mxu0 %v4851
        %v4943 = vpop.f32.mrf.mxu0
        %v4944 = vadd.f32 0.0, %v4943
        %4945 = vmatmul.f32.gmra.mxu0 %v4853
        %v4946 = vpop.f32.mrf.mxu0
        %v4947 = vadd.f32 0.0, %v4946
        %4948 = vmatmul.f32.gmra.mxu0 %v4855
        %v4949 = vpop.f32.mrf.mxu0
        %v4950 = vadd.f32 0.0, %v4949
        %4951 = vmatmul.f32.gmra.mxu0 %v4857
        %v4952 = vpop.f32.mrf.mxu0
        %v4953 = vadd.f32 0.0, %v4952
        %4954 = vmatmul.f32.gmra.mxu0 %v4859
        %v4955 = vpop.f32.mrf.mxu0
        %v4956 = vadd.f32 0.0, %v4955
        %4957 = vdwg.mxu0
        %4958 = vmax.xlane.f32.xlu0 %v4911
        %v4959 = vpop.xlane.xlu0 %4958
        %4960 = vmax.xlane.f32.xlu0 %v4914
        %v4961 = vpop.xlane.xlu0 %4960
        %4962 = vmax.xlane.f32.xlu0 %v4917
        %v4963 = vpop.xlane.xlu0 %4962
        %4964 = vmax.xlane.f32.xlu0 %v4920
        %v4965 = vpop.xlane.xlu0 %4964
        %4966 = vmax.xlane.f32.xlu0 %v4923
        %v4967 = vpop.xlane.xlu0 %4966
        %4968 = vmax.xlane.f32.xlu0 %v4926
        %v4969 = vpop.xlane.xlu0 %4968
        %4970 = vmax.xlane.f32.xlu0 %v4929
        %v4971 = vpop.xlane.xlu0 %4970
        %4972 = vmax.xlane.f32.xlu0 %v4932
        %v4973 = vpop.xlane.xlu0 %4972
        %4974 = vmax.xlane.f32.xlu0 %v4935
        %v4975 = vpop.xlane.xlu0 %4974
        %4976 = vmax.xlane.f32.xlu0 %v4938
        %v4977 = vpop.xlane.xlu0 %4976
        %4978 = vmax.xlane.f32.xlu0 %v4941
        %v4979 = vpop.xlane.xlu0 %4978
        %4980 = vmax.xlane.f32.xlu0 %v4944
        %v4981 = vpop.xlane.xlu0 %4980
        %4982 = vmax.xlane.f32.xlu0 %v4947
        %v4983 = vpop.xlane.xlu0 %4982
        %4984 = vmax.xlane.f32.xlu0 %v4950
        %v4985 = vpop.xlane.xlu0 %4984
        %4986 = vmax.xlane.f32.xlu0 %v4953
        %v4987 = vpop.xlane.xlu0 %4986
        %4988 = vmax.xlane.f32.xlu0 %v4956
        %v4989 = vpop.xlane.xlu0 %4988
        %v4990 = vsub.f32 %v4911, %v4959
        %v4991 = vsub.f32 %v4914, %v4961
        %v4992 = vsub.f32 %v4917, %v4963
        %v4993 = vsub.f32 %v4920, %v4965
        %v4994 = vsub.f32 %v4923, %v4967
        %v4995 = vsub.f32 %v4926, %v4969
        %v4996 = vsub.f32 %v4929, %v4971
        %v4997 = vsub.f32 %v4932, %v4973
        %v4998 = vsub.f32 %v4935, %v4975
        %v4999 = vsub.f32 %v4938, %v4977
        %v5000 = vsub.f32 %v4941, %v4979
        %v5001 = vsub.f32 %v4944, %v4981
        %v5002 = vsub.f32 %v4947, %v4983
        %v5003 = vsub.f32 %v4950, %v4985
        %v5004 = vsub.f32 %v4953, %v4987
        %v5005 = vsub.f32 %v4956, %v4989
        %v5006 = vmul.f32 %v4990, 1.442695
        %v5007 = vpow.pop %v5006
        %v5008 = vmul.f32 %v4991, 1.442695
        %v5009 = vpow.pop %v5008
        %v5010 = vmul.f32 %v4992, 1.442695
        %v5011 = vpow.pop %v5010
        %v5012 = vmul.f32 %v4993, 1.442695
        %v5013 = vpow.pop %v5012
        %v5014 = vmul.f32 %v4994, 1.442695
        %v5015 = vpow.pop %v5014
        %v5016 = vmul.f32 %v4995, 1.442695
        %v5017 = vpow.pop %v5016
        %v5018 = vmul.f32 %v4996, 1.442695
        %v5019 = vpow.pop %v5018
        %v5020 = vmul.f32 %v4997, 1.442695
        %v5021 = vpow.pop %v5020
        %v5022 = vmul.f32 %v4998, 1.442695
        %v5023 = vpow.pop %v5022
        %v5024 = vmul.f32 %v4999, 1.442695
        %v5025 = vpow.pop %v5024
        %v5026 = vmul.f32 %v5000, 1.442695
        %v5027 = vpow.pop %v5026
        %v5028 = vmul.f32 %v5001, 1.442695
        %v5029 = vpow.pop %v5028
        %v5030 = vmul.f32 %v5002, 1.442695
        %v5031 = vpow.pop %v5030
        %v5032 = vmul.f32 %v5003, 1.442695
        %v5033 = vpow.pop %v5032
        %v5034 = vmul.f32 %v5004, 1.442695
        %v5035 = vpow.pop %v5034
        %v5036 = vmul.f32 %v5005, 1.442695
        %v5037 = vpow.pop %v5036
        %5038 = vadd.xlane.f32.xlu0 %v5007
        %v5039 = vpop.xlane.xlu0 %5038
        %5040 = vadd.xlane.f32.xlu0 %v5009
        %v5041 = vpop.xlane.xlu0 %5040
        %5042 = vadd.xlane.f32.xlu0 %v5011
        %v5043 = vpop.xlane.xlu0 %5042
        %5044 = vadd.xlane.f32.xlu0 %v5013
        %v5045 = vpop.xlane.xlu0 %5044
        %5046 = vadd.xlane.f32.xlu0 %v5015
        %v5047 = vpop.xlane.xlu0 %5046
        %5048 = vadd.xlane.f32.xlu0 %v5017
        %v5049 = vpop.xlane.xlu0 %5048
        %5050 = vadd.xlane.f32.xlu0 %v5019
        %v5051 = vpop.xlane.xlu0 %5050
        %5052 = vadd.xlane.f32.xlu0 %v5021
        %v5053 = vpop.xlane.xlu0 %5052
        %5054 = vadd.xlane.f32.xlu0 %v5023
        %v5055 = vpop.xlane.xlu0 %5054
        %5056 = vadd.xlane.f32.xlu0 %v5025
        %v5057 = vpop.xlane.xlu0 %5056
        %5058 = vadd.xlane.f32.xlu0 %v5027
        %v5059 = vpop.xlane.xlu0 %5058
        %5060 = vadd.xlane.f32.xlu0 %v5029
        %v5061 = vpop.xlane.xlu0 %5060
        %5062 = vadd.xlane.f32.xlu0 %v5031
        %v5063 = vpop.xlane.xlu0 %5062
        %5064 = vadd.xlane.f32.xlu0 %v5033
        %v5065 = vpop.xlane.xlu0 %5064
        %5066 = vadd.xlane.f32.xlu0 %v5035
        %v5067 = vpop.xlane.xlu0 %5066
        %5068 = vadd.xlane.f32.xlu0 %v5037
        %v5069 = vpop.xlane.xlu0 %5068
        %v5070 = vrcp.pop %v5039
        %v5071 = vmul.f32 %v5039, %v5070
        %v5072 = vsub.f32 1.0, %v5071
        %v5073 = vmul.f32 %v5070, %v5072
        %v5074 = vadd.f32 %v5070, %v5073
        %vm5075 = vweird.f32 %v5039
        %vm5076 = vweird.f32 %v5070
        %vm5077 = vmor %vm5075, %vm5076
        %v5078 = vsel %vm5077, %v5070, %v5074
        %v5079 = vand.u32 2147483647, %v5039
        %vm5080 = vcmp.eq.f32.partialorder %v5079, 8.507059e+37
        %v5081 = vand.u32 %v5039, 2147483648
        %v5082 = vor.u32 1.1754944e-38, %v5081
        %v5083 = vsel %vm5080, %v5082, %v5078
        %v5084 = vrcp.pop %v5041
        %v5085 = vmul.f32 %v5041, %v5084
        %v5086 = vsub.f32 1.0, %v5085
        %v5087 = vmul.f32 %v5084, %v5086
        %v5088 = vadd.f32 %v5084, %v5087
        %vm5089 = vweird.f32 %v5041
        %vm5090 = vweird.f32 %v5084
        %vm5091 = vmor %vm5089, %vm5090
        %v5092 = vsel %vm5091, %v5084, %v5088
        %v5093 = vand.u32 2147483647, %v5041
        %vm5094 = vcmp.eq.f32.partialorder %v5093, 8.507059e+37
        %v5095 = vand.u32 %v5041, 2147483648
        %v5096 = vor.u32 1.1754944e-38, %v5095
        %v5097 = vsel %vm5094, %v5096, %v5092
        %v5098 = vrcp.pop %v5043
        %v5099 = vmul.f32 %v5043, %v5098
        %v5100 = vsub.f32 1.0, %v5099
        %v5101 = vmul.f32 %v5098, %v5100
        %v5102 = vadd.f32 %v5098, %v5101
        %vm5103 = vweird.f32 %v5043
        %vm5104 = vweird.f32 %v5098
        %vm5105 = vmor %vm5103, %vm5104
        %v5106 = vsel %vm5105, %v5098, %v5102
        %v5107 = vand.u32 2147483647, %v5043
        %vm5108 = vcmp.eq.f32.partialorder %v5107, 8.507059e+37
        %v5109 = vand.u32 %v5043, 2147483648
        %v5110 = vor.u32 1.1754944e-38, %v5109
        %v5111 = vsel %vm5108, %v5110, %v5106
        %v5112 = vrcp.pop %v5045
        %v5113 = vmul.f32 %v5045, %v5112
        %v5114 = vsub.f32 1.0, %v5113
        %v5115 = vmul.f32 %v5112, %v5114
        %v5116 = vadd.f32 %v5112, %v5115
        %vm5117 = vweird.f32 %v5045
        %vm5118 = vweird.f32 %v5112
        %vm5119 = vmor %vm5117, %vm5118
        %v5120 = vsel %vm5119, %v5112, %v5116
        %v5121 = vand.u32 2147483647, %v5045
        %vm5122 = vcmp.eq.f32.partialorder %v5121, 8.507059e+37
        %v5123 = vand.u32 %v5045, 2147483648
        %v5124 = vor.u32 1.1754944e-38, %v5123
        %v5125 = vsel %vm5122, %v5124, %v5120
        %v5126 = vrcp.pop %v5047
        %v5127 = vmul.f32 %v5047, %v5126
        %v5128 = vsub.f32 1.0, %v5127
        %v5129 = vmul.f32 %v5126, %v5128
        %v5130 = vadd.f32 %v5126, %v5129
        %vm5131 = vweird.f32 %v5047
        %vm5132 = vweird.f32 %v5126
        %vm5133 = vmor %vm5131, %vm5132
        %v5134 = vsel %vm5133, %v5126, %v5130
        %v5135 = vand.u32 2147483647, %v5047
        %vm5136 = vcmp.eq.f32.partialorder %v5135, 8.507059e+37
        %v5137 = vand.u32 %v5047, 2147483648
        %v5138 = vor.u32 1.1754944e-38, %v5137
        %v5139 = vsel %vm5136, %v5138, %v5134
        %v5140 = vrcp.pop %v5049
        %v5141 = vmul.f32 %v5049, %v5140
        %v5142 = vsub.f32 1.0, %v5141
        %v5143 = vmul.f32 %v5140, %v5142
        %v5144 = vadd.f32 %v5140, %v5143
        %vm5145 = vweird.f32 %v5049
        %vm5146 = vweird.f32 %v5140
        %vm5147 = vmor %vm5145, %vm5146
        %v5148 = vsel %vm5147, %v5140, %v5144
        %v5149 = vand.u32 2147483647, %v5049
        %vm5150 = vcmp.eq.f32.partialorder %v5149, 8.507059e+37
        %v5151 = vand.u32 %v5049, 2147483648
        %v5152 = vor.u32 1.1754944e-38, %v5151
        %v5153 = vsel %vm5150, %v5152, %v5148
        %v5154 = vrcp.pop %v5051
        %v5155 = vmul.f32 %v5051, %v5154
        %v5156 = vsub.f32 1.0, %v5155
        %v5157 = vmul.f32 %v5154, %v5156
        %v5158 = vadd.f32 %v5154, %v5157
        %vm5159 = vweird.f32 %v5051
        %vm5160 = vweird.f32 %v5154
        %vm5161 = vmor %vm5159, %vm5160
        %v5162 = vsel %vm5161, %v5154, %v5158
        %v5163 = vand.u32 2147483647, %v5051
        %vm5164 = vcmp.eq.f32.partialorder %v5163, 8.507059e+37
        %v5165 = vand.u32 %v5051, 2147483648
        %v5166 = vor.u32 1.1754944e-38, %v5165
        %v5167 = vsel %vm5164, %v5166, %v5162
        %v5168 = vrcp.pop %v5053
        %v5169 = vmul.f32 %v5053, %v5168
        %v5170 = vsub.f32 1.0, %v5169
        %v5171 = vmul.f32 %v5168, %v5170
        %v5172 = vadd.f32 %v5168, %v5171
        %vm5173 = vweird.f32 %v5053
        %vm5174 = vweird.f32 %v5168
        %vm5175 = vmor %vm5173, %vm5174
        %v5176 = vsel %vm5175, %v5168, %v5172
        %v5177 = vand.u32 2147483647, %v5053
        %vm5178 = vcmp.eq.f32.partialorder %v5177, 8.507059e+37
        %v5179 = vand.u32 %v5053, 2147483648
        %v5180 = vor.u32 1.1754944e-38, %v5179
        %v5181 = vsel %vm5178, %v5180, %v5176
        %v5182 = vrcp.pop %v5055
        %v5183 = vmul.f32 %v5055, %v5182
        %v5184 = vsub.f32 1.0, %v5183
        %v5185 = vmul.f32 %v5182, %v5184
        %v5186 = vadd.f32 %v5182, %v5185
        %vm5187 = vweird.f32 %v5055
        %vm5188 = vweird.f32 %v5182
        %vm5189 = vmor %vm5187, %vm5188
        %v5190 = vsel %vm5189, %v5182, %v5186
        %v5191 = vand.u32 2147483647, %v5055
        %vm5192 = vcmp.eq.f32.partialorder %v5191, 8.507059e+37
        %v5193 = vand.u32 %v5055, 2147483648
        %v5194 = vor.u32 1.1754944e-38, %v5193
        %v5195 = vsel %vm5192, %v5194, %v5190
        %v5196 = vrcp.pop %v5057
        %v5197 = vmul.f32 %v5057, %v5196
        %v5198 = vsub.f32 1.0, %v5197
        %v5199 = vmul.f32 %v5196, %v5198
        %v5200 = vadd.f32 %v5196, %v5199
        %vm5201 = vweird.f32 %v5057
        %vm5202 = vweird.f32 %v5196
        %vm5203 = vmor %vm5201, %vm5202
        %v5204 = vsel %vm5203, %v5196, %v5200
        %v5205 = vand.u32 2147483647, %v5057
        %vm5206 = vcmp.eq.f32.partialorder %v5205, 8.507059e+37
        %v5207 = vand.u32 %v5057, 2147483648
        %v5208 = vor.u32 1.1754944e-38, %v5207
        %v5209 = vsel %vm5206, %v5208, %v5204
        %v5210 = vrcp.pop %v5059
        %v5211 = vmul.f32 %v5059, %v5210
        %v5212 = vsub.f32 1.0, %v5211
        %v5213 = vmul.f32 %v5210, %v5212
        %v5214 = vadd.f32 %v5210, %v5213
        %vm5215 = vweird.f32 %v5059
        %vm5216 = vweird.f32 %v5210
        %vm5217 = vmor %vm5215, %vm5216
        %v5218 = vsel %vm5217, %v5210, %v5214
        %v5219 = vand.u32 2147483647, %v5059
        %vm5220 = vcmp.eq.f32.partialorder %v5219, 8.507059e+37
        %v5221 = vand.u32 %v5059, 2147483648
        %v5222 = vor.u32 1.1754944e-38, %v5221
        %v5223 = vsel %vm5220, %v5222, %v5218
        %v5224 = vrcp.pop %v5061
        %v5225 = vmul.f32 %v5061, %v5224
        %v5226 = vsub.f32 1.0, %v5225
        %v5227 = vmul.f32 %v5224, %v5226
        %v5228 = vadd.f32 %v5224, %v5227
        %vm5229 = vweird.f32 %v5061
        %vm5230 = vweird.f32 %v5224
        %vm5231 = vmor %vm5229, %vm5230
        %v5232 = vsel %vm5231, %v5224, %v5228
        %v5233 = vand.u32 2147483647, %v5061
        %vm5234 = vcmp.eq.f32.partialorder %v5233, 8.507059e+37
        %v5235 = vand.u32 %v5061, 2147483648
        %v5236 = vor.u32 1.1754944e-38, %v5235
        %v5237 = vsel %vm5234, %v5236, %v5232
        %v5238 = vrcp.pop %v5063
        %v5239 = vmul.f32 %v5063, %v5238
        %v5240 = vsub.f32 1.0, %v5239
        %v5241 = vmul.f32 %v5238, %v5240
        %v5242 = vadd.f32 %v5238, %v5241
        %vm5243 = vweird.f32 %v5063
        %vm5244 = vweird.f32 %v5238
        %vm5245 = vmor %vm5243, %vm5244
        %v5246 = vsel %vm5245, %v5238, %v5242
        %v5247 = vand.u32 2147483647, %v5063
        %vm5248 = vcmp.eq.f32.partialorder %v5247, 8.507059e+37
        %v5249 = vand.u32 %v5063, 2147483648
        %v5250 = vor.u32 1.1754944e-38, %v5249
        %v5251 = vsel %vm5248, %v5250, %v5246
        %v5252 = vrcp.pop %v5065
        %v5253 = vmul.f32 %v5065, %v5252
        %v5254 = vsub.f32 1.0, %v5253
        %v5255 = vmul.f32 %v5252, %v5254
        %v5256 = vadd.f32 %v5252, %v5255
        %vm5257 = vweird.f32 %v5065
        %vm5258 = vweird.f32 %v5252
        %vm5259 = vmor %vm5257, %vm5258
        %v5260 = vsel %vm5259, %v5252, %v5256
        %v5261 = vand.u32 2147483647, %v5065
        %vm5262 = vcmp.eq.f32.partialorder %v5261, 8.507059e+37
        %v5263 = vand.u32 %v5065, 2147483648
        %v5264 = vor.u32 1.1754944e-38, %v5263
        %v5265 = vsel %vm5262, %v5264, %v5260
        %v5266 = vrcp.pop %v5067
        %v5267 = vmul.f32 %v5067, %v5266
        %v5268 = vsub.f32 1.0, %v5267
        %v5269 = vmul.f32 %v5266, %v5268
        %v5270 = vadd.f32 %v5266, %v5269
        %vm5271 = vweird.f32 %v5067
        %vm5272 = vweird.f32 %v5266
        %vm5273 = vmor %vm5271, %vm5272
        %v5274 = vsel %vm5273, %v5266, %v5270
        %v5275 = vand.u32 2147483647, %v5067
        %vm5276 = vcmp.eq.f32.partialorder %v5275, 8.507059e+37
        %v5277 = vand.u32 %v5067, 2147483648
        %v5278 = vor.u32 1.1754944e-38, %v5277
        %v5279 = vsel %vm5276, %v5278, %v5274
        %v5280 = vrcp.pop %v5069
        %v5281 = vmul.f32 %v5069, %v5280
        %v5282 = vsub.f32 1.0, %v5281
        %v5283 = vmul.f32 %v5280, %v5282
        %v5284 = vadd.f32 %v5280, %v5283
        %vm5285 = vweird.f32 %v5069
        %vm5286 = vweird.f32 %v5280
        %vm5287 = vmor %vm5285, %vm5286
        %v5288 = vsel %vm5287, %v5280, %v5284
        %v5289 = vand.u32 2147483647, %v5069
        %vm5290 = vcmp.eq.f32.partialorder %v5289, 8.507059e+37
        %v5291 = vand.u32 %v5069, 2147483648
        %v5292 = vor.u32 1.1754944e-38, %v5291
        %v5293 = vsel %vm5290, %v5292, %v5288
        %v5294 = vmul.f32 %v5007, %v5083
        %v5295 = vmul.f32 %v5009, %v5097
        %v5296 = vmul.f32 %v5011, %v5111
        %v5297 = vmul.f32 %v5013, %v5125
        %v5298 = vmul.f32 %v5015, %v5139
        %v5299 = vmul.f32 %v5017, %v5153
        %v5300 = vmul.f32 %v5019, %v5167
        %v5301 = vmul.f32 %v5021, %v5181
        %v5302 = vmul.f32 %v5023, %v5195
        %v5303 = vmul.f32 %v5025, %v5209
        %v5304 = vmul.f32 %v5027, %v5223
        %v5305 = vmul.f32 %v5029, %v5237
        %v5306 = vmul.f32 %v5031, %v5251
        %v5307 = vmul.f32 %v5033, %v5265
        %v5308 = vmul.f32 %v5035, %v5279
        %v5309 = vmul.f32 %v5037, %v5293
        %v5310 = vadd.f32 %v4636, %v5294
        %v5311 = vadd.f32 %v4637, %v5295
        %v5312 = vadd.f32 %v4638, %v5296
        %v5313 = vadd.f32 %v4639, %v5297
        %v5314 = vadd.f32 %v4640, %v5298
        %v5315 = vadd.f32 %v4641, %v5299
        %v5316 = vadd.f32 %v4642, %v5300
        %v5317 = vadd.f32 %v4643, %v5301
        %v5318 = vadd.f32 %v4644, %v5302
        %v5319 = vadd.f32 %v4645, %v5303
        %v5320 = vadd.f32 %v4646, %v5304
        %v5321 = vadd.f32 %v4647, %v5305
        %v5322 = vadd.f32 %v4648, %v5306
        %v5323 = vadd.f32 %v4649, %v5307
        %v5324 = vadd.f32 %v4650, %v5308
        %v5325 = vadd.f32 %v4651, %v5309
        %5326 = vrot.lane.b32.xlu0 %v737, 32
        %v5327 = vpop.permute.xlu0 %5326
        %5328 = vrot.lane.b32.xlu0 %v740, 32
        %v5329 = vpop.permute.xlu0 %5328
        %5330 = vrot.lane.b32.xlu0 %v743, 32
        %v5331 = vpop.permute.xlu0 %5330
        %5332 = vrot.lane.b32.xlu0 %v746, 32
        %v5333 = vpop.permute.xlu0 %5332
        %5334 = vrot.lane.b32.xlu0 %v749, 32
        %v5335 = vpop.permute.xlu0 %5334
        %5336 = vrot.lane.b32.xlu0 %v752, 32
        %v5337 = vpop.permute.xlu0 %5336
        %5338 = vrot.lane.b32.xlu0 %v755, 32
        %v5339 = vpop.permute.xlu0 %5338
        %5340 = vrot.lane.b32.xlu0 %v758, 32
        %v5341 = vpop.permute.xlu0 %5340
        %5342 = vrot.lane.b32.xlu0 %v761, 32
        %v5343 = vpop.permute.xlu0 %5342
        %5344 = vrot.lane.b32.xlu0 %v764, 32
        %v5345 = vpop.permute.xlu0 %5344
        %5346 = vrot.lane.b32.xlu0 %v767, 32
        %v5347 = vpop.permute.xlu0 %5346
        %5348 = vrot.lane.b32.xlu0 %v770, 32
        %v5349 = vpop.permute.xlu0 %5348
        %5350 = vrot.lane.b32.xlu0 %v773, 32
        %v5351 = vpop.permute.xlu0 %5350
        %5352 = vrot.lane.b32.xlu0 %v776, 32
        %v5353 = vpop.permute.xlu0 %5352
        %5354 = vrot.lane.b32.xlu0 %v779, 32
        %v5355 = vpop.permute.xlu0 %5354
        %5356 = vrot.lane.b32.xlu0 %v782, 32
        %v5357 = vpop.permute.xlu0 %5356
        %5374 = vmatpush.msra.mxu0 %v5357
        %5375 = vmatpush.msra.mxu0 %v5355
        %5376 = vmatpush.msra.mxu0 %v5353
        %5377 = vmatpush.msra.mxu0 %v5351
        %5378 = vmatpush.msra.mxu0 %v5349
        %5379 = vmatpush.msra.mxu0 %v5347
        %5380 = vmatpush.msra.mxu0 %v5345
        %5381 = vmatpush.msra.mxu0 %v5343
        %5382 = vmatpush.msra.mxu0 %v5341
        %5383 = vmatpush.msra.mxu0 %v5339
        %5384 = vmatpush.msra.mxu0 %v5337
        %5385 = vmatpush.msra.mxu0 %v5335
        %5386 = vmatpush.msra.mxu0 %v5333
        %5387 = vmatpush.msra.mxu0 %v5331
        %5388 = vmatpush.msra.mxu0 %v5329
        %5389 = vmatpush.msra.mxu0 %v5327
        %5390 = vmatmul.f32.gmra.mxu0 %v5294
        %v5391 = vpop.f32.mrf.mxu0
        %v5392 = vadd.f32 0.0, %v5391
        %5393 = vmatmul.f32.gmra.mxu0 %v5295
        %v5394 = vpop.f32.mrf.mxu0
        %v5395 = vadd.f32 0.0, %v5394
        %5396 = vmatmul.f32.gmra.mxu0 %v5296
        %v5397 = vpop.f32.mrf.mxu0
        %v5398 = vadd.f32 0.0, %v5397
        %5399 = vmatmul.f32.gmra.mxu0 %v5297
        %v5400 = vpop.f32.mrf.mxu0
        %v5401 = vadd.f32 0.0, %v5400
        %5402 = vmatmul.f32.gmra.mxu0 %v5298
        %v5403 = vpop.f32.mrf.mxu0
        %v5404 = vadd.f32 0.0, %v5403
        %5405 = vmatmul.f32.gmra.mxu0 %v5299
        %v5406 = vpop.f32.mrf.mxu0
        %v5407 = vadd.f32 0.0, %v5406
        %5408 = vmatmul.f32.gmra.mxu0 %v5300
        %v5409 = vpop.f32.mrf.mxu0
        %v5410 = vadd.f32 0.0, %v5409
        %5411 = vmatmul.f32.gmra.mxu0 %v5301
        %v5412 = vpop.f32.mrf.mxu0
        %v5413 = vadd.f32 0.0, %v5412
        %5414 = vmatmul.f32.gmra.mxu0 %v5302
        %v5415 = vpop.f32.mrf.mxu0
        %v5416 = vadd.f32 0.0, %v5415
        %5417 = vmatmul.f32.gmra.mxu0 %v5303
        %v5418 = vpop.f32.mrf.mxu0
        %v5419 = vadd.f32 0.0, %v5418
        %5420 = vmatmul.f32.gmra.mxu0 %v5304
        %v5421 = vpop.f32.mrf.mxu0
        %v5422 = vadd.f32 0.0, %v5421
        %5423 = vmatmul.f32.gmra.mxu0 %v5305
        %v5424 = vpop.f32.mrf.mxu0
        %v5425 = vadd.f32 0.0, %v5424
        %5426 = vmatmul.f32.gmra.mxu0 %v5306
        %v5427 = vpop.f32.mrf.mxu0
        %v5428 = vadd.f32 0.0, %v5427
        %5429 = vmatmul.f32.gmra.mxu0 %v5307
        %v5430 = vpop.f32.mrf.mxu0
        %v5431 = vadd.f32 0.0, %v5430
        %5432 = vmatmul.f32.gmra.mxu0 %v5308
        %v5433 = vpop.f32.mrf.mxu0
        %v5434 = vadd.f32 0.0, %v5433
        %5435 = vmatmul.f32.gmra.mxu0 %v5309
        %v5436 = vpop.f32.mrf.mxu0
        %v5437 = vadd.f32 0.0, %v5436
        %5438 = vdwg.mxu0
        %5439 = vrot.lane.b32.xlu0 %v598, 16
        %v5440 = vpop.permute.xlu0 %5439
        %5441 = vrot.lane.b32.xlu0 %v599, 16
        %v5442 = vpop.permute.xlu0 %5441
        %5443 = vrot.lane.b32.xlu0 %v600, 16
        %v5444 = vpop.permute.xlu0 %5443
        %5445 = vrot.lane.b32.xlu0 %v601, 16
        %v5446 = vpop.permute.xlu0 %5445
        %5447 = vrot.lane.b32.xlu0 %v602, 16
        %v5448 = vpop.permute.xlu0 %5447
        %5449 = vrot.lane.b32.xlu0 %v603, 16
        %v5450 = vpop.permute.xlu0 %5449
        %5451 = vrot.lane.b32.xlu0 %v604, 16
        %v5452 = vpop.permute.xlu0 %5451
        %5453 = vrot.lane.b32.xlu0 %v605, 16
        %v5454 = vpop.permute.xlu0 %5453
        %5455 = vrot.lane.b32.xlu0 %v606, 16
        %v5456 = vpop.permute.xlu0 %5455
        %5457 = vrot.lane.b32.xlu0 %v607, 16
        %v5458 = vpop.permute.xlu0 %5457
        %5459 = vrot.lane.b32.xlu0 %v608, 16
        %v5460 = vpop.permute.xlu0 %5459
        %5461 = vrot.lane.b32.xlu0 %v609, 16
        %v5462 = vpop.permute.xlu0 %5461
        %5463 = vrot.lane.b32.xlu0 %v610, 16
        %v5464 = vpop.permute.xlu0 %5463
        %5465 = vrot.lane.b32.xlu0 %v611, 16
        %v5466 = vpop.permute.xlu0 %5465
        %5467 = vrot.lane.b32.xlu0 %v612, 16
        %v5468 = vpop.permute.xlu0 %5467
        %5469 = vrot.lane.b32.xlu0 %v613, 16
        %v5470 = vpop.permute.xlu0 %5469
        %5471 = vrot.lane.b32.xlu0 %v652, 16
        %v5472 = vpop.permute.xlu0 %5471
        %5473 = vrot.lane.b32.xlu0 %v655, 16
        %v5474 = vpop.permute.xlu0 %5473
        %5475 = vrot.lane.b32.xlu0 %v658, 16
        %v5476 = vpop.permute.xlu0 %5475
        %5477 = vrot.lane.b32.xlu0 %v661, 16
        %v5478 = vpop.permute.xlu0 %5477
        %5479 = vrot.lane.b32.xlu0 %v664, 16
        %v5480 = vpop.permute.xlu0 %5479
        %5481 = vrot.lane.b32.xlu0 %v667, 16
        %v5482 = vpop.permute.xlu0 %5481
        %5483 = vrot.lane.b32.xlu0 %v670, 16
        %v5484 = vpop.permute.xlu0 %5483
        %5485 = vrot.lane.b32.xlu0 %v673, 16
        %v5486 = vpop.permute.xlu0 %5485
        %5487 = vrot.lane.b32.xlu0 %v676, 16
        %v5488 = vpop.permute.xlu0 %5487
        %5489 = vrot.lane.b32.xlu0 %v679, 16
        %v5490 = vpop.permute.xlu0 %5489
        %5491 = vrot.lane.b32.xlu0 %v682, 16
        %v5492 = vpop.permute.xlu0 %5491
        %5493 = vrot.lane.b32.xlu0 %v685, 16
        %v5494 = vpop.permute.xlu0 %5493
        %5495 = vrot.lane.b32.xlu0 %v688, 16
        %v5496 = vpop.permute.xlu0 %5495
        %5497 = vrot.lane.b32.xlu0 %v691, 16
        %v5498 = vpop.permute.xlu0 %5497
        %5499 = vrot.lane.b32.xlu0 %v694, 16
        %v5500 = vpop.permute.xlu0 %5499
        %5501 = vrot.lane.b32.xlu0 %v697, 16
        %v5502 = vpop.permute.xlu0 %5501
        %v5503 = vsel %vm784, %v5440, 0
        %v5505 = vsel %vm784, %v5442, 0
        %v5507 = vsel %vm784, %v5444, 0
        %v5509 = vsel %vm784, %v5446, 0
        %v5511 = vsel %vm784, %v5448, 0
        %v5513 = vsel %vm784, %v5450, 0
        %v5515 = vsel %vm784, %v5452, 0
        %v5517 = vsel %vm784, %v5454, 0
        %v5519 = vsel %vm784, %v5456, 0
        %v5521 = vsel %vm784, %v5458, 0
        %v5523 = vsel %vm784, %v5460, 0
        %v5525 = vsel %vm784, %v5462, 0
        %v5527 = vsel %vm784, %v5464, 0
        %v5529 = vsel %vm784, %v5466, 0
        %v5531 = vsel %vm784, %v5468, 0
        %v5533 = vsel %vm784, %v5470, 0
        %v5535 = vsel %vm784, %v5472, 0
        %v5537 = vsel %vm784, %v5474, 0
        %v5539 = vsel %vm784, %v5476, 0
        %v5541 = vsel %vm784, %v5478, 0
        %v5543 = vsel %vm784, %v5480, 0
        %v5545 = vsel %vm784, %v5482, 0
        %v5547 = vsel %vm784, %v5484, 0
        %v5549 = vsel %vm784, %v5486, 0
        %v5551 = vsel %vm784, %v5488, 0
        %v5553 = vsel %vm784, %v5490, 0
        %v5555 = vsel %vm784, %v5492, 0
        %v5557 = vsel %vm784, %v5494, 0
        %v5559 = vsel %vm784, %v5496, 0
        %v5561 = vsel %vm784, %v5498, 0
        %v5563 = vsel %vm784, %v5500, 0
        %v5565 = vsel %vm784, %v5502, 0
        %5567 = vmatpush.xpose.msra.mxu0 %v5565
        %5568 = vmatpush.xpose.msra.mxu0 %v5563
        %5569 = vmatpush.xpose.msra.mxu0 %v5561
        %5570 = vmatpush.xpose.msra.mxu0 %v5559
        %5571 = vmatpush.xpose.msra.mxu0 %v5557
        %5572 = vmatpush.xpose.msra.mxu0 %v5555
        %5573 = vmatpush.xpose.msra.mxu0 %v5553
        %5574 = vmatpush.xpose.msra.mxu0 %v5551
        %5575 = vmatpush.xpose.msra.mxu0 %v5549
        %5576 = vmatpush.xpose.msra.mxu0 %v5547
        %5577 = vmatpush.xpose.msra.mxu0 %v5545
        %5578 = vmatpush.xpose.msra.mxu0 %v5543
        %5579 = vmatpush.xpose.msra.mxu0 %v5541
        %5580 = vmatpush.xpose.msra.mxu0 %v5539
        %5581 = vmatpush.xpose.msra.mxu0 %v5537
        %5582 = vmatpush.xpose.msra.mxu0 %v5535
        %5583 = vmatmul.f32.gmra.mxu0 %v5503
        %v5584 = vpop.f32.mrf.mxu0
        %v5585 = vadd.f32 0.0, %v5584
        %5586 = vmatmul.f32.gmra.mxu0 %v5505
        %v5587 = vpop.f32.mrf.mxu0
        %v5588 = vadd.f32 0.0, %v5587
        %5589 = vmatmul.f32.gmra.mxu0 %v5507
        %v5590 = vpop.f32.mrf.mxu0
        %v5591 = vadd.f32 0.0, %v5590
        %5592 = vmatmul.f32.gmra.mxu0 %v5509
        %v5593 = vpop.f32.mrf.mxu0
        %v5594 = vadd.f32 0.0, %v5593
        %5595 = vmatmul.f32.gmra.mxu0 %v5511
        %v5596 = vpop.f32.mrf.mxu0
        %v5597 = vadd.f32 0.0, %v5596
        %5598 = vmatmul.f32.gmra.mxu0 %v5513
        %v5599 = vpop.f32.mrf.mxu0
        %v5600 = vadd.f32 0.0, %v5599
        %5601 = vmatmul.f32.gmra.mxu0 %v5515
        %v5602 = vpop.f32.mrf.mxu0
        %v5603 = vadd.f32 0.0, %v5602
        %5604 = vmatmul.f32.gmra.mxu0 %v5517
        %v5605 = vpop.f32.mrf.mxu0
        %v5606 = vadd.f32 0.0, %v5605
        %5607 = vmatmul.f32.gmra.mxu0 %v5519
        %v5608 = vpop.f32.mrf.mxu0
        %v5609 = vadd.f32 0.0, %v5608
        %5610 = vmatmul.f32.gmra.mxu0 %v5521
        %v5611 = vpop.f32.mrf.mxu0
        %v5612 = vadd.f32 0.0, %v5611
        %5613 = vmatmul.f32.gmra.mxu0 %v5523
        %v5614 = vpop.f32.mrf.mxu0
        %v5615 = vadd.f32 0.0, %v5614
        %5616 = vmatmul.f32.gmra.mxu0 %v5525
        %v5617 = vpop.f32.mrf.mxu0
        %v5618 = vadd.f32 0.0, %v5617
        %5619 = vmatmul.f32.gmra.mxu0 %v5527
        %v5620 = vpop.f32.mrf.mxu0
        %v5621 = vadd.f32 0.0, %v5620
        %5622 = vmatmul.f32.gmra.mxu0 %v5529
        %v5623 = vpop.f32.mrf.mxu0
        %v5624 = vadd.f32 0.0, %v5623
        %5625 = vmatmul.f32.gmra.mxu0 %v5531
        %v5626 = vpop.f32.mrf.mxu0
        %v5627 = vadd.f32 0.0, %v5626
        %5628 = vmatmul.f32.gmra.mxu0 %v5533
        %v5629 = vpop.f32.mrf.mxu0
        %v5630 = vadd.f32 0.0, %v5629
        %5631 = vdwg.mxu0
        %5632 = vmax.xlane.f32.xlu0 %v5585
        %v5633 = vpop.xlane.xlu0 %5632
        %5634 = vmax.xlane.f32.xlu0 %v5588
        %v5635 = vpop.xlane.xlu0 %5634
        %5636 = vmax.xlane.f32.xlu0 %v5591
        %v5637 = vpop.xlane.xlu0 %5636
        %5638 = vmax.xlane.f32.xlu0 %v5594
        %v5639 = vpop.xlane.xlu0 %5638
        %5640 = vmax.xlane.f32.xlu0 %v5597
        %v5641 = vpop.xlane.xlu0 %5640
        %5642 = vmax.xlane.f32.xlu0 %v5600
        %v5643 = vpop.xlane.xlu0 %5642
        %5644 = vmax.xlane.f32.xlu0 %v5603
        %v5645 = vpop.xlane.xlu0 %5644
        %5646 = vmax.xlane.f32.xlu0 %v5606
        %v5647 = vpop.xlane.xlu0 %5646
        %5648 = vmax.xlane.f32.xlu0 %v5609
        %v5649 = vpop.xlane.xlu0 %5648
        %5650 = vmax.xlane.f32.xlu0 %v5612
        %v5651 = vpop.xlane.xlu0 %5650
        %5652 = vmax.xlane.f32.xlu0 %v5615
        %v5653 = vpop.xlane.xlu0 %5652
        %5654 = vmax.xlane.f32.xlu0 %v5618
        %v5655 = vpop.xlane.xlu0 %5654
        %5656 = vmax.xlane.f32.xlu0 %v5621
        %v5657 = vpop.xlane.xlu0 %5656
        %5658 = vmax.xlane.f32.xlu0 %v5624
        %v5659 = vpop.xlane.xlu0 %5658
        %5660 = vmax.xlane.f32.xlu0 %v5627
        %v5661 = vpop.xlane.xlu0 %5660
        %5662 = vmax.xlane.f32.xlu0 %v5630
        %v5663 = vpop.xlane.xlu0 %5662
        %v5664 = vsub.f32 %v5585, %v5633
        %v5665 = vsub.f32 %v5588, %v5635
        %v5666 = vsub.f32 %v5591, %v5637
        %v5667 = vsub.f32 %v5594, %v5639
        %v5668 = vsub.f32 %v5597, %v5641
        %v5669 = vsub.f32 %v5600, %v5643
        %v5670 = vsub.f32 %v5603, %v5645
        %v5671 = vsub.f32 %v5606, %v5647
        %v5672 = vsub.f32 %v5609, %v5649
        %v5673 = vsub.f32 %v5612, %v5651
        %v5674 = vsub.f32 %v5615, %v5653
        %v5675 = vsub.f32 %v5618, %v5655
        %v5676 = vsub.f32 %v5621, %v5657
        %v5677 = vsub.f32 %v5624, %v5659
        %v5678 = vsub.f32 %v5627, %v5661
        %v5679 = vsub.f32 %v5630, %v5663
        %v5680 = vmul.f32 %v5664, 1.442695
        %v5681 = vpow.pop %v5680
        %v5682 = vmul.f32 %v5665, 1.442695
        %v5683 = vpow.pop %v5682
        %v5684 = vmul.f32 %v5666, 1.442695
        %v5685 = vpow.pop %v5684
        %v5686 = vmul.f32 %v5667, 1.442695
        %v5687 = vpow.pop %v5686
        %v5688 = vmul.f32 %v5668, 1.442695
        %v5689 = vpow.pop %v5688
        %v5690 = vmul.f32 %v5669, 1.442695
        %v5691 = vpow.pop %v5690
        %v5692 = vmul.f32 %v5670, 1.442695
        %v5693 = vpow.pop %v5692
        %v5694 = vmul.f32 %v5671, 1.442695
        %v5695 = vpow.pop %v5694
        %v5696 = vmul.f32 %v5672, 1.442695
        %v5697 = vpow.pop %v5696
        %v5698 = vmul.f32 %v5673, 1.442695
        %v5699 = vpow.pop %v5698
        %v5700 = vmul.f32 %v5674, 1.442695
        %v5701 = vpow.pop %v5700
        %v5702 = vmul.f32 %v5675, 1.442695
        %v5703 = vpow.pop %v5702
        %v5704 = vmul.f32 %v5676, 1.442695
        %v5705 = vpow.pop %v5704
        %v5706 = vmul.f32 %v5677, 1.442695
        %v5707 = vpow.pop %v5706
        %v5708 = vmul.f32 %v5678, 1.442695
        %v5709 = vpow.pop %v5708
        %v5710 = vmul.f32 %v5679, 1.442695
        %v5711 = vpow.pop %v5710
        %5712 = vadd.xlane.f32.xlu0 %v5681
        %v5713 = vpop.xlane.xlu0 %5712
        %5714 = vadd.xlane.f32.xlu0 %v5683
        %v5715 = vpop.xlane.xlu0 %5714
        %5716 = vadd.xlane.f32.xlu0 %v5685
        %v5717 = vpop.xlane.xlu0 %5716
        %5718 = vadd.xlane.f32.xlu0 %v5687
        %v5719 = vpop.xlane.xlu0 %5718
        %5720 = vadd.xlane.f32.xlu0 %v5689
        %v5721 = vpop.xlane.xlu0 %5720
        %5722 = vadd.xlane.f32.xlu0 %v5691
        %v5723 = vpop.xlane.xlu0 %5722
        %5724 = vadd.xlane.f32.xlu0 %v5693
        %v5725 = vpop.xlane.xlu0 %5724
        %5726 = vadd.xlane.f32.xlu0 %v5695
        %v5727 = vpop.xlane.xlu0 %5726
        %5728 = vadd.xlane.f32.xlu0 %v5697
        %v5729 = vpop.xlane.xlu0 %5728
        %5730 = vadd.xlane.f32.xlu0 %v5699
        %v5731 = vpop.xlane.xlu0 %5730
        %5732 = vadd.xlane.f32.xlu0 %v5701
        %v5733 = vpop.xlane.xlu0 %5732
        %5734 = vadd.xlane.f32.xlu0 %v5703
        %v5735 = vpop.xlane.xlu0 %5734
        %5736 = vadd.xlane.f32.xlu0 %v5705
        %v5737 = vpop.xlane.xlu0 %5736
        %5738 = vadd.xlane.f32.xlu0 %v5707
        %v5739 = vpop.xlane.xlu0 %5738
        %5740 = vadd.xlane.f32.xlu0 %v5709
        %v5741 = vpop.xlane.xlu0 %5740
        %5742 = vadd.xlane.f32.xlu0 %v5711
        %v5743 = vpop.xlane.xlu0 %5742
        %v5744 = vrcp.pop %v5713
        %v5745 = vmul.f32 %v5713, %v5744
        %v5746 = vsub.f32 1.0, %v5745
        %v5747 = vmul.f32 %v5744, %v5746
        %v5748 = vadd.f32 %v5744, %v5747
        %vm5749 = vweird.f32 %v5713
        %vm5750 = vweird.f32 %v5744
        %vm5751 = vmor %vm5749, %vm5750
        %v5752 = vsel %vm5751, %v5744, %v5748
        %v5753 = vand.u32 2147483647, %v5713
        %vm5754 = vcmp.eq.f32.partialorder %v5753, 8.507059e+37
        %v5755 = vand.u32 %v5713, 2147483648
        %v5756 = vor.u32 1.1754944e-38, %v5755
        %v5757 = vsel %vm5754, %v5756, %v5752
        %v5758 = vrcp.pop %v5715
        %v5759 = vmul.f32 %v5715, %v5758
        %v5760 = vsub.f32 1.0, %v5759
        %v5761 = vmul.f32 %v5758, %v5760
        %v5762 = vadd.f32 %v5758, %v5761
        %vm5763 = vweird.f32 %v5715
        %vm5764 = vweird.f32 %v5758
        %vm5765 = vmor %vm5763, %vm5764
        %v5766 = vsel %vm5765, %v5758, %v5762
        %v5767 = vand.u32 2147483647, %v5715
        %vm5768 = vcmp.eq.f32.partialorder %v5767, 8.507059e+37
        %v5769 = vand.u32 %v5715, 2147483648
        %v5770 = vor.u32 1.1754944e-38, %v5769
        %v5771 = vsel %vm5768, %v5770, %v5766
        %v5772 = vrcp.pop %v5717
        %v5773 = vmul.f32 %v5717, %v5772
        %v5774 = vsub.f32 1.0, %v5773
        %v5775 = vmul.f32 %v5772, %v5774
        %v5776 = vadd.f32 %v5772, %v5775
        %vm5777 = vweird.f32 %v5717
        %vm5778 = vweird.f32 %v5772
        %vm5779 = vmor %vm5777, %vm5778
        %v5780 = vsel %vm5779, %v5772, %v5776
        %v5781 = vand.u32 2147483647, %v5717
        %vm5782 = vcmp.eq.f32.partialorder %v5781, 8.507059e+37
        %v5783 = vand.u32 %v5717, 2147483648
        %v5784 = vor.u32 1.1754944e-38, %v5783
        %v5785 = vsel %vm5782, %v5784, %v5780
        %v5786 = vrcp.pop %v5719
        %v5787 = vmul.f32 %v5719, %v5786
        %v5788 = vsub.f32 1.0, %v5787
        %v5789 = vmul.f32 %v5786, %v5788
        %v5790 = vadd.f32 %v5786, %v5789
        %vm5791 = vweird.f32 %v5719
        %vm5792 = vweird.f32 %v5786
        %vm5793 = vmor %vm5791, %vm5792
        %v5794 = vsel %vm5793, %v5786, %v5790
        %v5795 = vand.u32 2147483647, %v5719
        %vm5796 = vcmp.eq.f32.partialorder %v5795, 8.507059e+37
        %v5797 = vand.u32 %v5719, 2147483648
        %v5798 = vor.u32 1.1754944e-38, %v5797
        %v5799 = vsel %vm5796, %v5798, %v5794
        %v5800 = vrcp.pop %v5721
        %v5801 = vmul.f32 %v5721, %v5800
        %v5802 = vsub.f32 1.0, %v5801
        %v5803 = vmul.f32 %v5800, %v5802
        %v5804 = vadd.f32 %v5800, %v5803
        %vm5805 = vweird.f32 %v5721
        %vm5806 = vweird.f32 %v5800
        %vm5807 = vmor %vm5805, %vm5806
        %v5808 = vsel %vm5807, %v5800, %v5804
        %v5809 = vand.u32 2147483647, %v5721
        %vm5810 = vcmp.eq.f32.partialorder %v5809, 8.507059e+37
        %v5811 = vand.u32 %v5721, 2147483648
        %v5812 = vor.u32 1.1754944e-38, %v5811
        %v5813 = vsel %vm5810, %v5812, %v5808
        %v5814 = vrcp.pop %v5723
        %v5815 = vmul.f32 %v5723, %v5814
        %v5816 = vsub.f32 1.0, %v5815
        %v5817 = vmul.f32 %v5814, %v5816
        %v5818 = vadd.f32 %v5814, %v5817
        %vm5819 = vweird.f32 %v5723
        %vm5820 = vweird.f32 %v5814
        %vm5821 = vmor %vm5819, %vm5820
        %v5822 = vsel %vm5821, %v5814, %v5818
        %v5823 = vand.u32 2147483647, %v5723
        %vm5824 = vcmp.eq.f32.partialorder %v5823, 8.507059e+37
        %v5825 = vand.u32 %v5723, 2147483648
        %v5826 = vor.u32 1.1754944e-38, %v5825
        %v5827 = vsel %vm5824, %v5826, %v5822
        %v5828 = vrcp.pop %v5725
        %v5829 = vmul.f32 %v5725, %v5828
        %v5830 = vsub.f32 1.0, %v5829
        %v5831 = vmul.f32 %v5828, %v5830
        %v5832 = vadd.f32 %v5828, %v5831
        %vm5833 = vweird.f32 %v5725
        %vm5834 = vweird.f32 %v5828
        %vm5835 = vmor %vm5833, %vm5834
        %v5836 = vsel %vm5835, %v5828, %v5832
        %v5837 = vand.u32 2147483647, %v5725
        %vm5838 = vcmp.eq.f32.partialorder %v5837, 8.507059e+37
        %v5839 = vand.u32 %v5725, 2147483648
        %v5840 = vor.u32 1.1754944e-38, %v5839
        %v5841 = vsel %vm5838, %v5840, %v5836
        %v5842 = vrcp.pop %v5727
        %v5843 = vmul.f32 %v5727, %v5842
        %v5844 = vsub.f32 1.0, %v5843
        %v5845 = vmul.f32 %v5842, %v5844
        %v5846 = vadd.f32 %v5842, %v5845
        %vm5847 = vweird.f32 %v5727
        %vm5848 = vweird.f32 %v5842
        %vm5849 = vmor %vm5847, %vm5848
        %v5850 = vsel %vm5849, %v5842, %v5846
        %v5851 = vand.u32 2147483647, %v5727
        %vm5852 = vcmp.eq.f32.partialorder %v5851, 8.507059e+37
        %v5853 = vand.u32 %v5727, 2147483648
        %v5854 = vor.u32 1.1754944e-38, %v5853
        %v5855 = vsel %vm5852, %v5854, %v5850
        %v5856 = vrcp.pop %v5729
        %v5857 = vmul.f32 %v5729, %v5856
        %v5858 = vsub.f32 1.0, %v5857
        %v5859 = vmul.f32 %v5856, %v5858
        %v5860 = vadd.f32 %v5856, %v5859
        %vm5861 = vweird.f32 %v5729
        %vm5862 = vweird.f32 %v5856
        %vm5863 = vmor %vm5861, %vm5862
        %v5864 = vsel %vm5863, %v5856, %v5860
        %v5865 = vand.u32 2147483647, %v5729
        %vm5866 = vcmp.eq.f32.partialorder %v5865, 8.507059e+37
        %v5867 = vand.u32 %v5729, 2147483648
        %v5868 = vor.u32 1.1754944e-38, %v5867
        %v5869 = vsel %vm5866, %v5868, %v5864
        %v5870 = vrcp.pop %v5731
        %v5871 = vmul.f32 %v5731, %v5870
        %v5872 = vsub.f32 1.0, %v5871
        %v5873 = vmul.f32 %v5870, %v5872
        %v5874 = vadd.f32 %v5870, %v5873
        %vm5875 = vweird.f32 %v5731
        %vm5876 = vweird.f32 %v5870
        %vm5877 = vmor %vm5875, %vm5876
        %v5878 = vsel %vm5877, %v5870, %v5874
        %v5879 = vand.u32 2147483647, %v5731
        %vm5880 = vcmp.eq.f32.partialorder %v5879, 8.507059e+37
        %v5881 = vand.u32 %v5731, 2147483648
        %v5882 = vor.u32 1.1754944e-38, %v5881
        %v5883 = vsel %vm5880, %v5882, %v5878
        %v5884 = vrcp.pop %v5733
        %v5885 = vmul.f32 %v5733, %v5884
        %v5886 = vsub.f32 1.0, %v5885
        %v5887 = vmul.f32 %v5884, %v5886
        %v5888 = vadd.f32 %v5884, %v5887
        %vm5889 = vweird.f32 %v5733
        %vm5890 = vweird.f32 %v5884
        %vm5891 = vmor %vm5889, %vm5890
        %v5892 = vsel %vm5891, %v5884, %v5888
        %v5893 = vand.u32 2147483647, %v5733
        %vm5894 = vcmp.eq.f32.partialorder %v5893, 8.507059e+37
        %v5895 = vand.u32 %v5733, 2147483648
        %v5896 = vor.u32 1.1754944e-38, %v5895
        %v5897 = vsel %vm5894, %v5896, %v5892
        %v5898 = vrcp.pop %v5735
        %v5899 = vmul.f32 %v5735, %v5898
        %v5900 = vsub.f32 1.0, %v5899
        %v5901 = vmul.f32 %v5898, %v5900
        %v5902 = vadd.f32 %v5898, %v5901
        %vm5903 = vweird.f32 %v5735
        %vm5904 = vweird.f32 %v5898
        %vm5905 = vmor %vm5903, %vm5904
        %v5906 = vsel %vm5905, %v5898, %v5902
        %v5907 = vand.u32 2147483647, %v5735
        %vm5908 = vcmp.eq.f32.partialorder %v5907, 8.507059e+37
        %v5909 = vand.u32 %v5735, 2147483648
        %v5910 = vor.u32 1.1754944e-38, %v5909
        %v5911 = vsel %vm5908, %v5910, %v5906
        %v5912 = vrcp.pop %v5737
        %v5913 = vmul.f32 %v5737, %v5912
        %v5914 = vsub.f32 1.0, %v5913
        %v5915 = vmul.f32 %v5912, %v5914
        %v5916 = vadd.f32 %v5912, %v5915
        %vm5917 = vweird.f32 %v5737
        %vm5918 = vweird.f32 %v5912
        %vm5919 = vmor %vm5917, %vm5918
        %v5920 = vsel %vm5919, %v5912, %v5916
        %v5921 = vand.u32 2147483647, %v5737
        %vm5922 = vcmp.eq.f32.partialorder %v5921, 8.507059e+37
        %v5923 = vand.u32 %v5737, 2147483648
        %v5924 = vor.u32 1.1754944e-38, %v5923
        %v5925 = vsel %vm5922, %v5924, %v5920
        %v5926 = vrcp.pop %v5739
        %v5927 = vmul.f32 %v5739, %v5926
        %v5928 = vsub.f32 1.0, %v5927
        %v5929 = vmul.f32 %v5926, %v5928
        %v5930 = vadd.f32 %v5926, %v5929
        %vm5931 = vweird.f32 %v5739
        %vm5932 = vweird.f32 %v5926
        %vm5933 = vmor %vm5931, %vm5932
        %v5934 = vsel %vm5933, %v5926, %v5930
        %v5935 = vand.u32 2147483647, %v5739
        %vm5936 = vcmp.eq.f32.partialorder %v5935, 8.507059e+37
        %v5937 = vand.u32 %v5739, 2147483648
        %v5938 = vor.u32 1.1754944e-38, %v5937
        %v5939 = vsel %vm5936, %v5938, %v5934
        %v5940 = vrcp.pop %v5741
        %v5941 = vmul.f32 %v5741, %v5940
        %v5942 = vsub.f32 1.0, %v5941
        %v5943 = vmul.f32 %v5940, %v5942
        %v5944 = vadd.f32 %v5940, %v5943
        %vm5945 = vweird.f32 %v5741
        %vm5946 = vweird.f32 %v5940
        %vm5947 = vmor %vm5945, %vm5946
        %v5948 = vsel %vm5947, %v5940, %v5944
        %v5949 = vand.u32 2147483647, %v5741
        %vm5950 = vcmp.eq.f32.partialorder %v5949, 8.507059e+37
        %v5951 = vand.u32 %v5741, 2147483648
        %v5952 = vor.u32 1.1754944e-38, %v5951
        %v5953 = vsel %vm5950, %v5952, %v5948
        %v5954 = vrcp.pop %v5743
        %v5955 = vmul.f32 %v5743, %v5954
        %v5956 = vsub.f32 1.0, %v5955
        %v5957 = vmul.f32 %v5954, %v5956
        %v5958 = vadd.f32 %v5954, %v5957
        %vm5959 = vweird.f32 %v5743
        %vm5960 = vweird.f32 %v5954
        %vm5961 = vmor %vm5959, %vm5960
        %v5962 = vsel %vm5961, %v5954, %v5958
        %v5963 = vand.u32 2147483647, %v5743
        %vm5964 = vcmp.eq.f32.partialorder %v5963, 8.507059e+37
        %v5965 = vand.u32 %v5743, 2147483648
        %v5966 = vor.u32 1.1754944e-38, %v5965
        %v5967 = vsel %vm5964, %v5966, %v5962
        %v5968 = vmul.f32 %v5681, %v5757
        %v5969 = vmul.f32 %v5683, %v5771
        %v5970 = vmul.f32 %v5685, %v5785
        %v5971 = vmul.f32 %v5687, %v5799
        %v5972 = vmul.f32 %v5689, %v5813
        %v5973 = vmul.f32 %v5691, %v5827
        %v5974 = vmul.f32 %v5693, %v5841
        %v5975 = vmul.f32 %v5695, %v5855
        %v5976 = vmul.f32 %v5697, %v5869
        %v5977 = vmul.f32 %v5699, %v5883
        %v5978 = vmul.f32 %v5701, %v5897
        %v5979 = vmul.f32 %v5703, %v5911
        %v5980 = vmul.f32 %v5705, %v5925
        %v5981 = vmul.f32 %v5707, %v5939
        %v5982 = vmul.f32 %v5709, %v5953
        %v5983 = vmul.f32 %v5711, %v5967
        %v5984 = vadd.f32 %v5310, %v5968
        %v5985 = vadd.f32 %v5311, %v5969
        %v5986 = vadd.f32 %v5312, %v5970
        %v5987 = vadd.f32 %v5313, %v5971
        %v5988 = vadd.f32 %v5314, %v5972
        %v5989 = vadd.f32 %v5315, %v5973
        %v5990 = vadd.f32 %v5316, %v5974
        %v5991 = vadd.f32 %v5317, %v5975
        %v5992 = vadd.f32 %v5318, %v5976
        %v5993 = vadd.f32 %v5319, %v5977
        %v5994 = vadd.f32 %v5320, %v5978
        %v5995 = vadd.f32 %v5321, %v5979
        %v5996 = vadd.f32 %v5322, %v5980
        %v5997 = vadd.f32 %v5323, %v5981
        %v5998 = vadd.f32 %v5324, %v5982
        %v5999 = vadd.f32 %v5325, %v5983
        %6000 = vrot.lane.b32.xlu0 %v737, 16
        %v6001 = vpop.permute.xlu0 %6000
        %6002 = vrot.lane.b32.xlu0 %v740, 16
        %v6003 = vpop.permute.xlu0 %6002
        %6004 = vrot.lane.b32.xlu0 %v743, 16
        %v6005 = vpop.permute.xlu0 %6004
        %6006 = vrot.lane.b32.xlu0 %v746, 16
        %v6007 = vpop.permute.xlu0 %6006
        %6008 = vrot.lane.b32.xlu0 %v749, 16
        %v6009 = vpop.permute.xlu0 %6008
        %6010 = vrot.lane.b32.xlu0 %v752, 16
        %v6011 = vpop.permute.xlu0 %6010
        %6012 = vrot.lane.b32.xlu0 %v755, 16
        %v6013 = vpop.permute.xlu0 %6012
        %6014 = vrot.lane.b32.xlu0 %v758, 16
        %v6015 = vpop.permute.xlu0 %6014
        %6016 = vrot.lane.b32.xlu0 %v761, 16
        %v6017 = vpop.permute.xlu0 %6016
        %6018 = vrot.lane.b32.xlu0 %v764, 16
        %v6019 = vpop.permute.xlu0 %6018
        %6020 = vrot.lane.b32.xlu0 %v767, 16
        %v6021 = vpop.permute.xlu0 %6020
        %6022 = vrot.lane.b32.xlu0 %v770, 16
        %v6023 = vpop.permute.xlu0 %6022
        %6024 = vrot.lane.b32.xlu0 %v773, 16
        %v6025 = vpop.permute.xlu0 %6024
        %6026 = vrot.lane.b32.xlu0 %v776, 16
        %v6027 = vpop.permute.xlu0 %6026
        %6028 = vrot.lane.b32.xlu0 %v779, 16
        %v6029 = vpop.permute.xlu0 %6028
        %6030 = vrot.lane.b32.xlu0 %v782, 16
        %v6031 = vpop.permute.xlu0 %6030
        %6048 = vmatpush.msra.mxu0 %v6031
        %6049 = vmatpush.msra.mxu0 %v6029
        %6050 = vmatpush.msra.mxu0 %v6027
        %6051 = vmatpush.msra.mxu0 %v6025
        %6052 = vmatpush.msra.mxu0 %v6023
        %6053 = vmatpush.msra.mxu0 %v6021
        %6054 = vmatpush.msra.mxu0 %v6019
        %6055 = vmatpush.msra.mxu0 %v6017
        %6056 = vmatpush.msra.mxu0 %v6015
        %6057 = vmatpush.msra.mxu0 %v6013
        %6058 = vmatpush.msra.mxu0 %v6011
        %6059 = vmatpush.msra.mxu0 %v6009
        %6060 = vmatpush.msra.mxu0 %v6007
        %6061 = vmatpush.msra.mxu0 %v6005
        %6062 = vmatpush.msra.mxu0 %v6003
        %6063 = vmatpush.msra.mxu0 %v6001
        %6064 = vmatmul.f32.gmra.mxu0 %v5968
        %v6065 = vpop.f32.mrf.mxu0
        %v6066 = vadd.f32 0.0, %v6065
        %6067 = vmatmul.f32.gmra.mxu0 %v5969
        %v6068 = vpop.f32.mrf.mxu0
        %v6069 = vadd.f32 0.0, %v6068
        %6070 = vmatmul.f32.gmra.mxu0 %v5970
        %v6071 = vpop.f32.mrf.mxu0
        %v6072 = vadd.f32 0.0, %v6071
        %6073 = vmatmul.f32.gmra.mxu0 %v5971
        %v6074 = vpop.f32.mrf.mxu0
        %v6075 = vadd.f32 0.0, %v6074
        %6076 = vmatmul.f32.gmra.mxu0 %v5972
        %v6077 = vpop.f32.mrf.mxu0
        %v6078 = vadd.f32 0.0, %v6077
        %6079 = vmatmul.f32.gmra.mxu0 %v5973
        %v6080 = vpop.f32.mrf.mxu0
        %v6081 = vadd.f32 0.0, %v6080
        %6082 = vmatmul.f32.gmra.mxu0 %v5974
        %v6083 = vpop.f32.mrf.mxu0
        %v6084 = vadd.f32 0.0, %v6083
        %6085 = vmatmul.f32.gmra.mxu0 %v5975
        %v6086 = vpop.f32.mrf.mxu0
        %v6087 = vadd.f32 0.0, %v6086
        %6088 = vmatmul.f32.gmra.mxu0 %v5976
        %v6089 = vpop.f32.mrf.mxu0
        %v6090 = vadd.f32 0.0, %v6089
        %6091 = vmatmul.f32.gmra.mxu0 %v5977
        %v6092 = vpop.f32.mrf.mxu0
        %v6093 = vadd.f32 0.0, %v6092
        %6094 = vmatmul.f32.gmra.mxu0 %v5978
        %v6095 = vpop.f32.mrf.mxu0
        %v6096 = vadd.f32 0.0, %v6095
        %6097 = vmatmul.f32.gmra.mxu0 %v5979
        %v6098 = vpop.f32.mrf.mxu0
        %v6099 = vadd.f32 0.0, %v6098
        %6100 = vmatmul.f32.gmra.mxu0 %v5980
        %v6101 = vpop.f32.mrf.mxu0
        %v6102 = vadd.f32 0.0, %v6101
        %6103 = vmatmul.f32.gmra.mxu0 %v5981
        %v6104 = vpop.f32.mrf.mxu0
        %v6105 = vadd.f32 0.0, %v6104
        %6106 = vmatmul.f32.gmra.mxu0 %v5982
        %v6107 = vpop.f32.mrf.mxu0
        %v6108 = vadd.f32 0.0, %v6107
        %6109 = vmatmul.f32.gmra.mxu0 %v5983
        %v6110 = vpop.f32.mrf.mxu0
        %v6111 = vadd.f32 0.0, %v6110
        %6112 = vdwg.mxu0
        %6129 = vrot.lane.b32.xlu0 %v2022, 16
        %v6130 = vpop.permute.xlu0 %6129
        %6131 = vrot.lane.b32.xlu0 %v2025, 16
        %v6132 = vpop.permute.xlu0 %6131
        %6133 = vrot.lane.b32.xlu0 %v2028, 16
        %v6134 = vpop.permute.xlu0 %6133
        %6135 = vrot.lane.b32.xlu0 %v2031, 16
        %v6136 = vpop.permute.xlu0 %6135
        %6137 = vrot.lane.b32.xlu0 %v2034, 16
        %v6138 = vpop.permute.xlu0 %6137
        %6139 = vrot.lane.b32.xlu0 %v2037, 16
        %v6140 = vpop.permute.xlu0 %6139
        %6141 = vrot.lane.b32.xlu0 %v2040, 16
        %v6142 = vpop.permute.xlu0 %6141
        %6143 = vrot.lane.b32.xlu0 %v2043, 16
        %v6144 = vpop.permute.xlu0 %6143
        %6145 = vrot.lane.b32.xlu0 %v2046, 16
        %v6146 = vpop.permute.xlu0 %6145
        %6147 = vrot.lane.b32.xlu0 %v2049, 16
        %v6148 = vpop.permute.xlu0 %6147
        %6149 = vrot.lane.b32.xlu0 %v2052, 16
        %v6150 = vpop.permute.xlu0 %6149
        %6151 = vrot.lane.b32.xlu0 %v2055, 16
        %v6152 = vpop.permute.xlu0 %6151
        %6153 = vrot.lane.b32.xlu0 %v2058, 16
        %v6154 = vpop.permute.xlu0 %6153
        %6155 = vrot.lane.b32.xlu0 %v2061, 16
        %v6156 = vpop.permute.xlu0 %6155
        %6157 = vrot.lane.b32.xlu0 %v2064, 16
        %v6158 = vpop.permute.xlu0 %6157
        %6159 = vrot.lane.b32.xlu0 %v2067, 16
        %v6160 = vpop.permute.xlu0 %6159
        %6193 = vrot.lane.b32.xlu0 %v2696, 32
        %v6194 = vpop.permute.xlu0 %6193
        %6195 = vrot.lane.b32.xlu0 %v2699, 32
        %v6196 = vpop.permute.xlu0 %6195
        %6197 = vrot.lane.b32.xlu0 %v2702, 32
        %v6198 = vpop.permute.xlu0 %6197
        %6199 = vrot.lane.b32.xlu0 %v2705, 32
        %v6200 = vpop.permute.xlu0 %6199
        %6201 = vrot.lane.b32.xlu0 %v2708, 32
        %v6202 = vpop.permute.xlu0 %6201
        %6203 = vrot.lane.b32.xlu0 %v2711, 32
        %v6204 = vpop.permute.xlu0 %6203
        %6205 = vrot.lane.b32.xlu0 %v2714, 32
        %v6206 = vpop.permute.xlu0 %6205
        %6207 = vrot.lane.b32.xlu0 %v2717, 32
        %v6208 = vpop.permute.xlu0 %6207
        %6209 = vrot.lane.b32.xlu0 %v2720, 32
        %v6210 = vpop.permute.xlu0 %6209
        %6211 = vrot.lane.b32.xlu0 %v2723, 32
        %v6212 = vpop.permute.xlu0 %6211
        %6213 = vrot.lane.b32.xlu0 %v2726, 32
        %v6214 = vpop.permute.xlu0 %6213
        %6215 = vrot.lane.b32.xlu0 %v2729, 32
        %v6216 = vpop.permute.xlu0 %6215
        %6217 = vrot.lane.b32.xlu0 %v2732, 32
        %v6218 = vpop.permute.xlu0 %6217
        %6219 = vrot.lane.b32.xlu0 %v2735, 32
        %v6220 = vpop.permute.xlu0 %6219
        %6221 = vrot.lane.b32.xlu0 %v2738, 32
        %v6222 = vpop.permute.xlu0 %6221
        %6223 = vrot.lane.b32.xlu0 %v2741, 32
        %v6224 = vpop.permute.xlu0 %6223
        %6257 = vrot.lane.b32.xlu0 %v3370, 48
        %v6258 = vpop.permute.xlu0 %6257
        %6259 = vrot.lane.b32.xlu0 %v3373, 48
        %v6260 = vpop.permute.xlu0 %6259
        %6261 = vrot.lane.b32.xlu0 %v3376, 48
        %v6262 = vpop.permute.xlu0 %6261
        %6263 = vrot.lane.b32.xlu0 %v3379, 48
        %v6264 = vpop.permute.xlu0 %6263
        %6265 = vrot.lane.b32.xlu0 %v3382, 48
        %v6266 = vpop.permute.xlu0 %6265
        %6267 = vrot.lane.b32.xlu0 %v3385, 48
        %v6268 = vpop.permute.xlu0 %6267
        %6269 = vrot.lane.b32.xlu0 %v3388, 48
        %v6270 = vpop.permute.xlu0 %6269
        %6271 = vrot.lane.b32.xlu0 %v3391, 48
        %v6272 = vpop.permute.xlu0 %6271
        %6273 = vrot.lane.b32.xlu0 %v3394, 48
        %v6274 = vpop.permute.xlu0 %6273
        %6275 = vrot.lane.b32.xlu0 %v3397, 48
        %v6276 = vpop.permute.xlu0 %6275
        %6277 = vrot.lane.b32.xlu0 %v3400, 48
        %v6278 = vpop.permute.xlu0 %6277
        %6279 = vrot.lane.b32.xlu0 %v3403, 48
        %v6280 = vpop.permute.xlu0 %6279
        %6281 = vrot.lane.b32.xlu0 %v3406, 48
        %v6282 = vpop.permute.xlu0 %6281
        %6283 = vrot.lane.b32.xlu0 %v3409, 48
        %v6284 = vpop.permute.xlu0 %6283
        %6285 = vrot.lane.b32.xlu0 %v3412, 48
        %v6286 = vpop.permute.xlu0 %6285
        %6287 = vrot.lane.b32.xlu0 %v3415, 48
        %v6288 = vpop.permute.xlu0 %6287
        %6321 = vrot.lane.b32.xlu0 %v4044, 64
        %v6322 = vpop.permute.xlu0 %6321
        %6323 = vrot.lane.b32.xlu0 %v4047, 64
        %v6324 = vpop.permute.xlu0 %6323
        %6325 = vrot.lane.b32.xlu0 %v4050, 64
        %v6326 = vpop.permute.xlu0 %6325
        %6327 = vrot.lane.b32.xlu0 %v4053, 64
        %v6328 = vpop.permute.xlu0 %6327
        %6329 = vrot.lane.b32.xlu0 %v4056, 64
        %v6330 = vpop.permute.xlu0 %6329
        %6331 = vrot.lane.b32.xlu0 %v4059, 64
        %v6332 = vpop.permute.xlu0 %6331
        %6333 = vrot.lane.b32.xlu0 %v4062, 64
        %v6334 = vpop.permute.xlu0 %6333
        %6335 = vrot.lane.b32.xlu0 %v4065, 64
        %v6336 = vpop.permute.xlu0 %6335
        %6337 = vrot.lane.b32.xlu0 %v4068, 64
        %v6338 = vpop.permute.xlu0 %6337
        %6339 = vrot.lane.b32.xlu0 %v4071, 64
        %v6340 = vpop.permute.xlu0 %6339
        %6341 = vrot.lane.b32.xlu0 %v4074, 64
        %v6342 = vpop.permute.xlu0 %6341
        %6343 = vrot.lane.b32.xlu0 %v4077, 64
        %v6344 = vpop.permute.xlu0 %6343
        %6345 = vrot.lane.b32.xlu0 %v4080, 64
        %v6346 = vpop.permute.xlu0 %6345
        %6347 = vrot.lane.b32.xlu0 %v4083, 64
        %v6348 = vpop.permute.xlu0 %6347
        %6349 = vrot.lane.b32.xlu0 %v4086, 64
        %v6350 = vpop.permute.xlu0 %6349
        %6351 = vrot.lane.b32.xlu0 %v4089, 64
        %v6352 = vpop.permute.xlu0 %6351
        %6385 = vrot.lane.b32.xlu0 %v4718, 80
        %v6386 = vpop.permute.xlu0 %6385
        %6387 = vrot.lane.b32.xlu0 %v4721, 80
        %v6388 = vpop.permute.xlu0 %6387
        %6389 = vrot.lane.b32.xlu0 %v4724, 80
        %v6390 = vpop.permute.xlu0 %6389
        %6391 = vrot.lane.b32.xlu0 %v4727, 80
        %v6392 = vpop.permute.xlu0 %6391
        %6393 = vrot.lane.b32.xlu0 %v4730, 80
        %v6394 = vpop.permute.xlu0 %6393
        %6395 = vrot.lane.b32.xlu0 %v4733, 80
        %v6396 = vpop.permute.xlu0 %6395
        %6397 = vrot.lane.b32.xlu0 %v4736, 80
        %v6398 = vpop.permute.xlu0 %6397
        %6399 = vrot.lane.b32.xlu0 %v4739, 80
        %v6400 = vpop.permute.xlu0 %6399
        %6401 = vrot.lane.b32.xlu0 %v4742, 80
        %v6402 = vpop.permute.xlu0 %6401
        %6403 = vrot.lane.b32.xlu0 %v4745, 80
        %v6404 = vpop.permute.xlu0 %6403
        %6405 = vrot.lane.b32.xlu0 %v4748, 80
        %v6406 = vpop.permute.xlu0 %6405
        %6407 = vrot.lane.b32.xlu0 %v4751, 80
        %v6408 = vpop.permute.xlu0 %6407
        %6409 = vrot.lane.b32.xlu0 %v4754, 80
        %v6410 = vpop.permute.xlu0 %6409
        %6411 = vrot.lane.b32.xlu0 %v4757, 80
        %v6412 = vpop.permute.xlu0 %6411
        %6413 = vrot.lane.b32.xlu0 %v4760, 80
        %v6414 = vpop.permute.xlu0 %6413
        %6415 = vrot.lane.b32.xlu0 %v4763, 80
        %v6416 = vpop.permute.xlu0 %6415
        %6449 = vrot.lane.b32.xlu0 %v5392, 96
        %v6450 = vpop.permute.xlu0 %6449
        %6451 = vrot.lane.b32.xlu0 %v5395, 96
        %v6452 = vpop.permute.xlu0 %6451
        %6453 = vrot.lane.b32.xlu0 %v5398, 96
        %v6454 = vpop.permute.xlu0 %6453
        %6455 = vrot.lane.b32.xlu0 %v5401, 96
        %v6456 = vpop.permute.xlu0 %6455
        %6457 = vrot.lane.b32.xlu0 %v5404, 96
        %v6458 = vpop.permute.xlu0 %6457
        %6459 = vrot.lane.b32.xlu0 %v5407, 96
        %v6460 = vpop.permute.xlu0 %6459
        %6461 = vrot.lane.b32.xlu0 %v5410, 96
        %v6462 = vpop.permute.xlu0 %6461
        %6463 = vrot.lane.b32.xlu0 %v5413, 96
        %v6464 = vpop.permute.xlu0 %6463
        %6465 = vrot.lane.b32.xlu0 %v5416, 96
        %v6466 = vpop.permute.xlu0 %6465
        %6467 = vrot.lane.b32.xlu0 %v5419, 96
        %v6468 = vpop.permute.xlu0 %6467
        %6469 = vrot.lane.b32.xlu0 %v5422, 96
        %v6470 = vpop.permute.xlu0 %6469
        %6471 = vrot.lane.b32.xlu0 %v5425, 96
        %v6472 = vpop.permute.xlu0 %6471
        %6473 = vrot.lane.b32.xlu0 %v5428, 96
        %v6474 = vpop.permute.xlu0 %6473
        %6475 = vrot.lane.b32.xlu0 %v5431, 96
        %v6476 = vpop.permute.xlu0 %6475
        %6477 = vrot.lane.b32.xlu0 %v5434, 96
        %v6478 = vpop.permute.xlu0 %6477
        %6479 = vrot.lane.b32.xlu0 %v5437, 96
        %v6480 = vpop.permute.xlu0 %6479
        %6513 = vrot.lane.b32.xlu0 %v6066, 112
        %v6514 = vpop.permute.xlu0 %6513
        %6515 = vrot.lane.b32.xlu0 %v6069, 112
        %v6516 = vpop.permute.xlu0 %6515
        %6517 = vrot.lane.b32.xlu0 %v6072, 112
        %v6518 = vpop.permute.xlu0 %6517
        %6519 = vrot.lane.b32.xlu0 %v6075, 112
        %v6520 = vpop.permute.xlu0 %6519
        %6521 = vrot.lane.b32.xlu0 %v6078, 112
        %v6522 = vpop.permute.xlu0 %6521
        %6523 = vrot.lane.b32.xlu0 %v6081, 112
        %v6524 = vpop.permute.xlu0 %6523
        %6525 = vrot.lane.b32.xlu0 %v6084, 112
        %v6526 = vpop.permute.xlu0 %6525
        %6527 = vrot.lane.b32.xlu0 %v6087, 112
        %v6528 = vpop.permute.xlu0 %6527
        %6529 = vrot.lane.b32.xlu0 %v6090, 112
        %v6530 = vpop.permute.xlu0 %6529
        %6531 = vrot.lane.b32.xlu0 %v6093, 112
        %v6532 = vpop.permute.xlu0 %6531
        %6533 = vrot.lane.b32.xlu0 %v6096, 112
        %v6534 = vpop.permute.xlu0 %6533
        %6535 = vrot.lane.b32.xlu0 %v6099, 112
        %v6536 = vpop.permute.xlu0 %6535
        %6537 = vrot.lane.b32.xlu0 %v6102, 112
        %v6538 = vpop.permute.xlu0 %6537
        %6539 = vrot.lane.b32.xlu0 %v6105, 112
        %v6540 = vpop.permute.xlu0 %6539
        %6541 = vrot.lane.b32.xlu0 %v6108, 112
        %v6542 = vpop.permute.xlu0 %6541
        %6543 = vrot.lane.b32.xlu0 %v6111, 112
        %v6544 = vpop.permute.xlu0 %6543
        %v6561 = vsel %vm784, %v1332, %v6130
        %v6562 = vsel %vm784, %v1335, %v6132
        %v6563 = vsel %vm784, %v1338, %v6134
        %v6564 = vsel %vm784, %v1341, %v6136
        %v6565 = vsel %vm784, %v1344, %v6138
        %v6566 = vsel %vm784, %v1347, %v6140
        %v6567 = vsel %vm784, %v1350, %v6142
        %v6568 = vsel %vm784, %v1353, %v6144
        %v6569 = vsel %vm784, %v1356, %v6146
        %v6570 = vsel %vm784, %v1359, %v6148
        %v6571 = vsel %vm784, %v1362, %v6150
        %v6572 = vsel %vm784, %v1365, %v6152
        %v6573 = vsel %vm784, %v1368, %v6154
        %v6574 = vsel %vm784, %v1371, %v6156
        %v6575 = vsel %vm784, %v1374, %v6158
        %v6576 = vsel %vm784, %v1377, %v6160
        %vm6577 = vcmask 261120
        %v6578 = vsel %vm6577, %v6561, %v6194
        %v6579 = vsel %vm6577, %v6562, %v6196
        %v6580 = vsel %vm6577, %v6563, %v6198
        %v6581 = vsel %vm6577, %v6564, %v6200
        %v6582 = vsel %vm6577, %v6565, %v6202
        %v6583 = vsel %vm6577, %v6566, %v6204
        %v6584 = vsel %vm6577, %v6567, %v6206
        %v6585 = vsel %vm6577, %v6568, %v6208
        %v6586 = vsel %vm6577, %v6569, %v6210
        %v6587 = vsel %vm6577, %v6570, %v6212
        %v6588 = vsel %vm6577, %v6571, %v6214
        %v6589 = vsel %vm6577, %v6572, %v6216
        %v6590 = vsel %vm6577, %v6573, %v6218
        %v6591 = vsel %vm6577, %v6574, %v6220
        %v6592 = vsel %vm6577, %v6575, %v6222
        %v6593 = vsel %vm6577, %v6576, %v6224
        %vm6594 = vcmask 392192
        %v6595 = vsel %vm6594, %v6578, %v6258
        %v6596 = vsel %vm6594, %v6579, %v6260
        %v6597 = vsel %vm6594, %v6580, %v6262
        %v6598 = vsel %vm6594, %v6581, %v6264
        %v6599 = vsel %vm6594, %v6582, %v6266
        %v6600 = vsel %vm6594, %v6583, %v6268
        %v6601 = vsel %vm6594, %v6584, %v6270
        %v6602 = vsel %vm6594, %v6585, %v6272
        %v6603 = vsel %vm6594, %v6586, %v6274
        %v6604 = vsel %vm6594, %v6587, %v6276
        %v6605 = vsel %vm6594, %v6588, %v6278
        %v6606 = vsel %vm6594, %v6589, %v6280
        %v6607 = vsel %vm6594, %v6590, %v6282
        %v6608 = vsel %vm6594, %v6591, %v6284
        %v6609 = vsel %vm6594, %v6592, %v6286
        %v6610 = vsel %vm6594, %v6593, %v6288
        %vm6611 = vcmask 523264
        %v6612 = vsel %vm6611, %v6595, %v6322
        %v6613 = vsel %vm6611, %v6596, %v6324
        %v6614 = vsel %vm6611, %v6597, %v6326
        %v6615 = vsel %vm6611, %v6598, %v6328
        %v6616 = vsel %vm6611, %v6599, %v6330
        %v6617 = vsel %vm6611, %v6600, %v6332
        %v6618 = vsel %vm6611, %v6601, %v6334
        %v6619 = vsel %vm6611, %v6602, %v6336
        %v6620 = vsel %vm6611, %v6603, %v6338
        %v6621 = vsel %vm6611, %v6604, %v6340
        %v6622 = vsel %vm6611, %v6605, %v6342
        %v6623 = vsel %vm6611, %v6606, %v6344
        %v6624 = vsel %vm6611, %v6607, %v6346
        %v6625 = vsel %vm6611, %v6608, %v6348
        %v6626 = vsel %vm6611, %v6609, %v6350
        %v6627 = vsel %vm6611, %v6610, %v6352
        %vm6628 = vcmask 654336
        %v6629 = vsel %vm6628, %v6612, %v6386
        %v6630 = vsel %vm6628, %v6613, %v6388
        %v6631 = vsel %vm6628, %v6614, %v6390
        %v6632 = vsel %vm6628, %v6615, %v6392
        %v6633 = vsel %vm6628, %v6616, %v6394
        %v6634 = vsel %vm6628, %v6617, %v6396
        %v6635 = vsel %vm6628, %v6618, %v6398
        %v6636 = vsel %vm6628, %v6619, %v6400
        %v6637 = vsel %vm6628, %v6620, %v6402
        %v6638 = vsel %vm6628, %v6621, %v6404
        %v6639 = vsel %vm6628, %v6622, %v6406
        %v6640 = vsel %vm6628, %v6623, %v6408
        %v6641 = vsel %vm6628, %v6624, %v6410
        %v6642 = vsel %vm6628, %v6625, %v6412
        %v6643 = vsel %vm6628, %v6626, %v6414
        %v6644 = vsel %vm6628, %v6627, %v6416
        %vm6645 = vcmask 785408
        %v6646 = vsel %vm6645, %v6629, %v6450
        %v6647 = vsel %vm6645, %v6630, %v6452
        %v6648 = vsel %vm6645, %v6631, %v6454
        %v6649 = vsel %vm6645, %v6632, %v6456
        %v6650 = vsel %vm6645, %v6633, %v6458
        %v6651 = vsel %vm6645, %v6634, %v6460
        %v6652 = vsel %vm6645, %v6635, %v6462
        %v6653 = vsel %vm6645, %v6636, %v6464
        %v6654 = vsel %vm6645, %v6637, %v6466
        %v6655 = vsel %vm6645, %v6638, %v6468
        %v6656 = vsel %vm6645, %v6639, %v6470
        %v6657 = vsel %vm6645, %v6640, %v6472
        %v6658 = vsel %vm6645, %v6641, %v6474
        %v6659 = vsel %vm6645, %v6642, %v6476
        %v6660 = vsel %vm6645, %v6643, %v6478
        %v6661 = vsel %vm6645, %v6644, %v6480
        %vm6662 = vcmask 916480
        %v6663 = vsel %vm6662, %v6646, %v6514
        %v6664 = vsel %vm6662, %v6647, %v6516
        %v6665 = vsel %vm6662, %v6648, %v6518
        %v6666 = vsel %vm6662, %v6649, %v6520
        %v6667 = vsel %vm6662, %v6650, %v6522
        %v6668 = vsel %vm6662, %v6651, %v6524
        %v6669 = vsel %vm6662, %v6652, %v6526
        %v6670 = vsel %vm6662, %v6653, %v6528
        %v6671 = vsel %vm6662, %v6654, %v6530
        %v6672 = vsel %vm6662, %v6655, %v6532
        %v6673 = vsel %vm6662, %v6656, %v6534
        %v6674 = vsel %vm6662, %v6657, %v6536
        %v6675 = vsel %vm6662, %v6658, %v6538
        %v6676 = vsel %vm6662, %v6659, %v6540
        %v6677 = vsel %vm6662, %v6660, %v6542
        %v6678 = vsel %vm6662, %v6661, %v6544
        %v6679 = vld [vmem:[%s9] sm:$0xff]
        %v6680 = vld [vmem:[%s9 + $0x8] sm:$0xff]
        %v6681 = vld [vmem:[%s9 + $0x10] sm:$0xff]
        %v6682 = vld [vmem:[%s9 + $0x18] sm:$0xff]
        %v6683 = vld [vmem:[%s9 + $0x20] sm:$0xff]
        %v6684 = vld [vmem:[%s9 + $0x28] sm:$0xff]
        %v6685 = vld [vmem:[%s9 + $0x30] sm:$0xff]
        %v6686 = vld [vmem:[%s9 + $0x38] sm:$0xff]
        %v6687 = vld [vmem:[%s9 + $0x40] sm:$0xff]
        %v6688 = vld [vmem:[%s9 + $0x48] sm:$0xff]
        %v6689 = vld [vmem:[%s9 + $0x50] sm:$0xff]
        %v6690 = vld [vmem:[%s9 + $0x58] sm:$0xff]
        %v6691 = vld [vmem:[%s9 + $0x60] sm:$0xff]
        %v6692 = vld [vmem:[%s9 + $0x68] sm:$0xff]
        %v6693 = vld [vmem:[%s9 + $0x70] sm:$0xff]
        %v6694 = vld [vmem:[%s9 + $0x78] sm:$0xff]
        %v6695 = vld [vmem:[%s10] sm:$0x1]
        %v6697 = vperm.slane %v6695, 0
        %6699 = vmatpush.msra.mxu0 %v6694
        %6700 = vmatpush.msra.mxu0 %v6693
        %6701 = vmatpush.msra.mxu0 %v6692
        %6702 = vmatpush.msra.mxu0 %v6691
        %6703 = vmatpush.msra.mxu0 %v6690
        %6704 = vmatpush.msra.mxu0 %v6689
        %6705 = vmatpush.msra.mxu0 %v6688
        %6706 = vmatpush.msra.mxu0 %v6687
        %6707 = vmatpush.msra.mxu0 %v6686
        %6708 = vmatpush.msra.mxu0 %v6685
        %6709 = vmatpush.msra.mxu0 %v6684
        %6710 = vmatpush.msra.mxu0 %v6683
        %6711 = vmatpush.msra.mxu0 %v6682
        %6712 = vmatpush.msra.mxu0 %v6681
        %6713 = vmatpush.msra.mxu0 %v6680
        %6714 = vmatpush.msra.mxu0 %v6679
        %6715 = vmatmul.f32.gmra.mxu0 %v6663
        %v6716 = vpop.f32.mrf.mxu0
        %v6717 = vadd.f32 %v6697, %v6716
        %6718 = vmatmul.f32.gmra.mxu0 %v6664
        %v6719 = vpop.f32.mrf.mxu0
        %v6720 = vadd.f32 %v6697, %v6719
        %6721 = vmatmul.f32.gmra.mxu0 %v6665
        %v6722 = vpop.f32.mrf.mxu0
        %v6723 = vadd.f32 %v6697, %v6722
        %6724 = vmatmul.f32.gmra.mxu0 %v6666
        %v6725 = vpop.f32.mrf.mxu0
        %v6726 = vadd.f32 %v6697, %v6725
        %6727 = vmatmul.f32.gmra.mxu0 %v6667
        %v6728 = vpop.f32.mrf.mxu0
        %v6729 = vadd.f32 %v6697, %v6728
        %6730 = vmatmul.f32.gmra.mxu0 %v6668
        %v6731 = vpop.f32.mrf.mxu0
        %v6732 = vadd.f32 %v6697, %v6731
        %6733 = vmatmul.f32.gmra.mxu0 %v6669
        %v6734 = vpop.f32.mrf.mxu0
        %v6735 = vadd.f32 %v6697, %v6734
        %6736 = vmatmul.f32.gmra.mxu0 %v6670
        %v6737 = vpop.f32.mrf.mxu0
        %v6738 = vadd.f32 %v6697, %v6737
        %6739 = vmatmul.f32.gmra.mxu0 %v6671
        %v6740 = vpop.f32.mrf.mxu0
        %v6741 = vadd.f32 %v6697, %v6740
        %6742 = vmatmul.f32.gmra.mxu0 %v6672
        %v6743 = vpop.f32.mrf.mxu0
        %v6744 = vadd.f32 %v6697, %v6743
        %6745 = vmatmul.f32.gmra.mxu0 %v6673
        %v6746 = vpop.f32.mrf.mxu0
        %v6747 = vadd.f32 %v6697, %v6746
        %6748 = vmatmul.f32.gmra.mxu0 %v6674
        %v6749 = vpop.f32.mrf.mxu0
        %v6750 = vadd.f32 %v6697, %v6749
        %6751 = vmatmul.f32.gmra.mxu0 %v6675
        %v6752 = vpop.f32.mrf.mxu0
        %v6753 = vadd.f32 %v6697, %v6752
        %6754 = vmatmul.f32.gmra.mxu0 %v6676
        %v6755 = vpop.f32.mrf.mxu0
        %v6756 = vadd.f32 %v6697, %v6755
        %6757 = vmatmul.f32.gmra.mxu0 %v6677
        %v6758 = vpop.f32.mrf.mxu0
        %v6759 = vadd.f32 %v6697, %v6758
        %6760 = vmatmul.f32.gmra.mxu0 %v6678
        %v6761 = vpop.f32.mrf.mxu0
        %v6762 = vadd.f32 %v6697, %v6761
        %6763 = vdwg.mxu0
        %6764 = vst [vmem:[%s464] sm:$0xff] %v6717
        %6765 = vst [vmem:[%s464 + $0x8] sm:$0xff] %v6720
        %6766 = vst [vmem:[%s464 + $0x10] sm:$0xff] %v6723
        %6767 = vst [vmem:[%s464 + $0x18] sm:$0xff] %v6726
        %6768 = vst [vmem:[%s464 + $0x20] sm:$0xff] %v6729
        %6769 = vst [vmem:[%s464 + $0x28] sm:$0xff] %v6732
        %6770 = vst [vmem:[%s464 + $0x30] sm:$0xff] %v6735
        %6771 = vst [vmem:[%s464 + $0x38] sm:$0xff] %v6738
        %6772 = vst [vmem:[%s464 + $0x40] sm:$0xff] %v6741
        %6773 = vst [vmem:[%s464 + $0x48] sm:$0xff] %v6744
        %6774 = vst [vmem:[%s464 + $0x50] sm:$0xff] %v6747
        %6775 = vst [vmem:[%s464 + $0x58] sm:$0xff] %v6750
        %6776 = vst [vmem:[%s464 + $0x60] sm:$0xff] %v6753
        %6777 = vst [vmem:[%s464 + $0x68] sm:$0xff] %v6756
        %6778 = vst [vmem:[%s464 + $0x70] sm:$0xff] %v6759
        %6779 = vst [vmem:[%s464 + $0x78] sm:$0xff] %v6762
        %v6780 = vmul.f32 %v5984, 0.125
        %v6781 = vmul.f32 %v5985, 0.125
        %v6782 = vmul.f32 %v5986, 0.125
        %v6783 = vmul.f32 %v5987, 0.125
        %v6784 = vmul.f32 %v5988, 0.125
        %v6785 = vmul.f32 %v5989, 0.125
        %v6786 = vmul.f32 %v5990, 0.125
        %v6787 = vmul.f32 %v5991, 0.125
        %v6788 = vmul.f32 %v5992, 0.125
        %v6789 = vmul.f32 %v5993, 0.125
        %v6790 = vmul.f32 %v5994, 0.125
        %v6791 = vmul.f32 %v5995, 0.125
        %v6792 = vmul.f32 %v5996, 0.125
        %v6793 = vmul.f32 %v5997, 0.125
        %v6794 = vmul.f32 %v5998, 0.125
        %v6795 = vmul.f32 %v5999, 0.125
        %6796 = vst [vmem:[%s444] sm:$0xff] %v6780
        %6797 = vst [vmem:[%s444 + $0x8] sm:$0xff] %v6781
        %6798 = vst [vmem:[%s444 + $0x10] sm:$0xff] %v6782
        %6799 = vst [vmem:[%s444 + $0x18] sm:$0xff] %v6783
        %6800 = vst [vmem:[%s444 + $0x20] sm:$0xff] %v6784
        %6801 = vst [vmem:[%s444 + $0x28] sm:$0xff] %v6785
        %6802 = vst [vmem:[%s444 + $0x30] sm:$0xff] %v6786
        %6803 = vst [vmem:[%s444 + $0x38] sm:$0xff] %v6787
        %6804 = vst [vmem:[%s444 + $0x40] sm:$0xff] %v6788
        %6805 = vst [vmem:[%s444 + $0x48] sm:$0xff] %v6789
        %6806 = vst [vmem:[%s444 + $0x50] sm:$0xff] %v6790
        %6807 = vst [vmem:[%s444 + $0x58] sm:$0xff] %v6791
        %6808 = vst [vmem:[%s444 + $0x60] sm:$0xff] %v6792
        %6809 = vst [vmem:[%s444 + $0x68] sm:$0xff] %v6793
        %6810 = vst [vmem:[%s444 + $0x70] sm:$0xff] %v6794
        %6811 = vst [vmem:[%s444 + $0x78] sm:$0xff] %v6795
        %p6812 = scmp.lt.s32.totalorder %s27, 1
        %s6813 = scalar_select %p6812, %s27, 1
        %s6814 = smul.addr %s6813, 16
        %s6815 = smul.addr %s6814, 8
        %s6816 = scalar_lea.vmem %s11, %s6815
        %s6817 = sand.u32 %s307, 1
        %s6818 = scalar_lea.sflag [#allocation3], %s6817
        %s6819 = sand.u32 %s307, 1
        %s6820 = smul.addr %s6819, 128
        %s6821 = scalar_lea.vmem [#allocation2], %s6820
        // Predicated region
        $region65: #{multihead_attention_with_regularization.1} parent=63 // pred_check
          %p6822 = pneg %p291
        $region66: #{multihead_attention_with_regularization.1} parent=63 // pred_check_branch
          %6824 = sbr.rel (%p6822) target = $region68
        $region67: #{multihead_attention_with_regularization.1} parent=63 // pred_region
          _
        $region68: #{multihead_attention_with_regularization.1} parent=63 // pred_fallthru
          _
        // Predicated region
        $region69: #{multihead_attention_with_regularization.1} parent=63 // pred_check
          %p6825 = pneg %p317
        $region70: #{multihead_attention_with_regularization.1} parent=63 // pred_check_branch
          %6827 = sbr.rel (%p6825) target = $region72
        $region71: #{multihead_attention_with_regularization.1} parent=63 // pred_region
          %6829 = vsyncadd %s6818, 0
          %s6830 = smul.addr %s27, 16
          %s6831 = smul.addr %s6830, 8
          %s6832 = scalar_lea.hbm %s12, %s6831
          %s6833 = sshll.u32 %s6821, 4
          %s6834 = int_to_ptr.vmem [resolvable:$true] %s6833
          %s6835 = sshll.u32 %s6832, 4
          %s6836 = int_to_ptr.hbm [resolvable:$true] %s6835
          %6841 = dma.vmem_to_hbm [thread:$0]  %s6834, 2048, %s6836, %s6818, 128, 128, 8
        $region72: #{multihead_attention_with_regularization.1} parent=63 // pred_fallthru
          _
      $region64: #{multihead_attention_with_regularization.1} parent=5 // pred_fallthru
        _
      %p6842 = scmp.le.s32.totalorder 2, %s22
      // Predicated region
      $region73: #{multihead_attention_with_regularization.1} parent=5 // pred_check
        %p6843 = pneg %p6842
      $region74: #{multihead_attention_with_regularization.1} parent=5 // pred_check_branch
        %6845 = sbr.rel (%p6843) target = $region76
      $region75: #{multihead_attention_with_regularization.1} parent=5 // pred_region
        %s6846 = ssub.s32 %s22, 2
        // Predicated region
        $region77: #{multihead_attention_with_regularization.1} parent=75 // pred_check
          %p6847 = pneg %p297
        $region78: #{multihead_attention_with_regularization.1} parent=75 // pred_check_branch
          %6849 = sbr.rel (%p6847) target = $region80
        $region79: #{multihead_attention_with_regularization.1} parent=75 // pred_region
          %p6850 = scmp.lt.s32.totalorder %s28, 1
          %s6851 = scalar_select %p6850, %s28, 1
          %s6852 = smul.addr %s6851, 16
          %s6853 = smul.addr %s6852, 8
          %s6854 = scalar_lea.vmem %s11, %s6853
        $region80: #{multihead_attention_with_regularization.1} parent=75 // pred_fallthru
          _
        // Predicated region
        $region81: #{multihead_attention_with_regularization.1} parent=75 // pred_check
          %p6855 = pneg %p323
        $region82: #{multihead_attention_with_regularization.1} parent=75 // pred_check_branch
          %6857 = sbr.rel (%p6855) target = $region84
        $region83: #{multihead_attention_with_regularization.1} parent=75 // pred_region
          %s6858 = sand.u32 %s308, 1
          %s6859 = scalar_lea.sflag [#allocation3], %s6858
          %s6860 = sand.u32 %s308, 1
          %s6861 = smul.addr %s6860, 128
          %s6862 = scalar_lea.vmem [#allocation2], %s6861
          %6864 = dma.done %s6859, 2048
        $region84: #{multihead_attention_with_regularization.1} parent=75 // pred_fallthru
          _
      $region76: #{multihead_attention_with_regularization.1} parent=5 // pred_fallthru
        _
    $region6: #{multihead_attention_with_regularization.1} parent=1 // loop_footer
      %s26 = sadd.s32 1, %s22
    $region7: #{multihead_attention_with_regularization.1} parent=1 // loop_footer_branch
      %21 = sbr.rel target = $region3
    $region8: #{multihead_attention_with_regularization.1} parent=1 // loop_exit
      _
    %6865 = vsyncpa [#allocation3], 1
    %s6866 = scalar_lea.sflag [#allocation3], 1
    %6867 = vsyncpa %s6866, 1

</llo_original>
